<compile_context>
chip_gen: v5e
topology: v5e:2x2
jax: 0.10.0
libtpu: 0.0.40
codegen_flags: <defaults>
</compile_context>

<pallas_src>
import jax
import jax.numpy as jnp
from jax import lax
from jax.experimental import pallas as pl
from jax.experimental.pallas import tpu as pltpu

_LANES = 128


def _round_up(x, m):
    return (x + m - 1) // m * m


def _block_kernel(x_ref, w1_ref, b1_ref, w2_ref, b2_ref, o_ref):
    # x_ref:  (N, H, W, Cin_p)     f32   (channels zero-padded to a 128-lane vreg)
    # w1_ref: (9*Cin_p, Cmid_p)    bf16  (row order (kh, kw, cin), matches im2col)
    # b1_ref: (1, Cmid_p)          f32
    # w2_ref: (9*Cmid_p, Cout_p)   bf16
    # b2_ref: (1, Cout_p)          f32
    # o_ref:  (N*H2*W2, Cout_p)    f32   (lane-dense; channel pad sliced off in wrapper)
    x = x_ref[...]
    N, H, W, _ = x.shape
    Cmid_p = w1_ref.shape[-1]
    H1, W1 = H - 2, W - 2
    H2, W2 = H - 4, W - 4

    def im2col_3x3(t, Hout, Wout):
        # (N, Hin, Win, C) -> (N*Hout*Wout, 9*C), channel order (kh, kw, c) to
        # match the flattened HWIO weights.  C is a multiple of 128, so both
        # concat levels place whole vregs (no masked lane shuffles); the kw
        # slices are sublane shifts and the kh slices are major-dim offsets.
        C = t.shape[-1]
        tw = jnp.concatenate([t[:, :, kw:kw + Wout, :] for kw in range(3)], axis=-1)
        p = jnp.concatenate([tw[:, kh:kh + Hout] for kh in range(3)], axis=-1)
        return p.reshape(t.shape[0] * Hout * Wout, 9 * C)

    # ---- conv1 (VALID 3x3) as one MXU matmul: M = N*H1*W1, K = 9*Cin_p ----
    p1 = im2col_3x3(x, H1, W1).astype(jnp.bfloat16)          # cast once, post-relayout
    acc1 = jnp.dot(p1, w1_ref[...], preferred_element_type=jnp.float32)
    h = jnp.maximum(acc1 + b1_ref[...], 0.0)                 # (N*H1*W1, Cmid_p) f32

    # ---- ReLU output -> conv2 as one MXU matmul: M = N*H2*W2, K = 9*Cmid_p ----
    h4 = h.reshape(N, H1, W1, Cmid_p)                        # stays f32 for relayouts
    p2 = im2col_3x3(h4, H2, W2).astype(jnp.bfloat16)
    acc2 = jnp.dot(p2, w2_ref[...], preferred_element_type=jnp.float32) + b2_ref[...]

    # ---- single lane-dense store: full 128-lane rows, no masking ----
    o_ref[...] = acc2.astype(o_ref.dtype)


def block_forward(x_nchw, w1_oihw, b1, w2_oihw, b2):
    """Fused Block forward. x_nchw: (N, Cin, H, W) -> (N, Cout, H-4, W-4)."""
    N, Cin, H, W = x_nchw.shape
    Cmid, _, KH, KW = w1_oihw.shape
    Cout = w2_oihw.shape[0]
    assert (KH, KW) == (3, 3)
    H1, W1 = H - 2, W - 2
    H2, W2 = H - 4, W - 4

    cin_p = _round_up(Cin, _LANES)
    cmid_p = _round_up(Cmid, _LANES)
    cout_p = _round_up(Cout, _LANES)

    # Layout glue (NCHW -> NHWC, OIHW -> flattened HWIO) + zero-pad every channel
    # axis to a full vreg so all in-kernel slices/concats/stores are lane-dense.
    # Activations stay f32 (relayout-friendly on v5e); weights go bf16 once.
    x = jnp.transpose(x_nchw, (0, 2, 3, 1)).astype(jnp.float32)
    x = jnp.pad(x, ((0, 0), (0, 0), (0, 0), (0, cin_p - Cin)))

    w1 = jnp.transpose(w1_oihw, (2, 3, 1, 0)).astype(jnp.bfloat16)
    w1 = jnp.pad(w1, ((0, 0), (0, 0), (0, cin_p - Cin), (0, cmid_p - Cmid)))
    w1 = w1.reshape(9 * cin_p, cmid_p)
    w2 = jnp.transpose(w2_oihw, (2, 3, 1, 0)).astype(jnp.bfloat16)
    w2 = jnp.pad(w2, ((0, 0), (0, 0), (0, cmid_p - Cmid), (0, cout_p - Cout)))
    w2 = w2.reshape(9 * cmid_p, cout_p)
    b1p = jnp.pad(b1.astype(jnp.float32), (0, cmid_p - Cmid)).reshape(1, cmid_p)
    b2p = jnp.pad(b2.astype(jnp.float32), (0, cout_p - Cout)).reshape(1, cout_p)

    M2 = N * H2 * W2
    flops = 2 * (N * H1 * W1 * 9 * cin_p * cmid_p + M2 * 9 * cmid_p * cout_p)
    bytes_accessed = (x.size * 4 + w1.size * 2 + w2.size * 2
                      + b1p.size * 4 + b2p.size * 4 + M2 * cout_p * 4)

    out_flat = pl.pallas_call(
        _block_kernel,
        out_shape=jax.ShapeDtypeStruct((M2, cout_p), jnp.float32),
        grid_spec=pltpu.PrefetchScalarGridSpec(
            num_scalar_prefetch=0,
            # Batch folded into the matmul M dimension: a single grid step avoids
            # per-step overhead on single-TC v5e/v6e.  See TODO for the v7x
            # row-tiled "parallel" grid at production sizes.
            grid=(1,),
            in_specs=[
                pl.BlockSpec((N, H, W, cin_p), lambda i: (0, 0, 0, 0)),
                pl.BlockSpec((9 * cin_p, cmid_p), lambda i: (0, 0)),
                pl.BlockSpec((1, cmid_p), lambda i: (0, 0)),
                pl.BlockSpec((9 * cmid_p, cout_p), lambda i: (0, 0)),
                pl.BlockSpec((1, cout_p), lambda i: (0, 0)),
            ],
            out_specs=pl.BlockSpec((M2, cout_p), lambda i: (0, 0)),
        ),
        compiler_params=pltpu.CompilerParams(
            dimension_semantics=("arbitrary",),
            # ~2 MiB of I/O blocks + ~7 MiB of im2col temporaries -> 32 MiB leaves
            # ample headroom and stays at <= half of v7x's 64 MiB physical VMEM.
            vmem_limit_bytes=32 * 1024 * 1024,
        ),
        cost_estimate=pl.CostEstimate(flops=flops, transcendentals=0,
                                      bytes_accessed=bytes_accessed),
    )(x, w1, b1p, w2, b2p)

    out = out_flat.reshape(N, H2, W2, cout_p)[..., :Cout]     # drop the lane pad
    return jnp.transpose(out, (0, 3, 1, 2)).astype(x_nchw.dtype)   # back to NCHW


def _reference_forward(x_nchw, w1_oihw, b1, w2_oihw, b2):
    """Pure-JAX f32 reference (matches PyTorch Conv2d semantics, VALID padding)."""
    dn = ("NCHW", "OIHW", "NCHW")
    y = lax.conv_general_dilated(x_nchw, w1_oihw, (1, 1), "VALID",
                                 dimension_numbers=dn)
    y = y + b1[None, :, None, None]
    y = jnp.maximum(y, 0.0)
    y = lax.conv_general_dilated(y, w2_oihw, (1, 1), "VALID",
                                 dimension_numbers=dn)
    y = y + b2[None, :, None, None]
    return y


if __name__ == "__main__":
    # Small, deterministic shapes: batch=2, inChannels=4, outChannels=8, 16x16 spatial.
    N, Cin, Cout, H, W = 2, 4, 8, 16, 16

    key = jax.random.PRNGKey(0)
    kx, kw1, kb1, kw2, kb2 = jax.random.split(key, 5)

    x = jax.random.normal(kx, (N, Cin, H, W), dtype=jnp.float32)
    # PyTorch Conv2d weight layout: (out_channels, in_channels, kH, kW), bias: (out_channels,)
    w1 = jax.random.normal(kw1, (Cout, Cin, 3, 3), dtype=jnp.float32) * 0.1
    b1 = jax.random.normal(kb1, (Cout,), dtype=jnp.float32) * 0.1
    w2 = jax.random.normal(kw2, (Cout, Cout, 3, 3), dtype=jnp.float32) * 0.1
    b2 = jax.random.normal(kb2, (Cout,), dtype=jnp.float32) * 0.1

    out = jax.block_until_ready(block_forward(x, w1, b1, w2, b2))
    ref = jax.block_until_ready(_reference_forward(x, w1, b1, w2, b2))

    assert out.shape == (N, Cout, H - 4, W - 4), out.shape
    # bf16 MXU inputs with f32 accumulation -> expected deviation from the pure-f32
    # reference is ~1e-3 at these magnitudes; tolerance kept loose but safe.
    max_err = float(jnp.max(jnp.abs(out - ref)))
    assert jnp.allclose(out, ref, atol=5e-2, rtol=5e-2), max_err

    print("KERNEL_OK")
</pallas_src>

<mosaic_0001>
module attributes {stable_mosaic.version = 11 : i64} {
  func.func @_block_kernel(%arg0: i32, %arg1: memref<2x16x16x128xf32, #tpu.memory_space<vmem>>, %arg2: memref<1152x128xbf16, #tpu.memory_space<vmem>>, %arg3: memref<1x128xf32, #tpu.memory_space<vmem>>, %arg4: memref<1152x128xbf16, #tpu.memory_space<vmem>>, %arg5: memref<1x128xf32, #tpu.memory_space<vmem>>, %arg6: memref<288x128xf32, #tpu.memory_space<vmem>>) attributes {dimension_semantics = [#tpu.dimension_semantics<arbitrary>], iteration_bounds = array<i64: 1>, scalar_prefetch = 0 : i64, scratch_operands = 0 : i64, tpu.core_type = #tpu.core_type<tc>, window_params = [{pipeline_mode = #tpu.pipeline_mode<synchronous>, transform_indices = @transform_0, window_bounds = array<i64: 2, 16, 16, 128>}, {pipeline_mode = #tpu.pipeline_mode<synchronous>, transform_indices = @transform_1, window_bounds = array<i64: 1152, 128>}, {pipeline_mode = #tpu.pipeline_mode<synchronous>, transform_indices = @transform_2, window_bounds = array<i64: 1, 128>}, {pipeline_mode = #tpu.pipeline_mode<synchronous>, transform_indices = @transform_3, window_bounds = array<i64: 1152, 128>}, {pipeline_mode = #tpu.pipeline_mode<synchronous>, transform_indices = @transform_4, window_bounds = array<i64: 1, 128>}, {pipeline_mode = #tpu.pipeline_mode<synchronous>, transform_indices = @transform_5, window_bounds = array<i64: 288, 128>}]} {
    %c0 = arith.constant 0 : index
    %c0_0 = arith.constant 0 : index
    %c0_1 = arith.constant 0 : index
    %c0_2 = arith.constant 0 : index
    %0 = vector.load %arg1[%c0, %c0_0, %c0_1, %c0_2] : memref<2x16x16x128xf32, #tpu.memory_space<vmem>>, vector<2x16x16x128xf32>
    %1 = vector.extract_strided_slice %0 {offsets = [0, 0, 0, 0], sizes = [2, 16, 14, 128], strides = [1, 1, 1, 1]} : vector<2x16x16x128xf32> to vector<2x16x14x128xf32>
    %2 = vector.extract_strided_slice %0 {offsets = [0, 0, 1, 0], sizes = [2, 16, 14, 128], strides = [1, 1, 1, 1]} : vector<2x16x16x128xf32> to vector<2x16x14x128xf32>
    %3 = vector.extract_strided_slice %0 {offsets = [0, 0, 2, 0], sizes = [2, 16, 14, 128], strides = [1, 1, 1, 1]} : vector<2x16x16x128xf32> to vector<2x16x14x128xf32>
    %4 = tpu.concatenate %1, %2, %3 in 3 : vector<2x16x14x128xf32>, vector<2x16x14x128xf32>, vector<2x16x14x128xf32> -> vector<2x16x14x384xf32>
    %5 = vector.extract_strided_slice %4 {offsets = [0, 0, 0, 0], sizes = [2, 14, 14, 384], strides = [1, 1, 1, 1]} : vector<2x16x14x384xf32> to vector<2x14x14x384xf32>
    %6 = vector.extract_strided_slice %4 {offsets = [0, 1, 0, 0], sizes = [2, 14, 14, 384], strides = [1, 1, 1, 1]} : vector<2x16x14x384xf32> to vector<2x14x14x384xf32>
    %7 = vector.extract_strided_slice %4 {offsets = [0, 2, 0, 0], sizes = [2, 14, 14, 384], strides = [1, 1, 1, 1]} : vector<2x16x14x384xf32> to vector<2x14x14x384xf32>
    %8 = tpu.concatenate %5, %6, %7 in 3 : vector<2x14x14x384xf32>, vector<2x14x14x384xf32>, vector<2x14x14x384xf32> -> vector<2x14x14x1152xf32>
    %9 = vector.shape_cast %8 : vector<2x14x14x1152xf32> to vector<392x1152xf32>
    %10 = arith.truncf %9 : vector<392x1152xf32> to vector<392x1152xbf16>
    %c0_3 = arith.constant 0 : index
    %c0_4 = arith.constant 0 : index
    %11 = vector.load %arg2[%c0_3, %c0_4] : memref<1152x128xbf16, #tpu.memory_space<vmem>>, vector<1152x128xbf16>
    %cst = arith.constant dense<0.000000e+00> : vector<392x128xf32>
    %12 = tpu.matmul %10, %11, %cst {dimension_numbers = #tpu.dot_dimension_numbers<[1], [0], [0], [1], [0, 0, 1, 1], [], []>} : vector<392x1152xbf16>, vector<1152x128xbf16>, vector<392x128xf32> -> vector<392x128xf32>
    %c0_5 = arith.constant 0 : index
    %c0_6 = arith.constant 0 : index
    %13 = vector.load %arg3[%c0_5, %c0_6] : memref<1x128xf32, #tpu.memory_space<vmem>>, vector<1x128xf32>
    %14 = vector.broadcast %13 : vector<1x128xf32> to vector<392x128xf32>
    %15 = arith.addf %12, %14 : vector<392x128xf32>
    %cst_7 = arith.constant 0.000000e+00 : f32
    %16 = vector.broadcast %cst_7 : f32 to vector<392x128xf32>
    %17 = arith.maximumf %15, %16 : vector<392x128xf32>
    %18 = vector.shape_cast %17 : vector<392x128xf32> to vector<2x14x14x128xf32>
    %19 = vector.extract_strided_slice %18 {offsets = [0, 0, 0, 0], sizes = [2, 14, 12, 128], strides = [1, 1, 1, 1]} : vector<2x14x14x128xf32> to vector<2x14x12x128xf32>
    %20 = vector.extract_strided_slice %18 {offsets = [0, 0, 1, 0], sizes = [2, 14, 12, 128], strides = [1, 1, 1, 1]} : vector<2x14x14x128xf32> to vector<2x14x12x128xf32>
    %21 = vector.extract_strided_slice %18 {offsets = [0, 0, 2, 0], sizes = [2, 14, 12, 128], strides = [1, 1, 1, 1]} : vector<2x14x14x128xf32> to vector<2x14x12x128xf32>
    %22 = tpu.concatenate %19, %20, %21 in 3 : vector<2x14x12x128xf32>, vector<2x14x12x128xf32>, vector<2x14x12x128xf32> -> vector<2x14x12x384xf32>
    %23 = vector.extract_strided_slice %22 {offsets = [0, 0, 0, 0], sizes = [2, 12, 12, 384], strides = [1, 1, 1, 1]} : vector<2x14x12x384xf32> to vector<2x12x12x384xf32>
    %24 = vector.extract_strided_slice %22 {offsets = [0, 1, 0, 0], sizes = [2, 12, 12, 384], strides = [1, 1, 1, 1]} : vector<2x14x12x384xf32> to vector<2x12x12x384xf32>
    %25 = vector.extract_strided_slice %22 {offsets = [0, 2, 0, 0], sizes = [2, 12, 12, 384], strides = [1, 1, 1, 1]} : vector<2x14x12x384xf32> to vector<2x12x12x384xf32>
    %26 = tpu.concatenate %23, %24, %25 in 3 : vector<2x12x12x384xf32>, vector<2x12x12x384xf32>, vector<2x12x12x384xf32> -> vector<2x12x12x1152xf32>
    %27 = vector.shape_cast %26 : vector<2x12x12x1152xf32> to vector<288x1152xf32>
    %28 = arith.truncf %27 : vector<288x1152xf32> to vector<288x1152xbf16>
    %c0_8 = arith.constant 0 : index
    %c0_9 = arith.constant 0 : index
    %29 = vector.load %arg4[%c0_8, %c0_9] : memref<1152x128xbf16, #tpu.memory_space<vmem>>, vector<1152x128xbf16>
    %cst_10 = arith.constant dense<0.000000e+00> : vector<288x128xf32>
    %30 = tpu.matmul %28, %29, %cst_10 {dimension_numbers = #tpu.dot_dimension_numbers<[1], [0], [0], [1], [0, 0, 1, 1], [], []>} : vector<288x1152xbf16>, vector<1152x128xbf16>, vector<288x128xf32> -> vector<288x128xf32>
    %c0_11 = arith.constant 0 : index
    %c0_12 = arith.constant 0 : index
    %31 = vector.load %arg5[%c0_11, %c0_12] : memref<1x128xf32, #tpu.memory_space<vmem>>, vector<1x128xf32>
    %32 = vector.broadcast %31 : vector<1x128xf32> to vector<288x128xf32>
    %33 = arith.addf %30, %32 : vector<288x128xf32>
    %c0_13 = arith.constant 0 : index
    %c0_14 = arith.constant 0 : index
    %34 = vector.load %arg6[%c0_13, %c0_14] : memref<288x128xf32, #tpu.memory_space<vmem>>, vector<288x128xf32>
    tpu.vector_store %arg6[%c0_13, %c0_14], %33 {strides = array<i32>} : memref<288x128xf32, #tpu.memory_space<vmem>>, vector<288x128xf32>,
    return
  }
  func.func @transform_0(%arg0: i32) -> (i32, i32, i32, i32) {
    %c0_i32 = arith.constant 0 : i32
    %c0_i32_0 = arith.constant 0 : i32
    %c0_i32_1 = arith.constant 0 : i32
    %c0_i32_2 = arith.constant 0 : i32
    %c0_i32_3 = arith.constant 0 : i32
    return %c0_i32, %c0_i32_0, %c0_i32_1, %c0_i32_2 : i32, i32, i32, i32
  }
  func.func @transform_1(%arg0: i32) -> (i32, i32) {
    %c0_i32 = arith.constant 0 : i32
    %c0_i32_0 = arith.constant 0 : i32
    %c0_i32_1 = arith.constant 0 : i32
    return %c0_i32, %c0_i32_0 : i32, i32
  }
  func.func @transform_2(%arg0: i32) -> (i32, i32) {
    %c0_i32 = arith.constant 0 : i32
    %c0_i32_0 = arith.constant 0 : i32
    %c0_i32_1 = arith.constant 0 : i32
    return %c0_i32, %c0_i32_0 : i32, i32
  }
  func.func @transform_3(%arg0: i32) -> (i32, i32) {
    %c0_i32 = arith.constant 0 : i32
    %c0_i32_0 = arith.constant 0 : i32
    %c0_i32_1 = arith.constant 0 : i32
    return %c0_i32, %c0_i32_0 : i32, i32
  }
  func.func @transform_4(%arg0: i32) -> (i32, i32) {
    %c0_i32 = arith.constant 0 : i32
    %c0_i32_0 = arith.constant 0 : i32
    %c0_i32_1 = arith.constant 0 : i32
    return %c0_i32, %c0_i32_0 : i32, i32
  }
  func.func @transform_5(%arg0: i32) -> (i32, i32) {
    %c0_i32 = arith.constant 0 : i32
    %c0_i32_0 = arith.constant 0 : i32
    %c0_i32_1 = arith.constant 0 : i32
    return %c0_i32, %c0_i32_0 : i32, i32
  }
}

</mosaic_0001>

<llo_original>
// kernel: tpu_custom_call.1
$region0: #{tpu_custom_call.1}
  #allocation0 [shape = 'u32[]', space=smem, size = 0x4, offset = 0x4, fixed_abs, tag = 'smem constant byte address 0x4 - core index']
  #allocation1 [shape = 'u32[72,128]{1,0:T(1,128)}', space=vmem, size = 0x9000, scoped, tag = 'internal scratch']
  %s0 = inlined_call_operand.hbm [shape: f32[2,16,16,128], index: 0, kind: input, shape index: {}]
  %s1 = inlined_call_operand.hbm [shape: bf16[1152,128], index: 1, kind: input, shape index: {}]
  %s2 = inlined_call_operand.vmem [shape: f32[1,128], index: 2, kind: input, shape index: {}]
  %s3 = inlined_call_operand.hbm [shape: bf16[1152,128], index: 3, kind: input, shape index: {}]
  %s4 = inlined_call_operand.vmem [shape: f32[1,128], index: 4, kind: input, shape index: {}]
  %s5 = inlined_call_operand.hbm [shape: f32[288,128], index: 5, kind: output, shape index: {}]
  %s6 = sld [smem:[#allocation0]]
  $region42: #{tpu_custom_call.1} parent=0
    _
  %s8 = ssub.s32 1, %s6
  %s9 = scalar_select 0, %s8, %s6
  $region1: #{tpu_custom_call.1} parent=0
    #allocation2 [shape = 'u8[262144]{0}', space=vmem, size = 0x40000, scoped, tag = 'input window, operand 0, single buffered']
    #allocation3 [shape = 's32[1]{0}', space=sflag, size = 0x4, scoped, tag = 'scoped memory for tpu_custom_call.1']
    #allocation4 [shape = 's32[1]{0}', space=sflag, size = 0x4, scoped, tag = 'scoped memory for tpu_custom_call.1']
    #allocation5 [shape = 'u8[294912]{0}', space=vmem, size = 0x48000, scoped, tag = 'input window, operand 1, single buffered']
    #allocation6 [shape = 's32[1]{0}', space=sflag, size = 0x4, scoped, tag = 'scoped memory for tpu_custom_call.1']
    #allocation7 [shape = 'u8[294912]{0}', space=vmem, size = 0x48000, scoped, tag = 'input window, operand 3, single buffered']
    #allocation8 [shape = 'u8[147456]{0}', space=vmem, size = 0x24000, scoped, tag = 'output window, operand 0, single buffered']
    %10 = vsyncpa [#allocation3], 0
    %11 = vsyncpa [#allocation6], 0
    %12 = vsyncpa [#allocation4], 0
    // Predicated region
    $region2: #{tpu_custom_call.1} parent=1 // pred_check
      _
    $region3: #{tpu_custom_call.1} parent=1 // pred_check_branch
      %14 = sbr.rel (0) target = $region5
    $region4: #{tpu_custom_call.1} parent=1 // pred_region
      %16 = vsyncadd [#allocation3], 0
      %s17 = sshll.u32 %s0, 4
      %s18 = int_to_ptr.hbm [resolvable:$true] %s17
      %s19 = sshll.u32 [#allocation2], 4
      %s20 = int_to_ptr.vmem [resolvable:$true] %s19
      %25 = dma.hbm_to_vmem [thread:$0]  %s18, 8192, %s20, [#allocation3], 128, 128, 8
    $region5: #{tpu_custom_call.1} parent=1 // pred_fallthru
      _
    // Predicated region
    $region6: #{tpu_custom_call.1} parent=1 // pred_check
      _
    $region7: #{tpu_custom_call.1} parent=1 // pred_check_branch
      %27 = sbr.rel (0) target = $region9
    $region8: #{tpu_custom_call.1} parent=1 // pred_region
      %29 = vsyncadd [#allocation6], 0
      %s30 = sshll.u32 %s1, 4
      %s31 = int_to_ptr.hbm [resolvable:$true] %s30
      %s32 = sshll.u32 [#allocation5], 4
      %s33 = int_to_ptr.vmem [resolvable:$true] %s32
      %38 = dma.hbm_to_vmem [thread:$0]  %s31, 9216, %s33, [#allocation6], 64, 64, 4
    $region9: #{tpu_custom_call.1} parent=1 // pred_fallthru
      _
    // Predicated region
    $region10: #{tpu_custom_call.1} parent=1 // pred_check
      _
    $region11: #{tpu_custom_call.1} parent=1 // pred_check_branch
      %40 = sbr.rel (0) target = $region13
    $region12: #{tpu_custom_call.1} parent=1 // pred_region
      _
    $region13: #{tpu_custom_call.1} parent=1 // pred_fallthru
      _
    // Predicated region
    $region14: #{tpu_custom_call.1} parent=1 // pred_check
      _
    $region15: #{tpu_custom_call.1} parent=1 // pred_check_branch
      %42 = sbr.rel (0) target = $region17
    $region16: #{tpu_custom_call.1} parent=1 // pred_region
      %44 = vsyncadd [#allocation6], 0
      %s45 = sshll.u32 %s3, 4
      %s46 = int_to_ptr.hbm [resolvable:$true] %s45
      %s47 = sshll.u32 [#allocation7], 4
      %s48 = int_to_ptr.vmem [resolvable:$true] %s47
      %53 = dma.hbm_to_vmem [thread:$0]  %s46, 9216, %s48, [#allocation6], 64, 64, 4
    $region17: #{tpu_custom_call.1} parent=1 // pred_fallthru
      _
    // Predicated region
    $region18: #{tpu_custom_call.1} parent=1 // pred_check
      _
    $region19: #{tpu_custom_call.1} parent=1 // pred_check_branch
      %55 = sbr.rel (0) target = $region21
    $region20: #{tpu_custom_call.1} parent=1 // pred_region
      _
    $region21: #{tpu_custom_call.1} parent=1 // pred_fallthru
      _
    // Predicated region
    $region22: #{tpu_custom_call.1} parent=1 // pred_check
      _
    $region23: #{tpu_custom_call.1} parent=1 // pred_check_branch
      %57 = sbr.rel (0) target = $region25
    $region24: #{tpu_custom_call.1} parent=1 // pred_region
      %59 = dma.done [#allocation3], 8192
    $region25: #{tpu_custom_call.1} parent=1 // pred_fallthru
      _
    // Predicated region
    $region26: #{tpu_custom_call.1} parent=1 // pred_check
      _
    $region27: #{tpu_custom_call.1} parent=1 // pred_check_branch
      %61 = sbr.rel (0) target = $region29
    $region28: #{tpu_custom_call.1} parent=1 // pred_region
      %63 = dma.done [#allocation6], 9216
    $region29: #{tpu_custom_call.1} parent=1 // pred_fallthru
      _
    // Predicated region
    $region30: #{tpu_custom_call.1} parent=1 // pred_check
      _
    $region31: #{tpu_custom_call.1} parent=1 // pred_check_branch
      %65 = sbr.rel (0) target = $region33
    $region32: #{tpu_custom_call.1} parent=1 // pred_region
      %67 = dma.done [#allocation6], 9216
    $region33: #{tpu_custom_call.1} parent=1 // pred_fallthru
      _
    %v68 = vld [vmem:[#allocation2] sm:$0xff]
    %v69 = vld [vmem:[#allocation2 + $0x8] sm:$0xff]
    %v70 = vld [vmem:[#allocation2 + $0x10] sm:$0xff]
    %v71 = vld [vmem:[#allocation2 + $0x18] sm:$0xff]
    %v72 = vld [vmem:[#allocation2 + $0x20] sm:$0xff]
    %v73 = vld [vmem:[#allocation2 + $0x28] sm:$0xff]
    %v74 = vld [vmem:[#allocation2 + $0x30] sm:$0xff]
    %v75 = vld [vmem:[#allocation2 + $0x38] sm:$0xff]
    %v76 = vld [vmem:[#allocation2 + $0x40] sm:$0xff]
    %v77 = vld [vmem:[#allocation2 + $0x48] sm:$0xff]
    %v78 = vld [vmem:[#allocation2 + $0x50] sm:$0xff]
    %v79 = vld [vmem:[#allocation2 + $0x58] sm:$0xff]
    %v80 = vld [vmem:[#allocation2 + $0x60] sm:$0xff]
    %v81 = vld [vmem:[#allocation2 + $0x68] sm:$0xff]
    %v82 = vld [vmem:[#allocation2 + $0x70] sm:$0xff]
    %v83 = vld [vmem:[#allocation2 + $0x78] sm:$0xff]
    %v84 = vld [vmem:[#allocation2 + $0x80] sm:$0xff]
    %v85 = vld [vmem:[#allocation2 + $0x88] sm:$0xff]
    %v86 = vld [vmem:[#allocation2 + $0x90] sm:$0xff]
    %v87 = vld [vmem:[#allocation2 + $0x98] sm:$0xff]
    %v88 = vld [vmem:[#allocation2 + $0xa0] sm:$0xff]
    %v89 = vld [vmem:[#allocation2 + $0xa8] sm:$0xff]
    %v90 = vld [vmem:[#allocation2 + $0xb0] sm:$0xff]
    %v91 = vld [vmem:[#allocation2 + $0xb8] sm:$0xff]
    %v92 = vld [vmem:[#allocation2 + $0xc0] sm:$0xff]
    %v93 = vld [vmem:[#allocation2 + $0xc8] sm:$0xff]
    %v94 = vld [vmem:[#allocation2 + $0xd0] sm:$0xff]
    %v95 = vld [vmem:[#allocation2 + $0xd8] sm:$0xff]
    %v96 = vld [vmem:[#allocation2 + $0xe0] sm:$0xff]
    %v97 = vld [vmem:[#allocation2 + $0xe8] sm:$0xff]
    %v98 = vld [vmem:[#allocation2 + $0xf0] sm:$0xff]
    %v99 = vld [vmem:[#allocation2 + $0xf8] sm:$0xff]
    %v100 = vld [vmem:[#allocation2 + $0x100] sm:$0xff]
    %v101 = vld [vmem:[#allocation2 + $0x108] sm:$0xff]
    %v102 = vld [vmem:[#allocation2 + $0x110] sm:$0xff]
    %v103 = vld [vmem:[#allocation2 + $0x118] sm:$0xff]
    %v104 = vld [vmem:[#allocation2 + $0x120] sm:$0xff]
    %v105 = vld [vmem:[#allocation2 + $0x128] sm:$0xff]
    %v106 = vld [vmem:[#allocation2 + $0x130] sm:$0xff]
    %v107 = vld [vmem:[#allocation2 + $0x138] sm:$0xff]
    %v108 = vld [vmem:[#allocation2 + $0x140] sm:$0xff]
    %v109 = vld [vmem:[#allocation2 + $0x148] sm:$0xff]
    %v110 = vld [vmem:[#allocation2 + $0x150] sm:$0xff]
    %v111 = vld [vmem:[#allocation2 + $0x158] sm:$0xff]
    %v112 = vld [vmem:[#allocation2 + $0x160] sm:$0xff]
    %v113 = vld [vmem:[#allocation2 + $0x168] sm:$0xff]
    %v114 = vld [vmem:[#allocation2 + $0x170] sm:$0xff]
    %v115 = vld [vmem:[#allocation2 + $0x178] sm:$0xff]
    %v116 = vld [vmem:[#allocation2 + $0x180] sm:$0xff]
    %v117 = vld [vmem:[#allocation2 + $0x188] sm:$0xff]
    %v118 = vld [vmem:[#allocation2 + $0x190] sm:$0xff]
    %v119 = vld [vmem:[#allocation2 + $0x198] sm:$0xff]
    %v120 = vld [vmem:[#allocation2 + $0x1a0] sm:$0xff]
    %v121 = vld [vmem:[#allocation2 + $0x1a8] sm:$0xff]
    %v122 = vld [vmem:[#allocation2 + $0x1b0] sm:$0xff]
    %v123 = vld [vmem:[#allocation2 + $0x1b8] sm:$0xff]
    %v124 = vld [vmem:[#allocation2 + $0x1c0] sm:$0xff]
    %v125 = vld [vmem:[#allocation2 + $0x1c8] sm:$0xff]
    %v126 = vld [vmem:[#allocation2 + $0x1d0] sm:$0xff]
    %v127 = vld [vmem:[#allocation2 + $0x1d8] sm:$0xff]
    %v128 = vld [vmem:[#allocation2 + $0x1e0] sm:$0xff]
    %v129 = vld [vmem:[#allocation2 + $0x1e8] sm:$0xff]
    %v130 = vld [vmem:[#allocation2 + $0x1f0] sm:$0xff]
    %v131 = vld [vmem:[#allocation2 + $0x1f8] sm:$0xff]
    %vm196 = vcmask 1046528
    %v197 = vrot.slane %v68, 1
    %v198 = vrot.slane %v69, 1
    %v199 = vsel %vm196, %v197, %v198
    %v200 = vrot.slane %v70, 1
    %v201 = vrot.slane %v71, 1
    %v202 = vsel %vm196, %v200, %v201
    %v203 = vrot.slane %v72, 1
    %v204 = vrot.slane %v73, 1
    %v205 = vsel %vm196, %v203, %v204
    %v206 = vrot.slane %v74, 1
    %v207 = vrot.slane %v75, 1
    %v208 = vsel %vm196, %v206, %v207
    %v209 = vrot.slane %v76, 1
    %v210 = vrot.slane %v77, 1
    %v211 = vsel %vm196, %v209, %v210
    %v212 = vrot.slane %v78, 1
    %v213 = vrot.slane %v79, 1
    %v214 = vsel %vm196, %v212, %v213
    %v215 = vrot.slane %v80, 1
    %v216 = vrot.slane %v81, 1
    %v217 = vsel %vm196, %v215, %v216
    %v218 = vrot.slane %v82, 1
    %v219 = vrot.slane %v83, 1
    %v220 = vsel %vm196, %v218, %v219
    %v221 = vrot.slane %v84, 1
    %v222 = vrot.slane %v85, 1
    %v223 = vsel %vm196, %v221, %v222
    %v224 = vrot.slane %v86, 1
    %v225 = vrot.slane %v87, 1
    %v226 = vsel %vm196, %v224, %v225
    %v227 = vrot.slane %v88, 1
    %v228 = vrot.slane %v89, 1
    %v229 = vsel %vm196, %v227, %v228
    %v230 = vrot.slane %v90, 1
    %v231 = vrot.slane %v91, 1
    %v232 = vsel %vm196, %v230, %v231
    %v233 = vrot.slane %v92, 1
    %v234 = vrot.slane %v93, 1
    %v235 = vsel %vm196, %v233, %v234
    %v236 = vrot.slane %v94, 1
    %v237 = vrot.slane %v95, 1
    %v238 = vsel %vm196, %v236, %v237
    %v239 = vrot.slane %v96, 1
    %v240 = vrot.slane %v97, 1
    %v241 = vsel %vm196, %v239, %v240
    %v242 = vrot.slane %v98, 1
    %v243 = vrot.slane %v99, 1
    %v244 = vsel %vm196, %v242, %v243
    %v245 = vrot.slane %v100, 1
    %v246 = vrot.slane %v101, 1
    %v247 = vsel %vm196, %v245, %v246
    %v248 = vrot.slane %v102, 1
    %v249 = vrot.slane %v103, 1
    %v250 = vsel %vm196, %v248, %v249
    %v251 = vrot.slane %v104, 1
    %v252 = vrot.slane %v105, 1
    %v253 = vsel %vm196, %v251, %v252
    %v254 = vrot.slane %v106, 1
    %v255 = vrot.slane %v107, 1
    %v256 = vsel %vm196, %v254, %v255
    %v257 = vrot.slane %v108, 1
    %v258 = vrot.slane %v109, 1
    %v259 = vsel %vm196, %v257, %v258
    %v260 = vrot.slane %v110, 1
    %v261 = vrot.slane %v111, 1
    %v262 = vsel %vm196, %v260, %v261
    %v263 = vrot.slane %v112, 1
    %v264 = vrot.slane %v113, 1
    %v265 = vsel %vm196, %v263, %v264
    %v266 = vrot.slane %v114, 1
    %v267 = vrot.slane %v115, 1
    %v268 = vsel %vm196, %v266, %v267
    %v269 = vrot.slane %v116, 1
    %v270 = vrot.slane %v117, 1
    %v271 = vsel %vm196, %v269, %v270
    %v272 = vrot.slane %v118, 1
    %v273 = vrot.slane %v119, 1
    %v274 = vsel %vm196, %v272, %v273
    %v275 = vrot.slane %v120, 1
    %v276 = vrot.slane %v121, 1
    %v277 = vsel %vm196, %v275, %v276
    %v278 = vrot.slane %v122, 1
    %v279 = vrot.slane %v123, 1
    %v280 = vsel %vm196, %v278, %v279
    %v281 = vrot.slane %v124, 1
    %v282 = vrot.slane %v125, 1
    %v283 = vsel %vm196, %v281, %v282
    %v284 = vrot.slane %v126, 1
    %v285 = vrot.slane %v127, 1
    %v286 = vsel %vm196, %v284, %v285
    %v287 = vrot.slane %v128, 1
    %v288 = vrot.slane %v129, 1
    %v289 = vsel %vm196, %v287, %v288
    %v290 = vrot.slane %v130, 1
    %v291 = vrot.slane %v131, 1
    %v292 = vsel %vm196, %v290, %v291
    %vm293 = vcmask 1045504
    %v294 = vrot.slane %v68, 2
    %v295 = vrot.slane %v69, 2
    %v296 = vsel %vm293, %v294, %v295
    %v297 = vrot.slane %v70, 2
    %v298 = vrot.slane %v71, 2
    %v299 = vsel %vm293, %v297, %v298
    %v300 = vrot.slane %v72, 2
    %v301 = vrot.slane %v73, 2
    %v302 = vsel %vm293, %v300, %v301
    %v303 = vrot.slane %v74, 2
    %v304 = vrot.slane %v75, 2
    %v305 = vsel %vm293, %v303, %v304
    %v306 = vrot.slane %v76, 2
    %v307 = vrot.slane %v77, 2
    %v308 = vsel %vm293, %v306, %v307
    %v309 = vrot.slane %v78, 2
    %v310 = vrot.slane %v79, 2
    %v311 = vsel %vm293, %v309, %v310
    %v312 = vrot.slane %v80, 2
    %v313 = vrot.slane %v81, 2
    %v314 = vsel %vm293, %v312, %v313
    %v315 = vrot.slane %v82, 2
    %v316 = vrot.slane %v83, 2
    %v317 = vsel %vm293, %v315, %v316
    %v318 = vrot.slane %v84, 2
    %v319 = vrot.slane %v85, 2
    %v320 = vsel %vm293, %v318, %v319
    %v321 = vrot.slane %v86, 2
    %v322 = vrot.slane %v87, 2
    %v323 = vsel %vm293, %v321, %v322
    %v324 = vrot.slane %v88, 2
    %v325 = vrot.slane %v89, 2
    %v326 = vsel %vm293, %v324, %v325
    %v327 = vrot.slane %v90, 2
    %v328 = vrot.slane %v91, 2
    %v329 = vsel %vm293, %v327, %v328
    %v330 = vrot.slane %v92, 2
    %v331 = vrot.slane %v93, 2
    %v332 = vsel %vm293, %v330, %v331
    %v333 = vrot.slane %v94, 2
    %v334 = vrot.slane %v95, 2
    %v335 = vsel %vm293, %v333, %v334
    %v336 = vrot.slane %v96, 2
    %v337 = vrot.slane %v97, 2
    %v338 = vsel %vm293, %v336, %v337
    %v339 = vrot.slane %v98, 2
    %v340 = vrot.slane %v99, 2
    %v341 = vsel %vm293, %v339, %v340
    %v342 = vrot.slane %v100, 2
    %v343 = vrot.slane %v101, 2
    %v344 = vsel %vm293, %v342, %v343
    %v345 = vrot.slane %v102, 2
    %v346 = vrot.slane %v103, 2
    %v347 = vsel %vm293, %v345, %v346
    %v348 = vrot.slane %v104, 2
    %v349 = vrot.slane %v105, 2
    %v350 = vsel %vm293, %v348, %v349
    %v351 = vrot.slane %v106, 2
    %v352 = vrot.slane %v107, 2
    %v353 = vsel %vm293, %v351, %v352
    %v354 = vrot.slane %v108, 2
    %v355 = vrot.slane %v109, 2
    %v356 = vsel %vm293, %v354, %v355
    %v357 = vrot.slane %v110, 2
    %v358 = vrot.slane %v111, 2
    %v359 = vsel %vm293, %v357, %v358
    %v360 = vrot.slane %v112, 2
    %v361 = vrot.slane %v113, 2
    %v362 = vsel %vm293, %v360, %v361
    %v363 = vrot.slane %v114, 2
    %v364 = vrot.slane %v115, 2
    %v365 = vsel %vm293, %v363, %v364
    %v366 = vrot.slane %v116, 2
    %v367 = vrot.slane %v117, 2
    %v368 = vsel %vm293, %v366, %v367
    %v369 = vrot.slane %v118, 2
    %v370 = vrot.slane %v119, 2
    %v371 = vsel %vm293, %v369, %v370
    %v372 = vrot.slane %v120, 2
    %v373 = vrot.slane %v121, 2
    %v374 = vsel %vm293, %v372, %v373
    %v375 = vrot.slane %v122, 2
    %v376 = vrot.slane %v123, 2
    %v377 = vsel %vm293, %v375, %v376
    %v378 = vrot.slane %v124, 2
    %v379 = vrot.slane %v125, 2
    %v380 = vsel %vm293, %v378, %v379
    %v381 = vrot.slane %v126, 2
    %v382 = vrot.slane %v127, 2
    %v383 = vsel %vm293, %v381, %v382
    %v384 = vrot.slane %v128, 2
    %v385 = vrot.slane %v129, 2
    %v386 = vsel %vm293, %v384, %v385
    %v387 = vrot.slane %v130, 2
    %v388 = vrot.slane %v131, 2
    %v389 = vsel %vm293, %v387, %v388
    %v390 = vrot.slane %v199, 6
    %v391 = vrot.slane %v296, 4
    %v392 = vrot.slane %v299, 6
    %v393 = vrot.slane %v72, 4
    %v394 = vrot.slane %v205, 2
    %v395 = vrot.slane %v198, 6
    %v396 = vrot.slane %v295, 4
    %v397 = vrot.slane %v298, 6
    %v398 = vrot.slane %v73, 4
    %v399 = vrot.slane %v204, 2
    %v400 = vrot.slane %v202, 6
    %v401 = vrot.slane %v299, 4
    %v402 = vrot.slane %v302, 6
    %v403 = vrot.slane %v74, 4
    %v404 = vrot.slane %v208, 2
    %v405 = vrot.slane %v201, 6
    %v406 = vrot.slane %v298, 4
    %v407 = vrot.slane %v301, 6
    %v408 = vrot.slane %v75, 4
    %v409 = vrot.slane %v207, 2
    %v410 = vrot.slane %v205, 6
    %v411 = vrot.slane %v302, 4
    %v412 = vrot.slane %v305, 6
    %v413 = vrot.slane %v76, 4
    %v414 = vrot.slane %v211, 2
    %v415 = vrot.slane %v204, 6
    %v416 = vrot.slane %v301, 4
    %v417 = vrot.slane %v304, 6
    %v418 = vrot.slane %v77, 4
    %v419 = vrot.slane %v210, 2
    %v420 = vrot.slane %v208, 6
    %v421 = vrot.slane %v305, 4
    %v422 = vrot.slane %v308, 6
    %v423 = vrot.slane %v78, 4
    %v424 = vrot.slane %v214, 2
    %v425 = vrot.slane %v207, 6
    %v426 = vrot.slane %v304, 4
    %v427 = vrot.slane %v307, 6
    %v428 = vrot.slane %v79, 4
    %v429 = vrot.slane %v213, 2
    %v430 = vrot.slane %v211, 6
    %v431 = vrot.slane %v308, 4
    %v432 = vrot.slane %v311, 6
    %v433 = vrot.slane %v80, 4
    %v434 = vrot.slane %v217, 2
    %v435 = vrot.slane %v210, 6
    %v436 = vrot.slane %v307, 4
    %v437 = vrot.slane %v310, 6
    %v438 = vrot.slane %v81, 4
    %v439 = vrot.slane %v216, 2
    %v440 = vrot.slane %v214, 6
    %v441 = vrot.slane %v311, 4
    %v442 = vrot.slane %v314, 6
    %v443 = vrot.slane %v82, 4
    %v444 = vrot.slane %v220, 2
    %v445 = vrot.slane %v213, 6
    %v446 = vrot.slane %v310, 4
    %v447 = vrot.slane %v313, 6
    %v448 = vrot.slane %v83, 4
    %v449 = vrot.slane %v219, 2
    %v450 = vrot.slane %v217, 6
    %v451 = vrot.slane %v314, 4
    %v452 = vrot.slane %v317, 6
    %v453 = vrot.slane %v84, 4
    %v454 = vrot.slane %v223, 2
    %v455 = vrot.slane %v216, 6
    %v456 = vrot.slane %v313, 4
    %v457 = vrot.slane %v316, 6
    %v458 = vrot.slane %v85, 4
    %v459 = vrot.slane %v222, 2
    %v460 = vrot.slane %v220, 6
    %v461 = vrot.slane %v317, 4
    %v462 = vrot.slane %v320, 6
    %v463 = vrot.slane %v86, 4
    %v464 = vrot.slane %v226, 2
    %v465 = vrot.slane %v219, 6
    %v466 = vrot.slane %v316, 4
    %v467 = vrot.slane %v319, 6
    %v468 = vrot.slane %v87, 4
    %v469 = vrot.slane %v225, 2
    %v470 = vrot.slane %v223, 6
    %v471 = vrot.slane %v320, 4
    %v472 = vrot.slane %v323, 6
    %v473 = vrot.slane %v88, 4
    %v474 = vrot.slane %v229, 2
    %v475 = vrot.slane %v222, 6
    %v476 = vrot.slane %v319, 4
    %v477 = vrot.slane %v322, 6
    %v478 = vrot.slane %v89, 4
    %v479 = vrot.slane %v228, 2
    %v480 = vrot.slane %v226, 6
    %v481 = vrot.slane %v323, 4
    %v482 = vrot.slane %v326, 6
    %v483 = vrot.slane %v90, 4
    %v484 = vrot.slane %v232, 2
    %v485 = vrot.slane %v225, 6
    %v486 = vrot.slane %v322, 4
    %v487 = vrot.slane %v325, 6
    %v488 = vrot.slane %v91, 4
    %v489 = vrot.slane %v231, 2
    %v490 = vrot.slane %v229, 6
    %v491 = vrot.slane %v326, 4
    %v492 = vrot.slane %v329, 6
    %v493 = vrot.slane %v92, 4
    %v494 = vrot.slane %v235, 2
    %v495 = vrot.slane %v228, 6
    %v496 = vrot.slane %v325, 4
    %v497 = vrot.slane %v328, 6
    %v498 = vrot.slane %v93, 4
    %v499 = vrot.slane %v234, 2
    %v500 = vrot.slane %v232, 6
    %v501 = vrot.slane %v329, 4
    %v502 = vrot.slane %v332, 6
    %v503 = vrot.slane %v94, 4
    %v504 = vrot.slane %v238, 2
    %v505 = vrot.slane %v231, 6
    %v506 = vrot.slane %v328, 4
    %v507 = vrot.slane %v331, 6
    %v508 = vrot.slane %v95, 4
    %v509 = vrot.slane %v237, 2
    %v510 = vrot.slane %v235, 6
    %v511 = vrot.slane %v332, 4
    %v512 = vrot.slane %v335, 6
    %v513 = vrot.slane %v96, 4
    %v514 = vrot.slane %v241, 2
    %v515 = vrot.slane %v234, 6
    %v516 = vrot.slane %v331, 4
    %v517 = vrot.slane %v334, 6
    %v518 = vrot.slane %v97, 4
    %v519 = vrot.slane %v240, 2
    %v520 = vrot.slane %v238, 6
    %v521 = vrot.slane %v335, 4
    %v522 = vrot.slane %v338, 6
    %v523 = vrot.slane %v98, 4
    %v524 = vrot.slane %v244, 2
    %v525 = vrot.slane %v237, 6
    %v526 = vrot.slane %v334, 4
    %v527 = vrot.slane %v337, 6
    %v528 = vrot.slane %v99, 4
    %v529 = vrot.slane %v243, 2
    %v530 = vrot.slane %v247, 6
    %v531 = vrot.slane %v344, 4
    %v532 = vrot.slane %v347, 6
    %v533 = vrot.slane %v104, 4
    %v534 = vrot.slane %v253, 2
    %v535 = vrot.slane %v246, 6
    %v536 = vrot.slane %v343, 4
    %v537 = vrot.slane %v346, 6
    %v538 = vrot.slane %v105, 4
    %v539 = vrot.slane %v252, 2
    %v540 = vrot.slane %v250, 6
    %v541 = vrot.slane %v347, 4
    %v542 = vrot.slane %v350, 6
    %v543 = vrot.slane %v106, 4
    %v544 = vrot.slane %v256, 2
    %v545 = vrot.slane %v249, 6
    %v546 = vrot.slane %v346, 4
    %v547 = vrot.slane %v349, 6
    %v548 = vrot.slane %v107, 4
    %v549 = vrot.slane %v255, 2
    %v550 = vrot.slane %v253, 6
    %v551 = vrot.slane %v350, 4
    %v552 = vrot.slane %v353, 6
    %v553 = vrot.slane %v108, 4
    %v554 = vrot.slane %v259, 2
    %v555 = vrot.slane %v252, 6
    %v556 = vrot.slane %v349, 4
    %v557 = vrot.slane %v352, 6
    %v558 = vrot.slane %v109, 4
    %v559 = vrot.slane %v258, 2
    %v560 = vrot.slane %v256, 6
    %v561 = vrot.slane %v353, 4
    %v562 = vrot.slane %v356, 6
    %v563 = vrot.slane %v110, 4
    %v564 = vrot.slane %v262, 2
    %v565 = vrot.slane %v255, 6
    %v566 = vrot.slane %v352, 4
    %v567 = vrot.slane %v355, 6
    %v568 = vrot.slane %v111, 4
    %v569 = vrot.slane %v261, 2
    %v570 = vrot.slane %v259, 6
    %v571 = vrot.slane %v356, 4
    %v572 = vrot.slane %v359, 6
    %v573 = vrot.slane %v112, 4
    %v574 = vrot.slane %v265, 2
    %v575 = vrot.slane %v258, 6
    %v576 = vrot.slane %v355, 4
    %v577 = vrot.slane %v358, 6
    %v578 = vrot.slane %v113, 4
    %v579 = vrot.slane %v264, 2
    %v580 = vrot.slane %v262, 6
    %v581 = vrot.slane %v359, 4
    %v582 = vrot.slane %v362, 6
    %v583 = vrot.slane %v114, 4
    %v584 = vrot.slane %v268, 2
    %v585 = vrot.slane %v261, 6
    %v586 = vrot.slane %v358, 4
    %v587 = vrot.slane %v361, 6
    %v588 = vrot.slane %v115, 4
    %v589 = vrot.slane %v267, 2
    %v590 = vrot.slane %v265, 6
    %v591 = vrot.slane %v362, 4
    %v592 = vrot.slane %v365, 6
    %v593 = vrot.slane %v116, 4
    %v594 = vrot.slane %v271, 2
    %v595 = vrot.slane %v264, 6
    %v596 = vrot.slane %v361, 4
    %v597 = vrot.slane %v364, 6
    %v598 = vrot.slane %v117, 4
    %v599 = vrot.slane %v270, 2
    %v600 = vrot.slane %v268, 6
    %v601 = vrot.slane %v365, 4
    %v602 = vrot.slane %v368, 6
    %v603 = vrot.slane %v118, 4
    %v604 = vrot.slane %v274, 2
    %v605 = vrot.slane %v267, 6
    %v606 = vrot.slane %v364, 4
    %v607 = vrot.slane %v367, 6
    %v608 = vrot.slane %v119, 4
    %v609 = vrot.slane %v273, 2
    %v610 = vrot.slane %v271, 6
    %v611 = vrot.slane %v368, 4
    %v612 = vrot.slane %v371, 6
    %v613 = vrot.slane %v120, 4
    %v614 = vrot.slane %v277, 2
    %v615 = vrot.slane %v270, 6
    %v616 = vrot.slane %v367, 4
    %v617 = vrot.slane %v370, 6
    %v618 = vrot.slane %v121, 4
    %v619 = vrot.slane %v276, 2
    %v620 = vrot.slane %v274, 6
    %v621 = vrot.slane %v371, 4
    %v622 = vrot.slane %v374, 6
    %v623 = vrot.slane %v122, 4
    %v624 = vrot.slane %v280, 2
    %v625 = vrot.slane %v273, 6
    %v626 = vrot.slane %v370, 4
    %v627 = vrot.slane %v373, 6
    %v628 = vrot.slane %v123, 4
    %v629 = vrot.slane %v279, 2
    %v630 = vrot.slane %v277, 6
    %v631 = vrot.slane %v374, 4
    %v632 = vrot.slane %v377, 6
    %v633 = vrot.slane %v124, 4
    %v634 = vrot.slane %v283, 2
    %v635 = vrot.slane %v276, 6
    %v636 = vrot.slane %v373, 4
    %v637 = vrot.slane %v376, 6
    %v638 = vrot.slane %v125, 4
    %v639 = vrot.slane %v282, 2
    %v640 = vrot.slane %v280, 6
    %v641 = vrot.slane %v377, 4
    %v642 = vrot.slane %v380, 6
    %v643 = vrot.slane %v126, 4
    %v644 = vrot.slane %v286, 2
    %v645 = vrot.slane %v279, 6
    %v646 = vrot.slane %v376, 4
    %v647 = vrot.slane %v379, 6
    %v648 = vrot.slane %v127, 4
    %v649 = vrot.slane %v285, 2
    %v650 = vrot.slane %v283, 6
    %v651 = vrot.slane %v380, 4
    %v652 = vrot.slane %v383, 6
    %v653 = vrot.slane %v128, 4
    %v654 = vrot.slane %v289, 2
    %v655 = vrot.slane %v282, 6
    %v656 = vrot.slane %v379, 4
    %v657 = vrot.slane %v382, 6
    %v658 = vrot.slane %v129, 4
    %v659 = vrot.slane %v288, 2
    %v660 = vrot.slane %v286, 6
    %v661 = vrot.slane %v383, 4
    %v662 = vrot.slane %v386, 6
    %v663 = vrot.slane %v130, 4
    %v664 = vrot.slane %v292, 2
    %v665 = vrot.slane %v285, 6
    %v666 = vrot.slane %v382, 4
    %v667 = vrot.slane %v385, 6
    %v668 = vrot.slane %v131, 4
    %v669 = vrot.slane %v291, 2
    %vm670 = vcmask 1041408
    %v671 = vsel %vm670, %v68, %v390
    %vm672 = vcmask 1045508
    %v673 = vsel %vm672, %v391, %v297
    %vm674 = vcmask 1043456
    %v675 = vsel %vm674, %v671, %v673
    %v676 = vsel %vm670, %v202, %v392
    %v677 = vsel %vm672, %v393, %v394
    %v678 = vsel %vm674, %v676, %v677
    %vm679 = vcmask 1043458
    %v680 = vsel %vm679, %v68, %v390
    %v681 = vsel %vm293, %v297, %v391
    %vm682 = vcmask 1045506
    %v683 = vsel %vm682, %v680, %v681
    %v684 = vrot.slane %v683, 2
    %v685 = vsel %vm679, %v202, %v392
    %v686 = vsel %vm293, %v394, %v393
    %v687 = vsel %vm682, %v685, %v686
    %v688 = vrot.slane %v687, 2
    %v689 = vrot.slane %v302, 2
    %v690 = vsel %vm672, %v68, %v390
    %v691 = vsel %vm670, %v391, %v297
    %v692 = vsel %vm674, %v691, %v690
    %v693 = vrot.slane %v692, 4
    %v694 = vsel %vm672, %v202, %v392
    %v695 = vsel %vm670, %v393, %v394
    %v696 = vsel %vm674, %v695, %v694
    %v697 = vrot.slane %v696, 4
    %v698 = vsel %vm293, %v390, %v68
    %v699 = vsel %vm679, %v391, %v297
    %v700 = vsel %vm682, %v699, %v698
    %v701 = vrot.slane %v700, 6
    %v702 = vsel %vm293, %v392, %v202
    %v703 = vsel %vm679, %v393, %v394
    %v704 = vsel %vm682, %v703, %v702
    %v705 = vrot.slane %v704, 6
    %v706 = vsel %vm670, %v69, %v395
    %v707 = vsel %vm672, %v396, %v298
    %v708 = vsel %vm674, %v706, %v707
    %v709 = vsel %vm670, %v201, %v397
    %v710 = vsel %vm672, %v398, %v399
    %v711 = vsel %vm674, %v709, %v710
    %v712 = vsel %vm679, %v69, %v395
    %v713 = vsel %vm293, %v298, %v396
    %v714 = vsel %vm682, %v712, %v713
    %v715 = vrot.slane %v714, 2
    %v716 = vsel %vm679, %v201, %v397
    %v717 = vsel %vm293, %v399, %v398
    %v718 = vsel %vm682, %v716, %v717
    %v719 = vrot.slane %v718, 2
    %v720 = vrot.slane %v301, 2
    %v721 = vsel %vm672, %v69, %v395
    %v722 = vsel %vm670, %v396, %v298
    %v723 = vsel %vm674, %v722, %v721
    %v724 = vrot.slane %v723, 4
    %v725 = vsel %vm672, %v201, %v397
    %v726 = vsel %vm670, %v398, %v399
    %v727 = vsel %vm674, %v726, %v725
    %v728 = vrot.slane %v727, 4
    %v729 = vsel %vm670, %v70, %v400
    %v730 = vsel %vm672, %v401, %v300
    %v731 = vsel %vm674, %v729, %v730
    %v732 = vsel %vm670, %v205, %v402
    %v733 = vsel %vm672, %v403, %v404
    %v734 = vsel %vm674, %v732, %v733
    %v735 = vsel %vm679, %v70, %v400
    %v736 = vsel %vm293, %v300, %v401
    %v737 = vsel %vm682, %v735, %v736
    %v738 = vrot.slane %v737, 2
    %v739 = vsel %vm679, %v205, %v402
    %v740 = vsel %vm293, %v404, %v403
    %v741 = vsel %vm682, %v739, %v740
    %v742 = vrot.slane %v741, 2
    %v743 = vrot.slane %v305, 2
    %v744 = vsel %vm672, %v70, %v400
    %v745 = vsel %vm670, %v401, %v300
    %v746 = vsel %vm674, %v745, %v744
    %v747 = vrot.slane %v746, 4
    %v748 = vsel %vm672, %v205, %v402
    %v749 = vsel %vm670, %v403, %v404
    %v750 = vsel %vm674, %v749, %v748
    %v751 = vrot.slane %v750, 4
    %v752 = vsel %vm293, %v400, %v70
    %v753 = vsel %vm679, %v401, %v300
    %v754 = vsel %vm682, %v753, %v752
    %v755 = vrot.slane %v754, 6
    %v756 = vsel %vm293, %v402, %v205
    %v757 = vsel %vm679, %v403, %v404
    %v758 = vsel %vm682, %v757, %v756
    %v759 = vrot.slane %v758, 6
    %v760 = vsel %vm670, %v71, %v405
    %v761 = vsel %vm672, %v406, %v301
    %v762 = vsel %vm674, %v760, %v761
    %v763 = vsel %vm670, %v204, %v407
    %v764 = vsel %vm672, %v408, %v409
    %v765 = vsel %vm674, %v763, %v764
    %v766 = vsel %vm679, %v71, %v405
    %v767 = vsel %vm293, %v301, %v406
    %v768 = vsel %vm682, %v766, %v767
    %v769 = vrot.slane %v768, 2
    %v770 = vsel %vm679, %v204, %v407
    %v771 = vsel %vm293, %v409, %v408
    %v772 = vsel %vm682, %v770, %v771
    %v773 = vrot.slane %v772, 2
    %v774 = vrot.slane %v304, 2
    %v775 = vsel %vm672, %v71, %v405
    %v776 = vsel %vm670, %v406, %v301
    %v777 = vsel %vm674, %v776, %v775
    %v778 = vrot.slane %v777, 4
    %v779 = vsel %vm672, %v204, %v407
    %v780 = vsel %vm670, %v408, %v409
    %v781 = vsel %vm674, %v780, %v779
    %v782 = vrot.slane %v781, 4
    %v783 = vsel %vm670, %v72, %v410
    %v784 = vsel %vm672, %v411, %v303
    %v785 = vsel %vm674, %v783, %v784
    %v786 = vsel %vm670, %v208, %v412
    %v787 = vsel %vm672, %v413, %v414
    %v788 = vsel %vm674, %v786, %v787
    %v789 = vsel %vm679, %v72, %v410
    %v790 = vsel %vm293, %v303, %v411
    %v791 = vsel %vm682, %v789, %v790
    %v792 = vrot.slane %v791, 2
    %v793 = vsel %vm679, %v208, %v412
    %v794 = vsel %vm293, %v414, %v413
    %v795 = vsel %vm682, %v793, %v794
    %v796 = vrot.slane %v795, 2
    %v797 = vrot.slane %v308, 2
    %v798 = vsel %vm672, %v72, %v410
    %v799 = vsel %vm670, %v411, %v303
    %v800 = vsel %vm674, %v799, %v798
    %v801 = vrot.slane %v800, 4
    %v802 = vsel %vm672, %v208, %v412
    %v803 = vsel %vm670, %v413, %v414
    %v804 = vsel %vm674, %v803, %v802
    %v805 = vrot.slane %v804, 4
    %v806 = vsel %vm293, %v410, %v72
    %v807 = vsel %vm679, %v411, %v303
    %v808 = vsel %vm682, %v807, %v806
    %v809 = vrot.slane %v808, 6
    %v810 = vsel %vm293, %v412, %v208
    %v811 = vsel %vm679, %v413, %v414
    %v812 = vsel %vm682, %v811, %v810
    %v813 = vrot.slane %v812, 6
    %v814 = vsel %vm670, %v73, %v415
    %v815 = vsel %vm672, %v416, %v304
    %v816 = vsel %vm674, %v814, %v815
    %v817 = vsel %vm670, %v207, %v417
    %v818 = vsel %vm672, %v418, %v419
    %v819 = vsel %vm674, %v817, %v818
    %v820 = vsel %vm679, %v73, %v415
    %v821 = vsel %vm293, %v304, %v416
    %v822 = vsel %vm682, %v820, %v821
    %v823 = vrot.slane %v822, 2
    %v824 = vsel %vm679, %v207, %v417
    %v825 = vsel %vm293, %v419, %v418
    %v826 = vsel %vm682, %v824, %v825
    %v827 = vrot.slane %v826, 2
    %v828 = vrot.slane %v307, 2
    %v829 = vsel %vm672, %v73, %v415
    %v830 = vsel %vm670, %v416, %v304
    %v831 = vsel %vm674, %v830, %v829
    %v832 = vrot.slane %v831, 4
    %v833 = vsel %vm672, %v207, %v417
    %v834 = vsel %vm670, %v418, %v419
    %v835 = vsel %vm674, %v834, %v833
    %v836 = vrot.slane %v835, 4
    %v837 = vsel %vm670, %v74, %v420
    %v838 = vsel %vm672, %v421, %v306
    %v839 = vsel %vm674, %v837, %v838
    %v840 = vsel %vm670, %v211, %v422
    %v841 = vsel %vm672, %v423, %v424
    %v842 = vsel %vm674, %v840, %v841
    %v843 = vsel %vm679, %v74, %v420
    %v844 = vsel %vm293, %v306, %v421
    %v845 = vsel %vm682, %v843, %v844
    %v846 = vrot.slane %v845, 2
    %v847 = vsel %vm679, %v211, %v422
    %v848 = vsel %vm293, %v424, %v423
    %v849 = vsel %vm682, %v847, %v848
    %v850 = vrot.slane %v849, 2
    %v851 = vrot.slane %v311, 2
    %v852 = vsel %vm672, %v74, %v420
    %v853 = vsel %vm670, %v421, %v306
    %v854 = vsel %vm674, %v853, %v852
    %v855 = vrot.slane %v854, 4
    %v856 = vsel %vm672, %v211, %v422
    %v857 = vsel %vm670, %v423, %v424
    %v858 = vsel %vm674, %v857, %v856
    %v859 = vrot.slane %v858, 4
    %v860 = vsel %vm293, %v420, %v74
    %v861 = vsel %vm679, %v421, %v306
    %v862 = vsel %vm682, %v861, %v860
    %v863 = vrot.slane %v862, 6
    %v864 = vsel %vm293, %v422, %v211
    %v865 = vsel %vm679, %v423, %v424
    %v866 = vsel %vm682, %v865, %v864
    %v867 = vrot.slane %v866, 6
    %v868 = vsel %vm670, %v75, %v425
    %v869 = vsel %vm672, %v426, %v307
    %v870 = vsel %vm674, %v868, %v869
    %v871 = vsel %vm670, %v210, %v427
    %v872 = vsel %vm672, %v428, %v429
    %v873 = vsel %vm674, %v871, %v872
    %v874 = vsel %vm679, %v75, %v425
    %v875 = vsel %vm293, %v307, %v426
    %v876 = vsel %vm682, %v874, %v875
    %v877 = vrot.slane %v876, 2
    %v878 = vsel %vm679, %v210, %v427
    %v879 = vsel %vm293, %v429, %v428
    %v880 = vsel %vm682, %v878, %v879
    %v881 = vrot.slane %v880, 2
    %v882 = vrot.slane %v310, 2
    %v883 = vsel %vm672, %v75, %v425
    %v884 = vsel %vm670, %v426, %v307
    %v885 = vsel %vm674, %v884, %v883
    %v886 = vrot.slane %v885, 4
    %v887 = vsel %vm672, %v210, %v427
    %v888 = vsel %vm670, %v428, %v429
    %v889 = vsel %vm674, %v888, %v887
    %v890 = vrot.slane %v889, 4
    %v891 = vsel %vm670, %v76, %v430
    %v892 = vsel %vm672, %v431, %v309
    %v893 = vsel %vm674, %v891, %v892
    %v894 = vsel %vm670, %v214, %v432
    %v895 = vsel %vm672, %v433, %v434
    %v896 = vsel %vm674, %v894, %v895
    %v897 = vsel %vm679, %v76, %v430
    %v898 = vsel %vm293, %v309, %v431
    %v899 = vsel %vm682, %v897, %v898
    %v900 = vrot.slane %v899, 2
    %v901 = vsel %vm679, %v214, %v432
    %v902 = vsel %vm293, %v434, %v433
    %v903 = vsel %vm682, %v901, %v902
    %v904 = vrot.slane %v903, 2
    %v905 = vrot.slane %v314, 2
    %v906 = vsel %vm672, %v76, %v430
    %v907 = vsel %vm670, %v431, %v309
    %v908 = vsel %vm674, %v907, %v906
    %v909 = vrot.slane %v908, 4
    %v910 = vsel %vm672, %v214, %v432
    %v911 = vsel %vm670, %v433, %v434
    %v912 = vsel %vm674, %v911, %v910
    %v913 = vrot.slane %v912, 4
    %v914 = vsel %vm293, %v430, %v76
    %v915 = vsel %vm679, %v431, %v309
    %v916 = vsel %vm682, %v915, %v914
    %v917 = vrot.slane %v916, 6
    %v918 = vsel %vm293, %v432, %v214
    %v919 = vsel %vm679, %v433, %v434
    %v920 = vsel %vm682, %v919, %v918
    %v921 = vrot.slane %v920, 6
    %v922 = vsel %vm670, %v77, %v435
    %v923 = vsel %vm672, %v436, %v310
    %v924 = vsel %vm674, %v922, %v923
    %v925 = vsel %vm670, %v213, %v437
    %v926 = vsel %vm672, %v438, %v439
    %v927 = vsel %vm674, %v925, %v926
    %v928 = vsel %vm679, %v77, %v435
    %v929 = vsel %vm293, %v310, %v436
    %v930 = vsel %vm682, %v928, %v929
    %v931 = vrot.slane %v930, 2
    %v932 = vsel %vm679, %v213, %v437
    %v933 = vsel %vm293, %v439, %v438
    %v934 = vsel %vm682, %v932, %v933
    %v935 = vrot.slane %v934, 2
    %v936 = vrot.slane %v313, 2
    %v937 = vsel %vm672, %v77, %v435
    %v938 = vsel %vm670, %v436, %v310
    %v939 = vsel %vm674, %v938, %v937
    %v940 = vrot.slane %v939, 4
    %v941 = vsel %vm672, %v213, %v437
    %v942 = vsel %vm670, %v438, %v439
    %v943 = vsel %vm674, %v942, %v941
    %v944 = vrot.slane %v943, 4
    %v945 = vsel %vm670, %v78, %v440
    %v946 = vsel %vm672, %v441, %v312
    %v947 = vsel %vm674, %v945, %v946
    %v948 = vsel %vm670, %v217, %v442
    %v949 = vsel %vm672, %v443, %v444
    %v950 = vsel %vm674, %v948, %v949
    %v951 = vsel %vm679, %v78, %v440
    %v952 = vsel %vm293, %v312, %v441
    %v953 = vsel %vm682, %v951, %v952
    %v954 = vrot.slane %v953, 2
    %v955 = vsel %vm679, %v217, %v442
    %v956 = vsel %vm293, %v444, %v443
    %v957 = vsel %vm682, %v955, %v956
    %v958 = vrot.slane %v957, 2
    %v959 = vrot.slane %v317, 2
    %v960 = vsel %vm672, %v78, %v440
    %v961 = vsel %vm670, %v441, %v312
    %v962 = vsel %vm674, %v961, %v960
    %v963 = vrot.slane %v962, 4
    %v964 = vsel %vm672, %v217, %v442
    %v965 = vsel %vm670, %v443, %v444
    %v966 = vsel %vm674, %v965, %v964
    %v967 = vrot.slane %v966, 4
    %v968 = vsel %vm293, %v440, %v78
    %v969 = vsel %vm679, %v441, %v312
    %v970 = vsel %vm682, %v969, %v968
    %v971 = vrot.slane %v970, 6
    %v972 = vsel %vm293, %v442, %v217
    %v973 = vsel %vm679, %v443, %v444
    %v974 = vsel %vm682, %v973, %v972
    %v975 = vrot.slane %v974, 6
    %v976 = vsel %vm670, %v79, %v445
    %v977 = vsel %vm672, %v446, %v313
    %v978 = vsel %vm674, %v976, %v977
    %v979 = vsel %vm670, %v216, %v447
    %v980 = vsel %vm672, %v448, %v449
    %v981 = vsel %vm674, %v979, %v980
    %v982 = vsel %vm679, %v79, %v445
    %v983 = vsel %vm293, %v313, %v446
    %v984 = vsel %vm682, %v982, %v983
    %v985 = vrot.slane %v984, 2
    %v986 = vsel %vm679, %v216, %v447
    %v987 = vsel %vm293, %v449, %v448
    %v988 = vsel %vm682, %v986, %v987
    %v989 = vrot.slane %v988, 2
    %v990 = vrot.slane %v316, 2
    %v991 = vsel %vm672, %v79, %v445
    %v992 = vsel %vm670, %v446, %v313
    %v993 = vsel %vm674, %v992, %v991
    %v994 = vrot.slane %v993, 4
    %v995 = vsel %vm672, %v216, %v447
    %v996 = vsel %vm670, %v448, %v449
    %v997 = vsel %vm674, %v996, %v995
    %v998 = vrot.slane %v997, 4
    %v999 = vsel %vm670, %v80, %v450
    %v1000 = vsel %vm672, %v451, %v315
    %v1001 = vsel %vm674, %v999, %v1000
    %v1002 = vsel %vm670, %v220, %v452
    %v1003 = vsel %vm672, %v453, %v454
    %v1004 = vsel %vm674, %v1002, %v1003
    %v1005 = vsel %vm679, %v80, %v450
    %v1006 = vsel %vm293, %v315, %v451
    %v1007 = vsel %vm682, %v1005, %v1006
    %v1008 = vrot.slane %v1007, 2
    %v1009 = vsel %vm679, %v220, %v452
    %v1010 = vsel %vm293, %v454, %v453
    %v1011 = vsel %vm682, %v1009, %v1010
    %v1012 = vrot.slane %v1011, 2
    %v1013 = vrot.slane %v320, 2
    %v1014 = vsel %vm672, %v80, %v450
    %v1015 = vsel %vm670, %v451, %v315
    %v1016 = vsel %vm674, %v1015, %v1014
    %v1017 = vrot.slane %v1016, 4
    %v1018 = vsel %vm672, %v220, %v452
    %v1019 = vsel %vm670, %v453, %v454
    %v1020 = vsel %vm674, %v1019, %v1018
    %v1021 = vrot.slane %v1020, 4
    %v1022 = vsel %vm293, %v450, %v80
    %v1023 = vsel %vm679, %v451, %v315
    %v1024 = vsel %vm682, %v1023, %v1022
    %v1025 = vrot.slane %v1024, 6
    %v1026 = vsel %vm293, %v452, %v220
    %v1027 = vsel %vm679, %v453, %v454
    %v1028 = vsel %vm682, %v1027, %v1026
    %v1029 = vrot.slane %v1028, 6
    %v1030 = vsel %vm670, %v81, %v455
    %v1031 = vsel %vm672, %v456, %v316
    %v1032 = vsel %vm674, %v1030, %v1031
    %v1033 = vsel %vm670, %v219, %v457
    %v1034 = vsel %vm672, %v458, %v459
    %v1035 = vsel %vm674, %v1033, %v1034
    %v1036 = vsel %vm679, %v81, %v455
    %v1037 = vsel %vm293, %v316, %v456
    %v1038 = vsel %vm682, %v1036, %v1037
    %v1039 = vrot.slane %v1038, 2
    %v1040 = vsel %vm679, %v219, %v457
    %v1041 = vsel %vm293, %v459, %v458
    %v1042 = vsel %vm682, %v1040, %v1041
    %v1043 = vrot.slane %v1042, 2
    %v1044 = vrot.slane %v319, 2
    %v1045 = vsel %vm672, %v81, %v455
    %v1046 = vsel %vm670, %v456, %v316
    %v1047 = vsel %vm674, %v1046, %v1045
    %v1048 = vrot.slane %v1047, 4
    %v1049 = vsel %vm672, %v219, %v457
    %v1050 = vsel %vm670, %v458, %v459
    %v1051 = vsel %vm674, %v1050, %v1049
    %v1052 = vrot.slane %v1051, 4
    %v1053 = vsel %vm670, %v82, %v460
    %v1054 = vsel %vm672, %v461, %v318
    %v1055 = vsel %vm674, %v1053, %v1054
    %v1056 = vsel %vm670, %v223, %v462
    %v1057 = vsel %vm672, %v463, %v464
    %v1058 = vsel %vm674, %v1056, %v1057
    %v1059 = vsel %vm679, %v82, %v460
    %v1060 = vsel %vm293, %v318, %v461
    %v1061 = vsel %vm682, %v1059, %v1060
    %v1062 = vrot.slane %v1061, 2
    %v1063 = vsel %vm679, %v223, %v462
    %v1064 = vsel %vm293, %v464, %v463
    %v1065 = vsel %vm682, %v1063, %v1064
    %v1066 = vrot.slane %v1065, 2
    %v1067 = vrot.slane %v323, 2
    %v1068 = vsel %vm672, %v82, %v460
    %v1069 = vsel %vm670, %v461, %v318
    %v1070 = vsel %vm674, %v1069, %v1068
    %v1071 = vrot.slane %v1070, 4
    %v1072 = vsel %vm672, %v223, %v462
    %v1073 = vsel %vm670, %v463, %v464
    %v1074 = vsel %vm674, %v1073, %v1072
    %v1075 = vrot.slane %v1074, 4
    %v1076 = vsel %vm293, %v460, %v82
    %v1077 = vsel %vm679, %v461, %v318
    %v1078 = vsel %vm682, %v1077, %v1076
    %v1079 = vrot.slane %v1078, 6
    %v1080 = vsel %vm293, %v462, %v223
    %v1081 = vsel %vm679, %v463, %v464
    %v1082 = vsel %vm682, %v1081, %v1080
    %v1083 = vrot.slane %v1082, 6
    %v1084 = vsel %vm670, %v83, %v465
    %v1085 = vsel %vm672, %v466, %v319
    %v1086 = vsel %vm674, %v1084, %v1085
    %v1087 = vsel %vm670, %v222, %v467
    %v1088 = vsel %vm672, %v468, %v469
    %v1089 = vsel %vm674, %v1087, %v1088
    %v1090 = vsel %vm679, %v83, %v465
    %v1091 = vsel %vm293, %v319, %v466
    %v1092 = vsel %vm682, %v1090, %v1091
    %v1093 = vrot.slane %v1092, 2
    %v1094 = vsel %vm679, %v222, %v467
    %v1095 = vsel %vm293, %v469, %v468
    %v1096 = vsel %vm682, %v1094, %v1095
    %v1097 = vrot.slane %v1096, 2
    %v1098 = vrot.slane %v322, 2
    %v1099 = vsel %vm672, %v83, %v465
    %v1100 = vsel %vm670, %v466, %v319
    %v1101 = vsel %vm674, %v1100, %v1099
    %v1102 = vrot.slane %v1101, 4
    %v1103 = vsel %vm672, %v222, %v467
    %v1104 = vsel %vm670, %v468, %v469
    %v1105 = vsel %vm674, %v1104, %v1103
    %v1106 = vrot.slane %v1105, 4
    %v1107 = vsel %vm670, %v84, %v470
    %v1108 = vsel %vm672, %v471, %v321
    %v1109 = vsel %vm674, %v1107, %v1108
    %v1110 = vsel %vm670, %v226, %v472
    %v1111 = vsel %vm672, %v473, %v474
    %v1112 = vsel %vm674, %v1110, %v1111
    %v1113 = vsel %vm679, %v84, %v470
    %v1114 = vsel %vm293, %v321, %v471
    %v1115 = vsel %vm682, %v1113, %v1114
    %v1116 = vrot.slane %v1115, 2
    %v1117 = vsel %vm679, %v226, %v472
    %v1118 = vsel %vm293, %v474, %v473
    %v1119 = vsel %vm682, %v1117, %v1118
    %v1120 = vrot.slane %v1119, 2
    %v1121 = vrot.slane %v326, 2
    %v1122 = vsel %vm672, %v84, %v470
    %v1123 = vsel %vm670, %v471, %v321
    %v1124 = vsel %vm674, %v1123, %v1122
    %v1125 = vrot.slane %v1124, 4
    %v1126 = vsel %vm672, %v226, %v472
    %v1127 = vsel %vm670, %v473, %v474
    %v1128 = vsel %vm674, %v1127, %v1126
    %v1129 = vrot.slane %v1128, 4
    %v1130 = vsel %vm293, %v470, %v84
    %v1131 = vsel %vm679, %v471, %v321
    %v1132 = vsel %vm682, %v1131, %v1130
    %v1133 = vrot.slane %v1132, 6
    %v1134 = vsel %vm293, %v472, %v226
    %v1135 = vsel %vm679, %v473, %v474
    %v1136 = vsel %vm682, %v1135, %v1134
    %v1137 = vrot.slane %v1136, 6
    %v1138 = vsel %vm670, %v85, %v475
    %v1139 = vsel %vm672, %v476, %v322
    %v1140 = vsel %vm674, %v1138, %v1139
    %v1141 = vsel %vm670, %v225, %v477
    %v1142 = vsel %vm672, %v478, %v479
    %v1143 = vsel %vm674, %v1141, %v1142
    %v1144 = vsel %vm679, %v85, %v475
    %v1145 = vsel %vm293, %v322, %v476
    %v1146 = vsel %vm682, %v1144, %v1145
    %v1147 = vrot.slane %v1146, 2
    %v1148 = vsel %vm679, %v225, %v477
    %v1149 = vsel %vm293, %v479, %v478
    %v1150 = vsel %vm682, %v1148, %v1149
    %v1151 = vrot.slane %v1150, 2
    %v1152 = vrot.slane %v325, 2
    %v1153 = vsel %vm672, %v85, %v475
    %v1154 = vsel %vm670, %v476, %v322
    %v1155 = vsel %vm674, %v1154, %v1153
    %v1156 = vrot.slane %v1155, 4
    %v1157 = vsel %vm672, %v225, %v477
    %v1158 = vsel %vm670, %v478, %v479
    %v1159 = vsel %vm674, %v1158, %v1157
    %v1160 = vrot.slane %v1159, 4
    %v1161 = vsel %vm670, %v86, %v480
    %v1162 = vsel %vm672, %v481, %v324
    %v1163 = vsel %vm674, %v1161, %v1162
    %v1164 = vsel %vm670, %v229, %v482
    %v1165 = vsel %vm672, %v483, %v484
    %v1166 = vsel %vm674, %v1164, %v1165
    %v1167 = vsel %vm679, %v86, %v480
    %v1168 = vsel %vm293, %v324, %v481
    %v1169 = vsel %vm682, %v1167, %v1168
    %v1170 = vrot.slane %v1169, 2
    %v1171 = vsel %vm679, %v229, %v482
    %v1172 = vsel %vm293, %v484, %v483
    %v1173 = vsel %vm682, %v1171, %v1172
    %v1174 = vrot.slane %v1173, 2
    %v1175 = vrot.slane %v329, 2
    %v1176 = vsel %vm672, %v86, %v480
    %v1177 = vsel %vm670, %v481, %v324
    %v1178 = vsel %vm674, %v1177, %v1176
    %v1179 = vrot.slane %v1178, 4
    %v1180 = vsel %vm672, %v229, %v482
    %v1181 = vsel %vm670, %v483, %v484
    %v1182 = vsel %vm674, %v1181, %v1180
    %v1183 = vrot.slane %v1182, 4
    %v1184 = vsel %vm293, %v480, %v86
    %v1185 = vsel %vm679, %v481, %v324
    %v1186 = vsel %vm682, %v1185, %v1184
    %v1187 = vrot.slane %v1186, 6
    %v1188 = vsel %vm293, %v482, %v229
    %v1189 = vsel %vm679, %v483, %v484
    %v1190 = vsel %vm682, %v1189, %v1188
    %v1191 = vrot.slane %v1190, 6
    %v1192 = vsel %vm670, %v87, %v485
    %v1193 = vsel %vm672, %v486, %v325
    %v1194 = vsel %vm674, %v1192, %v1193
    %v1195 = vsel %vm670, %v228, %v487
    %v1196 = vsel %vm672, %v488, %v489
    %v1197 = vsel %vm674, %v1195, %v1196
    %v1198 = vsel %vm679, %v87, %v485
    %v1199 = vsel %vm293, %v325, %v486
    %v1200 = vsel %vm682, %v1198, %v1199
    %v1201 = vrot.slane %v1200, 2
    %v1202 = vsel %vm679, %v228, %v487
    %v1203 = vsel %vm293, %v489, %v488
    %v1204 = vsel %vm682, %v1202, %v1203
    %v1205 = vrot.slane %v1204, 2
    %v1206 = vrot.slane %v328, 2
    %v1207 = vsel %vm672, %v87, %v485
    %v1208 = vsel %vm670, %v486, %v325
    %v1209 = vsel %vm674, %v1208, %v1207
    %v1210 = vrot.slane %v1209, 4
    %v1211 = vsel %vm672, %v228, %v487
    %v1212 = vsel %vm670, %v488, %v489
    %v1213 = vsel %vm674, %v1212, %v1211
    %v1214 = vrot.slane %v1213, 4
    %v1215 = vsel %vm670, %v88, %v490
    %v1216 = vsel %vm672, %v491, %v327
    %v1217 = vsel %vm674, %v1215, %v1216
    %v1218 = vsel %vm670, %v232, %v492
    %v1219 = vsel %vm672, %v493, %v494
    %v1220 = vsel %vm674, %v1218, %v1219
    %v1221 = vsel %vm679, %v88, %v490
    %v1222 = vsel %vm293, %v327, %v491
    %v1223 = vsel %vm682, %v1221, %v1222
    %v1224 = vrot.slane %v1223, 2
    %v1225 = vsel %vm679, %v232, %v492
    %v1226 = vsel %vm293, %v494, %v493
    %v1227 = vsel %vm682, %v1225, %v1226
    %v1228 = vrot.slane %v1227, 2
    %v1229 = vrot.slane %v332, 2
    %v1230 = vsel %vm672, %v88, %v490
    %v1231 = vsel %vm670, %v491, %v327
    %v1232 = vsel %vm674, %v1231, %v1230
    %v1233 = vrot.slane %v1232, 4
    %v1234 = vsel %vm672, %v232, %v492
    %v1235 = vsel %vm670, %v493, %v494
    %v1236 = vsel %vm674, %v1235, %v1234
    %v1237 = vrot.slane %v1236, 4
    %v1238 = vsel %vm293, %v490, %v88
    %v1239 = vsel %vm679, %v491, %v327
    %v1240 = vsel %vm682, %v1239, %v1238
    %v1241 = vrot.slane %v1240, 6
    %v1242 = vsel %vm293, %v492, %v232
    %v1243 = vsel %vm679, %v493, %v494
    %v1244 = vsel %vm682, %v1243, %v1242
    %v1245 = vrot.slane %v1244, 6
    %v1246 = vsel %vm670, %v89, %v495
    %v1247 = vsel %vm672, %v496, %v328
    %v1248 = vsel %vm674, %v1246, %v1247
    %v1249 = vsel %vm670, %v231, %v497
    %v1250 = vsel %vm672, %v498, %v499
    %v1251 = vsel %vm674, %v1249, %v1250
    %v1252 = vsel %vm679, %v89, %v495
    %v1253 = vsel %vm293, %v328, %v496
    %v1254 = vsel %vm682, %v1252, %v1253
    %v1255 = vrot.slane %v1254, 2
    %v1256 = vsel %vm679, %v231, %v497
    %v1257 = vsel %vm293, %v499, %v498
    %v1258 = vsel %vm682, %v1256, %v1257
    %v1259 = vrot.slane %v1258, 2
    %v1260 = vrot.slane %v331, 2
    %v1261 = vsel %vm672, %v89, %v495
    %v1262 = vsel %vm670, %v496, %v328
    %v1263 = vsel %vm674, %v1262, %v1261
    %v1264 = vrot.slane %v1263, 4
    %v1265 = vsel %vm672, %v231, %v497
    %v1266 = vsel %vm670, %v498, %v499
    %v1267 = vsel %vm674, %v1266, %v1265
    %v1268 = vrot.slane %v1267, 4
    %v1269 = vsel %vm670, %v90, %v500
    %v1270 = vsel %vm672, %v501, %v330
    %v1271 = vsel %vm674, %v1269, %v1270
    %v1272 = vsel %vm670, %v235, %v502
    %v1273 = vsel %vm672, %v503, %v504
    %v1274 = vsel %vm674, %v1272, %v1273
    %v1275 = vsel %vm679, %v90, %v500
    %v1276 = vsel %vm293, %v330, %v501
    %v1277 = vsel %vm682, %v1275, %v1276
    %v1278 = vrot.slane %v1277, 2
    %v1279 = vsel %vm679, %v235, %v502
    %v1280 = vsel %vm293, %v504, %v503
    %v1281 = vsel %vm682, %v1279, %v1280
    %v1282 = vrot.slane %v1281, 2
    %v1283 = vrot.slane %v335, 2
    %v1284 = vsel %vm672, %v90, %v500
    %v1285 = vsel %vm670, %v501, %v330
    %v1286 = vsel %vm674, %v1285, %v1284
    %v1287 = vrot.slane %v1286, 4
    %v1288 = vsel %vm672, %v235, %v502
    %v1289 = vsel %vm670, %v503, %v504
    %v1290 = vsel %vm674, %v1289, %v1288
    %v1291 = vrot.slane %v1290, 4
    %v1292 = vsel %vm293, %v500, %v90
    %v1293 = vsel %vm679, %v501, %v330
    %v1294 = vsel %vm682, %v1293, %v1292
    %v1295 = vrot.slane %v1294, 6
    %v1296 = vsel %vm293, %v502, %v235
    %v1297 = vsel %vm679, %v503, %v504
    %v1298 = vsel %vm682, %v1297, %v1296
    %v1299 = vrot.slane %v1298, 6
    %v1300 = vsel %vm670, %v91, %v505
    %v1301 = vsel %vm672, %v506, %v331
    %v1302 = vsel %vm674, %v1300, %v1301
    %v1303 = vsel %vm670, %v234, %v507
    %v1304 = vsel %vm672, %v508, %v509
    %v1305 = vsel %vm674, %v1303, %v1304
    %v1306 = vsel %vm679, %v91, %v505
    %v1307 = vsel %vm293, %v331, %v506
    %v1308 = vsel %vm682, %v1306, %v1307
    %v1309 = vrot.slane %v1308, 2
    %v1310 = vsel %vm679, %v234, %v507
    %v1311 = vsel %vm293, %v509, %v508
    %v1312 = vsel %vm682, %v1310, %v1311
    %v1313 = vrot.slane %v1312, 2
    %v1314 = vrot.slane %v334, 2
    %v1315 = vsel %vm672, %v91, %v505
    %v1316 = vsel %vm670, %v506, %v331
    %v1317 = vsel %vm674, %v1316, %v1315
    %v1318 = vrot.slane %v1317, 4
    %v1319 = vsel %vm672, %v234, %v507
    %v1320 = vsel %vm670, %v508, %v509
    %v1321 = vsel %vm674, %v1320, %v1319
    %v1322 = vrot.slane %v1321, 4
    %v1323 = vsel %vm670, %v92, %v510
    %v1324 = vsel %vm672, %v511, %v333
    %v1325 = vsel %vm674, %v1323, %v1324
    %v1326 = vsel %vm670, %v238, %v512
    %v1327 = vsel %vm672, %v513, %v514
    %v1328 = vsel %vm674, %v1326, %v1327
    %v1329 = vsel %vm679, %v92, %v510
    %v1330 = vsel %vm293, %v333, %v511
    %v1331 = vsel %vm682, %v1329, %v1330
    %v1332 = vrot.slane %v1331, 2
    %v1333 = vsel %vm679, %v238, %v512
    %v1334 = vsel %vm293, %v514, %v513
    %v1335 = vsel %vm682, %v1333, %v1334
    %v1336 = vrot.slane %v1335, 2
    %v1337 = vrot.slane %v338, 2
    %v1338 = vsel %vm672, %v92, %v510
    %v1339 = vsel %vm670, %v511, %v333
    %v1340 = vsel %vm674, %v1339, %v1338
    %v1341 = vrot.slane %v1340, 4
    %v1342 = vsel %vm672, %v238, %v512
    %v1343 = vsel %vm670, %v513, %v514
    %v1344 = vsel %vm674, %v1343, %v1342
    %v1345 = vrot.slane %v1344, 4
    %v1346 = vrot.slane %v338, 4
    %v1347 = vsel %vm293, %v510, %v92
    %v1348 = vsel %vm679, %v511, %v333
    %v1349 = vsel %vm682, %v1348, %v1347
    %v1350 = vrot.slane %v1349, 6
    %v1351 = vsel %vm293, %v512, %v238
    %v1352 = vsel %vm679, %v513, %v514
    %v1353 = vsel %vm682, %v1352, %v1351
    %v1354 = vrot.slane %v1353, 6
    %v1355 = vsel %vm670, %v93, %v515
    %v1356 = vsel %vm672, %v516, %v334
    %v1357 = vsel %vm674, %v1355, %v1356
    %v1358 = vsel %vm670, %v237, %v517
    %v1359 = vsel %vm672, %v518, %v519
    %v1360 = vsel %vm674, %v1358, %v1359
    %v1361 = vsel %vm679, %v93, %v515
    %v1362 = vsel %vm293, %v334, %v516
    %v1363 = vsel %vm682, %v1361, %v1362
    %v1364 = vrot.slane %v1363, 2
    %v1365 = vsel %vm679, %v237, %v517
    %v1366 = vsel %vm293, %v519, %v518
    %v1367 = vsel %vm682, %v1365, %v1366
    %v1368 = vrot.slane %v1367, 2
    %v1369 = vrot.slane %v337, 2
    %v1370 = vsel %vm672, %v93, %v515
    %v1371 = vsel %vm670, %v516, %v334
    %v1372 = vsel %vm674, %v1371, %v1370
    %v1373 = vrot.slane %v1372, 4
    %v1374 = vsel %vm672, %v237, %v517
    %v1375 = vsel %vm670, %v518, %v519
    %v1376 = vsel %vm674, %v1375, %v1374
    %v1377 = vrot.slane %v1376, 4
    %v1378 = vrot.slane %v337, 4
    %v1379 = vsel %vm670, %v94, %v520
    %v1380 = vsel %vm672, %v521, %v336
    %v1381 = vsel %vm674, %v1379, %v1380
    %v1382 = vsel %vm670, %v241, %v522
    %v1383 = vsel %vm672, %v523, %v524
    %v1384 = vsel %vm674, %v1382, %v1383
    %v1385 = vsel %vm679, %v94, %v520
    %v1386 = vsel %vm293, %v336, %v521
    %v1387 = vsel %vm682, %v1385, %v1386
    %v1388 = vrot.slane %v1387, 2
    %v1389 = vsel %vm679, %v241, %v522
    %v1390 = vsel %vm293, %v524, %v523
    %v1391 = vsel %vm682, %v1389, %v1390
    %v1392 = vrot.slane %v1391, 2
    %v1393 = vrot.slane %v341, 2
    %v1394 = vsel %vm672, %v94, %v520
    %v1395 = vsel %vm670, %v521, %v336
    %v1396 = vsel %vm674, %v1395, %v1394
    %v1397 = vrot.slane %v1396, 4
    %v1398 = vsel %vm672, %v241, %v522
    %v1399 = vsel %vm670, %v523, %v524
    %v1400 = vsel %vm674, %v1399, %v1398
    %v1401 = vrot.slane %v1400, 4
    %v1402 = vrot.slane %v341, 4
    %v1403 = vsel %vm293, %v520, %v94
    %v1404 = vsel %vm679, %v521, %v336
    %v1405 = vsel %vm682, %v1404, %v1403
    %v1406 = vrot.slane %v1405, 6
    %v1407 = vsel %vm293, %v522, %v241
    %v1408 = vsel %vm679, %v523, %v524
    %v1409 = vsel %vm682, %v1408, %v1407
    %v1410 = vrot.slane %v1409, 6
    %v1411 = vrot.slane %v341, 6
    %v1412 = vsel %vm670, %v95, %v525
    %v1413 = vsel %vm672, %v526, %v337
    %v1414 = vsel %vm674, %v1412, %v1413
    %v1415 = vsel %vm670, %v240, %v527
    %v1416 = vsel %vm672, %v528, %v529
    %v1417 = vsel %vm674, %v1415, %v1416
    %v1418 = vsel %vm679, %v95, %v525
    %v1419 = vsel %vm293, %v337, %v526
    %v1420 = vsel %vm682, %v1418, %v1419
    %v1421 = vrot.slane %v1420, 2
    %v1422 = vsel %vm679, %v240, %v527
    %v1423 = vsel %vm293, %v529, %v528
    %v1424 = vsel %vm682, %v1422, %v1423
    %v1425 = vrot.slane %v1424, 2
    %v1426 = vrot.slane %v340, 2
    %v1427 = vsel %vm672, %v95, %v525
    %v1428 = vsel %vm670, %v526, %v337
    %v1429 = vsel %vm674, %v1428, %v1427
    %v1430 = vrot.slane %v1429, 4
    %v1431 = vsel %vm672, %v240, %v527
    %v1432 = vsel %vm670, %v528, %v529
    %v1433 = vsel %vm674, %v1432, %v1431
    %v1434 = vrot.slane %v1433, 4
    %v1435 = vrot.slane %v340, 4
    %v1436 = vsel %vm670, %v100, %v530
    %v1437 = vsel %vm672, %v531, %v345
    %v1438 = vsel %vm674, %v1436, %v1437
    %v1439 = vsel %vm670, %v250, %v532
    %v1440 = vsel %vm672, %v533, %v534
    %v1441 = vsel %vm674, %v1439, %v1440
    %v1442 = vsel %vm679, %v100, %v530
    %v1443 = vsel %vm293, %v345, %v531
    %v1444 = vsel %vm682, %v1442, %v1443
    %v1445 = vrot.slane %v1444, 2
    %v1446 = vsel %vm679, %v250, %v532
    %v1447 = vsel %vm293, %v534, %v533
    %v1448 = vsel %vm682, %v1446, %v1447
    %v1449 = vrot.slane %v1448, 2
    %v1450 = vrot.slane %v350, 2
    %v1451 = vsel %vm672, %v100, %v530
    %v1452 = vsel %vm670, %v531, %v345
    %v1453 = vsel %vm674, %v1452, %v1451
    %v1454 = vrot.slane %v1453, 4
    %v1455 = vsel %vm672, %v250, %v532
    %v1456 = vsel %vm670, %v533, %v534
    %v1457 = vsel %vm674, %v1456, %v1455
    %v1458 = vrot.slane %v1457, 4
    %v1459 = vsel %vm293, %v530, %v100
    %v1460 = vsel %vm679, %v531, %v345
    %v1461 = vsel %vm682, %v1460, %v1459
    %v1462 = vrot.slane %v1461, 6
    %v1463 = vsel %vm293, %v532, %v250
    %v1464 = vsel %vm679, %v533, %v534
    %v1465 = vsel %vm682, %v1464, %v1463
    %v1466 = vrot.slane %v1465, 6
    %v1467 = vsel %vm670, %v101, %v535
    %v1468 = vsel %vm672, %v536, %v346
    %v1469 = vsel %vm674, %v1467, %v1468
    %v1470 = vsel %vm670, %v249, %v537
    %v1471 = vsel %vm672, %v538, %v539
    %v1472 = vsel %vm674, %v1470, %v1471
    %v1473 = vsel %vm679, %v101, %v535
    %v1474 = vsel %vm293, %v346, %v536
    %v1475 = vsel %vm682, %v1473, %v1474
    %v1476 = vrot.slane %v1475, 2
    %v1477 = vsel %vm679, %v249, %v537
    %v1478 = vsel %vm293, %v539, %v538
    %v1479 = vsel %vm682, %v1477, %v1478
    %v1480 = vrot.slane %v1479, 2
    %v1481 = vrot.slane %v349, 2
    %v1482 = vsel %vm672, %v101, %v535
    %v1483 = vsel %vm670, %v536, %v346
    %v1484 = vsel %vm674, %v1483, %v1482
    %v1485 = vrot.slane %v1484, 4
    %v1486 = vsel %vm672, %v249, %v537
    %v1487 = vsel %vm670, %v538, %v539
    %v1488 = vsel %vm674, %v1487, %v1486
    %v1489 = vrot.slane %v1488, 4
    %v1490 = vsel %vm670, %v102, %v540
    %v1491 = vsel %vm672, %v541, %v348
    %v1492 = vsel %vm674, %v1490, %v1491
    %v1493 = vsel %vm670, %v253, %v542
    %v1494 = vsel %vm672, %v543, %v544
    %v1495 = vsel %vm674, %v1493, %v1494
    %v1496 = vsel %vm679, %v102, %v540
    %v1497 = vsel %vm293, %v348, %v541
    %v1498 = vsel %vm682, %v1496, %v1497
    %v1499 = vrot.slane %v1498, 2
    %v1500 = vsel %vm679, %v253, %v542
    %v1501 = vsel %vm293, %v544, %v543
    %v1502 = vsel %vm682, %v1500, %v1501
    %v1503 = vrot.slane %v1502, 2
    %v1504 = vrot.slane %v353, 2
    %v1505 = vsel %vm672, %v102, %v540
    %v1506 = vsel %vm670, %v541, %v348
    %v1507 = vsel %vm674, %v1506, %v1505
    %v1508 = vrot.slane %v1507, 4
    %v1509 = vsel %vm672, %v253, %v542
    %v1510 = vsel %vm670, %v543, %v544
    %v1511 = vsel %vm674, %v1510, %v1509
    %v1512 = vrot.slane %v1511, 4
    %v1513 = vsel %vm293, %v540, %v102
    %v1514 = vsel %vm679, %v541, %v348
    %v1515 = vsel %vm682, %v1514, %v1513
    %v1516 = vrot.slane %v1515, 6
    %v1517 = vsel %vm293, %v542, %v253
    %v1518 = vsel %vm679, %v543, %v544
    %v1519 = vsel %vm682, %v1518, %v1517
    %v1520 = vrot.slane %v1519, 6
    %v1521 = vsel %vm670, %v103, %v545
    %v1522 = vsel %vm672, %v546, %v349
    %v1523 = vsel %vm674, %v1521, %v1522
    %v1524 = vsel %vm670, %v252, %v547
    %v1525 = vsel %vm672, %v548, %v549
    %v1526 = vsel %vm674, %v1524, %v1525
    %v1527 = vsel %vm679, %v103, %v545
    %v1528 = vsel %vm293, %v349, %v546
    %v1529 = vsel %vm682, %v1527, %v1528
    %v1530 = vrot.slane %v1529, 2
    %v1531 = vsel %vm679, %v252, %v547
    %v1532 = vsel %vm293, %v549, %v548
    %v1533 = vsel %vm682, %v1531, %v1532
    %v1534 = vrot.slane %v1533, 2
    %v1535 = vrot.slane %v352, 2
    %v1536 = vsel %vm672, %v103, %v545
    %v1537 = vsel %vm670, %v546, %v349
    %v1538 = vsel %vm674, %v1537, %v1536
    %v1539 = vrot.slane %v1538, 4
    %v1540 = vsel %vm672, %v252, %v547
    %v1541 = vsel %vm670, %v548, %v549
    %v1542 = vsel %vm674, %v1541, %v1540
    %v1543 = vrot.slane %v1542, 4
    %v1544 = vsel %vm670, %v104, %v550
    %v1545 = vsel %vm672, %v551, %v351
    %v1546 = vsel %vm674, %v1544, %v1545
    %v1547 = vsel %vm670, %v256, %v552
    %v1548 = vsel %vm672, %v553, %v554
    %v1549 = vsel %vm674, %v1547, %v1548
    %v1550 = vsel %vm679, %v104, %v550
    %v1551 = vsel %vm293, %v351, %v551
    %v1552 = vsel %vm682, %v1550, %v1551
    %v1553 = vrot.slane %v1552, 2
    %v1554 = vsel %vm679, %v256, %v552
    %v1555 = vsel %vm293, %v554, %v553
    %v1556 = vsel %vm682, %v1554, %v1555
    %v1557 = vrot.slane %v1556, 2
    %v1558 = vrot.slane %v356, 2
    %v1559 = vsel %vm672, %v104, %v550
    %v1560 = vsel %vm670, %v551, %v351
    %v1561 = vsel %vm674, %v1560, %v1559
    %v1562 = vrot.slane %v1561, 4
    %v1563 = vsel %vm672, %v256, %v552
    %v1564 = vsel %vm670, %v553, %v554
    %v1565 = vsel %vm674, %v1564, %v1563
    %v1566 = vrot.slane %v1565, 4
    %v1567 = vsel %vm293, %v550, %v104
    %v1568 = vsel %vm679, %v551, %v351
    %v1569 = vsel %vm682, %v1568, %v1567
    %v1570 = vrot.slane %v1569, 6
    %v1571 = vsel %vm293, %v552, %v256
    %v1572 = vsel %vm679, %v553, %v554
    %v1573 = vsel %vm682, %v1572, %v1571
    %v1574 = vrot.slane %v1573, 6
    %v1575 = vsel %vm670, %v105, %v555
    %v1576 = vsel %vm672, %v556, %v352
    %v1577 = vsel %vm674, %v1575, %v1576
    %v1578 = vsel %vm670, %v255, %v557
    %v1579 = vsel %vm672, %v558, %v559
    %v1580 = vsel %vm674, %v1578, %v1579
    %v1581 = vsel %vm679, %v105, %v555
    %v1582 = vsel %vm293, %v352, %v556
    %v1583 = vsel %vm682, %v1581, %v1582
    %v1584 = vrot.slane %v1583, 2
    %v1585 = vsel %vm679, %v255, %v557
    %v1586 = vsel %vm293, %v559, %v558
    %v1587 = vsel %vm682, %v1585, %v1586
    %v1588 = vrot.slane %v1587, 2
    %v1589 = vrot.slane %v355, 2
    %v1590 = vsel %vm672, %v105, %v555
    %v1591 = vsel %vm670, %v556, %v352
    %v1592 = vsel %vm674, %v1591, %v1590
    %v1593 = vrot.slane %v1592, 4
    %v1594 = vsel %vm672, %v255, %v557
    %v1595 = vsel %vm670, %v558, %v559
    %v1596 = vsel %vm674, %v1595, %v1594
    %v1597 = vrot.slane %v1596, 4
    %v1598 = vsel %vm670, %v106, %v560
    %v1599 = vsel %vm672, %v561, %v354
    %v1600 = vsel %vm674, %v1598, %v1599
    %v1601 = vsel %vm670, %v259, %v562
    %v1602 = vsel %vm672, %v563, %v564
    %v1603 = vsel %vm674, %v1601, %v1602
    %v1604 = vsel %vm679, %v106, %v560
    %v1605 = vsel %vm293, %v354, %v561
    %v1606 = vsel %vm682, %v1604, %v1605
    %v1607 = vrot.slane %v1606, 2
    %v1608 = vsel %vm679, %v259, %v562
    %v1609 = vsel %vm293, %v564, %v563
    %v1610 = vsel %vm682, %v1608, %v1609
    %v1611 = vrot.slane %v1610, 2
    %v1612 = vrot.slane %v359, 2
    %v1613 = vsel %vm672, %v106, %v560
    %v1614 = vsel %vm670, %v561, %v354
    %v1615 = vsel %vm674, %v1614, %v1613
    %v1616 = vrot.slane %v1615, 4
    %v1617 = vsel %vm672, %v259, %v562
    %v1618 = vsel %vm670, %v563, %v564
    %v1619 = vsel %vm674, %v1618, %v1617
    %v1620 = vrot.slane %v1619, 4
    %v1621 = vsel %vm293, %v560, %v106
    %v1622 = vsel %vm679, %v561, %v354
    %v1623 = vsel %vm682, %v1622, %v1621
    %v1624 = vrot.slane %v1623, 6
    %v1625 = vsel %vm293, %v562, %v259
    %v1626 = vsel %vm679, %v563, %v564
    %v1627 = vsel %vm682, %v1626, %v1625
    %v1628 = vrot.slane %v1627, 6
    %v1629 = vsel %vm670, %v107, %v565
    %v1630 = vsel %vm672, %v566, %v355
    %v1631 = vsel %vm674, %v1629, %v1630
    %v1632 = vsel %vm670, %v258, %v567
    %v1633 = vsel %vm672, %v568, %v569
    %v1634 = vsel %vm674, %v1632, %v1633
    %v1635 = vsel %vm679, %v107, %v565
    %v1636 = vsel %vm293, %v355, %v566
    %v1637 = vsel %vm682, %v1635, %v1636
    %v1638 = vrot.slane %v1637, 2
    %v1639 = vsel %vm679, %v258, %v567
    %v1640 = vsel %vm293, %v569, %v568
    %v1641 = vsel %vm682, %v1639, %v1640
    %v1642 = vrot.slane %v1641, 2
    %v1643 = vrot.slane %v358, 2
    %v1644 = vsel %vm672, %v107, %v565
    %v1645 = vsel %vm670, %v566, %v355
    %v1646 = vsel %vm674, %v1645, %v1644
    %v1647 = vrot.slane %v1646, 4
    %v1648 = vsel %vm672, %v258, %v567
    %v1649 = vsel %vm670, %v568, %v569
    %v1650 = vsel %vm674, %v1649, %v1648
    %v1651 = vrot.slane %v1650, 4
    %v1652 = vsel %vm670, %v108, %v570
    %v1653 = vsel %vm672, %v571, %v357
    %v1654 = vsel %vm674, %v1652, %v1653
    %v1655 = vsel %vm670, %v262, %v572
    %v1656 = vsel %vm672, %v573, %v574
    %v1657 = vsel %vm674, %v1655, %v1656
    %v1658 = vsel %vm679, %v108, %v570
    %v1659 = vsel %vm293, %v357, %v571
    %v1660 = vsel %vm682, %v1658, %v1659
    %v1661 = vrot.slane %v1660, 2
    %v1662 = vsel %vm679, %v262, %v572
    %v1663 = vsel %vm293, %v574, %v573
    %v1664 = vsel %vm682, %v1662, %v1663
    %v1665 = vrot.slane %v1664, 2
    %v1666 = vrot.slane %v362, 2
    %v1667 = vsel %vm672, %v108, %v570
    %v1668 = vsel %vm670, %v571, %v357
    %v1669 = vsel %vm674, %v1668, %v1667
    %v1670 = vrot.slane %v1669, 4
    %v1671 = vsel %vm672, %v262, %v572
    %v1672 = vsel %vm670, %v573, %v574
    %v1673 = vsel %vm674, %v1672, %v1671
    %v1674 = vrot.slane %v1673, 4
    %v1675 = vsel %vm293, %v570, %v108
    %v1676 = vsel %vm679, %v571, %v357
    %v1677 = vsel %vm682, %v1676, %v1675
    %v1678 = vrot.slane %v1677, 6
    %v1679 = vsel %vm293, %v572, %v262
    %v1680 = vsel %vm679, %v573, %v574
    %v1681 = vsel %vm682, %v1680, %v1679
    %v1682 = vrot.slane %v1681, 6
    %v1683 = vsel %vm670, %v109, %v575
    %v1684 = vsel %vm672, %v576, %v358
    %v1685 = vsel %vm674, %v1683, %v1684
    %v1686 = vsel %vm670, %v261, %v577
    %v1687 = vsel %vm672, %v578, %v579
    %v1688 = vsel %vm674, %v1686, %v1687
    %v1689 = vsel %vm679, %v109, %v575
    %v1690 = vsel %vm293, %v358, %v576
    %v1691 = vsel %vm682, %v1689, %v1690
    %v1692 = vrot.slane %v1691, 2
    %v1693 = vsel %vm679, %v261, %v577
    %v1694 = vsel %vm293, %v579, %v578
    %v1695 = vsel %vm682, %v1693, %v1694
    %v1696 = vrot.slane %v1695, 2
    %v1697 = vrot.slane %v361, 2
    %v1698 = vsel %vm672, %v109, %v575
    %v1699 = vsel %vm670, %v576, %v358
    %v1700 = vsel %vm674, %v1699, %v1698
    %v1701 = vrot.slane %v1700, 4
    %v1702 = vsel %vm672, %v261, %v577
    %v1703 = vsel %vm670, %v578, %v579
    %v1704 = vsel %vm674, %v1703, %v1702
    %v1705 = vrot.slane %v1704, 4
    %v1706 = vsel %vm670, %v110, %v580
    %v1707 = vsel %vm672, %v581, %v360
    %v1708 = vsel %vm674, %v1706, %v1707
    %v1709 = vsel %vm670, %v265, %v582
    %v1710 = vsel %vm672, %v583, %v584
    %v1711 = vsel %vm674, %v1709, %v1710
    %v1712 = vsel %vm679, %v110, %v580
    %v1713 = vsel %vm293, %v360, %v581
    %v1714 = vsel %vm682, %v1712, %v1713
    %v1715 = vrot.slane %v1714, 2
    %v1716 = vsel %vm679, %v265, %v582
    %v1717 = vsel %vm293, %v584, %v583
    %v1718 = vsel %vm682, %v1716, %v1717
    %v1719 = vrot.slane %v1718, 2
    %v1720 = vrot.slane %v365, 2
    %v1721 = vsel %vm672, %v110, %v580
    %v1722 = vsel %vm670, %v581, %v360
    %v1723 = vsel %vm674, %v1722, %v1721
    %v1724 = vrot.slane %v1723, 4
    %v1725 = vsel %vm672, %v265, %v582
    %v1726 = vsel %vm670, %v583, %v584
    %v1727 = vsel %vm674, %v1726, %v1725
    %v1728 = vrot.slane %v1727, 4
    %v1729 = vsel %vm293, %v580, %v110
    %v1730 = vsel %vm679, %v581, %v360
    %v1731 = vsel %vm682, %v1730, %v1729
    %v1732 = vrot.slane %v1731, 6
    %v1733 = vsel %vm293, %v582, %v265
    %v1734 = vsel %vm679, %v583, %v584
    %v1735 = vsel %vm682, %v1734, %v1733
    %v1736 = vrot.slane %v1735, 6
    %v1737 = vsel %vm670, %v111, %v585
    %v1738 = vsel %vm672, %v586, %v361
    %v1739 = vsel %vm674, %v1737, %v1738
    %v1740 = vsel %vm670, %v264, %v587
    %v1741 = vsel %vm672, %v588, %v589
    %v1742 = vsel %vm674, %v1740, %v1741
    %v1743 = vsel %vm679, %v111, %v585
    %v1744 = vsel %vm293, %v361, %v586
    %v1745 = vsel %vm682, %v1743, %v1744
    %v1746 = vrot.slane %v1745, 2
    %v1747 = vsel %vm679, %v264, %v587
    %v1748 = vsel %vm293, %v589, %v588
    %v1749 = vsel %vm682, %v1747, %v1748
    %v1750 = vrot.slane %v1749, 2
    %v1751 = vrot.slane %v364, 2
    %v1752 = vsel %vm672, %v111, %v585
    %v1753 = vsel %vm670, %v586, %v361
    %v1754 = vsel %vm674, %v1753, %v1752
    %v1755 = vrot.slane %v1754, 4
    %v1756 = vsel %vm672, %v264, %v587
    %v1757 = vsel %vm670, %v588, %v589
    %v1758 = vsel %vm674, %v1757, %v1756
    %v1759 = vrot.slane %v1758, 4
    %v1760 = vsel %vm670, %v112, %v590
    %v1761 = vsel %vm672, %v591, %v363
    %v1762 = vsel %vm674, %v1760, %v1761
    %v1763 = vsel %vm670, %v268, %v592
    %v1764 = vsel %vm672, %v593, %v594
    %v1765 = vsel %vm674, %v1763, %v1764
    %v1766 = vsel %vm679, %v112, %v590
    %v1767 = vsel %vm293, %v363, %v591
    %v1768 = vsel %vm682, %v1766, %v1767
    %v1769 = vrot.slane %v1768, 2
    %v1770 = vsel %vm679, %v268, %v592
    %v1771 = vsel %vm293, %v594, %v593
    %v1772 = vsel %vm682, %v1770, %v1771
    %v1773 = vrot.slane %v1772, 2
    %v1774 = vrot.slane %v368, 2
    %v1775 = vsel %vm672, %v112, %v590
    %v1776 = vsel %vm670, %v591, %v363
    %v1777 = vsel %vm674, %v1776, %v1775
    %v1778 = vrot.slane %v1777, 4
    %v1779 = vsel %vm672, %v268, %v592
    %v1780 = vsel %vm670, %v593, %v594
    %v1781 = vsel %vm674, %v1780, %v1779
    %v1782 = vrot.slane %v1781, 4
    %v1783 = vsel %vm293, %v590, %v112
    %v1784 = vsel %vm679, %v591, %v363
    %v1785 = vsel %vm682, %v1784, %v1783
    %v1786 = vrot.slane %v1785, 6
    %v1787 = vsel %vm293, %v592, %v268
    %v1788 = vsel %vm679, %v593, %v594
    %v1789 = vsel %vm682, %v1788, %v1787
    %v1790 = vrot.slane %v1789, 6
    %v1791 = vsel %vm670, %v113, %v595
    %v1792 = vsel %vm672, %v596, %v364
    %v1793 = vsel %vm674, %v1791, %v1792
    %v1794 = vsel %vm670, %v267, %v597
    %v1795 = vsel %vm672, %v598, %v599
    %v1796 = vsel %vm674, %v1794, %v1795
    %v1797 = vsel %vm679, %v113, %v595
    %v1798 = vsel %vm293, %v364, %v596
    %v1799 = vsel %vm682, %v1797, %v1798
    %v1800 = vrot.slane %v1799, 2
    %v1801 = vsel %vm679, %v267, %v597
    %v1802 = vsel %vm293, %v599, %v598
    %v1803 = vsel %vm682, %v1801, %v1802
    %v1804 = vrot.slane %v1803, 2
    %v1805 = vrot.slane %v367, 2
    %v1806 = vsel %vm672, %v113, %v595
    %v1807 = vsel %vm670, %v596, %v364
    %v1808 = vsel %vm674, %v1807, %v1806
    %v1809 = vrot.slane %v1808, 4
    %v1810 = vsel %vm672, %v267, %v597
    %v1811 = vsel %vm670, %v598, %v599
    %v1812 = vsel %vm674, %v1811, %v1810
    %v1813 = vrot.slane %v1812, 4
    %v1814 = vsel %vm670, %v114, %v600
    %v1815 = vsel %vm672, %v601, %v366
    %v1816 = vsel %vm674, %v1814, %v1815
    %v1817 = vsel %vm670, %v271, %v602
    %v1818 = vsel %vm672, %v603, %v604
    %v1819 = vsel %vm674, %v1817, %v1818
    %v1820 = vsel %vm679, %v114, %v600
    %v1821 = vsel %vm293, %v366, %v601
    %v1822 = vsel %vm682, %v1820, %v1821
    %v1823 = vrot.slane %v1822, 2
    %v1824 = vsel %vm679, %v271, %v602
    %v1825 = vsel %vm293, %v604, %v603
    %v1826 = vsel %vm682, %v1824, %v1825
    %v1827 = vrot.slane %v1826, 2
    %v1828 = vrot.slane %v371, 2
    %v1829 = vsel %vm672, %v114, %v600
    %v1830 = vsel %vm670, %v601, %v366
    %v1831 = vsel %vm674, %v1830, %v1829
    %v1832 = vrot.slane %v1831, 4
    %v1833 = vsel %vm672, %v271, %v602
    %v1834 = vsel %vm670, %v603, %v604
    %v1835 = vsel %vm674, %v1834, %v1833
    %v1836 = vrot.slane %v1835, 4
    %v1837 = vsel %vm293, %v600, %v114
    %v1838 = vsel %vm679, %v601, %v366
    %v1839 = vsel %vm682, %v1838, %v1837
    %v1840 = vrot.slane %v1839, 6
    %v1841 = vsel %vm293, %v602, %v271
    %v1842 = vsel %vm679, %v603, %v604
    %v1843 = vsel %vm682, %v1842, %v1841
    %v1844 = vrot.slane %v1843, 6
    %v1845 = vsel %vm670, %v115, %v605
    %v1846 = vsel %vm672, %v606, %v367
    %v1847 = vsel %vm674, %v1845, %v1846
    %v1848 = vsel %vm670, %v270, %v607
    %v1849 = vsel %vm672, %v608, %v609
    %v1850 = vsel %vm674, %v1848, %v1849
    %v1851 = vsel %vm679, %v115, %v605
    %v1852 = vsel %vm293, %v367, %v606
    %v1853 = vsel %vm682, %v1851, %v1852
    %v1854 = vrot.slane %v1853, 2
    %v1855 = vsel %vm679, %v270, %v607
    %v1856 = vsel %vm293, %v609, %v608
    %v1857 = vsel %vm682, %v1855, %v1856
    %v1858 = vrot.slane %v1857, 2
    %v1859 = vrot.slane %v370, 2
    %v1860 = vsel %vm672, %v115, %v605
    %v1861 = vsel %vm670, %v606, %v367
    %v1862 = vsel %vm674, %v1861, %v1860
    %v1863 = vrot.slane %v1862, 4
    %v1864 = vsel %vm672, %v270, %v607
    %v1865 = vsel %vm670, %v608, %v609
    %v1866 = vsel %vm674, %v1865, %v1864
    %v1867 = vrot.slane %v1866, 4
    %v1868 = vsel %vm670, %v116, %v610
    %v1869 = vsel %vm672, %v611, %v369
    %v1870 = vsel %vm674, %v1868, %v1869
    %v1871 = vsel %vm670, %v274, %v612
    %v1872 = vsel %vm672, %v613, %v614
    %v1873 = vsel %vm674, %v1871, %v1872
    %v1874 = vsel %vm679, %v116, %v610
    %v1875 = vsel %vm293, %v369, %v611
    %v1876 = vsel %vm682, %v1874, %v1875
    %v1877 = vrot.slane %v1876, 2
    %v1878 = vsel %vm679, %v274, %v612
    %v1879 = vsel %vm293, %v614, %v613
    %v1880 = vsel %vm682, %v1878, %v1879
    %v1881 = vrot.slane %v1880, 2
    %v1882 = vrot.slane %v374, 2
    %v1883 = vsel %vm672, %v116, %v610
    %v1884 = vsel %vm670, %v611, %v369
    %v1885 = vsel %vm674, %v1884, %v1883
    %v1886 = vrot.slane %v1885, 4
    %v1887 = vsel %vm672, %v274, %v612
    %v1888 = vsel %vm670, %v613, %v614
    %v1889 = vsel %vm674, %v1888, %v1887
    %v1890 = vrot.slane %v1889, 4
    %v1891 = vsel %vm293, %v610, %v116
    %v1892 = vsel %vm679, %v611, %v369
    %v1893 = vsel %vm682, %v1892, %v1891
    %v1894 = vrot.slane %v1893, 6
    %v1895 = vsel %vm293, %v612, %v274
    %v1896 = vsel %vm679, %v613, %v614
    %v1897 = vsel %vm682, %v1896, %v1895
    %v1898 = vrot.slane %v1897, 6
    %v1899 = vsel %vm670, %v117, %v615
    %v1900 = vsel %vm672, %v616, %v370
    %v1901 = vsel %vm674, %v1899, %v1900
    %v1902 = vsel %vm670, %v273, %v617
    %v1903 = vsel %vm672, %v618, %v619
    %v1904 = vsel %vm674, %v1902, %v1903
    %v1905 = vsel %vm679, %v117, %v615
    %v1906 = vsel %vm293, %v370, %v616
    %v1907 = vsel %vm682, %v1905, %v1906
    %v1908 = vrot.slane %v1907, 2
    %v1909 = vsel %vm679, %v273, %v617
    %v1910 = vsel %vm293, %v619, %v618
    %v1911 = vsel %vm682, %v1909, %v1910
    %v1912 = vrot.slane %v1911, 2
    %v1913 = vrot.slane %v373, 2
    %v1914 = vsel %vm672, %v117, %v615
    %v1915 = vsel %vm670, %v616, %v370
    %v1916 = vsel %vm674, %v1915, %v1914
    %v1917 = vrot.slane %v1916, 4
    %v1918 = vsel %vm672, %v273, %v617
    %v1919 = vsel %vm670, %v618, %v619
    %v1920 = vsel %vm674, %v1919, %v1918
    %v1921 = vrot.slane %v1920, 4
    %v1922 = vsel %vm670, %v118, %v620
    %v1923 = vsel %vm672, %v621, %v372
    %v1924 = vsel %vm674, %v1922, %v1923
    %v1925 = vsel %vm670, %v277, %v622
    %v1926 = vsel %vm672, %v623, %v624
    %v1927 = vsel %vm674, %v1925, %v1926
    %v1928 = vsel %vm679, %v118, %v620
    %v1929 = vsel %vm293, %v372, %v621
    %v1930 = vsel %vm682, %v1928, %v1929
    %v1931 = vrot.slane %v1930, 2
    %v1932 = vsel %vm679, %v277, %v622
    %v1933 = vsel %vm293, %v624, %v623
    %v1934 = vsel %vm682, %v1932, %v1933
    %v1935 = vrot.slane %v1934, 2
    %v1936 = vrot.slane %v377, 2
    %v1937 = vsel %vm672, %v118, %v620
    %v1938 = vsel %vm670, %v621, %v372
    %v1939 = vsel %vm674, %v1938, %v1937
    %v1940 = vrot.slane %v1939, 4
    %v1941 = vsel %vm672, %v277, %v622
    %v1942 = vsel %vm670, %v623, %v624
    %v1943 = vsel %vm674, %v1942, %v1941
    %v1944 = vrot.slane %v1943, 4
    %v1945 = vsel %vm293, %v620, %v118
    %v1946 = vsel %vm679, %v621, %v372
    %v1947 = vsel %vm682, %v1946, %v1945
    %v1948 = vrot.slane %v1947, 6
    %v1949 = vsel %vm293, %v622, %v277
    %v1950 = vsel %vm679, %v623, %v624
    %v1951 = vsel %vm682, %v1950, %v1949
    %v1952 = vrot.slane %v1951, 6
    %v1953 = vsel %vm670, %v119, %v625
    %v1954 = vsel %vm672, %v626, %v373
    %v1955 = vsel %vm674, %v1953, %v1954
    %v1956 = vsel %vm670, %v276, %v627
    %v1957 = vsel %vm672, %v628, %v629
    %v1958 = vsel %vm674, %v1956, %v1957
    %v1959 = vsel %vm679, %v119, %v625
    %v1960 = vsel %vm293, %v373, %v626
    %v1961 = vsel %vm682, %v1959, %v1960
    %v1962 = vrot.slane %v1961, 2
    %v1963 = vsel %vm679, %v276, %v627
    %v1964 = vsel %vm293, %v629, %v628
    %v1965 = vsel %vm682, %v1963, %v1964
    %v1966 = vrot.slane %v1965, 2
    %v1967 = vrot.slane %v376, 2
    %v1968 = vsel %vm672, %v119, %v625
    %v1969 = vsel %vm670, %v626, %v373
    %v1970 = vsel %vm674, %v1969, %v1968
    %v1971 = vrot.slane %v1970, 4
    %v1972 = vsel %vm672, %v276, %v627
    %v1973 = vsel %vm670, %v628, %v629
    %v1974 = vsel %vm674, %v1973, %v1972
    %v1975 = vrot.slane %v1974, 4
    %v1976 = vsel %vm670, %v120, %v630
    %v1977 = vsel %vm672, %v631, %v375
    %v1978 = vsel %vm674, %v1976, %v1977
    %v1979 = vsel %vm670, %v280, %v632
    %v1980 = vsel %vm672, %v633, %v634
    %v1981 = vsel %vm674, %v1979, %v1980
    %v1982 = vsel %vm679, %v120, %v630
    %v1983 = vsel %vm293, %v375, %v631
    %v1984 = vsel %vm682, %v1982, %v1983
    %v1985 = vrot.slane %v1984, 2
    %v1986 = vsel %vm679, %v280, %v632
    %v1987 = vsel %vm293, %v634, %v633
    %v1988 = vsel %vm682, %v1986, %v1987
    %v1989 = vrot.slane %v1988, 2
    %v1990 = vrot.slane %v380, 2
    %v1991 = vsel %vm672, %v120, %v630
    %v1992 = vsel %vm670, %v631, %v375
    %v1993 = vsel %vm674, %v1992, %v1991
    %v1994 = vrot.slane %v1993, 4
    %v1995 = vsel %vm672, %v280, %v632
    %v1996 = vsel %vm670, %v633, %v634
    %v1997 = vsel %vm674, %v1996, %v1995
    %v1998 = vrot.slane %v1997, 4
    %v1999 = vsel %vm293, %v630, %v120
    %v2000 = vsel %vm679, %v631, %v375
    %v2001 = vsel %vm682, %v2000, %v1999
    %v2002 = vrot.slane %v2001, 6
    %v2003 = vsel %vm293, %v632, %v280
    %v2004 = vsel %vm679, %v633, %v634
    %v2005 = vsel %vm682, %v2004, %v2003
    %v2006 = vrot.slane %v2005, 6
    %v2007 = vsel %vm670, %v121, %v635
    %v2008 = vsel %vm672, %v636, %v376
    %v2009 = vsel %vm674, %v2007, %v2008
    %v2010 = vsel %vm670, %v279, %v637
    %v2011 = vsel %vm672, %v638, %v639
    %v2012 = vsel %vm674, %v2010, %v2011
    %v2013 = vsel %vm679, %v121, %v635
    %v2014 = vsel %vm293, %v376, %v636
    %v2015 = vsel %vm682, %v2013, %v2014
    %v2016 = vrot.slane %v2015, 2
    %v2017 = vsel %vm679, %v279, %v637
    %v2018 = vsel %vm293, %v639, %v638
    %v2019 = vsel %vm682, %v2017, %v2018
    %v2020 = vrot.slane %v2019, 2
    %v2021 = vrot.slane %v379, 2
    %v2022 = vsel %vm672, %v121, %v635
    %v2023 = vsel %vm670, %v636, %v376
    %v2024 = vsel %vm674, %v2023, %v2022
    %v2025 = vrot.slane %v2024, 4
    %v2026 = vsel %vm672, %v279, %v637
    %v2027 = vsel %vm670, %v638, %v639
    %v2028 = vsel %vm674, %v2027, %v2026
    %v2029 = vrot.slane %v2028, 4
    %v2030 = vsel %vm670, %v122, %v640
    %v2031 = vsel %vm672, %v641, %v378
    %v2032 = vsel %vm674, %v2030, %v2031
    %v2033 = vsel %vm670, %v283, %v642
    %v2034 = vsel %vm672, %v643, %v644
    %v2035 = vsel %vm674, %v2033, %v2034
    %v2036 = vsel %vm679, %v122, %v640
    %v2037 = vsel %vm293, %v378, %v641
    %v2038 = vsel %vm682, %v2036, %v2037
    %v2039 = vrot.slane %v2038, 2
    %v2040 = vsel %vm679, %v283, %v642
    %v2041 = vsel %vm293, %v644, %v643
    %v2042 = vsel %vm682, %v2040, %v2041
    %v2043 = vrot.slane %v2042, 2
    %v2044 = vrot.slane %v383, 2
    %v2045 = vsel %vm672, %v122, %v640
    %v2046 = vsel %vm670, %v641, %v378
    %v2047 = vsel %vm674, %v2046, %v2045
    %v2048 = vrot.slane %v2047, 4
    %v2049 = vsel %vm672, %v283, %v642
    %v2050 = vsel %vm670, %v643, %v644
    %v2051 = vsel %vm674, %v2050, %v2049
    %v2052 = vrot.slane %v2051, 4
    %v2053 = vsel %vm293, %v640, %v122
    %v2054 = vsel %vm679, %v641, %v378
    %v2055 = vsel %vm682, %v2054, %v2053
    %v2056 = vrot.slane %v2055, 6
    %v2057 = vsel %vm293, %v642, %v283
    %v2058 = vsel %vm679, %v643, %v644
    %v2059 = vsel %vm682, %v2058, %v2057
    %v2060 = vrot.slane %v2059, 6
    %v2061 = vsel %vm670, %v123, %v645
    %v2062 = vsel %vm672, %v646, %v379
    %v2063 = vsel %vm674, %v2061, %v2062
    %v2064 = vsel %vm670, %v282, %v647
    %v2065 = vsel %vm672, %v648, %v649
    %v2066 = vsel %vm674, %v2064, %v2065
    %v2067 = vsel %vm679, %v123, %v645
    %v2068 = vsel %vm293, %v379, %v646
    %v2069 = vsel %vm682, %v2067, %v2068
    %v2070 = vrot.slane %v2069, 2
    %v2071 = vsel %vm679, %v282, %v647
    %v2072 = vsel %vm293, %v649, %v648
    %v2073 = vsel %vm682, %v2071, %v2072
    %v2074 = vrot.slane %v2073, 2
    %v2075 = vrot.slane %v382, 2
    %v2076 = vsel %vm672, %v123, %v645
    %v2077 = vsel %vm670, %v646, %v379
    %v2078 = vsel %vm674, %v2077, %v2076
    %v2079 = vrot.slane %v2078, 4
    %v2080 = vsel %vm672, %v282, %v647
    %v2081 = vsel %vm670, %v648, %v649
    %v2082 = vsel %vm674, %v2081, %v2080
    %v2083 = vrot.slane %v2082, 4
    %v2084 = vsel %vm670, %v124, %v650
    %v2085 = vsel %vm672, %v651, %v381
    %v2086 = vsel %vm674, %v2084, %v2085
    %v2087 = vsel %vm670, %v286, %v652
    %v2088 = vsel %vm672, %v653, %v654
    %v2089 = vsel %vm674, %v2087, %v2088
    %v2090 = vsel %vm679, %v124, %v650
    %v2091 = vsel %vm293, %v381, %v651
    %v2092 = vsel %vm682, %v2090, %v2091
    %v2093 = vrot.slane %v2092, 2
    %v2094 = vsel %vm679, %v286, %v652
    %v2095 = vsel %vm293, %v654, %v653
    %v2096 = vsel %vm682, %v2094, %v2095
    %v2097 = vrot.slane %v2096, 2
    %v2098 = vrot.slane %v386, 2
    %v2099 = vsel %vm672, %v124, %v650
    %v2100 = vsel %vm670, %v651, %v381
    %v2101 = vsel %vm674, %v2100, %v2099
    %v2102 = vrot.slane %v2101, 4
    %v2103 = vsel %vm672, %v286, %v652
    %v2104 = vsel %vm670, %v653, %v654
    %v2105 = vsel %vm674, %v2104, %v2103
    %v2106 = vrot.slane %v2105, 4
    %v2107 = vrot.slane %v386, 4
    %v2108 = vsel %vm293, %v650, %v124
    %v2109 = vsel %vm679, %v651, %v381
    %v2110 = vsel %vm682, %v2109, %v2108
    %v2111 = vrot.slane %v2110, 6
    %v2112 = vsel %vm293, %v652, %v286
    %v2113 = vsel %vm679, %v653, %v654
    %v2114 = vsel %vm682, %v2113, %v2112
    %v2115 = vrot.slane %v2114, 6
    %v2116 = vsel %vm670, %v125, %v655
    %v2117 = vsel %vm672, %v656, %v382
    %v2118 = vsel %vm674, %v2116, %v2117
    %v2119 = vsel %vm670, %v285, %v657
    %v2120 = vsel %vm672, %v658, %v659
    %v2121 = vsel %vm674, %v2119, %v2120
    %v2122 = vsel %vm679, %v125, %v655
    %v2123 = vsel %vm293, %v382, %v656
    %v2124 = vsel %vm682, %v2122, %v2123
    %v2125 = vrot.slane %v2124, 2
    %v2126 = vsel %vm679, %v285, %v657
    %v2127 = vsel %vm293, %v659, %v658
    %v2128 = vsel %vm682, %v2126, %v2127
    %v2129 = vrot.slane %v2128, 2
    %v2130 = vrot.slane %v385, 2
    %v2131 = vsel %vm672, %v125, %v655
    %v2132 = vsel %vm670, %v656, %v382
    %v2133 = vsel %vm674, %v2132, %v2131
    %v2134 = vrot.slane %v2133, 4
    %v2135 = vsel %vm672, %v285, %v657
    %v2136 = vsel %vm670, %v658, %v659
    %v2137 = vsel %vm674, %v2136, %v2135
    %v2138 = vrot.slane %v2137, 4
    %v2139 = vrot.slane %v385, 4
    %v2140 = vsel %vm670, %v126, %v660
    %v2141 = vsel %vm672, %v661, %v384
    %v2142 = vsel %vm674, %v2140, %v2141
    %v2143 = vsel %vm670, %v289, %v662
    %v2144 = vsel %vm672, %v663, %v664
    %v2145 = vsel %vm674, %v2143, %v2144
    %v2146 = vsel %vm679, %v126, %v660
    %v2147 = vsel %vm293, %v384, %v661
    %v2148 = vsel %vm682, %v2146, %v2147
    %v2149 = vrot.slane %v2148, 2
    %v2150 = vsel %vm679, %v289, %v662
    %v2151 = vsel %vm293, %v664, %v663
    %v2152 = vsel %vm682, %v2150, %v2151
    %v2153 = vrot.slane %v2152, 2
    %v2154 = vrot.slane %v389, 2
    %v2155 = vsel %vm672, %v126, %v660
    %v2156 = vsel %vm670, %v661, %v384
    %v2157 = vsel %vm674, %v2156, %v2155
    %v2158 = vrot.slane %v2157, 4
    %v2159 = vsel %vm672, %v289, %v662
    %v2160 = vsel %vm670, %v663, %v664
    %v2161 = vsel %vm674, %v2160, %v2159
    %v2162 = vrot.slane %v2161, 4
    %v2163 = vrot.slane %v389, 4
    %v2164 = vsel %vm293, %v660, %v126
    %v2165 = vsel %vm679, %v661, %v384
    %v2166 = vsel %vm682, %v2165, %v2164
    %v2167 = vrot.slane %v2166, 6
    %v2168 = vsel %vm293, %v662, %v289
    %v2169 = vsel %vm679, %v663, %v664
    %v2170 = vsel %vm682, %v2169, %v2168
    %v2171 = vrot.slane %v2170, 6
    %v2172 = vrot.slane %v389, 6
    %v2173 = vsel %vm670, %v127, %v665
    %v2174 = vsel %vm672, %v666, %v385
    %v2175 = vsel %vm674, %v2173, %v2174
    %v2176 = vsel %vm670, %v288, %v667
    %v2177 = vsel %vm672, %v668, %v669
    %v2178 = vsel %vm674, %v2176, %v2177
    %v2179 = vsel %vm679, %v127, %v665
    %v2180 = vsel %vm293, %v385, %v666
    %v2181 = vsel %vm682, %v2179, %v2180
    %v2182 = vrot.slane %v2181, 2
    %v2183 = vsel %vm679, %v288, %v667
    %v2184 = vsel %vm293, %v669, %v668
    %v2185 = vsel %vm682, %v2183, %v2184
    %v2186 = vrot.slane %v2185, 2
    %v2187 = vrot.slane %v388, 2
    %v2188 = vsel %vm672, %v127, %v665
    %v2189 = vsel %vm670, %v666, %v385
    %v2190 = vsel %vm674, %v2189, %v2188
    %v2191 = vrot.slane %v2190, 4
    %v2192 = vsel %vm672, %v288, %v667
    %v2193 = vsel %vm670, %v668, %v669
    %v2194 = vsel %vm674, %v2193, %v2192
    %v2195 = vrot.slane %v2194, 4
    %v2196 = vrot.slane %v388, 4
    %2197 = vst [vmem:[#allocation1] ss:$4 sm:$0xff] %v675
    %s2198 = scalar_lea.vmem [#allocation1], 1
    %2199 = vst [vmem:[%s2198] ss:$4 sm:$0xff] %v684
    %s2200 = scalar_lea.vmem [#allocation1], 2
    %2201 = vst [vmem:[%s2200] ss:$4 sm:$0xff] %v693
    %s2202 = scalar_lea.vmem [#allocation1], 3
    %2203 = vst [vmem:[%s2202] ss:$4 sm:$0xff] %v701
    %s2204 = scalar_lea.vmem [#allocation1], 32
    %2205 = vst [vmem:[%s2204] ss:$4 sm:$0xff] %v678
    %s2206 = scalar_lea.vmem [#allocation1], 33
    %2207 = vst [vmem:[%s2206] ss:$4 sm:$0xff] %v688
    %s2208 = scalar_lea.vmem [#allocation1], 34
    %2209 = vst [vmem:[%s2208] ss:$4 sm:$0xff] %v697
    %s2210 = scalar_lea.vmem [#allocation1], 35
    %2211 = vst [vmem:[%s2210] ss:$4 sm:$0xff] %v705
    %v2212 = vld.sshfl [vmem:[#allocation1] sm:$0xff pattern:$0x73625140]
    %v2213 = vld.sshfl [vmem:[#allocation1 + $0x8] sm:$0xff pattern:$0x73625140]
    %v2214 = vld.sshfl [vmem:[#allocation1 + $0x10] sm:$0xff pattern:$0x73625140]
    %v2215 = vld.sshfl [vmem:[#allocation1 + $0x18] sm:$0xff pattern:$0x73625140]
    %v2216 = vld.sshfl [vmem:[#allocation1 + $0x20] sm:$0xff pattern:$0x73625140]
    %v2217 = vld.sshfl [vmem:[#allocation1 + $0x28] sm:$0xff pattern:$0x73625140]
    %v2218 = vld.sshfl [vmem:[#allocation1 + $0x30] sm:$0xff pattern:$0x73625140]
    %v2219 = vld.sshfl [vmem:[#allocation1 + $0x38] sm:$0xff pattern:$0x73625140]
    %2220 = vst [vmem:[#allocation1] ss:$4 sm:$0xff] %v302
    %2221 = vst [vmem:[%s2198] ss:$4 sm:$0xff] %v689
    %2222 = vst [vmem:[%s2200] ss:$4 sm:$0xff] %v411
    %2223 = vst [vmem:[%s2202] ss:$4 sm:$0xff] %v402
    %2224 = vst [vmem:[%s2204] ss:$4 sm:$0xff] %v708
    %2225 = vst [vmem:[%s2206] ss:$4 sm:$0xff] %v715
    %2226 = vst [vmem:[%s2208] ss:$4 sm:$0xff] %v724
    %2227 = vst [vmem:[%s2210] ss:$4 sm:$0xff] %v731
    %v2228 = vld.sshfl [vmem:[#allocation1] sm:$0xff pattern:$0x73625140]
    %v2229 = vld.sshfl [vmem:[#allocation1 + $0x20] sm:$0xff pattern:$0x73625140]
    %v2230 = vld.sshfl [vmem:[#allocation1 + $0x28] sm:$0xff pattern:$0x73625140]
    %v2231 = vld.sshfl [vmem:[#allocation1 + $0x30] sm:$0xff pattern:$0x73625140]
    %v2232 = vld.sshfl [vmem:[#allocation1 + $0x38] sm:$0xff pattern:$0x73625140]
    %2233 = vst [vmem:[#allocation1] ss:$4 sm:$0xff] %v711
    %2234 = vst [vmem:[%s2198] ss:$4 sm:$0xff] %v719
    %2235 = vst [vmem:[%s2200] ss:$4 sm:$0xff] %v728
    %2236 = vst [vmem:[%s2202] ss:$4 sm:$0xff] %v734
    %2237 = vst [vmem:[%s2204] ss:$4 sm:$0xff] %v301
    %2238 = vst [vmem:[%s2206] ss:$4 sm:$0xff] %v720
    %2239 = vst [vmem:[%s2208] ss:$4 sm:$0xff] %v416
    %2240 = vst [vmem:[%s2210] ss:$4 sm:$0xff] %v305
    %v2241 = vld.sshfl [vmem:[#allocation1] sm:$0xff pattern:$0x73625140]
    %v2242 = vld.sshfl [vmem:[#allocation1 + $0x8] sm:$0xff pattern:$0x73625140]
    %v2243 = vld.sshfl [vmem:[#allocation1 + $0x10] sm:$0xff pattern:$0x73625140]
    %v2244 = vld.sshfl [vmem:[#allocation1 + $0x18] sm:$0xff pattern:$0x73625140]
    %v2245 = vld.sshfl [vmem:[#allocation1 + $0x20] sm:$0xff pattern:$0x73625140]
    %2246 = vst [vmem:[#allocation1] ss:$4 sm:$0xff] %v738
    %2247 = vst [vmem:[%s2198] ss:$4 sm:$0xff] %v747
    %2248 = vst [vmem:[%s2200] ss:$4 sm:$0xff] %v755
    %2249 = vst [vmem:[%s2202] ss:$4 sm:$0xff] %v762
    %2250 = vst [vmem:[%s2204] ss:$4 sm:$0xff] %v742
    %2251 = vst [vmem:[%s2206] ss:$4 sm:$0xff] %v751
    %2252 = vst [vmem:[%s2208] ss:$4 sm:$0xff] %v759
    %2253 = vst [vmem:[%s2210] ss:$4 sm:$0xff] %v765
    %v2254 = vld.sshfl [vmem:[#allocation1] sm:$0xff pattern:$0x73625140]
    %v2255 = vld.sshfl [vmem:[#allocation1 + $0x8] sm:$0xff pattern:$0x73625140]
    %v2256 = vld.sshfl [vmem:[#allocation1 + $0x10] sm:$0xff pattern:$0x73625140]
    %v2257 = vld.sshfl [vmem:[#allocation1 + $0x18] sm:$0xff pattern:$0x73625140]
    %v2258 = vld.sshfl [vmem:[#allocation1 + $0x20] sm:$0xff pattern:$0x73625140]
    %v2259 = vld.sshfl [vmem:[#allocation1 + $0x28] sm:$0xff pattern:$0x73625140]
    %v2260 = vld.sshfl [vmem:[#allocation1 + $0x30] sm:$0xff pattern:$0x73625140]
    %v2261 = vld.sshfl [vmem:[#allocation1 + $0x38] sm:$0xff pattern:$0x73625140]
    %2262 = vst [vmem:[#allocation1] ss:$4 sm:$0xff] %v743
    %2263 = vst [vmem:[%s2198] ss:$4 sm:$0xff] %v421
    %2264 = vst [vmem:[%s2200] ss:$4 sm:$0xff] %v412
    %2265 = vst [vmem:[%s2202] ss:$4 sm:$0xff] %v304
    %2266 = vst [vmem:[%s2204] ss:$4 sm:$0xff] %v769
    %2267 = vst [vmem:[%s2206] ss:$4 sm:$0xff] %v778
    %2268 = vst [vmem:[%s2208] ss:$4 sm:$0xff] %v785
    %2269 = vst [vmem:[%s2210] ss:$4 sm:$0xff] %v792
    %v2270 = vld.sshfl [vmem:[#allocation1] sm:$0xff pattern:$0x73625140]
    %v2271 = vld.sshfl [vmem:[#allocation1 + $0x20] sm:$0xff pattern:$0x73625140]
    %v2272 = vld.sshfl [vmem:[#allocation1 + $0x28] sm:$0xff pattern:$0x73625140]
    %v2273 = vld.sshfl [vmem:[#allocation1 + $0x30] sm:$0xff pattern:$0x73625140]
    %v2274 = vld.sshfl [vmem:[#allocation1 + $0x38] sm:$0xff pattern:$0x73625140]
    %2275 = vst [vmem:[#allocation1] ss:$4 sm:$0xff] %v773
    %2276 = vst [vmem:[%s2198] ss:$4 sm:$0xff] %v782
    %2277 = vst [vmem:[%s2200] ss:$4 sm:$0xff] %v788
    %2278 = vst [vmem:[%s2202] ss:$4 sm:$0xff] %v796
    %2279 = vst [vmem:[%s2204] ss:$4 sm:$0xff] %v774
    %2280 = vst [vmem:[%s2206] ss:$4 sm:$0xff] %v426
    %2281 = vst [vmem:[%s2208] ss:$4 sm:$0xff] %v308
    %2282 = vst [vmem:[%s2210] ss:$4 sm:$0xff] %v797
    %v2283 = vld.sshfl [vmem:[#allocation1] sm:$0xff pattern:$0x73625140]
    %v2284 = vld.sshfl [vmem:[#allocation1 + $0x8] sm:$0xff pattern:$0x73625140]
    %v2285 = vld.sshfl [vmem:[#allocation1 + $0x10] sm:$0xff pattern:$0x73625140]
    %v2286 = vld.sshfl [vmem:[#allocation1 + $0x18] sm:$0xff pattern:$0x73625140]
    %v2287 = vld.sshfl [vmem:[#allocation1 + $0x20] sm:$0xff pattern:$0x73625140]
    %2288 = vst [vmem:[#allocation1] ss:$4 sm:$0xff] %v801
    %2289 = vst [vmem:[%s2198] ss:$4 sm:$0xff] %v809
    %2290 = vst [vmem:[%s2200] ss:$4 sm:$0xff] %v816
    %2291 = vst [vmem:[%s2202] ss:$4 sm:$0xff] %v823
    %2292 = vst [vmem:[%s2204] ss:$4 sm:$0xff] %v805
    %2293 = vst [vmem:[%s2206] ss:$4 sm:$0xff] %v813
    %2294 = vst [vmem:[%s2208] ss:$4 sm:$0xff] %v819
    %2295 = vst [vmem:[%s2210] ss:$4 sm:$0xff] %v827
    %v2296 = vld.sshfl [vmem:[#allocation1] sm:$0xff pattern:$0x73625140]
    %v2297 = vld.sshfl [vmem:[#allocation1 + $0x8] sm:$0xff pattern:$0x73625140]
    %v2298 = vld.sshfl [vmem:[#allocation1 + $0x10] sm:$0xff pattern:$0x73625140]
    %v2299 = vld.sshfl [vmem:[#allocation1 + $0x18] sm:$0xff pattern:$0x73625140]
    %v2300 = vld.sshfl [vmem:[#allocation1 + $0x20] sm:$0xff pattern:$0x73625140]
    %v2301 = vld.sshfl [vmem:[#allocation1 + $0x28] sm:$0xff pattern:$0x73625140]
    %v2302 = vld.sshfl [vmem:[#allocation1 + $0x30] sm:$0xff pattern:$0x73625140]
    %v2303 = vld.sshfl [vmem:[#allocation1 + $0x38] sm:$0xff pattern:$0x73625140]
    %2304 = vst [vmem:[#allocation1] ss:$4 sm:$0xff] %v431
    %2305 = vst [vmem:[%s2198] ss:$4 sm:$0xff] %v422
    %2306 = vst [vmem:[%s2200] ss:$4 sm:$0xff] %v307
    %2307 = vst [vmem:[%s2202] ss:$4 sm:$0xff] %v828
    %2308 = vst [vmem:[%s2204] ss:$4 sm:$0xff] %v832
    %2309 = vst [vmem:[%s2206] ss:$4 sm:$0xff] %v839
    %2310 = vst [vmem:[%s2208] ss:$4 sm:$0xff] %v846
    %2311 = vst [vmem:[%s2210] ss:$4 sm:$0xff] %v855
    %v2312 = vld.sshfl [vmem:[#allocation1] sm:$0xff pattern:$0x73625140]
    %v2313 = vld.sshfl [vmem:[#allocation1 + $0x20] sm:$0xff pattern:$0x73625140]
    %v2314 = vld.sshfl [vmem:[#allocation1 + $0x28] sm:$0xff pattern:$0x73625140]
    %v2315 = vld.sshfl [vmem:[#allocation1 + $0x30] sm:$0xff pattern:$0x73625140]
    %v2316 = vld.sshfl [vmem:[#allocation1 + $0x38] sm:$0xff pattern:$0x73625140]
    %2317 = vst [vmem:[#allocation1] ss:$4 sm:$0xff] %v836
    %2318 = vst [vmem:[%s2198] ss:$4 sm:$0xff] %v842
    %2319 = vst [vmem:[%s2200] ss:$4 sm:$0xff] %v850
    %2320 = vst [vmem:[%s2202] ss:$4 sm:$0xff] %v859
    %2321 = vst [vmem:[%s2204] ss:$4 sm:$0xff] %v436
    %2322 = vst [vmem:[%s2206] ss:$4 sm:$0xff] %v311
    %2323 = vst [vmem:[%s2208] ss:$4 sm:$0xff] %v851
    %2324 = vst [vmem:[%s2210] ss:$4 sm:$0xff] %v441
    %v2325 = vld.sshfl [vmem:[#allocation1] sm:$0xff pattern:$0x73625140]
    %v2326 = vld.sshfl [vmem:[#allocation1 + $0x8] sm:$0xff pattern:$0x73625140]
    %v2327 = vld.sshfl [vmem:[#allocation1 + $0x10] sm:$0xff pattern:$0x73625140]
    %v2328 = vld.sshfl [vmem:[#allocation1 + $0x18] sm:$0xff pattern:$0x73625140]
    %v2329 = vld.sshfl [vmem:[#allocation1 + $0x20] sm:$0xff pattern:$0x73625140]
    %2330 = vst [vmem:[#allocation1] ss:$4 sm:$0xff] %v863
    %2331 = vst [vmem:[%s2198] ss:$4 sm:$0xff] %v870
    %2332 = vst [vmem:[%s2200] ss:$4 sm:$0xff] %v877
    %2333 = vst [vmem:[%s2202] ss:$4 sm:$0xff] %v886
    %2334 = vst [vmem:[%s2204] ss:$4 sm:$0xff] %v867
    %2335 = vst [vmem:[%s2206] ss:$4 sm:$0xff] %v873
    %2336 = vst [vmem:[%s2208] ss:$4 sm:$0xff] %v881
    %2337 = vst [vmem:[%s2210] ss:$4 sm:$0xff] %v890
    %v2338 = vld.sshfl [vmem:[#allocation1] sm:$0xff pattern:$0x73625140]
    %v2339 = vld.sshfl [vmem:[#allocation1 + $0x8] sm:$0xff pattern:$0x73625140]
    %v2340 = vld.sshfl [vmem:[#allocation1 + $0x10] sm:$0xff pattern:$0x73625140]
    %v2341 = vld.sshfl [vmem:[#allocation1 + $0x18] sm:$0xff pattern:$0x73625140]
    %v2342 = vld.sshfl [vmem:[#allocation1 + $0x20] sm:$0xff pattern:$0x73625140]
    %v2343 = vld.sshfl [vmem:[#allocation1 + $0x28] sm:$0xff pattern:$0x73625140]
    %v2344 = vld.sshfl [vmem:[#allocation1 + $0x30] sm:$0xff pattern:$0x73625140]
    %v2345 = vld.sshfl [vmem:[#allocation1 + $0x38] sm:$0xff pattern:$0x73625140]
    %2346 = vst [vmem:[#allocation1] ss:$4 sm:$0xff] %v432
    %2347 = vst [vmem:[%s2198] ss:$4 sm:$0xff] %v310
    %2348 = vst [vmem:[%s2200] ss:$4 sm:$0xff] %v882
    %2349 = vst [vmem:[%s2202] ss:$4 sm:$0xff] %v446
    %2350 = vst [vmem:[%s2204] ss:$4 sm:$0xff] %v893
    %2351 = vst [vmem:[%s2206] ss:$4 sm:$0xff] %v900
    %2352 = vst [vmem:[%s2208] ss:$4 sm:$0xff] %v909
    %2353 = vst [vmem:[%s2210] ss:$4 sm:$0xff] %v917
    %v2354 = vld.sshfl [vmem:[#allocation1] sm:$0xff pattern:$0x73625140]
    %v2355 = vld.sshfl [vmem:[#allocation1 + $0x20] sm:$0xff pattern:$0x73625140]
    %v2356 = vld.sshfl [vmem:[#allocation1 + $0x28] sm:$0xff pattern:$0x73625140]
    %v2357 = vld.sshfl [vmem:[#allocation1 + $0x30] sm:$0xff pattern:$0x73625140]
    %v2358 = vld.sshfl [vmem:[#allocation1 + $0x38] sm:$0xff pattern:$0x73625140]
    %2359 = vst [vmem:[#allocation1] ss:$4 sm:$0xff] %v896
    %2360 = vst [vmem:[%s2198] ss:$4 sm:$0xff] %v904
    %2361 = vst [vmem:[%s2200] ss:$4 sm:$0xff] %v913
    %2362 = vst [vmem:[%s2202] ss:$4 sm:$0xff] %v921
    %2363 = vst [vmem:[%s2204] ss:$4 sm:$0xff] %v314
    %2364 = vst [vmem:[%s2206] ss:$4 sm:$0xff] %v905
    %2365 = vst [vmem:[%s2208] ss:$4 sm:$0xff] %v451
    %2366 = vst [vmem:[%s2210] ss:$4 sm:$0xff] %v442
    %v2367 = vld.sshfl [vmem:[#allocation1] sm:$0xff pattern:$0x73625140]
    %v2368 = vld.sshfl [vmem:[#allocation1 + $0x8] sm:$0xff pattern:$0x73625140]
    %v2369 = vld.sshfl [vmem:[#allocation1 + $0x10] sm:$0xff pattern:$0x73625140]
    %v2370 = vld.sshfl [vmem:[#allocation1 + $0x18] sm:$0xff pattern:$0x73625140]
    %v2371 = vld.sshfl [vmem:[#allocation1 + $0x20] sm:$0xff pattern:$0x73625140]
    %2372 = vst [vmem:[#allocation1] ss:$4 sm:$0xff] %v924
    %2373 = vst [vmem:[%s2198] ss:$4 sm:$0xff] %v931
    %2374 = vst [vmem:[%s2200] ss:$4 sm:$0xff] %v940
    %2375 = vst [vmem:[%s2202] ss:$4 sm:$0xff] %v947
    %2376 = vst [vmem:[%s2204] ss:$4 sm:$0xff] %v927
    %2377 = vst [vmem:[%s2206] ss:$4 sm:$0xff] %v935
    %2378 = vst [vmem:[%s2208] ss:$4 sm:$0xff] %v944
    %2379 = vst [vmem:[%s2210] ss:$4 sm:$0xff] %v950
    %v2380 = vld.sshfl [vmem:[#allocation1] sm:$0xff pattern:$0x73625140]
    %v2381 = vld.sshfl [vmem:[#allocation1 + $0x8] sm:$0xff pattern:$0x73625140]
    %v2382 = vld.sshfl [vmem:[#allocation1 + $0x10] sm:$0xff pattern:$0x73625140]
    %v2383 = vld.sshfl [vmem:[#allocation1 + $0x18] sm:$0xff pattern:$0x73625140]
    %v2384 = vld.sshfl [vmem:[#allocation1 + $0x20] sm:$0xff pattern:$0x73625140]
    %v2385 = vld.sshfl [vmem:[#allocation1 + $0x28] sm:$0xff pattern:$0x73625140]
    %v2386 = vld.sshfl [vmem:[#allocation1 + $0x30] sm:$0xff pattern:$0x73625140]
    %v2387 = vld.sshfl [vmem:[#allocation1 + $0x38] sm:$0xff pattern:$0x73625140]
    %2388 = vst [vmem:[#allocation1] ss:$4 sm:$0xff] %v313
    %2389 = vst [vmem:[%s2198] ss:$4 sm:$0xff] %v936
    %2390 = vst [vmem:[%s2200] ss:$4 sm:$0xff] %v456
    %2391 = vst [vmem:[%s2202] ss:$4 sm:$0xff] %v317
    %2392 = vst [vmem:[%s2204] ss:$4 sm:$0xff] %v954
    %2393 = vst [vmem:[%s2206] ss:$4 sm:$0xff] %v963
    %2394 = vst [vmem:[%s2208] ss:$4 sm:$0xff] %v971
    %2395 = vst [vmem:[%s2210] ss:$4 sm:$0xff] %v978
    %v2396 = vld.sshfl [vmem:[#allocation1] sm:$0xff pattern:$0x73625140]
    %v2397 = vld.sshfl [vmem:[#allocation1 + $0x20] sm:$0xff pattern:$0x73625140]
    %v2398 = vld.sshfl [vmem:[#allocation1 + $0x28] sm:$0xff pattern:$0x73625140]
    %v2399 = vld.sshfl [vmem:[#allocation1 + $0x30] sm:$0xff pattern:$0x73625140]
    %v2400 = vld.sshfl [vmem:[#allocation1 + $0x38] sm:$0xff pattern:$0x73625140]
    %2401 = vst [vmem:[#allocation1] ss:$4 sm:$0xff] %v958
    %2402 = vst [vmem:[%s2198] ss:$4 sm:$0xff] %v967
    %2403 = vst [vmem:[%s2200] ss:$4 sm:$0xff] %v975
    %2404 = vst [vmem:[%s2202] ss:$4 sm:$0xff] %v981
    %2405 = vst [vmem:[%s2204] ss:$4 sm:$0xff] %v959
    %2406 = vst [vmem:[%s2206] ss:$4 sm:$0xff] %v461
    %2407 = vst [vmem:[%s2208] ss:$4 sm:$0xff] %v452
    %2408 = vst [vmem:[%s2210] ss:$4 sm:$0xff] %v316
    %v2409 = vld.sshfl [vmem:[#allocation1] sm:$0xff pattern:$0x73625140]
    %v2410 = vld.sshfl [vmem:[#allocation1 + $0x8] sm:$0xff pattern:$0x73625140]
    %v2411 = vld.sshfl [vmem:[#allocation1 + $0x10] sm:$0xff pattern:$0x73625140]
    %v2412 = vld.sshfl [vmem:[#allocation1 + $0x18] sm:$0xff pattern:$0x73625140]
    %v2413 = vld.sshfl [vmem:[#allocation1 + $0x20] sm:$0xff pattern:$0x73625140]
    %2414 = vst [vmem:[#allocation1] ss:$4 sm:$0xff] %v985
    %2415 = vst [vmem:[%s2198] ss:$4 sm:$0xff] %v994
    %2416 = vst [vmem:[%s2200] ss:$4 sm:$0xff] %v1001
    %2417 = vst [vmem:[%s2202] ss:$4 sm:$0xff] %v1008
    %2418 = vst [vmem:[%s2204] ss:$4 sm:$0xff] %v989
    %2419 = vst [vmem:[%s2206] ss:$4 sm:$0xff] %v998
    %2420 = vst [vmem:[%s2208] ss:$4 sm:$0xff] %v1004
    %2421 = vst [vmem:[%s2210] ss:$4 sm:$0xff] %v1012
    %v2422 = vld.sshfl [vmem:[#allocation1] sm:$0xff pattern:$0x73625140]
    %v2423 = vld.sshfl [vmem:[#allocation1 + $0x8] sm:$0xff pattern:$0x73625140]
    %v2424 = vld.sshfl [vmem:[#allocation1 + $0x10] sm:$0xff pattern:$0x73625140]
    %v2425 = vld.sshfl [vmem:[#allocation1 + $0x18] sm:$0xff pattern:$0x73625140]
    %v2426 = vld.sshfl [vmem:[#allocation1 + $0x20] sm:$0xff pattern:$0x73625140]
    %v2427 = vld.sshfl [vmem:[#allocation1 + $0x28] sm:$0xff pattern:$0x73625140]
    %v2428 = vld.sshfl [vmem:[#allocation1 + $0x30] sm:$0xff pattern:$0x73625140]
    %v2429 = vld.sshfl [vmem:[#allocation1 + $0x38] sm:$0xff pattern:$0x73625140]
    %2430 = vst [vmem:[#allocation1] ss:$4 sm:$0xff] %v990
    %2431 = vst [vmem:[%s2198] ss:$4 sm:$0xff] %v466
    %2432 = vst [vmem:[%s2200] ss:$4 sm:$0xff] %v320
    %2433 = vst [vmem:[%s2202] ss:$4 sm:$0xff] %v1013
    %2434 = vst [vmem:[%s2204] ss:$4 sm:$0xff] %v1017
    %2435 = vst [vmem:[%s2206] ss:$4 sm:$0xff] %v1025
    %2436 = vst [vmem:[%s2208] ss:$4 sm:$0xff] %v1032
    %2437 = vst [vmem:[%s2210] ss:$4 sm:$0xff] %v1039
    %v2438 = vld.sshfl [vmem:[#allocation1] sm:$0xff pattern:$0x73625140]
    %v2439 = vld.sshfl [vmem:[#allocation1 + $0x20] sm:$0xff pattern:$0x73625140]
    %v2440 = vld.sshfl [vmem:[#allocation1 + $0x28] sm:$0xff pattern:$0x73625140]
    %v2441 = vld.sshfl [vmem:[#allocation1 + $0x30] sm:$0xff pattern:$0x73625140]
    %v2442 = vld.sshfl [vmem:[#allocation1 + $0x38] sm:$0xff pattern:$0x73625140]
    %2443 = vst [vmem:[#allocation1] ss:$4 sm:$0xff] %v1021
    %2444 = vst [vmem:[%s2198] ss:$4 sm:$0xff] %v1029
    %2445 = vst [vmem:[%s2200] ss:$4 sm:$0xff] %v1035
    %2446 = vst [vmem:[%s2202] ss:$4 sm:$0xff] %v1043
    %2447 = vst [vmem:[%s2204] ss:$4 sm:$0xff] %v471
    %2448 = vst [vmem:[%s2206] ss:$4 sm:$0xff] %v462
    %2449 = vst [vmem:[%s2208] ss:$4 sm:$0xff] %v319
    %2450 = vst [vmem:[%s2210] ss:$4 sm:$0xff] %v1044
    %v2451 = vld.sshfl [vmem:[#allocation1] sm:$0xff pattern:$0x73625140]
    %v2452 = vld.sshfl [vmem:[#allocation1 + $0x8] sm:$0xff pattern:$0x73625140]
    %v2453 = vld.sshfl [vmem:[#allocation1 + $0x10] sm:$0xff pattern:$0x73625140]
    %v2454 = vld.sshfl [vmem:[#allocation1 + $0x18] sm:$0xff pattern:$0x73625140]
    %v2455 = vld.sshfl [vmem:[#allocation1 + $0x20] sm:$0xff pattern:$0x73625140]
    %2456 = vst [vmem:[#allocation1] ss:$4 sm:$0xff] %v1048
    %2457 = vst [vmem:[%s2198] ss:$4 sm:$0xff] %v1055
    %2458 = vst [vmem:[%s2200] ss:$4 sm:$0xff] %v1062
    %2459 = vst [vmem:[%s2202] ss:$4 sm:$0xff] %v1071
    %2460 = vst [vmem:[%s2204] ss:$4 sm:$0xff] %v1052
    %2461 = vst [vmem:[%s2206] ss:$4 sm:$0xff] %v1058
    %2462 = vst [vmem:[%s2208] ss:$4 sm:$0xff] %v1066
    %2463 = vst [vmem:[%s2210] ss:$4 sm:$0xff] %v1075
    %v2464 = vld.sshfl [vmem:[#allocation1] sm:$0xff pattern:$0x73625140]
    %v2465 = vld.sshfl [vmem:[#allocation1 + $0x8] sm:$0xff pattern:$0x73625140]
    %v2466 = vld.sshfl [vmem:[#allocation1 + $0x10] sm:$0xff pattern:$0x73625140]
    %v2467 = vld.sshfl [vmem:[#allocation1 + $0x18] sm:$0xff pattern:$0x73625140]
    %v2468 = vld.sshfl [vmem:[#allocation1 + $0x20] sm:$0xff pattern:$0x73625140]
    %v2469 = vld.sshfl [vmem:[#allocation1 + $0x28] sm:$0xff pattern:$0x73625140]
    %v2470 = vld.sshfl [vmem:[#allocation1 + $0x30] sm:$0xff pattern:$0x73625140]
    %v2471 = vld.sshfl [vmem:[#allocation1 + $0x38] sm:$0xff pattern:$0x73625140]
    %2472 = vst [vmem:[#allocation1] ss:$4 sm:$0xff] %v476
    %2473 = vst [vmem:[%s2198] ss:$4 sm:$0xff] %v323
    %2474 = vst [vmem:[%s2200] ss:$4 sm:$0xff] %v1067
    %2475 = vst [vmem:[%s2202] ss:$4 sm:$0xff] %v481
    %2476 = vst [vmem:[%s2204] ss:$4 sm:$0xff] %v1079
    %2477 = vst [vmem:[%s2206] ss:$4 sm:$0xff] %v1086
    %2478 = vst [vmem:[%s2208] ss:$4 sm:$0xff] %v1093
    %2479 = vst [vmem:[%s2210] ss:$4 sm:$0xff] %v1102
    %v2480 = vld.sshfl [vmem:[#allocation1] sm:$0xff pattern:$0x73625140]
    %v2481 = vld.sshfl [vmem:[#allocation1 + $0x20] sm:$0xff pattern:$0x73625140]
    %v2482 = vld.sshfl [vmem:[#allocation1 + $0x28] sm:$0xff pattern:$0x73625140]
    %v2483 = vld.sshfl [vmem:[#allocation1 + $0x30] sm:$0xff pattern:$0x73625140]
    %v2484 = vld.sshfl [vmem:[#allocation1 + $0x38] sm:$0xff pattern:$0x73625140]
    %2485 = vst [vmem:[#allocation1] ss:$4 sm:$0xff] %v1083
    %2486 = vst [vmem:[%s2198] ss:$4 sm:$0xff] %v1089
    %2487 = vst [vmem:[%s2200] ss:$4 sm:$0xff] %v1097
    %2488 = vst [vmem:[%s2202] ss:$4 sm:$0xff] %v1106
    %2489 = vst [vmem:[%s2204] ss:$4 sm:$0xff] %v472
    %2490 = vst [vmem:[%s2206] ss:$4 sm:$0xff] %v322
    %2491 = vst [vmem:[%s2208] ss:$4 sm:$0xff] %v1098
    %2492 = vst [vmem:[%s2210] ss:$4 sm:$0xff] %v486
    %v2493 = vld.sshfl [vmem:[#allocation1] sm:$0xff pattern:$0x73625140]
    %v2494 = vld.sshfl [vmem:[#allocation1 + $0x8] sm:$0xff pattern:$0x73625140]
    %v2495 = vld.sshfl [vmem:[#allocation1 + $0x10] sm:$0xff pattern:$0x73625140]
    %v2496 = vld.sshfl [vmem:[#allocation1 + $0x18] sm:$0xff pattern:$0x73625140]
    %v2497 = vld.sshfl [vmem:[#allocation1 + $0x20] sm:$0xff pattern:$0x73625140]
    %2498 = vst [vmem:[#allocation1] ss:$4 sm:$0xff] %v1109
    %2499 = vst [vmem:[%s2198] ss:$4 sm:$0xff] %v1116
    %2500 = vst [vmem:[%s2200] ss:$4 sm:$0xff] %v1125
    %2501 = vst [vmem:[%s2202] ss:$4 sm:$0xff] %v1133
    %2502 = vst [vmem:[%s2204] ss:$4 sm:$0xff] %v1112
    %2503 = vst [vmem:[%s2206] ss:$4 sm:$0xff] %v1120
    %2504 = vst [vmem:[%s2208] ss:$4 sm:$0xff] %v1129
    %2505 = vst [vmem:[%s2210] ss:$4 sm:$0xff] %v1137
    %v2506 = vld.sshfl [vmem:[#allocation1] sm:$0xff pattern:$0x73625140]
    %v2507 = vld.sshfl [vmem:[#allocation1 + $0x8] sm:$0xff pattern:$0x73625140]
    %v2508 = vld.sshfl [vmem:[#allocation1 + $0x10] sm:$0xff pattern:$0x73625140]
    %v2509 = vld.sshfl [vmem:[#allocation1 + $0x18] sm:$0xff pattern:$0x73625140]
    %v2510 = vld.sshfl [vmem:[#allocation1 + $0x20] sm:$0xff pattern:$0x73625140]
    %v2511 = vld.sshfl [vmem:[#allocation1 + $0x28] sm:$0xff pattern:$0x73625140]
    %v2512 = vld.sshfl [vmem:[#allocation1 + $0x30] sm:$0xff pattern:$0x73625140]
    %v2513 = vld.sshfl [vmem:[#allocation1 + $0x38] sm:$0xff pattern:$0x73625140]
    %2514 = vst [vmem:[#allocation1] ss:$4 sm:$0xff] %v326
    %2515 = vst [vmem:[%s2198] ss:$4 sm:$0xff] %v1121
    %2516 = vst [vmem:[%s2200] ss:$4 sm:$0xff] %v491
    %2517 = vst [vmem:[%s2202] ss:$4 sm:$0xff] %v482
    %2518 = vst [vmem:[%s2204] ss:$4 sm:$0xff] %v1140
    %2519 = vst [vmem:[%s2206] ss:$4 sm:$0xff] %v1147
    %2520 = vst [vmem:[%s2208] ss:$4 sm:$0xff] %v1156
    %2521 = vst [vmem:[%s2210] ss:$4 sm:$0xff] %v1163
    %v2522 = vld.sshfl [vmem:[#allocation1] sm:$0xff pattern:$0x73625140]
    %v2523 = vld.sshfl [vmem:[#allocation1 + $0x20] sm:$0xff pattern:$0x73625140]
    %v2524 = vld.sshfl [vmem:[#allocation1 + $0x28] sm:$0xff pattern:$0x73625140]
    %v2525 = vld.sshfl [vmem:[#allocation1 + $0x30] sm:$0xff pattern:$0x73625140]
    %v2526 = vld.sshfl [vmem:[#allocation1 + $0x38] sm:$0xff pattern:$0x73625140]
    %2527 = vst [vmem:[#allocation1] ss:$4 sm:$0xff] %v1143
    %2528 = vst [vmem:[%s2198] ss:$4 sm:$0xff] %v1151
    %2529 = vst [vmem:[%s2200] ss:$4 sm:$0xff] %v1160
    %2530 = vst [vmem:[%s2202] ss:$4 sm:$0xff] %v1166
    %2531 = vst [vmem:[%s2204] ss:$4 sm:$0xff] %v325
    %2532 = vst [vmem:[%s2206] ss:$4 sm:$0xff] %v1152
    %2533 = vst [vmem:[%s2208] ss:$4 sm:$0xff] %v496
    %2534 = vst [vmem:[%s2210] ss:$4 sm:$0xff] %v329
    %v2535 = vld.sshfl [vmem:[#allocation1] sm:$0xff pattern:$0x73625140]
    %v2536 = vld.sshfl [vmem:[#allocation1 + $0x8] sm:$0xff pattern:$0x73625140]
    %v2537 = vld.sshfl [vmem:[#allocation1 + $0x10] sm:$0xff pattern:$0x73625140]
    %v2538 = vld.sshfl [vmem:[#allocation1 + $0x18] sm:$0xff pattern:$0x73625140]
    %v2539 = vld.sshfl [vmem:[#allocation1 + $0x20] sm:$0xff pattern:$0x73625140]
    %2540 = vst [vmem:[#allocation1] ss:$4 sm:$0xff] %v1170
    %2541 = vst [vmem:[%s2198] ss:$4 sm:$0xff] %v1179
    %2542 = vst [vmem:[%s2200] ss:$4 sm:$0xff] %v1187
    %2543 = vst [vmem:[%s2202] ss:$4 sm:$0xff] %v1194
    %2544 = vst [vmem:[%s2204] ss:$4 sm:$0xff] %v1174
    %2545 = vst [vmem:[%s2206] ss:$4 sm:$0xff] %v1183
    %2546 = vst [vmem:[%s2208] ss:$4 sm:$0xff] %v1191
    %2547 = vst [vmem:[%s2210] ss:$4 sm:$0xff] %v1197
    %v2548 = vld.sshfl [vmem:[#allocation1] sm:$0xff pattern:$0x73625140]
    %v2549 = vld.sshfl [vmem:[#allocation1 + $0x8] sm:$0xff pattern:$0x73625140]
    %v2550 = vld.sshfl [vmem:[#allocation1 + $0x10] sm:$0xff pattern:$0x73625140]
    %v2551 = vld.sshfl [vmem:[#allocation1 + $0x18] sm:$0xff pattern:$0x73625140]
    %v2552 = vld.sshfl [vmem:[#allocation1 + $0x20] sm:$0xff pattern:$0x73625140]
    %v2553 = vld.sshfl [vmem:[#allocation1 + $0x28] sm:$0xff pattern:$0x73625140]
    %v2554 = vld.sshfl [vmem:[#allocation1 + $0x30] sm:$0xff pattern:$0x73625140]
    %v2555 = vld.sshfl [vmem:[#allocation1 + $0x38] sm:$0xff pattern:$0x73625140]
    %2556 = vst [vmem:[#allocation1] ss:$4 sm:$0xff] %v1175
    %2557 = vst [vmem:[%s2198] ss:$4 sm:$0xff] %v501
    %2558 = vst [vmem:[%s2200] ss:$4 sm:$0xff] %v492
    %2559 = vst [vmem:[%s2202] ss:$4 sm:$0xff] %v328
    %2560 = vst [vmem:[%s2204] ss:$4 sm:$0xff] %v1201
    %2561 = vst [vmem:[%s2206] ss:$4 sm:$0xff] %v1210
    %2562 = vst [vmem:[%s2208] ss:$4 sm:$0xff] %v1217
    %2563 = vst [vmem:[%s2210] ss:$4 sm:$0xff] %v1224
    %v2564 = vld.sshfl [vmem:[#allocation1] sm:$0xff pattern:$0x73625140]
    %v2565 = vld.sshfl [vmem:[#allocation1 + $0x20] sm:$0xff pattern:$0x73625140]
    %v2566 = vld.sshfl [vmem:[#allocation1 + $0x28] sm:$0xff pattern:$0x73625140]
    %v2567 = vld.sshfl [vmem:[#allocation1 + $0x30] sm:$0xff pattern:$0x73625140]
    %v2568 = vld.sshfl [vmem:[#allocation1 + $0x38] sm:$0xff pattern:$0x73625140]
    %2569 = vst [vmem:[#allocation1] ss:$4 sm:$0xff] %v1205
    %2570 = vst [vmem:[%s2198] ss:$4 sm:$0xff] %v1214
    %2571 = vst [vmem:[%s2200] ss:$4 sm:$0xff] %v1220
    %2572 = vst [vmem:[%s2202] ss:$4 sm:$0xff] %v1228
    %2573 = vst [vmem:[%s2204] ss:$4 sm:$0xff] %v1206
    %2574 = vst [vmem:[%s2206] ss:$4 sm:$0xff] %v506
    %2575 = vst [vmem:[%s2208] ss:$4 sm:$0xff] %v332
    %2576 = vst [vmem:[%s2210] ss:$4 sm:$0xff] %v1229
    %v2577 = vld.sshfl [vmem:[#allocation1] sm:$0xff pattern:$0x73625140]
    %v2578 = vld.sshfl [vmem:[#allocation1 + $0x8] sm:$0xff pattern:$0x73625140]
    %v2579 = vld.sshfl [vmem:[#allocation1 + $0x10] sm:$0xff pattern:$0x73625140]
    %v2580 = vld.sshfl [vmem:[#allocation1 + $0x18] sm:$0xff pattern:$0x73625140]
    %v2581 = vld.sshfl [vmem:[#allocation1 + $0x20] sm:$0xff pattern:$0x73625140]
    %2582 = vst [vmem:[#allocation1] ss:$4 sm:$0xff] %v1233
    %2583 = vst [vmem:[%s2198] ss:$4 sm:$0xff] %v1241
    %2584 = vst [vmem:[%s2200] ss:$4 sm:$0xff] %v1248
    %2585 = vst [vmem:[%s2202] ss:$4 sm:$0xff] %v1255
    %2586 = vst [vmem:[%s2204] ss:$4 sm:$0xff] %v1237
    %2587 = vst [vmem:[%s2206] ss:$4 sm:$0xff] %v1245
    %2588 = vst [vmem:[%s2208] ss:$4 sm:$0xff] %v1251
    %2589 = vst [vmem:[%s2210] ss:$4 sm:$0xff] %v1259
    %v2590 = vld.sshfl [vmem:[#allocation1] sm:$0xff pattern:$0x73625140]
    %v2591 = vld.sshfl [vmem:[#allocation1 + $0x8] sm:$0xff pattern:$0x73625140]
    %v2592 = vld.sshfl [vmem:[#allocation1 + $0x10] sm:$0xff pattern:$0x73625140]
    %v2593 = vld.sshfl [vmem:[#allocation1 + $0x18] sm:$0xff pattern:$0x73625140]
    %v2594 = vld.sshfl [vmem:[#allocation1 + $0x20] sm:$0xff pattern:$0x73625140]
    %v2595 = vld.sshfl [vmem:[#allocation1 + $0x28] sm:$0xff pattern:$0x73625140]
    %v2596 = vld.sshfl [vmem:[#allocation1 + $0x30] sm:$0xff pattern:$0x73625140]
    %v2597 = vld.sshfl [vmem:[#allocation1 + $0x38] sm:$0xff pattern:$0x73625140]
    %2598 = vst [vmem:[#allocation1] ss:$4 sm:$0xff] %v511
    %2599 = vst [vmem:[%s2198] ss:$4 sm:$0xff] %v502
    %2600 = vst [vmem:[%s2200] ss:$4 sm:$0xff] %v331
    %2601 = vst [vmem:[%s2202] ss:$4 sm:$0xff] %v1260
    %2602 = vst [vmem:[%s2204] ss:$4 sm:$0xff] %v1264
    %2603 = vst [vmem:[%s2206] ss:$4 sm:$0xff] %v1271
    %2604 = vst [vmem:[%s2208] ss:$4 sm:$0xff] %v1278
    %2605 = vst [vmem:[%s2210] ss:$4 sm:$0xff] %v1287
    %v2606 = vld.sshfl [vmem:[#allocation1] sm:$0xff pattern:$0x73625140]
    %v2607 = vld.sshfl [vmem:[#allocation1 + $0x20] sm:$0xff pattern:$0x73625140]
    %v2608 = vld.sshfl [vmem:[#allocation1 + $0x28] sm:$0xff pattern:$0x73625140]
    %v2609 = vld.sshfl [vmem:[#allocation1 + $0x30] sm:$0xff pattern:$0x73625140]
    %v2610 = vld.sshfl [vmem:[#allocation1 + $0x38] sm:$0xff pattern:$0x73625140]
    %2611 = vst [vmem:[#allocation1] ss:$4 sm:$0xff] %v1268
    %2612 = vst [vmem:[%s2198] ss:$4 sm:$0xff] %v1274
    %2613 = vst [vmem:[%s2200] ss:$4 sm:$0xff] %v1282
    %2614 = vst [vmem:[%s2202] ss:$4 sm:$0xff] %v1291
    %2615 = vst [vmem:[%s2204] ss:$4 sm:$0xff] %v516
    %2616 = vst [vmem:[%s2206] ss:$4 sm:$0xff] %v335
    %2617 = vst [vmem:[%s2208] ss:$4 sm:$0xff] %v1283
    %2618 = vst [vmem:[%s2210] ss:$4 sm:$0xff] %v521
    %v2619 = vld.sshfl [vmem:[#allocation1] sm:$0xff pattern:$0x73625140]
    %v2620 = vld.sshfl [vmem:[#allocation1 + $0x8] sm:$0xff pattern:$0x73625140]
    %v2621 = vld.sshfl [vmem:[#allocation1 + $0x10] sm:$0xff pattern:$0x73625140]
    %v2622 = vld.sshfl [vmem:[#allocation1 + $0x18] sm:$0xff pattern:$0x73625140]
    %v2623 = vld.sshfl [vmem:[#allocation1 + $0x20] sm:$0xff pattern:$0x73625140]
    %2624 = vst [vmem:[#allocation1] ss:$4 sm:$0xff] %v1295
    %2625 = vst [vmem:[%s2198] ss:$4 sm:$0xff] %v1302
    %2626 = vst [vmem:[%s2200] ss:$4 sm:$0xff] %v1309
    %2627 = vst [vmem:[%s2202] ss:$4 sm:$0xff] %v1318
    %2628 = vst [vmem:[%s2204] ss:$4 sm:$0xff] %v1299
    %2629 = vst [vmem:[%s2206] ss:$4 sm:$0xff] %v1305
    %2630 = vst [vmem:[%s2208] ss:$4 sm:$0xff] %v1313
    %2631 = vst [vmem:[%s2210] ss:$4 sm:$0xff] %v1322
    %v2632 = vld.sshfl [vmem:[#allocation1] sm:$0xff pattern:$0x73625140]
    %v2633 = vld.sshfl [vmem:[#allocation1 + $0x8] sm:$0xff pattern:$0x73625140]
    %v2634 = vld.sshfl [vmem:[#allocation1 + $0x10] sm:$0xff pattern:$0x73625140]
    %v2635 = vld.sshfl [vmem:[#allocation1 + $0x18] sm:$0xff pattern:$0x73625140]
    %v2636 = vld.sshfl [vmem:[#allocation1 + $0x20] sm:$0xff pattern:$0x73625140]
    %v2637 = vld.sshfl [vmem:[#allocation1 + $0x28] sm:$0xff pattern:$0x73625140]
    %v2638 = vld.sshfl [vmem:[#allocation1 + $0x30] sm:$0xff pattern:$0x73625140]
    %v2639 = vld.sshfl [vmem:[#allocation1 + $0x38] sm:$0xff pattern:$0x73625140]
    %2640 = vst [vmem:[#allocation1] ss:$4 sm:$0xff] %v512
    %2641 = vst [vmem:[%s2198] ss:$4 sm:$0xff] %v334
    %2642 = vst [vmem:[%s2200] ss:$4 sm:$0xff] %v1314
    %2643 = vst [vmem:[%s2202] ss:$4 sm:$0xff] %v526
    %2644 = vst [vmem:[%s2204] ss:$4 sm:$0xff] %v1325
    %2645 = vst [vmem:[%s2206] ss:$4 sm:$0xff] %v1332
    %2646 = vst [vmem:[%s2208] ss:$4 sm:$0xff] %v1341
    %2647 = vst [vmem:[%s2210] ss:$4 sm:$0xff] %v1350
    %v2648 = vld.sshfl [vmem:[#allocation1] sm:$0xff pattern:$0x73625140]
    %v2649 = vld.sshfl [vmem:[#allocation1 + $0x20] sm:$0xff pattern:$0x73625140]
    %v2650 = vld.sshfl [vmem:[#allocation1 + $0x28] sm:$0xff pattern:$0x73625140]
    %v2651 = vld.sshfl [vmem:[#allocation1 + $0x30] sm:$0xff pattern:$0x73625140]
    %v2652 = vld.sshfl [vmem:[#allocation1 + $0x38] sm:$0xff pattern:$0x73625140]
    %2653 = vst [vmem:[#allocation1] ss:$4 sm:$0xff] %v1328
    %2654 = vst [vmem:[%s2198] ss:$4 sm:$0xff] %v1336
    %2655 = vst [vmem:[%s2200] ss:$4 sm:$0xff] %v1345
    %2656 = vst [vmem:[%s2202] ss:$4 sm:$0xff] %v1354
    %2657 = vst [vmem:[%s2204] ss:$4 sm:$0xff] %v338
    %2658 = vst [vmem:[%s2206] ss:$4 sm:$0xff] %v1337
    %2659 = vst [vmem:[%s2208] ss:$4 sm:$0xff] %v1346
    %2660 = vst [vmem:[%s2210] ss:$4 sm:$0xff] %v522
    %v2661 = vld.sshfl [vmem:[#allocation1] sm:$0xff pattern:$0x73625140]
    %v2662 = vld.sshfl [vmem:[#allocation1 + $0x8] sm:$0xff pattern:$0x73625140]
    %v2663 = vld.sshfl [vmem:[#allocation1 + $0x10] sm:$0xff pattern:$0x73625140]
    %v2664 = vld.sshfl [vmem:[#allocation1 + $0x18] sm:$0xff pattern:$0x73625140]
    %v2665 = vld.sshfl [vmem:[#allocation1 + $0x20] sm:$0xff pattern:$0x73625140]
    %2666 = vst [vmem:[#allocation1] ss:$4 sm:$0xff] %v1357
    %2667 = vst [vmem:[%s2198] ss:$4 sm:$0xff] %v1364
    %2668 = vst [vmem:[%s2200] ss:$4 sm:$0xff] %v1373
    %2669 = vst [vmem:[%s2202] ss:$4 sm:$0xff] %v1381
    %2670 = vst [vmem:[%s2204] ss:$4 sm:$0xff] %v1360
    %2671 = vst [vmem:[%s2206] ss:$4 sm:$0xff] %v1368
    %2672 = vst [vmem:[%s2208] ss:$4 sm:$0xff] %v1377
    %2673 = vst [vmem:[%s2210] ss:$4 sm:$0xff] %v1384
    %v2674 = vld.sshfl [vmem:[#allocation1] sm:$0xff pattern:$0x73625140]
    %v2675 = vld.sshfl [vmem:[#allocation1 + $0x8] sm:$0xff pattern:$0x73625140]
    %v2676 = vld.sshfl [vmem:[#allocation1 + $0x10] sm:$0xff pattern:$0x73625140]
    %v2677 = vld.sshfl [vmem:[#allocation1 + $0x18] sm:$0xff pattern:$0x73625140]
    %v2678 = vld.sshfl [vmem:[#allocation1 + $0x20] sm:$0xff pattern:$0x73625140]
    %v2679 = vld.sshfl [vmem:[#allocation1 + $0x28] sm:$0xff pattern:$0x73625140]
    %v2680 = vld.sshfl [vmem:[#allocation1 + $0x30] sm:$0xff pattern:$0x73625140]
    %v2681 = vld.sshfl [vmem:[#allocation1 + $0x38] sm:$0xff pattern:$0x73625140]
    %2682 = vst [vmem:[#allocation1] ss:$4 sm:$0xff] %v337
    %2683 = vst [vmem:[%s2198] ss:$4 sm:$0xff] %v1369
    %2684 = vst [vmem:[%s2200] ss:$4 sm:$0xff] %v1378
    %2685 = vst [vmem:[%s2202] ss:$4 sm:$0xff] %v341
    %2686 = vst [vmem:[%s2204] ss:$4 sm:$0xff] %v1388
    %2687 = vst [vmem:[%s2206] ss:$4 sm:$0xff] %v1397
    %2688 = vst [vmem:[%s2208] ss:$4 sm:$0xff] %v1406
    %2689 = vst [vmem:[%s2210] ss:$4 sm:$0xff] %v1414
    %v2690 = vld.sshfl [vmem:[#allocation1] sm:$0xff pattern:$0x73625140]
    %v2691 = vld.sshfl [vmem:[#allocation1 + $0x20] sm:$0xff pattern:$0x73625140]
    %v2692 = vld.sshfl [vmem:[#allocation1 + $0x28] sm:$0xff pattern:$0x73625140]
    %v2693 = vld.sshfl [vmem:[#allocation1 + $0x30] sm:$0xff pattern:$0x73625140]
    %v2694 = vld.sshfl [vmem:[#allocation1 + $0x38] sm:$0xff pattern:$0x73625140]
    %2695 = vst [vmem:[#allocation1] ss:$4 sm:$0xff] %v1392
    %2696 = vst [vmem:[%s2198] ss:$4 sm:$0xff] %v1401
    %2697 = vst [vmem:[%s2200] ss:$4 sm:$0xff] %v1410
    %2698 = vst [vmem:[%s2202] ss:$4 sm:$0xff] %v1417
    %2699 = vst [vmem:[%s2204] ss:$4 sm:$0xff] %v1393
    %2700 = vst [vmem:[%s2206] ss:$4 sm:$0xff] %v1402
    %2701 = vst [vmem:[%s2208] ss:$4 sm:$0xff] %v1411
    %2702 = vst [vmem:[%s2210] ss:$4 sm:$0xff] %v340
    %v2703 = vld.sshfl [vmem:[#allocation1] sm:$0xff pattern:$0x73625140]
    %v2704 = vld.sshfl [vmem:[#allocation1 + $0x8] sm:$0xff pattern:$0x73625140]
    %v2705 = vld.sshfl [vmem:[#allocation1 + $0x10] sm:$0xff pattern:$0x73625140]
    %v2706 = vld.sshfl [vmem:[#allocation1 + $0x18] sm:$0xff pattern:$0x73625140]
    %v2707 = vld.sshfl [vmem:[#allocation1 + $0x20] sm:$0xff pattern:$0x73625140]
    %2708 = vst [vmem:[#allocation1] ss:$4 sm:$0xff] %v1421
    %2709 = vst [vmem:[%s2198] ss:$4 sm:$0xff] %v1430
    %2710 = vst [vmem:[%s2200] ss:$4 sm:$0xff] %v1438
    %2711 = vst [vmem:[%s2202] ss:$4 sm:$0xff] %v1445
    %2712 = vst [vmem:[%s2204] ss:$4 sm:$0xff] %v1425
    %2713 = vst [vmem:[%s2206] ss:$4 sm:$0xff] %v1434
    %2714 = vst [vmem:[%s2208] ss:$4 sm:$0xff] %v1441
    %2715 = vst [vmem:[%s2210] ss:$4 sm:$0xff] %v1449
    %v2716 = vld.sshfl [vmem:[#allocation1] sm:$0xff pattern:$0x73625140]
    %v2717 = vld.sshfl [vmem:[#allocation1 + $0x8] sm:$0xff pattern:$0x73625140]
    %v2718 = vld.sshfl [vmem:[#allocation1 + $0x10] sm:$0xff pattern:$0x73625140]
    %v2719 = vld.sshfl [vmem:[#allocation1 + $0x18] sm:$0xff pattern:$0x73625140]
    %v2720 = vld.sshfl [vmem:[#allocation1 + $0x20] sm:$0xff pattern:$0x73625140]
    %v2721 = vld.sshfl [vmem:[#allocation1 + $0x28] sm:$0xff pattern:$0x73625140]
    %v2722 = vld.sshfl [vmem:[#allocation1 + $0x30] sm:$0xff pattern:$0x73625140]
    %v2723 = vld.sshfl [vmem:[#allocation1 + $0x38] sm:$0xff pattern:$0x73625140]
    %2724 = vst [vmem:[#allocation1] ss:$4 sm:$0xff] %v1426
    %2725 = vst [vmem:[%s2198] ss:$4 sm:$0xff] %v1435
    %2726 = vst [vmem:[%s2200] ss:$4 sm:$0xff] %v350
    %2727 = vst [vmem:[%s2202] ss:$4 sm:$0xff] %v1450
    %2728 = vst [vmem:[%s2204] ss:$4 sm:$0xff] %v1454
    %2729 = vst [vmem:[%s2206] ss:$4 sm:$0xff] %v1462
    %2730 = vst [vmem:[%s2208] ss:$4 sm:$0xff] %v1469
    %2731 = vst [vmem:[%s2210] ss:$4 sm:$0xff] %v1476
    %v2732 = vld.sshfl [vmem:[#allocation1] sm:$0xff pattern:$0x73625140]
    %v2733 = vld.sshfl [vmem:[#allocation1 + $0x20] sm:$0xff pattern:$0x73625140]
    %v2734 = vld.sshfl [vmem:[#allocation1 + $0x28] sm:$0xff pattern:$0x73625140]
    %v2735 = vld.sshfl [vmem:[#allocation1 + $0x30] sm:$0xff pattern:$0x73625140]
    %v2736 = vld.sshfl [vmem:[#allocation1 + $0x38] sm:$0xff pattern:$0x73625140]
    %2737 = vst [vmem:[#allocation1] ss:$4 sm:$0xff] %v1458
    %2738 = vst [vmem:[%s2198] ss:$4 sm:$0xff] %v1466
    %2739 = vst [vmem:[%s2200] ss:$4 sm:$0xff] %v1472
    %2740 = vst [vmem:[%s2202] ss:$4 sm:$0xff] %v1480
    %2741 = vst [vmem:[%s2204] ss:$4 sm:$0xff] %v551
    %2742 = vst [vmem:[%s2206] ss:$4 sm:$0xff] %v542
    %2743 = vst [vmem:[%s2208] ss:$4 sm:$0xff] %v349
    %2744 = vst [vmem:[%s2210] ss:$4 sm:$0xff] %v1481
    %v2745 = vld.sshfl [vmem:[#allocation1] sm:$0xff pattern:$0x73625140]
    %v2746 = vld.sshfl [vmem:[#allocation1 + $0x8] sm:$0xff pattern:$0x73625140]
    %v2747 = vld.sshfl [vmem:[#allocation1 + $0x10] sm:$0xff pattern:$0x73625140]
    %v2748 = vld.sshfl [vmem:[#allocation1 + $0x18] sm:$0xff pattern:$0x73625140]
    %v2749 = vld.sshfl [vmem:[#allocation1 + $0x20] sm:$0xff pattern:$0x73625140]
    %2750 = vst [vmem:[#allocation1] ss:$4 sm:$0xff] %v1485
    %2751 = vst [vmem:[%s2198] ss:$4 sm:$0xff] %v1492
    %2752 = vst [vmem:[%s2200] ss:$4 sm:$0xff] %v1499
    %2753 = vst [vmem:[%s2202] ss:$4 sm:$0xff] %v1508
    %2754 = vst [vmem:[%s2204] ss:$4 sm:$0xff] %v1489
    %2755 = vst [vmem:[%s2206] ss:$4 sm:$0xff] %v1495
    %2756 = vst [vmem:[%s2208] ss:$4 sm:$0xff] %v1503
    %2757 = vst [vmem:[%s2210] ss:$4 sm:$0xff] %v1512
    %v2758 = vld.sshfl [vmem:[#allocation1] sm:$0xff pattern:$0x73625140]
    %v2759 = vld.sshfl [vmem:[#allocation1 + $0x8] sm:$0xff pattern:$0x73625140]
    %v2760 = vld.sshfl [vmem:[#allocation1 + $0x10] sm:$0xff pattern:$0x73625140]
    %v2761 = vld.sshfl [vmem:[#allocation1 + $0x18] sm:$0xff pattern:$0x73625140]
    %v2762 = vld.sshfl [vmem:[#allocation1 + $0x20] sm:$0xff pattern:$0x73625140]
    %v2763 = vld.sshfl [vmem:[#allocation1 + $0x28] sm:$0xff pattern:$0x73625140]
    %v2764 = vld.sshfl [vmem:[#allocation1 + $0x30] sm:$0xff pattern:$0x73625140]
    %v2765 = vld.sshfl [vmem:[#allocation1 + $0x38] sm:$0xff pattern:$0x73625140]
    %2766 = vst [vmem:[#allocation1] ss:$4 sm:$0xff] %v556
    %2767 = vst [vmem:[%s2198] ss:$4 sm:$0xff] %v353
    %2768 = vst [vmem:[%s2200] ss:$4 sm:$0xff] %v1504
    %2769 = vst [vmem:[%s2202] ss:$4 sm:$0xff] %v561
    %2770 = vst [vmem:[%s2204] ss:$4 sm:$0xff] %v1516
    %2771 = vst [vmem:[%s2206] ss:$4 sm:$0xff] %v1523
    %2772 = vst [vmem:[%s2208] ss:$4 sm:$0xff] %v1530
    %2773 = vst [vmem:[%s2210] ss:$4 sm:$0xff] %v1539
    %v2774 = vld.sshfl [vmem:[#allocation1] sm:$0xff pattern:$0x73625140]
    %v2775 = vld.sshfl [vmem:[#allocation1 + $0x20] sm:$0xff pattern:$0x73625140]
    %v2776 = vld.sshfl [vmem:[#allocation1 + $0x28] sm:$0xff pattern:$0x73625140]
    %v2777 = vld.sshfl [vmem:[#allocation1 + $0x30] sm:$0xff pattern:$0x73625140]
    %v2778 = vld.sshfl [vmem:[#allocation1 + $0x38] sm:$0xff pattern:$0x73625140]
    %2779 = vst [vmem:[#allocation1] ss:$4 sm:$0xff] %v1520
    %2780 = vst [vmem:[%s2198] ss:$4 sm:$0xff] %v1526
    %2781 = vst [vmem:[%s2200] ss:$4 sm:$0xff] %v1534
    %2782 = vst [vmem:[%s2202] ss:$4 sm:$0xff] %v1543
    %2783 = vst [vmem:[%s2204] ss:$4 sm:$0xff] %v552
    %2784 = vst [vmem:[%s2206] ss:$4 sm:$0xff] %v352
    %2785 = vst [vmem:[%s2208] ss:$4 sm:$0xff] %v1535
    %2786 = vst [vmem:[%s2210] ss:$4 sm:$0xff] %v566
    %v2787 = vld.sshfl [vmem:[#allocation1] sm:$0xff pattern:$0x73625140]
    %v2788 = vld.sshfl [vmem:[#allocation1 + $0x8] sm:$0xff pattern:$0x73625140]
    %v2789 = vld.sshfl [vmem:[#allocation1 + $0x10] sm:$0xff pattern:$0x73625140]
    %v2790 = vld.sshfl [vmem:[#allocation1 + $0x18] sm:$0xff pattern:$0x73625140]
    %v2791 = vld.sshfl [vmem:[#allocation1 + $0x20] sm:$0xff pattern:$0x73625140]
    %2792 = vst [vmem:[#allocation1] ss:$4 sm:$0xff] %v1546
    %2793 = vst [vmem:[%s2198] ss:$4 sm:$0xff] %v1553
    %2794 = vst [vmem:[%s2200] ss:$4 sm:$0xff] %v1562
    %2795 = vst [vmem:[%s2202] ss:$4 sm:$0xff] %v1570
    %2796 = vst [vmem:[%s2204] ss:$4 sm:$0xff] %v1549
    %2797 = vst [vmem:[%s2206] ss:$4 sm:$0xff] %v1557
    %2798 = vst [vmem:[%s2208] ss:$4 sm:$0xff] %v1566
    %2799 = vst [vmem:[%s2210] ss:$4 sm:$0xff] %v1574
    %v2800 = vld.sshfl [vmem:[#allocation1] sm:$0xff pattern:$0x73625140]
    %v2801 = vld.sshfl [vmem:[#allocation1 + $0x8] sm:$0xff pattern:$0x73625140]
    %v2802 = vld.sshfl [vmem:[#allocation1 + $0x10] sm:$0xff pattern:$0x73625140]
    %v2803 = vld.sshfl [vmem:[#allocation1 + $0x18] sm:$0xff pattern:$0x73625140]
    %v2804 = vld.sshfl [vmem:[#allocation1 + $0x20] sm:$0xff pattern:$0x73625140]
    %v2805 = vld.sshfl [vmem:[#allocation1 + $0x28] sm:$0xff pattern:$0x73625140]
    %v2806 = vld.sshfl [vmem:[#allocation1 + $0x30] sm:$0xff pattern:$0x73625140]
    %v2807 = vld.sshfl [vmem:[#allocation1 + $0x38] sm:$0xff pattern:$0x73625140]
    %2808 = vst [vmem:[#allocation1] ss:$4 sm:$0xff] %v356
    %2809 = vst [vmem:[%s2198] ss:$4 sm:$0xff] %v1558
    %2810 = vst [vmem:[%s2200] ss:$4 sm:$0xff] %v571
    %2811 = vst [vmem:[%s2202] ss:$4 sm:$0xff] %v562
    %2812 = vst [vmem:[%s2204] ss:$4 sm:$0xff] %v1577
    %2813 = vst [vmem:[%s2206] ss:$4 sm:$0xff] %v1584
    %2814 = vst [vmem:[%s2208] ss:$4 sm:$0xff] %v1593
    %2815 = vst [vmem:[%s2210] ss:$4 sm:$0xff] %v1600
    %v2816 = vld.sshfl [vmem:[#allocation1] sm:$0xff pattern:$0x73625140]
    %v2817 = vld.sshfl [vmem:[#allocation1 + $0x20] sm:$0xff pattern:$0x73625140]
    %v2818 = vld.sshfl [vmem:[#allocation1 + $0x28] sm:$0xff pattern:$0x73625140]
    %v2819 = vld.sshfl [vmem:[#allocation1 + $0x30] sm:$0xff pattern:$0x73625140]
    %v2820 = vld.sshfl [vmem:[#allocation1 + $0x38] sm:$0xff pattern:$0x73625140]
    %2821 = vst [vmem:[#allocation1] ss:$4 sm:$0xff] %v1580
    %2822 = vst [vmem:[%s2198] ss:$4 sm:$0xff] %v1588
    %2823 = vst [vmem:[%s2200] ss:$4 sm:$0xff] %v1597
    %2824 = vst [vmem:[%s2202] ss:$4 sm:$0xff] %v1603
    %2825 = vst [vmem:[%s2204] ss:$4 sm:$0xff] %v355
    %2826 = vst [vmem:[%s2206] ss:$4 sm:$0xff] %v1589
    %2827 = vst [vmem:[%s2208] ss:$4 sm:$0xff] %v576
    %2828 = vst [vmem:[%s2210] ss:$4 sm:$0xff] %v359
    %v2829 = vld.sshfl [vmem:[#allocation1] sm:$0xff pattern:$0x73625140]
    %v2830 = vld.sshfl [vmem:[#allocation1 + $0x8] sm:$0xff pattern:$0x73625140]
    %v2831 = vld.sshfl [vmem:[#allocation1 + $0x10] sm:$0xff pattern:$0x73625140]
    %v2832 = vld.sshfl [vmem:[#allocation1 + $0x18] sm:$0xff pattern:$0x73625140]
    %v2833 = vld.sshfl [vmem:[#allocation1 + $0x20] sm:$0xff pattern:$0x73625140]
    %2834 = vst [vmem:[#allocation1] ss:$4 sm:$0xff] %v1607
    %2835 = vst [vmem:[%s2198] ss:$4 sm:$0xff] %v1616
    %2836 = vst [vmem:[%s2200] ss:$4 sm:$0xff] %v1624
    %2837 = vst [vmem:[%s2202] ss:$4 sm:$0xff] %v1631
    %2838 = vst [vmem:[%s2204] ss:$4 sm:$0xff] %v1611
    %2839 = vst [vmem:[%s2206] ss:$4 sm:$0xff] %v1620
    %2840 = vst [vmem:[%s2208] ss:$4 sm:$0xff] %v1628
    %2841 = vst [vmem:[%s2210] ss:$4 sm:$0xff] %v1634
    %v2842 = vld.sshfl [vmem:[#allocation1] sm:$0xff pattern:$0x73625140]
    %v2843 = vld.sshfl [vmem:[#allocation1 + $0x8] sm:$0xff pattern:$0x73625140]
    %v2844 = vld.sshfl [vmem:[#allocation1 + $0x10] sm:$0xff pattern:$0x73625140]
    %v2845 = vld.sshfl [vmem:[#allocation1 + $0x18] sm:$0xff pattern:$0x73625140]
    %v2846 = vld.sshfl [vmem:[#allocation1 + $0x20] sm:$0xff pattern:$0x73625140]
    %v2847 = vld.sshfl [vmem:[#allocation1 + $0x28] sm:$0xff pattern:$0x73625140]
    %v2848 = vld.sshfl [vmem:[#allocation1 + $0x30] sm:$0xff pattern:$0x73625140]
    %v2849 = vld.sshfl [vmem:[#allocation1 + $0x38] sm:$0xff pattern:$0x73625140]
    %2850 = vst [vmem:[#allocation1] ss:$4 sm:$0xff] %v1612
    %2851 = vst [vmem:[%s2198] ss:$4 sm:$0xff] %v581
    %2852 = vst [vmem:[%s2200] ss:$4 sm:$0xff] %v572
    %2853 = vst [vmem:[%s2202] ss:$4 sm:$0xff] %v358
    %2854 = vst [vmem:[%s2204] ss:$4 sm:$0xff] %v1638
    %2855 = vst [vmem:[%s2206] ss:$4 sm:$0xff] %v1647
    %2856 = vst [vmem:[%s2208] ss:$4 sm:$0xff] %v1654
    %2857 = vst [vmem:[%s2210] ss:$4 sm:$0xff] %v1661
    %v2858 = vld.sshfl [vmem:[#allocation1] sm:$0xff pattern:$0x73625140]
    %v2859 = vld.sshfl [vmem:[#allocation1 + $0x20] sm:$0xff pattern:$0x73625140]
    %v2860 = vld.sshfl [vmem:[#allocation1 + $0x28] sm:$0xff pattern:$0x73625140]
    %v2861 = vld.sshfl [vmem:[#allocation1 + $0x30] sm:$0xff pattern:$0x73625140]
    %v2862 = vld.sshfl [vmem:[#allocation1 + $0x38] sm:$0xff pattern:$0x73625140]
    %2863 = vst [vmem:[#allocation1] ss:$4 sm:$0xff] %v1642
    %2864 = vst [vmem:[%s2198] ss:$4 sm:$0xff] %v1651
    %2865 = vst [vmem:[%s2200] ss:$4 sm:$0xff] %v1657
    %2866 = vst [vmem:[%s2202] ss:$4 sm:$0xff] %v1665
    %2867 = vst [vmem:[%s2204] ss:$4 sm:$0xff] %v1643
    %2868 = vst [vmem:[%s2206] ss:$4 sm:$0xff] %v586
    %2869 = vst [vmem:[%s2208] ss:$4 sm:$0xff] %v362
    %2870 = vst [vmem:[%s2210] ss:$4 sm:$0xff] %v1666
    %v2871 = vld.sshfl [vmem:[#allocation1] sm:$0xff pattern:$0x73625140]
    %v2872 = vld.sshfl [vmem:[#allocation1 + $0x8] sm:$0xff pattern:$0x73625140]
    %v2873 = vld.sshfl [vmem:[#allocation1 + $0x10] sm:$0xff pattern:$0x73625140]
    %v2874 = vld.sshfl [vmem:[#allocation1 + $0x18] sm:$0xff pattern:$0x73625140]
    %v2875 = vld.sshfl [vmem:[#allocation1 + $0x20] sm:$0xff pattern:$0x73625140]
    %2876 = vst [vmem:[#allocation1] ss:$4 sm:$0xff] %v1670
    %2877 = vst [vmem:[%s2198] ss:$4 sm:$0xff] %v1678
    %2878 = vst [vmem:[%s2200] ss:$4 sm:$0xff] %v1685
    %2879 = vst [vmem:[%s2202] ss:$4 sm:$0xff] %v1692
    %2880 = vst [vmem:[%s2204] ss:$4 sm:$0xff] %v1674
    %2881 = vst [vmem:[%s2206] ss:$4 sm:$0xff] %v1682
    %2882 = vst [vmem:[%s2208] ss:$4 sm:$0xff] %v1688
    %2883 = vst [vmem:[%s2210] ss:$4 sm:$0xff] %v1696
    %v2884 = vld.sshfl [vmem:[#allocation1] sm:$0xff pattern:$0x73625140]
    %v2885 = vld.sshfl [vmem:[#allocation1 + $0x8] sm:$0xff pattern:$0x73625140]
    %v2886 = vld.sshfl [vmem:[#allocation1 + $0x10] sm:$0xff pattern:$0x73625140]
    %v2887 = vld.sshfl [vmem:[#allocation1 + $0x18] sm:$0xff pattern:$0x73625140]
    %v2888 = vld.sshfl [vmem:[#allocation1 + $0x20] sm:$0xff pattern:$0x73625140]
    %v2889 = vld.sshfl [vmem:[#allocation1 + $0x28] sm:$0xff pattern:$0x73625140]
    %v2890 = vld.sshfl [vmem:[#allocation1 + $0x30] sm:$0xff pattern:$0x73625140]
    %v2891 = vld.sshfl [vmem:[#allocation1 + $0x38] sm:$0xff pattern:$0x73625140]
    %2892 = vst [vmem:[#allocation1] ss:$4 sm:$0xff] %v591
    %2893 = vst [vmem:[%s2198] ss:$4 sm:$0xff] %v582
    %2894 = vst [vmem:[%s2200] ss:$4 sm:$0xff] %v361
    %2895 = vst [vmem:[%s2202] ss:$4 sm:$0xff] %v1697
    %2896 = vst [vmem:[%s2204] ss:$4 sm:$0xff] %v1701
    %2897 = vst [vmem:[%s2206] ss:$4 sm:$0xff] %v1708
    %2898 = vst [vmem:[%s2208] ss:$4 sm:$0xff] %v1715
    %2899 = vst [vmem:[%s2210] ss:$4 sm:$0xff] %v1724
    %v2900 = vld.sshfl [vmem:[#allocation1] sm:$0xff pattern:$0x73625140]
    %v2901 = vld.sshfl [vmem:[#allocation1 + $0x20] sm:$0xff pattern:$0x73625140]
    %v2902 = vld.sshfl [vmem:[#allocation1 + $0x28] sm:$0xff pattern:$0x73625140]
    %v2903 = vld.sshfl [vmem:[#allocation1 + $0x30] sm:$0xff pattern:$0x73625140]
    %v2904 = vld.sshfl [vmem:[#allocation1 + $0x38] sm:$0xff pattern:$0x73625140]
    %2905 = vst [vmem:[#allocation1] ss:$4 sm:$0xff] %v1705
    %2906 = vst [vmem:[%s2198] ss:$4 sm:$0xff] %v1711
    %2907 = vst [vmem:[%s2200] ss:$4 sm:$0xff] %v1719
    %2908 = vst [vmem:[%s2202] ss:$4 sm:$0xff] %v1728
    %2909 = vst [vmem:[%s2204] ss:$4 sm:$0xff] %v596
    %2910 = vst [vmem:[%s2206] ss:$4 sm:$0xff] %v365
    %2911 = vst [vmem:[%s2208] ss:$4 sm:$0xff] %v1720
    %2912 = vst [vmem:[%s2210] ss:$4 sm:$0xff] %v601
    %v2913 = vld.sshfl [vmem:[#allocation1] sm:$0xff pattern:$0x73625140]
    %v2914 = vld.sshfl [vmem:[#allocation1 + $0x8] sm:$0xff pattern:$0x73625140]
    %v2915 = vld.sshfl [vmem:[#allocation1 + $0x10] sm:$0xff pattern:$0x73625140]
    %v2916 = vld.sshfl [vmem:[#allocation1 + $0x18] sm:$0xff pattern:$0x73625140]
    %v2917 = vld.sshfl [vmem:[#allocation1 + $0x20] sm:$0xff pattern:$0x73625140]
    %2918 = vst [vmem:[#allocation1] ss:$4 sm:$0xff] %v1732
    %2919 = vst [vmem:[%s2198] ss:$4 sm:$0xff] %v1739
    %2920 = vst [vmem:[%s2200] ss:$4 sm:$0xff] %v1746
    %2921 = vst [vmem:[%s2202] ss:$4 sm:$0xff] %v1755
    %2922 = vst [vmem:[%s2204] ss:$4 sm:$0xff] %v1736
    %2923 = vst [vmem:[%s2206] ss:$4 sm:$0xff] %v1742
    %2924 = vst [vmem:[%s2208] ss:$4 sm:$0xff] %v1750
    %2925 = vst [vmem:[%s2210] ss:$4 sm:$0xff] %v1759
    %v2926 = vld.sshfl [vmem:[#allocation1] sm:$0xff pattern:$0x73625140]
    %v2927 = vld.sshfl [vmem:[#allocation1 + $0x8] sm:$0xff pattern:$0x73625140]
    %v2928 = vld.sshfl [vmem:[#allocation1 + $0x10] sm:$0xff pattern:$0x73625140]
    %v2929 = vld.sshfl [vmem:[#allocation1 + $0x18] sm:$0xff pattern:$0x73625140]
    %v2930 = vld.sshfl [vmem:[#allocation1 + $0x20] sm:$0xff pattern:$0x73625140]
    %v2931 = vld.sshfl [vmem:[#allocation1 + $0x28] sm:$0xff pattern:$0x73625140]
    %v2932 = vld.sshfl [vmem:[#allocation1 + $0x30] sm:$0xff pattern:$0x73625140]
    %v2933 = vld.sshfl [vmem:[#allocation1 + $0x38] sm:$0xff pattern:$0x73625140]
    %2934 = vst [vmem:[#allocation1] ss:$4 sm:$0xff] %v592
    %2935 = vst [vmem:[%s2198] ss:$4 sm:$0xff] %v364
    %2936 = vst [vmem:[%s2200] ss:$4 sm:$0xff] %v1751
    %2937 = vst [vmem:[%s2202] ss:$4 sm:$0xff] %v606
    %2938 = vst [vmem:[%s2204] ss:$4 sm:$0xff] %v1762
    %2939 = vst [vmem:[%s2206] ss:$4 sm:$0xff] %v1769
    %2940 = vst [vmem:[%s2208] ss:$4 sm:$0xff] %v1778
    %2941 = vst [vmem:[%s2210] ss:$4 sm:$0xff] %v1786
    %v2942 = vld.sshfl [vmem:[#allocation1] sm:$0xff pattern:$0x73625140]
    %v2943 = vld.sshfl [vmem:[#allocation1 + $0x20] sm:$0xff pattern:$0x73625140]
    %v2944 = vld.sshfl [vmem:[#allocation1 + $0x28] sm:$0xff pattern:$0x73625140]
    %v2945 = vld.sshfl [vmem:[#allocation1 + $0x30] sm:$0xff pattern:$0x73625140]
    %v2946 = vld.sshfl [vmem:[#allocation1 + $0x38] sm:$0xff pattern:$0x73625140]
    %2947 = vst [vmem:[#allocation1] ss:$4 sm:$0xff] %v1765
    %2948 = vst [vmem:[%s2198] ss:$4 sm:$0xff] %v1773
    %2949 = vst [vmem:[%s2200] ss:$4 sm:$0xff] %v1782
    %2950 = vst [vmem:[%s2202] ss:$4 sm:$0xff] %v1790
    %2951 = vst [vmem:[%s2204] ss:$4 sm:$0xff] %v368
    %2952 = vst [vmem:[%s2206] ss:$4 sm:$0xff] %v1774
    %2953 = vst [vmem:[%s2208] ss:$4 sm:$0xff] %v611
    %2954 = vst [vmem:[%s2210] ss:$4 sm:$0xff] %v602
    %v2955 = vld.sshfl [vmem:[#allocation1] sm:$0xff pattern:$0x73625140]
    %v2956 = vld.sshfl [vmem:[#allocation1 + $0x8] sm:$0xff pattern:$0x73625140]
    %v2957 = vld.sshfl [vmem:[#allocation1 + $0x10] sm:$0xff pattern:$0x73625140]
    %v2958 = vld.sshfl [vmem:[#allocation1 + $0x18] sm:$0xff pattern:$0x73625140]
    %v2959 = vld.sshfl [vmem:[#allocation1 + $0x20] sm:$0xff pattern:$0x73625140]
    %2960 = vst [vmem:[#allocation1] ss:$4 sm:$0xff] %v1793
    %2961 = vst [vmem:[%s2198] ss:$4 sm:$0xff] %v1800
    %2962 = vst [vmem:[%s2200] ss:$4 sm:$0xff] %v1809
    %2963 = vst [vmem:[%s2202] ss:$4 sm:$0xff] %v1816
    %2964 = vst [vmem:[%s2204] ss:$4 sm:$0xff] %v1796
    %2965 = vst [vmem:[%s2206] ss:$4 sm:$0xff] %v1804
    %2966 = vst [vmem:[%s2208] ss:$4 sm:$0xff] %v1813
    %2967 = vst [vmem:[%s2210] ss:$4 sm:$0xff] %v1819
    %v2968 = vld.sshfl [vmem:[#allocation1] sm:$0xff pattern:$0x73625140]
    %v2969 = vld.sshfl [vmem:[#allocation1 + $0x8] sm:$0xff pattern:$0x73625140]
    %v2970 = vld.sshfl [vmem:[#allocation1 + $0x10] sm:$0xff pattern:$0x73625140]
    %v2971 = vld.sshfl [vmem:[#allocation1 + $0x18] sm:$0xff pattern:$0x73625140]
    %v2972 = vld.sshfl [vmem:[#allocation1 + $0x20] sm:$0xff pattern:$0x73625140]
    %v2973 = vld.sshfl [vmem:[#allocation1 + $0x28] sm:$0xff pattern:$0x73625140]
    %v2974 = vld.sshfl [vmem:[#allocation1 + $0x30] sm:$0xff pattern:$0x73625140]
    %v2975 = vld.sshfl [vmem:[#allocation1 + $0x38] sm:$0xff pattern:$0x73625140]
    %2976 = vst [vmem:[#allocation1] ss:$4 sm:$0xff] %v367
    %2977 = vst [vmem:[%s2198] ss:$4 sm:$0xff] %v1805
    %2978 = vst [vmem:[%s2200] ss:$4 sm:$0xff] %v616
    %2979 = vst [vmem:[%s2202] ss:$4 sm:$0xff] %v371
    %2980 = vst [vmem:[%s2204] ss:$4 sm:$0xff] %v1823
    %2981 = vst [vmem:[%s2206] ss:$4 sm:$0xff] %v1832
    %2982 = vst [vmem:[%s2208] ss:$4 sm:$0xff] %v1840
    %2983 = vst [vmem:[%s2210] ss:$4 sm:$0xff] %v1847
    %v2984 = vld.sshfl [vmem:[#allocation1] sm:$0xff pattern:$0x73625140]
    %v2985 = vld.sshfl [vmem:[#allocation1 + $0x20] sm:$0xff pattern:$0x73625140]
    %v2986 = vld.sshfl [vmem:[#allocation1 + $0x28] sm:$0xff pattern:$0x73625140]
    %v2987 = vld.sshfl [vmem:[#allocation1 + $0x30] sm:$0xff pattern:$0x73625140]
    %v2988 = vld.sshfl [vmem:[#allocation1 + $0x38] sm:$0xff pattern:$0x73625140]
    %2989 = vst [vmem:[#allocation1] ss:$4 sm:$0xff] %v1827
    %2990 = vst [vmem:[%s2198] ss:$4 sm:$0xff] %v1836
    %2991 = vst [vmem:[%s2200] ss:$4 sm:$0xff] %v1844
    %2992 = vst [vmem:[%s2202] ss:$4 sm:$0xff] %v1850
    %2993 = vst [vmem:[%s2204] ss:$4 sm:$0xff] %v1828
    %2994 = vst [vmem:[%s2206] ss:$4 sm:$0xff] %v621
    %2995 = vst [vmem:[%s2208] ss:$4 sm:$0xff] %v612
    %2996 = vst [vmem:[%s2210] ss:$4 sm:$0xff] %v370
    %v2997 = vld.sshfl [vmem:[#allocation1] sm:$0xff pattern:$0x73625140]
    %v2998 = vld.sshfl [vmem:[#allocation1 + $0x8] sm:$0xff pattern:$0x73625140]
    %v2999 = vld.sshfl [vmem:[#allocation1 + $0x10] sm:$0xff pattern:$0x73625140]
    %v3000 = vld.sshfl [vmem:[#allocation1 + $0x18] sm:$0xff pattern:$0x73625140]
    %v3001 = vld.sshfl [vmem:[#allocation1 + $0x20] sm:$0xff pattern:$0x73625140]
    %3002 = vst [vmem:[#allocation1] ss:$4 sm:$0xff] %v1854
    %3003 = vst [vmem:[%s2198] ss:$4 sm:$0xff] %v1863
    %3004 = vst [vmem:[%s2200] ss:$4 sm:$0xff] %v1870
    %3005 = vst [vmem:[%s2202] ss:$4 sm:$0xff] %v1877
    %3006 = vst [vmem:[%s2204] ss:$4 sm:$0xff] %v1858
    %3007 = vst [vmem:[%s2206] ss:$4 sm:$0xff] %v1867
    %3008 = vst [vmem:[%s2208] ss:$4 sm:$0xff] %v1873
    %3009 = vst [vmem:[%s2210] ss:$4 sm:$0xff] %v1881
    %v3010 = vld.sshfl [vmem:[#allocation1] sm:$0xff pattern:$0x73625140]
    %v3011 = vld.sshfl [vmem:[#allocation1 + $0x8] sm:$0xff pattern:$0x73625140]
    %v3012 = vld.sshfl [vmem:[#allocation1 + $0x10] sm:$0xff pattern:$0x73625140]
    %v3013 = vld.sshfl [vmem:[#allocation1 + $0x18] sm:$0xff pattern:$0x73625140]
    %v3014 = vld.sshfl [vmem:[#allocation1 + $0x20] sm:$0xff pattern:$0x73625140]
    %v3015 = vld.sshfl [vmem:[#allocation1 + $0x28] sm:$0xff pattern:$0x73625140]
    %v3016 = vld.sshfl [vmem:[#allocation1 + $0x30] sm:$0xff pattern:$0x73625140]
    %v3017 = vld.sshfl [vmem:[#allocation1 + $0x38] sm:$0xff pattern:$0x73625140]
    %3018 = vst [vmem:[#allocation1] ss:$4 sm:$0xff] %v1859
    %3019 = vst [vmem:[%s2198] ss:$4 sm:$0xff] %v626
    %3020 = vst [vmem:[%s2200] ss:$4 sm:$0xff] %v374
    %3021 = vst [vmem:[%s2202] ss:$4 sm:$0xff] %v1882
    %3022 = vst [vmem:[%s2204] ss:$4 sm:$0xff] %v1886
    %3023 = vst [vmem:[%s2206] ss:$4 sm:$0xff] %v1894
    %3024 = vst [vmem:[%s2208] ss:$4 sm:$0xff] %v1901
    %3025 = vst [vmem:[%s2210] ss:$4 sm:$0xff] %v1908
    %v3026 = vld.sshfl [vmem:[#allocation1] sm:$0xff pattern:$0x73625140]
    %v3027 = vld.sshfl [vmem:[#allocation1 + $0x20] sm:$0xff pattern:$0x73625140]
    %v3028 = vld.sshfl [vmem:[#allocation1 + $0x28] sm:$0xff pattern:$0x73625140]
    %v3029 = vld.sshfl [vmem:[#allocation1 + $0x30] sm:$0xff pattern:$0x73625140]
    %v3030 = vld.sshfl [vmem:[#allocation1 + $0x38] sm:$0xff pattern:$0x73625140]
    %3031 = vst [vmem:[#allocation1] ss:$4 sm:$0xff] %v1890
    %3032 = vst [vmem:[%s2198] ss:$4 sm:$0xff] %v1898
    %3033 = vst [vmem:[%s2200] ss:$4 sm:$0xff] %v1904
    %3034 = vst [vmem:[%s2202] ss:$4 sm:$0xff] %v1912
    %3035 = vst [vmem:[%s2204] ss:$4 sm:$0xff] %v631
    %3036 = vst [vmem:[%s2206] ss:$4 sm:$0xff] %v622
    %3037 = vst [vmem:[%s2208] ss:$4 sm:$0xff] %v373
    %3038 = vst [vmem:[%s2210] ss:$4 sm:$0xff] %v1913
    %v3039 = vld.sshfl [vmem:[#allocation1] sm:$0xff pattern:$0x73625140]
    %v3040 = vld.sshfl [vmem:[#allocation1 + $0x8] sm:$0xff pattern:$0x73625140]
    %v3041 = vld.sshfl [vmem:[#allocation1 + $0x10] sm:$0xff pattern:$0x73625140]
    %v3042 = vld.sshfl [vmem:[#allocation1 + $0x18] sm:$0xff pattern:$0x73625140]
    %v3043 = vld.sshfl [vmem:[#allocation1 + $0x20] sm:$0xff pattern:$0x73625140]
    %3044 = vst [vmem:[#allocation1] ss:$4 sm:$0xff] %v1917
    %3045 = vst [vmem:[%s2198] ss:$4 sm:$0xff] %v1924
    %3046 = vst [vmem:[%s2200] ss:$4 sm:$0xff] %v1931
    %3047 = vst [vmem:[%s2202] ss:$4 sm:$0xff] %v1940
    %3048 = vst [vmem:[%s2204] ss:$4 sm:$0xff] %v1921
    %3049 = vst [vmem:[%s2206] ss:$4 sm:$0xff] %v1927
    %3050 = vst [vmem:[%s2208] ss:$4 sm:$0xff] %v1935
    %3051 = vst [vmem:[%s2210] ss:$4 sm:$0xff] %v1944
    %v3052 = vld.sshfl [vmem:[#allocation1] sm:$0xff pattern:$0x73625140]
    %v3053 = vld.sshfl [vmem:[#allocation1 + $0x8] sm:$0xff pattern:$0x73625140]
    %v3054 = vld.sshfl [vmem:[#allocation1 + $0x10] sm:$0xff pattern:$0x73625140]
    %v3055 = vld.sshfl [vmem:[#allocation1 + $0x18] sm:$0xff pattern:$0x73625140]
    %v3056 = vld.sshfl [vmem:[#allocation1 + $0x20] sm:$0xff pattern:$0x73625140]
    %v3057 = vld.sshfl [vmem:[#allocation1 + $0x28] sm:$0xff pattern:$0x73625140]
    %v3058 = vld.sshfl [vmem:[#allocation1 + $0x30] sm:$0xff pattern:$0x73625140]
    %v3059 = vld.sshfl [vmem:[#allocation1 + $0x38] sm:$0xff pattern:$0x73625140]
    %3060 = vst [vmem:[#allocation1] ss:$4 sm:$0xff] %v636
    %3061 = vst [vmem:[%s2198] ss:$4 sm:$0xff] %v377
    %3062 = vst [vmem:[%s2200] ss:$4 sm:$0xff] %v1936
    %3063 = vst [vmem:[%s2202] ss:$4 sm:$0xff] %v641
    %3064 = vst [vmem:[%s2204] ss:$4 sm:$0xff] %v1948
    %3065 = vst [vmem:[%s2206] ss:$4 sm:$0xff] %v1955
    %3066 = vst [vmem:[%s2208] ss:$4 sm:$0xff] %v1962
    %3067 = vst [vmem:[%s2210] ss:$4 sm:$0xff] %v1971
    %v3068 = vld.sshfl [vmem:[#allocation1] sm:$0xff pattern:$0x73625140]
    %v3069 = vld.sshfl [vmem:[#allocation1 + $0x20] sm:$0xff pattern:$0x73625140]
    %v3070 = vld.sshfl [vmem:[#allocation1 + $0x28] sm:$0xff pattern:$0x73625140]
    %v3071 = vld.sshfl [vmem:[#allocation1 + $0x30] sm:$0xff pattern:$0x73625140]
    %v3072 = vld.sshfl [vmem:[#allocation1 + $0x38] sm:$0xff pattern:$0x73625140]
    %3073 = vst [vmem:[#allocation1] ss:$4 sm:$0xff] %v1952
    %3074 = vst [vmem:[%s2198] ss:$4 sm:$0xff] %v1958
    %3075 = vst [vmem:[%s2200] ss:$4 sm:$0xff] %v1966
    %3076 = vst [vmem:[%s2202] ss:$4 sm:$0xff] %v1975
    %3077 = vst [vmem:[%s2204] ss:$4 sm:$0xff] %v632
    %3078 = vst [vmem:[%s2206] ss:$4 sm:$0xff] %v376
    %3079 = vst [vmem:[%s2208] ss:$4 sm:$0xff] %v1967
    %3080 = vst [vmem:[%s2210] ss:$4 sm:$0xff] %v646
    %v3081 = vld.sshfl [vmem:[#allocation1] sm:$0xff pattern:$0x73625140]
    %v3082 = vld.sshfl [vmem:[#allocation1 + $0x8] sm:$0xff pattern:$0x73625140]
    %v3083 = vld.sshfl [vmem:[#allocation1 + $0x10] sm:$0xff pattern:$0x73625140]
    %v3084 = vld.sshfl [vmem:[#allocation1 + $0x18] sm:$0xff pattern:$0x73625140]
    %v3085 = vld.sshfl [vmem:[#allocation1 + $0x20] sm:$0xff pattern:$0x73625140]
    %3086 = vst [vmem:[#allocation1] ss:$4 sm:$0xff] %v1978
    %3087 = vst [vmem:[%s2198] ss:$4 sm:$0xff] %v1985
    %3088 = vst [vmem:[%s2200] ss:$4 sm:$0xff] %v1994
    %3089 = vst [vmem:[%s2202] ss:$4 sm:$0xff] %v2002
    %3090 = vst [vmem:[%s2204] ss:$4 sm:$0xff] %v1981
    %3091 = vst [vmem:[%s2206] ss:$4 sm:$0xff] %v1989
    %3092 = vst [vmem:[%s2208] ss:$4 sm:$0xff] %v1998
    %3093 = vst [vmem:[%s2210] ss:$4 sm:$0xff] %v2006
    %v3094 = vld.sshfl [vmem:[#allocation1] sm:$0xff pattern:$0x73625140]
    %v3095 = vld.sshfl [vmem:[#allocation1 + $0x8] sm:$0xff pattern:$0x73625140]
    %v3096 = vld.sshfl [vmem:[#allocation1 + $0x10] sm:$0xff pattern:$0x73625140]
    %v3097 = vld.sshfl [vmem:[#allocation1 + $0x18] sm:$0xff pattern:$0x73625140]
    %v3098 = vld.sshfl [vmem:[#allocation1 + $0x20] sm:$0xff pattern:$0x73625140]
    %v3099 = vld.sshfl [vmem:[#allocation1 + $0x28] sm:$0xff pattern:$0x73625140]
    %v3100 = vld.sshfl [vmem:[#allocation1 + $0x30] sm:$0xff pattern:$0x73625140]
    %v3101 = vld.sshfl [vmem:[#allocation1 + $0x38] sm:$0xff pattern:$0x73625140]
    %3102 = vst [vmem:[#allocation1] ss:$4 sm:$0xff] %v380
    %3103 = vst [vmem:[%s2198] ss:$4 sm:$0xff] %v1990
    %3104 = vst [vmem:[%s2200] ss:$4 sm:$0xff] %v651
    %3105 = vst [vmem:[%s2202] ss:$4 sm:$0xff] %v642
    %3106 = vst [vmem:[%s2204] ss:$4 sm:$0xff] %v2009
    %3107 = vst [vmem:[%s2206] ss:$4 sm:$0xff] %v2016
    %3108 = vst [vmem:[%s2208] ss:$4 sm:$0xff] %v2025
    %3109 = vst [vmem:[%s2210] ss:$4 sm:$0xff] %v2032
    %v3110 = vld.sshfl [vmem:[#allocation1] sm:$0xff pattern:$0x73625140]
    %v3111 = vld.sshfl [vmem:[#allocation1 + $0x20] sm:$0xff pattern:$0x73625140]
    %v3112 = vld.sshfl [vmem:[#allocation1 + $0x28] sm:$0xff pattern:$0x73625140]
    %v3113 = vld.sshfl [vmem:[#allocation1 + $0x30] sm:$0xff pattern:$0x73625140]
    %v3114 = vld.sshfl [vmem:[#allocation1 + $0x38] sm:$0xff pattern:$0x73625140]
    %3115 = vst [vmem:[#allocation1] ss:$4 sm:$0xff] %v2012
    %3116 = vst [vmem:[%s2198] ss:$4 sm:$0xff] %v2020
    %3117 = vst [vmem:[%s2200] ss:$4 sm:$0xff] %v2029
    %3118 = vst [vmem:[%s2202] ss:$4 sm:$0xff] %v2035
    %3119 = vst [vmem:[%s2204] ss:$4 sm:$0xff] %v379
    %3120 = vst [vmem:[%s2206] ss:$4 sm:$0xff] %v2021
    %3121 = vst [vmem:[%s2208] ss:$4 sm:$0xff] %v656
    %3122 = vst [vmem:[%s2210] ss:$4 sm:$0xff] %v383
    %v3123 = vld.sshfl [vmem:[#allocation1] sm:$0xff pattern:$0x73625140]
    %v3124 = vld.sshfl [vmem:[#allocation1 + $0x8] sm:$0xff pattern:$0x73625140]
    %v3125 = vld.sshfl [vmem:[#allocation1 + $0x10] sm:$0xff pattern:$0x73625140]
    %v3126 = vld.sshfl [vmem:[#allocation1 + $0x18] sm:$0xff pattern:$0x73625140]
    %v3127 = vld.sshfl [vmem:[#allocation1 + $0x20] sm:$0xff pattern:$0x73625140]
    %3128 = vst [vmem:[#allocation1] ss:$4 sm:$0xff] %v2039
    %3129 = vst [vmem:[%s2198] ss:$4 sm:$0xff] %v2048
    %3130 = vst [vmem:[%s2200] ss:$4 sm:$0xff] %v2056
    %3131 = vst [vmem:[%s2202] ss:$4 sm:$0xff] %v2063
    %3132 = vst [vmem:[%s2204] ss:$4 sm:$0xff] %v2043
    %3133 = vst [vmem:[%s2206] ss:$4 sm:$0xff] %v2052
    %3134 = vst [vmem:[%s2208] ss:$4 sm:$0xff] %v2060
    %3135 = vst [vmem:[%s2210] ss:$4 sm:$0xff] %v2066
    %v3136 = vld.sshfl [vmem:[#allocation1] sm:$0xff pattern:$0x73625140]
    %v3137 = vld.sshfl [vmem:[#allocation1 + $0x8] sm:$0xff pattern:$0x73625140]
    %v3138 = vld.sshfl [vmem:[#allocation1 + $0x10] sm:$0xff pattern:$0x73625140]
    %v3139 = vld.sshfl [vmem:[#allocation1 + $0x18] sm:$0xff pattern:$0x73625140]
    %v3140 = vld.sshfl [vmem:[#allocation1 + $0x20] sm:$0xff pattern:$0x73625140]
    %v3141 = vld.sshfl [vmem:[#allocation1 + $0x28] sm:$0xff pattern:$0x73625140]
    %v3142 = vld.sshfl [vmem:[#allocation1 + $0x30] sm:$0xff pattern:$0x73625140]
    %v3143 = vld.sshfl [vmem:[#allocation1 + $0x38] sm:$0xff pattern:$0x73625140]
    %3144 = vst [vmem:[#allocation1] ss:$4 sm:$0xff] %v2044
    %3145 = vst [vmem:[%s2198] ss:$4 sm:$0xff] %v661
    %3146 = vst [vmem:[%s2200] ss:$4 sm:$0xff] %v652
    %3147 = vst [vmem:[%s2202] ss:$4 sm:$0xff] %v382
    %3148 = vst [vmem:[%s2204] ss:$4 sm:$0xff] %v2070
    %3149 = vst [vmem:[%s2206] ss:$4 sm:$0xff] %v2079
    %3150 = vst [vmem:[%s2208] ss:$4 sm:$0xff] %v2086
    %3151 = vst [vmem:[%s2210] ss:$4 sm:$0xff] %v2093
    %v3152 = vld.sshfl [vmem:[#allocation1] sm:$0xff pattern:$0x73625140]
    %v3153 = vld.sshfl [vmem:[#allocation1 + $0x20] sm:$0xff pattern:$0x73625140]
    %v3154 = vld.sshfl [vmem:[#allocation1 + $0x28] sm:$0xff pattern:$0x73625140]
    %v3155 = vld.sshfl [vmem:[#allocation1 + $0x30] sm:$0xff pattern:$0x73625140]
    %v3156 = vld.sshfl [vmem:[#allocation1 + $0x38] sm:$0xff pattern:$0x73625140]
    %3157 = vst [vmem:[#allocation1] ss:$4 sm:$0xff] %v2074
    %3158 = vst [vmem:[%s2198] ss:$4 sm:$0xff] %v2083
    %3159 = vst [vmem:[%s2200] ss:$4 sm:$0xff] %v2089
    %3160 = vst [vmem:[%s2202] ss:$4 sm:$0xff] %v2097
    %3161 = vst [vmem:[%s2204] ss:$4 sm:$0xff] %v2075
    %3162 = vst [vmem:[%s2206] ss:$4 sm:$0xff] %v666
    %3163 = vst [vmem:[%s2208] ss:$4 sm:$0xff] %v386
    %3164 = vst [vmem:[%s2210] ss:$4 sm:$0xff] %v2098
    %v3165 = vld.sshfl [vmem:[#allocation1] sm:$0xff pattern:$0x73625140]
    %v3166 = vld.sshfl [vmem:[#allocation1 + $0x8] sm:$0xff pattern:$0x73625140]
    %v3167 = vld.sshfl [vmem:[#allocation1 + $0x10] sm:$0xff pattern:$0x73625140]
    %v3168 = vld.sshfl [vmem:[#allocation1 + $0x18] sm:$0xff pattern:$0x73625140]
    %v3169 = vld.sshfl [vmem:[#allocation1 + $0x20] sm:$0xff pattern:$0x73625140]
    %3170 = vst [vmem:[#allocation1] ss:$4 sm:$0xff] %v2102
    %3171 = vst [vmem:[%s2198] ss:$4 sm:$0xff] %v2111
    %3172 = vst [vmem:[%s2200] ss:$4 sm:$0xff] %v2118
    %3173 = vst [vmem:[%s2202] ss:$4 sm:$0xff] %v2125
    %3174 = vst [vmem:[%s2204] ss:$4 sm:$0xff] %v2106
    %3175 = vst [vmem:[%s2206] ss:$4 sm:$0xff] %v2115
    %3176 = vst [vmem:[%s2208] ss:$4 sm:$0xff] %v2121
    %3177 = vst [vmem:[%s2210] ss:$4 sm:$0xff] %v2129
    %v3178 = vld.sshfl [vmem:[#allocation1] sm:$0xff pattern:$0x73625140]
    %v3179 = vld.sshfl [vmem:[#allocation1 + $0x8] sm:$0xff pattern:$0x73625140]
    %v3180 = vld.sshfl [vmem:[#allocation1 + $0x10] sm:$0xff pattern:$0x73625140]
    %v3181 = vld.sshfl [vmem:[#allocation1 + $0x18] sm:$0xff pattern:$0x73625140]
    %v3182 = vld.sshfl [vmem:[#allocation1 + $0x20] sm:$0xff pattern:$0x73625140]
    %v3183 = vld.sshfl [vmem:[#allocation1 + $0x28] sm:$0xff pattern:$0x73625140]
    %v3184 = vld.sshfl [vmem:[#allocation1 + $0x30] sm:$0xff pattern:$0x73625140]
    %v3185 = vld.sshfl [vmem:[#allocation1 + $0x38] sm:$0xff pattern:$0x73625140]
    %3186 = vst [vmem:[#allocation1] ss:$4 sm:$0xff] %v2107
    %3187 = vst [vmem:[%s2198] ss:$4 sm:$0xff] %v662
    %3188 = vst [vmem:[%s2200] ss:$4 sm:$0xff] %v385
    %3189 = vst [vmem:[%s2202] ss:$4 sm:$0xff] %v2130
    %3190 = vst [vmem:[%s2204] ss:$4 sm:$0xff] %v2134
    %3191 = vst [vmem:[%s2206] ss:$4 sm:$0xff] %v2142
    %3192 = vst [vmem:[%s2208] ss:$4 sm:$0xff] %v2149
    %3193 = vst [vmem:[%s2210] ss:$4 sm:$0xff] %v2158
    %v3194 = vld.sshfl [vmem:[#allocation1] sm:$0xff pattern:$0x73625140]
    %v3195 = vld.sshfl [vmem:[#allocation1 + $0x20] sm:$0xff pattern:$0x73625140]
    %v3196 = vld.sshfl [vmem:[#allocation1 + $0x28] sm:$0xff pattern:$0x73625140]
    %v3197 = vld.sshfl [vmem:[#allocation1 + $0x30] sm:$0xff pattern:$0x73625140]
    %v3198 = vld.sshfl [vmem:[#allocation1 + $0x38] sm:$0xff pattern:$0x73625140]
    %3199 = vst [vmem:[#allocation1] ss:$4 sm:$0xff] %v2138
    %3200 = vst [vmem:[%s2198] ss:$4 sm:$0xff] %v2145
    %3201 = vst [vmem:[%s2200] ss:$4 sm:$0xff] %v2153
    %3202 = vst [vmem:[%s2202] ss:$4 sm:$0xff] %v2162
    %3203 = vst [vmem:[%s2204] ss:$4 sm:$0xff] %v2139
    %3204 = vst [vmem:[%s2206] ss:$4 sm:$0xff] %v389
    %3205 = vst [vmem:[%s2208] ss:$4 sm:$0xff] %v2154
    %3206 = vst [vmem:[%s2210] ss:$4 sm:$0xff] %v2163
    %v3207 = vld.sshfl [vmem:[#allocation1] sm:$0xff pattern:$0x73625140]
    %v3208 = vld.sshfl [vmem:[#allocation1 + $0x8] sm:$0xff pattern:$0x73625140]
    %v3209 = vld.sshfl [vmem:[#allocation1 + $0x10] sm:$0xff pattern:$0x73625140]
    %v3210 = vld.sshfl [vmem:[#allocation1 + $0x18] sm:$0xff pattern:$0x73625140]
    %v3211 = vld.sshfl [vmem:[#allocation1 + $0x20] sm:$0xff pattern:$0x73625140]
    %3212 = vst [vmem:[#allocation1] ss:$4 sm:$0xff] %v2167
    %3213 = vst [vmem:[%s2198] ss:$4 sm:$0xff] %v2175
    %3214 = vst [vmem:[%s2200] ss:$4 sm:$0xff] %v2182
    %3215 = vst [vmem:[%s2202] ss:$4 sm:$0xff] %v2191
    %3216 = vst [vmem:[%s2204] ss:$4 sm:$0xff] %v2171
    %3217 = vst [vmem:[%s2206] ss:$4 sm:$0xff] %v2178
    %3218 = vst [vmem:[%s2208] ss:$4 sm:$0xff] %v2186
    %3219 = vst [vmem:[%s2210] ss:$4 sm:$0xff] %v2195
    %v3220 = vld.sshfl [vmem:[#allocation1] sm:$0xff pattern:$0x73625140]
    %v3221 = vld.sshfl [vmem:[#allocation1 + $0x8] sm:$0xff pattern:$0x73625140]
    %v3222 = vld.sshfl [vmem:[#allocation1 + $0x10] sm:$0xff pattern:$0x73625140]
    %v3223 = vld.sshfl [vmem:[#allocation1 + $0x18] sm:$0xff pattern:$0x73625140]
    %v3224 = vld.sshfl [vmem:[#allocation1 + $0x20] sm:$0xff pattern:$0x73625140]
    %v3225 = vld.sshfl [vmem:[#allocation1 + $0x28] sm:$0xff pattern:$0x73625140]
    %v3226 = vld.sshfl [vmem:[#allocation1 + $0x30] sm:$0xff pattern:$0x73625140]
    %v3227 = vld.sshfl [vmem:[#allocation1 + $0x38] sm:$0xff pattern:$0x73625140]
    %3228 = vst [vmem:[#allocation1] ss:$4 sm:$0xff] %v2172
    %3229 = vst [vmem:[%s2198] ss:$4 sm:$0xff] %v388
    %3230 = vst [vmem:[%s2200] ss:$4 sm:$0xff] %v2187
    %3231 = vst [vmem:[%s2202] ss:$4 sm:$0xff] %v2196
    %v3232 = vld.sshfl [vmem:[#allocation1] sm:$0xff pattern:$0x73625140]
    %v3674 = vpack.c.bf16 %v2229, %v2212
    %v3675 = vpack.c.bf16 %v2230, %v2213
    %v3676 = vpack.c.bf16 %v2231, %v2214
    %v3677 = vpack.c.bf16 %v2232, %v2215
    %v3678 = vpack.c.bf16 %v2241, %v2216
    %v3679 = vpack.c.bf16 %v2242, %v2217
    %v3680 = vpack.c.bf16 %v2243, %v2218
    %v3681 = vpack.c.bf16 %v2244, %v2219
    %v3682 = vpack.c.bf16 %v2245, %v2228
    %v3683 = vpack.c.bf16 %v2271, %v2254
    %v3684 = vpack.c.bf16 %v2272, %v2255
    %v3685 = vpack.c.bf16 %v2273, %v2256
    %v3686 = vpack.c.bf16 %v2274, %v2257
    %v3687 = vpack.c.bf16 %v2283, %v2258
    %v3688 = vpack.c.bf16 %v2284, %v2259
    %v3689 = vpack.c.bf16 %v2285, %v2260
    %v3690 = vpack.c.bf16 %v2286, %v2261
    %v3691 = vpack.c.bf16 %v2287, %v2270
    %v3692 = vpack.c.bf16 %v2313, %v2296
    %v3693 = vpack.c.bf16 %v2314, %v2297
    %v3694 = vpack.c.bf16 %v2315, %v2298
    %v3695 = vpack.c.bf16 %v2316, %v2299
    %v3696 = vpack.c.bf16 %v2325, %v2300
    %v3697 = vpack.c.bf16 %v2326, %v2301
    %v3698 = vpack.c.bf16 %v2327, %v2302
    %v3699 = vpack.c.bf16 %v2328, %v2303
    %v3700 = vpack.c.bf16 %v2329, %v2312
    %v3701 = vpack.c.bf16 %v2355, %v2338
    %v3702 = vpack.c.bf16 %v2356, %v2339
    %v3703 = vpack.c.bf16 %v2357, %v2340
    %v3704 = vpack.c.bf16 %v2358, %v2341
    %v3705 = vpack.c.bf16 %v2367, %v2342
    %v3706 = vpack.c.bf16 %v2368, %v2343
    %v3707 = vpack.c.bf16 %v2369, %v2344
    %v3708 = vpack.c.bf16 %v2370, %v2345
    %v3709 = vpack.c.bf16 %v2371, %v2354
    %v3710 = vpack.c.bf16 %v2397, %v2380
    %v3711 = vpack.c.bf16 %v2398, %v2381
    %v3712 = vpack.c.bf16 %v2399, %v2382
    %v3713 = vpack.c.bf16 %v2400, %v2383
    %v3714 = vpack.c.bf16 %v2409, %v2384
    %v3715 = vpack.c.bf16 %v2410, %v2385
    %v3716 = vpack.c.bf16 %v2411, %v2386
    %v3717 = vpack.c.bf16 %v2412, %v2387
    %v3718 = vpack.c.bf16 %v2413, %v2396
    %v3719 = vpack.c.bf16 %v2439, %v2422
    %v3720 = vpack.c.bf16 %v2440, %v2423
    %v3721 = vpack.c.bf16 %v2441, %v2424
    %v3722 = vpack.c.bf16 %v2442, %v2425
    %v3723 = vpack.c.bf16 %v2451, %v2426
    %v3724 = vpack.c.bf16 %v2452, %v2427
    %v3725 = vpack.c.bf16 %v2453, %v2428
    %v3726 = vpack.c.bf16 %v2454, %v2429
    %v3727 = vpack.c.bf16 %v2455, %v2438
    %v3728 = vpack.c.bf16 %v2481, %v2464
    %v3729 = vpack.c.bf16 %v2482, %v2465
    %v3730 = vpack.c.bf16 %v2483, %v2466
    %v3731 = vpack.c.bf16 %v2484, %v2467
    %v3732 = vpack.c.bf16 %v2493, %v2468
    %v3733 = vpack.c.bf16 %v2494, %v2469
    %v3734 = vpack.c.bf16 %v2495, %v2470
    %v3735 = vpack.c.bf16 %v2496, %v2471
    %v3736 = vpack.c.bf16 %v2497, %v2480
    %v3737 = vpack.c.bf16 %v2523, %v2506
    %v3738 = vpack.c.bf16 %v2524, %v2507
    %v3739 = vpack.c.bf16 %v2525, %v2508
    %v3740 = vpack.c.bf16 %v2526, %v2509
    %v3741 = vpack.c.bf16 %v2535, %v2510
    %v3742 = vpack.c.bf16 %v2536, %v2511
    %v3743 = vpack.c.bf16 %v2537, %v2512
    %v3744 = vpack.c.bf16 %v2538, %v2513
    %v3745 = vpack.c.bf16 %v2539, %v2522
    %v3746 = vpack.c.bf16 %v2565, %v2548
    %v3747 = vpack.c.bf16 %v2566, %v2549
    %v3748 = vpack.c.bf16 %v2567, %v2550
    %v3749 = vpack.c.bf16 %v2568, %v2551
    %v3750 = vpack.c.bf16 %v2577, %v2552
    %v3751 = vpack.c.bf16 %v2578, %v2553
    %v3752 = vpack.c.bf16 %v2579, %v2554
    %v3753 = vpack.c.bf16 %v2580, %v2555
    %v3754 = vpack.c.bf16 %v2581, %v2564
    %v3755 = vpack.c.bf16 %v2607, %v2590
    %v3756 = vpack.c.bf16 %v2608, %v2591
    %v3757 = vpack.c.bf16 %v2609, %v2592
    %v3758 = vpack.c.bf16 %v2610, %v2593
    %v3759 = vpack.c.bf16 %v2619, %v2594
    %v3760 = vpack.c.bf16 %v2620, %v2595
    %v3761 = vpack.c.bf16 %v2621, %v2596
    %v3762 = vpack.c.bf16 %v2622, %v2597
    %v3763 = vpack.c.bf16 %v2623, %v2606
    %v3764 = vpack.c.bf16 %v2649, %v2632
    %v3765 = vpack.c.bf16 %v2650, %v2633
    %v3766 = vpack.c.bf16 %v2651, %v2634
    %v3767 = vpack.c.bf16 %v2652, %v2635
    %v3768 = vpack.c.bf16 %v2661, %v2636
    %v3769 = vpack.c.bf16 %v2662, %v2637
    %v3770 = vpack.c.bf16 %v2663, %v2638
    %v3771 = vpack.c.bf16 %v2664, %v2639
    %v3772 = vpack.c.bf16 %v2665, %v2648
    %v3773 = vpack.c.bf16 %v2691, %v2674
    %v3774 = vpack.c.bf16 %v2692, %v2675
    %v3775 = vpack.c.bf16 %v2693, %v2676
    %v3776 = vpack.c.bf16 %v2694, %v2677
    %v3777 = vpack.c.bf16 %v2703, %v2678
    %v3778 = vpack.c.bf16 %v2704, %v2679
    %v3779 = vpack.c.bf16 %v2705, %v2680
    %v3780 = vpack.c.bf16 %v2706, %v2681
    %v3781 = vpack.c.bf16 %v2707, %v2690
    %v3782 = vpack.c.bf16 %v2733, %v2716
    %v3783 = vpack.c.bf16 %v2734, %v2717
    %v3784 = vpack.c.bf16 %v2735, %v2718
    %v3785 = vpack.c.bf16 %v2736, %v2719
    %v3786 = vpack.c.bf16 %v2745, %v2720
    %v3787 = vpack.c.bf16 %v2746, %v2721
    %v3788 = vpack.c.bf16 %v2747, %v2722
    %v3789 = vpack.c.bf16 %v2748, %v2723
    %v3790 = vpack.c.bf16 %v2749, %v2732
    %v3791 = vpack.c.bf16 %v2775, %v2758
    %v3792 = vpack.c.bf16 %v2776, %v2759
    %v3793 = vpack.c.bf16 %v2777, %v2760
    %v3794 = vpack.c.bf16 %v2778, %v2761
    %v3795 = vpack.c.bf16 %v2787, %v2762
    %v3796 = vpack.c.bf16 %v2788, %v2763
    %v3797 = vpack.c.bf16 %v2789, %v2764
    %v3798 = vpack.c.bf16 %v2790, %v2765
    %v3799 = vpack.c.bf16 %v2791, %v2774
    %v3800 = vpack.c.bf16 %v2817, %v2800
    %v3801 = vpack.c.bf16 %v2818, %v2801
    %v3802 = vpack.c.bf16 %v2819, %v2802
    %v3803 = vpack.c.bf16 %v2820, %v2803
    %v3804 = vpack.c.bf16 %v2829, %v2804
    %v3805 = vpack.c.bf16 %v2830, %v2805
    %v3806 = vpack.c.bf16 %v2831, %v2806
    %v3807 = vpack.c.bf16 %v2832, %v2807
    %v3808 = vpack.c.bf16 %v2833, %v2816
    %v3809 = vpack.c.bf16 %v2859, %v2842
    %v3810 = vpack.c.bf16 %v2860, %v2843
    %v3811 = vpack.c.bf16 %v2861, %v2844
    %v3812 = vpack.c.bf16 %v2862, %v2845
    %v3813 = vpack.c.bf16 %v2871, %v2846
    %v3814 = vpack.c.bf16 %v2872, %v2847
    %v3815 = vpack.c.bf16 %v2873, %v2848
    %v3816 = vpack.c.bf16 %v2874, %v2849
    %v3817 = vpack.c.bf16 %v2875, %v2858
    %v3818 = vpack.c.bf16 %v2901, %v2884
    %v3819 = vpack.c.bf16 %v2902, %v2885
    %v3820 = vpack.c.bf16 %v2903, %v2886
    %v3821 = vpack.c.bf16 %v2904, %v2887
    %v3822 = vpack.c.bf16 %v2913, %v2888
    %v3823 = vpack.c.bf16 %v2914, %v2889
    %v3824 = vpack.c.bf16 %v2915, %v2890
    %v3825 = vpack.c.bf16 %v2916, %v2891
    %v3826 = vpack.c.bf16 %v2917, %v2900
    %v3827 = vpack.c.bf16 %v2943, %v2926
    %v3828 = vpack.c.bf16 %v2944, %v2927
    %v3829 = vpack.c.bf16 %v2945, %v2928
    %v3830 = vpack.c.bf16 %v2946, %v2929
    %v3831 = vpack.c.bf16 %v2955, %v2930
    %v3832 = vpack.c.bf16 %v2956, %v2931
    %v3833 = vpack.c.bf16 %v2957, %v2932
    %v3834 = vpack.c.bf16 %v2958, %v2933
    %v3835 = vpack.c.bf16 %v2959, %v2942
    %v3836 = vpack.c.bf16 %v2985, %v2968
    %v3837 = vpack.c.bf16 %v2986, %v2969
    %v3838 = vpack.c.bf16 %v2987, %v2970
    %v3839 = vpack.c.bf16 %v2988, %v2971
    %v3840 = vpack.c.bf16 %v2997, %v2972
    %v3841 = vpack.c.bf16 %v2998, %v2973
    %v3842 = vpack.c.bf16 %v2999, %v2974
    %v3843 = vpack.c.bf16 %v3000, %v2975
    %v3844 = vpack.c.bf16 %v3001, %v2984
    %v3845 = vpack.c.bf16 %v3027, %v3010
    %v3846 = vpack.c.bf16 %v3028, %v3011
    %v3847 = vpack.c.bf16 %v3029, %v3012
    %v3848 = vpack.c.bf16 %v3030, %v3013
    %v3849 = vpack.c.bf16 %v3039, %v3014
    %v3850 = vpack.c.bf16 %v3040, %v3015
    %v3851 = vpack.c.bf16 %v3041, %v3016
    %v3852 = vpack.c.bf16 %v3042, %v3017
    %v3853 = vpack.c.bf16 %v3043, %v3026
    %v3854 = vpack.c.bf16 %v3069, %v3052
    %v3855 = vpack.c.bf16 %v3070, %v3053
    %v3856 = vpack.c.bf16 %v3071, %v3054
    %v3857 = vpack.c.bf16 %v3072, %v3055
    %v3858 = vpack.c.bf16 %v3081, %v3056
    %v3859 = vpack.c.bf16 %v3082, %v3057
    %v3860 = vpack.c.bf16 %v3083, %v3058
    %v3861 = vpack.c.bf16 %v3084, %v3059
    %v3862 = vpack.c.bf16 %v3085, %v3068
    %v3863 = vpack.c.bf16 %v3111, %v3094
    %v3864 = vpack.c.bf16 %v3112, %v3095
    %v3865 = vpack.c.bf16 %v3113, %v3096
    %v3866 = vpack.c.bf16 %v3114, %v3097
    %v3867 = vpack.c.bf16 %v3123, %v3098
    %v3868 = vpack.c.bf16 %v3124, %v3099
    %v3869 = vpack.c.bf16 %v3125, %v3100
    %v3870 = vpack.c.bf16 %v3126, %v3101
    %v3871 = vpack.c.bf16 %v3127, %v3110
    %v3872 = vpack.c.bf16 %v3153, %v3136
    %v3873 = vpack.c.bf16 %v3154, %v3137
    %v3874 = vpack.c.bf16 %v3155, %v3138
    %v3875 = vpack.c.bf16 %v3156, %v3139
    %v3876 = vpack.c.bf16 %v3165, %v3140
    %v3877 = vpack.c.bf16 %v3166, %v3141
    %v3878 = vpack.c.bf16 %v3167, %v3142
    %v3879 = vpack.c.bf16 %v3168, %v3143
    %v3880 = vpack.c.bf16 %v3169, %v3152
    %v3881 = vpack.c.bf16 %v3195, %v3178
    %v3882 = vpack.c.bf16 %v3196, %v3179
    %v3883 = vpack.c.bf16 %v3197, %v3180
    %v3884 = vpack.c.bf16 %v3198, %v3181
    %v3885 = vpack.c.bf16 %v3207, %v3182
    %v3886 = vpack.c.bf16 %v3208, %v3183
    %v3887 = vpack.c.bf16 %v3209, %v3184
    %v3888 = vpack.c.bf16 %v3210, %v3185
    %v3889 = vpack.c.bf16 %v3211, %v3194
    %v3890 = vpack.c.bf16 %v3220, %v3220
    %v3891 = vpack.c.bf16 %v3221, %v3221
    %v3892 = vpack.c.bf16 %v3222, %v3222
    %v3893 = vpack.c.bf16 %v3223, %v3223
    %v3894 = vpack.c.bf16 %v3224, %v3224
    %v3895 = vpack.c.bf16 %v3225, %v3225
    %v3896 = vpack.c.bf16 %v3226, %v3226
    %v3897 = vpack.c.bf16 %v3227, %v3227
    %v3898 = vpack.c.bf16 %v3232, %v3232
    %v3899 = vld [vmem:[#allocation5] sm:$0xf]
    %v3900 = vld [vmem:[#allocation5 + $0x4] sm:$0xf]
    %v3901 = vld [vmem:[#allocation5 + $0x8] sm:$0xf]
    %v3902 = vld [vmem:[#allocation5 + $0xc] sm:$0xf]
    %v3903 = vld [vmem:[#allocation5 + $0x10] sm:$0xf]
    %v3904 = vld [vmem:[#allocation5 + $0x14] sm:$0xf]
    %v3905 = vld [vmem:[#allocation5 + $0x18] sm:$0xf]
    %v3906 = vld [vmem:[#allocation5 + $0x1c] sm:$0xf]
    %v3907 = vld [vmem:[#allocation5 + $0x20] sm:$0xf]
    %v3908 = vld [vmem:[#allocation5 + $0x24] sm:$0xf]
    %v3909 = vld [vmem:[#allocation5 + $0x28] sm:$0xf]
    %v3910 = vld [vmem:[#allocation5 + $0x2c] sm:$0xf]
    %v3911 = vld [vmem:[#allocation5 + $0x30] sm:$0xf]
    %v3912 = vld [vmem:[#allocation5 + $0x34] sm:$0xf]
    %v3913 = vld [vmem:[#allocation5 + $0x38] sm:$0xf]
    %v3914 = vld [vmem:[#allocation5 + $0x3c] sm:$0xf]
    %v3915 = vld [vmem:[#allocation5 + $0x40] sm:$0xf]
    %v3916 = vld [vmem:[#allocation5 + $0x44] sm:$0xf]
    %v3917 = vld [vmem:[#allocation5 + $0x48] sm:$0xf]
    %v3918 = vld [vmem:[#allocation5 + $0x4c] sm:$0xf]
    %v3919 = vld [vmem:[#allocation5 + $0x50] sm:$0xf]
    %v3920 = vld [vmem:[#allocation5 + $0x54] sm:$0xf]
    %v3921 = vld [vmem:[#allocation5 + $0x58] sm:$0xf]
    %v3922 = vld [vmem:[#allocation5 + $0x5c] sm:$0xf]
    %v3923 = vld [vmem:[#allocation5 + $0x60] sm:$0xf]
    %v3924 = vld [vmem:[#allocation5 + $0x64] sm:$0xf]
    %v3925 = vld [vmem:[#allocation5 + $0x68] sm:$0xf]
    %v3926 = vld [vmem:[#allocation5 + $0x6c] sm:$0xf]
    %v3927 = vld [vmem:[#allocation5 + $0x70] sm:$0xf]
    %v3928 = vld [vmem:[#allocation5 + $0x74] sm:$0xf]
    %v3929 = vld [vmem:[#allocation5 + $0x78] sm:$0xf]
    %v3930 = vld [vmem:[#allocation5 + $0x7c] sm:$0xf]
    %v3931 = vld [vmem:[#allocation5 + $0x80] sm:$0xf]
    %v3932 = vld [vmem:[#allocation5 + $0x84] sm:$0xf]
    %v3933 = vld [vmem:[#allocation5 + $0x88] sm:$0xf]
    %v3934 = vld [vmem:[#allocation5 + $0x8c] sm:$0xf]
    %v3935 = vld [vmem:[#allocation5 + $0x90] sm:$0xf]
    %v3936 = vld [vmem:[#allocation5 + $0x94] sm:$0xf]
    %v3937 = vld [vmem:[#allocation5 + $0x98] sm:$0xf]
    %v3938 = vld [vmem:[#allocation5 + $0x9c] sm:$0xf]
    %v3939 = vld [vmem:[#allocation5 + $0xa0] sm:$0xf]
    %v3940 = vld [vmem:[#allocation5 + $0xa4] sm:$0xf]
    %v3941 = vld [vmem:[#allocation5 + $0xa8] sm:$0xf]
    %v3942 = vld [vmem:[#allocation5 + $0xac] sm:$0xf]
    %v3943 = vld [vmem:[#allocation5 + $0xb0] sm:$0xf]
    %v3944 = vld [vmem:[#allocation5 + $0xb4] sm:$0xf]
    %v3945 = vld [vmem:[#allocation5 + $0xb8] sm:$0xf]
    %v3946 = vld [vmem:[#allocation5 + $0xbc] sm:$0xf]
    %v3947 = vld [vmem:[#allocation5 + $0xc0] sm:$0xf]
    %v3948 = vld [vmem:[#allocation5 + $0xc4] sm:$0xf]
    %v3949 = vld [vmem:[#allocation5 + $0xc8] sm:$0xf]
    %v3950 = vld [vmem:[#allocation5 + $0xcc] sm:$0xf]
    %v3951 = vld [vmem:[#allocation5 + $0xd0] sm:$0xf]
    %v3952 = vld [vmem:[#allocation5 + $0xd4] sm:$0xf]
    %v3953 = vld [vmem:[#allocation5 + $0xd8] sm:$0xf]
    %v3954 = vld [vmem:[#allocation5 + $0xdc] sm:$0xf]
    %v3955 = vld [vmem:[#allocation5 + $0xe0] sm:$0xf]
    %v3956 = vld [vmem:[#allocation5 + $0xe4] sm:$0xf]
    %v3957 = vld [vmem:[#allocation5 + $0xe8] sm:$0xf]
    %v3958 = vld [vmem:[#allocation5 + $0xec] sm:$0xf]
    %v3959 = vld [vmem:[#allocation5 + $0xf0] sm:$0xf]
    %v3960 = vld [vmem:[#allocation5 + $0xf4] sm:$0xf]
    %v3961 = vld [vmem:[#allocation5 + $0xf8] sm:$0xf]
    %v3962 = vld [vmem:[#allocation5 + $0xfc] sm:$0xf]
    %v3963 = vld [vmem:[#allocation5 + $0x100] sm:$0xf]
    %v3964 = vld [vmem:[#allocation5 + $0x104] sm:$0xf]
    %v3965 = vld [vmem:[#allocation5 + $0x108] sm:$0xf]
    %v3966 = vld [vmem:[#allocation5 + $0x10c] sm:$0xf]
    %v3967 = vld [vmem:[#allocation5 + $0x110] sm:$0xf]
    %v3968 = vld [vmem:[#allocation5 + $0x114] sm:$0xf]
    %v3969 = vld [vmem:[#allocation5 + $0x118] sm:$0xf]
    %v3970 = vld [vmem:[#allocation5 + $0x11c] sm:$0xf]
    %v3971 = vld [vmem:[#allocation5 + $0x120] sm:$0xf]
    %v3972 = vld [vmem:[#allocation5 + $0x124] sm:$0xf]
    %v3973 = vld [vmem:[#allocation5 + $0x128] sm:$0xf]
    %v3974 = vld [vmem:[#allocation5 + $0x12c] sm:$0xf]
    %v3975 = vld [vmem:[#allocation5 + $0x130] sm:$0xf]
    %v3976 = vld [vmem:[#allocation5 + $0x134] sm:$0xf]
    %v3977 = vld [vmem:[#allocation5 + $0x138] sm:$0xf]
    %v3978 = vld [vmem:[#allocation5 + $0x13c] sm:$0xf]
    %v3979 = vld [vmem:[#allocation5 + $0x140] sm:$0xf]
    %v3980 = vld [vmem:[#allocation5 + $0x144] sm:$0xf]
    %v3981 = vld [vmem:[#allocation5 + $0x148] sm:$0xf]
    %v3982 = vld [vmem:[#allocation5 + $0x14c] sm:$0xf]
    %v3983 = vld [vmem:[#allocation5 + $0x150] sm:$0xf]
    %v3984 = vld [vmem:[#allocation5 + $0x154] sm:$0xf]
    %v3985 = vld [vmem:[#allocation5 + $0x158] sm:$0xf]
    %v3986 = vld [vmem:[#allocation5 + $0x15c] sm:$0xf]
    %v3987 = vld [vmem:[#allocation5 + $0x160] sm:$0xf]
    %v3988 = vld [vmem:[#allocation5 + $0x164] sm:$0xf]
    %v3989 = vld [vmem:[#allocation5 + $0x168] sm:$0xf]
    %v3990 = vld [vmem:[#allocation5 + $0x16c] sm:$0xf]
    %v3991 = vld [vmem:[#allocation5 + $0x170] sm:$0xf]
    %v3992 = vld [vmem:[#allocation5 + $0x174] sm:$0xf]
    %v3993 = vld [vmem:[#allocation5 + $0x178] sm:$0xf]
    %v3994 = vld [vmem:[#allocation5 + $0x17c] sm:$0xf]
    %v3995 = vld [vmem:[#allocation5 + $0x180] sm:$0xf]
    %v3996 = vld [vmem:[#allocation5 + $0x184] sm:$0xf]
    %v3997 = vld [vmem:[#allocation5 + $0x188] sm:$0xf]
    %v3998 = vld [vmem:[#allocation5 + $0x18c] sm:$0xf]
    %v3999 = vld [vmem:[#allocation5 + $0x190] sm:$0xf]
    %v4000 = vld [vmem:[#allocation5 + $0x194] sm:$0xf]
    %v4001 = vld [vmem:[#allocation5 + $0x198] sm:$0xf]
    %v4002 = vld [vmem:[#allocation5 + $0x19c] sm:$0xf]
    %v4003 = vld [vmem:[#allocation5 + $0x1a0] sm:$0xf]
    %v4004 = vld [vmem:[#allocation5 + $0x1a4] sm:$0xf]
    %v4005 = vld [vmem:[#allocation5 + $0x1a8] sm:$0xf]
    %v4006 = vld [vmem:[#allocation5 + $0x1ac] sm:$0xf]
    %v4007 = vld [vmem:[#allocation5 + $0x1b0] sm:$0xf]
    %v4008 = vld [vmem:[#allocation5 + $0x1b4] sm:$0xf]
    %v4009 = vld [vmem:[#allocation5 + $0x1b8] sm:$0xf]
    %v4010 = vld [vmem:[#allocation5 + $0x1bc] sm:$0xf]
    %v4011 = vld [vmem:[#allocation5 + $0x1c0] sm:$0xf]
    %v4012 = vld [vmem:[#allocation5 + $0x1c4] sm:$0xf]
    %v4013 = vld [vmem:[#allocation5 + $0x1c8] sm:$0xf]
    %v4014 = vld [vmem:[#allocation5 + $0x1cc] sm:$0xf]
    %v4015 = vld [vmem:[#allocation5 + $0x1d0] sm:$0xf]
    %v4016 = vld [vmem:[#allocation5 + $0x1d4] sm:$0xf]
    %v4017 = vld [vmem:[#allocation5 + $0x1d8] sm:$0xf]
    %v4018 = vld [vmem:[#allocation5 + $0x1dc] sm:$0xf]
    %v4019 = vld [vmem:[#allocation5 + $0x1e0] sm:$0xf]
    %v4020 = vld [vmem:[#allocation5 + $0x1e4] sm:$0xf]
    %v4021 = vld [vmem:[#allocation5 + $0x1e8] sm:$0xf]
    %v4022 = vld [vmem:[#allocation5 + $0x1ec] sm:$0xf]
    %v4023 = vld [vmem:[#allocation5 + $0x1f0] sm:$0xf]
    %v4024 = vld [vmem:[#allocation5 + $0x1f4] sm:$0xf]
    %v4025 = vld [vmem:[#allocation5 + $0x1f8] sm:$0xf]
    %v4026 = vld [vmem:[#allocation5 + $0x1fc] sm:$0xf]
    %v4027 = vld [vmem:[#allocation5 + $0x200] sm:$0xf]
    %v4028 = vld [vmem:[#allocation5 + $0x204] sm:$0xf]
    %v4029 = vld [vmem:[#allocation5 + $0x208] sm:$0xf]
    %v4030 = vld [vmem:[#allocation5 + $0x20c] sm:$0xf]
    %v4031 = vld [vmem:[#allocation5 + $0x210] sm:$0xf]
    %v4032 = vld [vmem:[#allocation5 + $0x214] sm:$0xf]
    %v4033 = vld [vmem:[#allocation5 + $0x218] sm:$0xf]
    %v4034 = vld [vmem:[#allocation5 + $0x21c] sm:$0xf]
    %v4035 = vld [vmem:[#allocation5 + $0x220] sm:$0xf]
    %v4036 = vld [vmem:[#allocation5 + $0x224] sm:$0xf]
    %v4037 = vld [vmem:[#allocation5 + $0x228] sm:$0xf]
    %v4038 = vld [vmem:[#allocation5 + $0x22c] sm:$0xf]
    %v4039 = vld [vmem:[#allocation5 + $0x230] sm:$0xf]
    %v4040 = vld [vmem:[#allocation5 + $0x234] sm:$0xf]
    %v4041 = vld [vmem:[#allocation5 + $0x238] sm:$0xf]
    %v4042 = vld [vmem:[#allocation5 + $0x23c] sm:$0xf]
    %v4043 = vld [vmem:[%s2] sm:$0x1]
    %v4045 = vperm.slane %v4043, 0
    %v4191 = vunpack.c.l.b16 %v3899
    %v4192 = vunpack.c.l.b16 %v3900
    %v4193 = vunpack.c.l.b16 %v3901
    %v4194 = vunpack.c.l.b16 %v3902
    %v4195 = vunpack.c.l.b16 %v3903
    %v4196 = vunpack.c.l.b16 %v3904
    %v4197 = vunpack.c.l.b16 %v3905
    %v4198 = vunpack.c.l.b16 %v3906
    %v4199 = vunpack.c.l.b16 %v3907
    %v4200 = vunpack.c.l.b16 %v3908
    %v4201 = vunpack.c.l.b16 %v3909
    %v4202 = vunpack.c.l.b16 %v3910
    %v4203 = vunpack.c.l.b16 %v3911
    %v4204 = vunpack.c.l.b16 %v3912
    %v4205 = vunpack.c.l.b16 %v3913
    %v4206 = vunpack.c.l.b16 %v3914
    %v4207 = vunpack.c.l.b16 %v3915
    %v4208 = vunpack.c.l.b16 %v3916
    %v4209 = vunpack.c.l.b16 %v3917
    %v4210 = vunpack.c.l.b16 %v3918
    %v4211 = vunpack.c.l.b16 %v3919
    %v4212 = vunpack.c.l.b16 %v3920
    %v4213 = vunpack.c.l.b16 %v3921
    %v4214 = vunpack.c.l.b16 %v3922
    %v4215 = vunpack.c.l.b16 %v3923
    %v4216 = vunpack.c.l.b16 %v3924
    %v4217 = vunpack.c.l.b16 %v3925
    %v4218 = vunpack.c.l.b16 %v3926
    %v4219 = vunpack.c.l.b16 %v3927
    %v4220 = vunpack.c.l.b16 %v3928
    %v4221 = vunpack.c.l.b16 %v3929
    %v4222 = vunpack.c.l.b16 %v3930
    %v4223 = vunpack.c.l.b16 %v3931
    %v4224 = vunpack.c.l.b16 %v3932
    %v4225 = vunpack.c.l.b16 %v3933
    %v4226 = vunpack.c.l.b16 %v3934
    %v4227 = vunpack.c.l.b16 %v3935
    %v4228 = vunpack.c.l.b16 %v3936
    %v4229 = vunpack.c.l.b16 %v3937
    %v4230 = vunpack.c.l.b16 %v3938
    %v4231 = vunpack.c.l.b16 %v3939
    %v4232 = vunpack.c.l.b16 %v3940
    %v4233 = vunpack.c.l.b16 %v3941
    %v4234 = vunpack.c.l.b16 %v3942
    %v4235 = vunpack.c.l.b16 %v3943
    %v4236 = vunpack.c.l.b16 %v3944
    %v4237 = vunpack.c.l.b16 %v3945
    %v4238 = vunpack.c.l.b16 %v3946
    %v4239 = vunpack.c.l.b16 %v3947
    %v4240 = vunpack.c.l.b16 %v3948
    %v4241 = vunpack.c.l.b16 %v3949
    %v4242 = vunpack.c.l.b16 %v3950
    %v4243 = vunpack.c.l.b16 %v3951
    %v4244 = vunpack.c.l.b16 %v3952
    %v4245 = vunpack.c.l.b16 %v3953
    %v4246 = vunpack.c.l.b16 %v3954
    %v4247 = vunpack.c.l.b16 %v3955
    %v4248 = vunpack.c.l.b16 %v3956
    %v4249 = vunpack.c.l.b16 %v3957
    %v4250 = vunpack.c.l.b16 %v3958
    %v4251 = vunpack.c.l.b16 %v3959
    %v4252 = vunpack.c.l.b16 %v3960
    %v4253 = vunpack.c.l.b16 %v3961
    %v4254 = vunpack.c.l.b16 %v3962
    %v4255 = vunpack.c.l.b16 %v3963
    %v4256 = vunpack.c.l.b16 %v3964
    %v4257 = vunpack.c.l.b16 %v3965
    %v4258 = vunpack.c.l.b16 %v3966
    %v4259 = vunpack.c.l.b16 %v3967
    %v4260 = vunpack.c.l.b16 %v3968
    %v4261 = vunpack.c.l.b16 %v3969
    %v4262 = vunpack.c.l.b16 %v3970
    %v4263 = vunpack.c.l.b16 %v3971
    %v4264 = vunpack.c.l.b16 %v3972
    %v4265 = vunpack.c.l.b16 %v3973
    %v4266 = vunpack.c.l.b16 %v3974
    %v4267 = vunpack.c.l.b16 %v3975
    %v4268 = vunpack.c.l.b16 %v3976
    %v4269 = vunpack.c.l.b16 %v3977
    %v4270 = vunpack.c.l.b16 %v3978
    %v4271 = vunpack.c.l.b16 %v3979
    %v4272 = vunpack.c.l.b16 %v3980
    %v4273 = vunpack.c.l.b16 %v3981
    %v4274 = vunpack.c.l.b16 %v3982
    %v4275 = vunpack.c.l.b16 %v3983
    %v4276 = vunpack.c.l.b16 %v3984
    %v4277 = vunpack.c.l.b16 %v3985
    %v4278 = vunpack.c.l.b16 %v3986
    %v4279 = vunpack.c.l.b16 %v3987
    %v4280 = vunpack.c.l.b16 %v3988
    %v4281 = vunpack.c.l.b16 %v3989
    %v4282 = vunpack.c.l.b16 %v3990
    %v4283 = vunpack.c.l.b16 %v3991
    %v4284 = vunpack.c.l.b16 %v3992
    %v4285 = vunpack.c.l.b16 %v3993
    %v4286 = vunpack.c.l.b16 %v3994
    %v4287 = vunpack.c.l.b16 %v3995
    %v4288 = vunpack.c.l.b16 %v3996
    %v4289 = vunpack.c.l.b16 %v3997
    %v4290 = vunpack.c.l.b16 %v3998
    %v4291 = vunpack.c.l.b16 %v3999
    %v4292 = vunpack.c.l.b16 %v4000
    %v4293 = vunpack.c.l.b16 %v4001
    %v4294 = vunpack.c.l.b16 %v4002
    %v4295 = vunpack.c.l.b16 %v4003
    %v4296 = vunpack.c.l.b16 %v4004
    %v4297 = vunpack.c.l.b16 %v4005
    %v4298 = vunpack.c.l.b16 %v4006
    %v4299 = vunpack.c.l.b16 %v4007
    %v4300 = vunpack.c.l.b16 %v4008
    %v4301 = vunpack.c.l.b16 %v4009
    %v4302 = vunpack.c.l.b16 %v4010
    %v4303 = vunpack.c.l.b16 %v4011
    %v4304 = vunpack.c.l.b16 %v4012
    %v4305 = vunpack.c.l.b16 %v4013
    %v4306 = vunpack.c.l.b16 %v4014
    %v4307 = vunpack.c.l.b16 %v4015
    %v4308 = vunpack.c.l.b16 %v4016
    %v4309 = vunpack.c.l.b16 %v4017
    %v4310 = vunpack.c.l.b16 %v4018
    %v4311 = vunpack.c.l.b16 %v4019
    %v4312 = vunpack.c.l.b16 %v4020
    %v4313 = vunpack.c.l.b16 %v4021
    %v4314 = vunpack.c.l.b16 %v4022
    %v4315 = vunpack.c.l.b16 %v4023
    %v4316 = vunpack.c.l.b16 %v4024
    %v4317 = vunpack.c.l.b16 %v4025
    %v4318 = vunpack.c.l.b16 %v4026
    %v4319 = vunpack.c.l.b16 %v4027
    %v4320 = vunpack.c.l.b16 %v4028
    %v4321 = vunpack.c.l.b16 %v4029
    %v4322 = vunpack.c.l.b16 %v4030
    %v4323 = vunpack.c.l.b16 %v4031
    %v4324 = vunpack.c.l.b16 %v4032
    %v4325 = vunpack.c.l.b16 %v4033
    %v4326 = vunpack.c.l.b16 %v4034
    %v4327 = vunpack.c.l.b16 %v4035
    %v4328 = vunpack.c.l.b16 %v4036
    %v4329 = vunpack.c.l.b16 %v4037
    %v4330 = vunpack.c.l.b16 %v4038
    %v4331 = vunpack.c.l.b16 %v4039
    %v4332 = vunpack.c.l.b16 %v4040
    %v4333 = vunpack.c.l.b16 %v4041
    %v4334 = vunpack.c.l.b16 %v4042
    %v4335 = vpack.c.b16 %v4192, %v4191
    %v4336 = vpack.c.b16 %v4194, %v4193
    %v4337 = vpack.c.b16 %v4196, %v4195
    %v4338 = vpack.c.b16 %v4198, %v4197
    %v4339 = vpack.c.b16 %v4200, %v4199
    %v4340 = vpack.c.b16 %v4202, %v4201
    %v4341 = vpack.c.b16 %v4204, %v4203
    %v4342 = vpack.c.b16 %v4206, %v4205
    %v4343 = vpack.c.b16 %v4208, %v4207
    %v4344 = vpack.c.b16 %v4210, %v4209
    %v4345 = vpack.c.b16 %v4212, %v4211
    %v4346 = vpack.c.b16 %v4214, %v4213
    %v4347 = vpack.c.b16 %v4216, %v4215
    %v4348 = vpack.c.b16 %v4218, %v4217
    %v4349 = vpack.c.b16 %v4220, %v4219
    %v4350 = vpack.c.b16 %v4222, %v4221
    %v4351 = vpack.c.b16 %v4224, %v4223
    %v4352 = vpack.c.b16 %v4226, %v4225
    %v4353 = vpack.c.b16 %v4228, %v4227
    %v4354 = vpack.c.b16 %v4230, %v4229
    %v4355 = vpack.c.b16 %v4232, %v4231
    %v4356 = vpack.c.b16 %v4234, %v4233
    %v4357 = vpack.c.b16 %v4236, %v4235
    %v4358 = vpack.c.b16 %v4238, %v4237
    %v4359 = vpack.c.b16 %v4240, %v4239
    %v4360 = vpack.c.b16 %v4242, %v4241
    %v4361 = vpack.c.b16 %v4244, %v4243
    %v4362 = vpack.c.b16 %v4246, %v4245
    %v4363 = vpack.c.b16 %v4248, %v4247
    %v4364 = vpack.c.b16 %v4250, %v4249
    %v4365 = vpack.c.b16 %v4252, %v4251
    %v4366 = vpack.c.b16 %v4254, %v4253
    %v4367 = vpack.c.b16 %v4256, %v4255
    %v4368 = vpack.c.b16 %v4258, %v4257
    %v4369 = vpack.c.b16 %v4260, %v4259
    %v4370 = vpack.c.b16 %v4262, %v4261
    %v4371 = vpack.c.b16 %v4264, %v4263
    %v4372 = vpack.c.b16 %v4266, %v4265
    %v4373 = vpack.c.b16 %v4268, %v4267
    %v4374 = vpack.c.b16 %v4270, %v4269
    %v4375 = vpack.c.b16 %v4272, %v4271
    %v4376 = vpack.c.b16 %v4274, %v4273
    %v4377 = vpack.c.b16 %v4276, %v4275
    %v4378 = vpack.c.b16 %v4278, %v4277
    %v4379 = vpack.c.b16 %v4280, %v4279
    %v4380 = vpack.c.b16 %v4282, %v4281
    %v4381 = vpack.c.b16 %v4284, %v4283
    %v4382 = vpack.c.b16 %v4286, %v4285
    %v4383 = vpack.c.b16 %v4288, %v4287
    %v4384 = vpack.c.b16 %v4290, %v4289
    %v4385 = vpack.c.b16 %v4292, %v4291
    %v4386 = vpack.c.b16 %v4294, %v4293
    %v4387 = vpack.c.b16 %v4296, %v4295
    %v4388 = vpack.c.b16 %v4298, %v4297
    %v4389 = vpack.c.b16 %v4300, %v4299
    %v4390 = vpack.c.b16 %v4302, %v4301
    %v4391 = vpack.c.b16 %v4304, %v4303
    %v4392 = vpack.c.b16 %v4306, %v4305
    %v4393 = vpack.c.b16 %v4308, %v4307
    %v4394 = vpack.c.b16 %v4310, %v4309
    %v4395 = vpack.c.b16 %v4312, %v4311
    %v4396 = vpack.c.b16 %v4314, %v4313
    %v4397 = vpack.c.b16 %v4316, %v4315
    %v4398 = vpack.c.b16 %v4318, %v4317
    %v4399 = vpack.c.b16 %v4320, %v4319
    %v4400 = vpack.c.b16 %v4322, %v4321
    %v4401 = vpack.c.b16 %v4324, %v4323
    %v4402 = vpack.c.b16 %v4326, %v4325
    %v4403 = vpack.c.b16 %v4328, %v4327
    %v4404 = vpack.c.b16 %v4330, %v4329
    %v4405 = vpack.c.b16 %v4332, %v4331
    %v4406 = vpack.c.b16 %v4334, %v4333
    %4479 = vmatpush.bf16.msra.mxu0 %v4342
    %4480 = vmatpush.bf16.msra.mxu0 %v4341
    %4481 = vmatpush.bf16.msra.mxu0 %v4340
    %4482 = vmatpush.bf16.msra.mxu0 %v4339
    %4483 = vmatpush.bf16.msra.mxu0 %v4338
    %4484 = vmatpush.bf16.msra.mxu0 %v4337
    %4485 = vmatpush.bf16.msra.mxu0 %v4336
    %4486 = vmatpush.bf16.msra.mxu0 %v4335
    %4487 = vmatmul.bf16.gmra.mxu0 %v3674
    %v4488 = vpop.f32.mrf.mxu0
    %v4489 = vadd.f32 %v4045, %v4488
    %v4490 = vpop.f32.mrf.mxu0
    %v4491 = vadd.f32 %v4045, %v4490
    %4492 = vmatmul.bf16.gmra.mxu0 %v3683
    %v4493 = vpop.f32.mrf.mxu0
    %v4494 = vadd.f32 %v4045, %v4493
    %v4495 = vpop.f32.mrf.mxu0
    %v4496 = vadd.f32 %v4045, %v4495
    %4497 = vmatmul.bf16.gmra.mxu0 %v3692
    %v4498 = vpop.f32.mrf.mxu0
    %v4499 = vadd.f32 %v4045, %v4498
    %v4500 = vpop.f32.mrf.mxu0
    %v4501 = vadd.f32 %v4045, %v4500
    %4502 = vmatmul.bf16.gmra.mxu0 %v3701
    %v4503 = vpop.f32.mrf.mxu0
    %v4504 = vadd.f32 %v4045, %v4503
    %v4505 = vpop.f32.mrf.mxu0
    %v4506 = vadd.f32 %v4045, %v4505
    %4507 = vmatmul.bf16.gmra.mxu0 %v3710
    %v4508 = vpop.f32.mrf.mxu0
    %v4509 = vadd.f32 %v4045, %v4508
    %v4510 = vpop.f32.mrf.mxu0
    %v4511 = vadd.f32 %v4045, %v4510
    %4512 = vmatmul.bf16.gmra.mxu0 %v3719
    %v4513 = vpop.f32.mrf.mxu0
    %v4514 = vadd.f32 %v4045, %v4513
    %v4515 = vpop.f32.mrf.mxu0
    %v4516 = vadd.f32 %v4045, %v4515
    %4517 = vmatmul.bf16.gmra.mxu0 %v3728
    %v4518 = vpop.f32.mrf.mxu0
    %v4519 = vadd.f32 %v4045, %v4518
    %v4520 = vpop.f32.mrf.mxu0
    %v4521 = vadd.f32 %v4045, %v4520
    %4522 = vmatmul.bf16.gmra.mxu0 %v3737
    %v4523 = vpop.f32.mrf.mxu0
    %v4524 = vadd.f32 %v4045, %v4523
    %v4525 = vpop.f32.mrf.mxu0
    %v4526 = vadd.f32 %v4045, %v4525
    %4527 = vmatmul.bf16.gmra.mxu0 %v3746
    %v4528 = vpop.f32.mrf.mxu0
    %v4529 = vadd.f32 %v4045, %v4528
    %v4530 = vpop.f32.mrf.mxu0
    %v4531 = vadd.f32 %v4045, %v4530
    %4532 = vmatmul.bf16.gmra.mxu0 %v3755
    %v4533 = vpop.f32.mrf.mxu0
    %v4534 = vadd.f32 %v4045, %v4533
    %v4535 = vpop.f32.mrf.mxu0
    %v4536 = vadd.f32 %v4045, %v4535
    %4537 = vmatmul.bf16.gmra.mxu0 %v3764
    %v4538 = vpop.f32.mrf.mxu0
    %v4539 = vadd.f32 %v4045, %v4538
    %v4540 = vpop.f32.mrf.mxu0
    %v4541 = vadd.f32 %v4045, %v4540
    %4542 = vmatmul.bf16.gmra.mxu0 %v3773
    %v4543 = vpop.f32.mrf.mxu0
    %v4544 = vadd.f32 %v4045, %v4543
    %v4545 = vpop.f32.mrf.mxu0
    %v4546 = vadd.f32 %v4045, %v4545
    %4547 = vmatmul.bf16.gmra.mxu0 %v3782
    %v4548 = vpop.f32.mrf.mxu0
    %v4549 = vadd.f32 %v4045, %v4548
    %v4550 = vpop.f32.mrf.mxu0
    %v4551 = vadd.f32 %v4045, %v4550
    %4552 = vmatmul.bf16.gmra.mxu0 %v3791
    %v4553 = vpop.f32.mrf.mxu0
    %v4554 = vadd.f32 %v4045, %v4553
    %v4555 = vpop.f32.mrf.mxu0
    %v4556 = vadd.f32 %v4045, %v4555
    %4557 = vmatmul.bf16.gmra.mxu0 %v3800
    %v4558 = vpop.f32.mrf.mxu0
    %v4559 = vadd.f32 %v4045, %v4558
    %v4560 = vpop.f32.mrf.mxu0
    %v4561 = vadd.f32 %v4045, %v4560
    %4562 = vmatmul.bf16.gmra.mxu0 %v3809
    %v4563 = vpop.f32.mrf.mxu0
    %v4564 = vadd.f32 %v4045, %v4563
    %v4565 = vpop.f32.mrf.mxu0
    %v4566 = vadd.f32 %v4045, %v4565
    %4567 = vmatmul.bf16.gmra.mxu0 %v3818
    %v4568 = vpop.f32.mrf.mxu0
    %v4569 = vadd.f32 %v4045, %v4568
    %v4570 = vpop.f32.mrf.mxu0
    %v4571 = vadd.f32 %v4045, %v4570
    %4572 = vmatmul.bf16.gmra.mxu0 %v3827
    %v4573 = vpop.f32.mrf.mxu0
    %v4574 = vadd.f32 %v4045, %v4573
    %v4575 = vpop.f32.mrf.mxu0
    %v4576 = vadd.f32 %v4045, %v4575
    %4577 = vmatmul.bf16.gmra.mxu0 %v3836
    %v4578 = vpop.f32.mrf.mxu0
    %v4579 = vadd.f32 %v4045, %v4578
    %v4580 = vpop.f32.mrf.mxu0
    %v4581 = vadd.f32 %v4045, %v4580
    %4582 = vmatmul.bf16.gmra.mxu0 %v3845
    %v4583 = vpop.f32.mrf.mxu0
    %v4584 = vadd.f32 %v4045, %v4583
    %v4585 = vpop.f32.mrf.mxu0
    %v4586 = vadd.f32 %v4045, %v4585
    %4587 = vmatmul.bf16.gmra.mxu0 %v3854
    %v4588 = vpop.f32.mrf.mxu0
    %v4589 = vadd.f32 %v4045, %v4588
    %v4590 = vpop.f32.mrf.mxu0
    %v4591 = vadd.f32 %v4045, %v4590
    %4592 = vmatmul.bf16.gmra.mxu0 %v3863
    %v4593 = vpop.f32.mrf.mxu0
    %v4594 = vadd.f32 %v4045, %v4593
    %v4595 = vpop.f32.mrf.mxu0
    %v4596 = vadd.f32 %v4045, %v4595
    %4597 = vmatmul.bf16.gmra.mxu0 %v3872
    %v4598 = vpop.f32.mrf.mxu0
    %v4599 = vadd.f32 %v4045, %v4598
    %v4600 = vpop.f32.mrf.mxu0
    %v4601 = vadd.f32 %v4045, %v4600
    %4602 = vmatmul.bf16.gmra.mxu0 %v3881
    %v4603 = vpop.f32.mrf.mxu0
    %v4604 = vadd.f32 %v4045, %v4603
    %v4605 = vpop.f32.mrf.mxu0
    %v4606 = vadd.f32 %v4045, %v4605
    %4607 = vmatmul.bf16.gmra.mxu0 %v3890
    %v4608 = vpop.f32.mrf.mxu0
    %v4609 = vadd.f32 %v4045, %v4608
    %v4610 = vpop.f32.mrf.mxu0
    %4611 = vdwg.mxu0
    %4612 = vmatpush.bf16.msra.mxu0 %v4350
    %4613 = vmatpush.bf16.msra.mxu0 %v4349
    %4614 = vmatpush.bf16.msra.mxu0 %v4348
    %4615 = vmatpush.bf16.msra.mxu0 %v4347
    %4616 = vmatpush.bf16.msra.mxu0 %v4346
    %4617 = vmatpush.bf16.msra.mxu0 %v4345
    %4618 = vmatpush.bf16.msra.mxu0 %v4344
    %4619 = vmatpush.bf16.msra.mxu0 %v4343
    %4620 = vmatmul.bf16.gmra.mxu0 %v3675
    %v4621 = vpop.f32.mrf.mxu0
    %v4622 = vadd.f32 %v4489, %v4621
    %v4623 = vpop.f32.mrf.mxu0
    %v4624 = vadd.f32 %v4491, %v4623
    %4625 = vmatmul.bf16.gmra.mxu0 %v3684
    %v4626 = vpop.f32.mrf.mxu0
    %v4627 = vadd.f32 %v4494, %v4626
    %v4628 = vpop.f32.mrf.mxu0
    %v4629 = vadd.f32 %v4496, %v4628
    %4630 = vmatmul.bf16.gmra.mxu0 %v3693
    %v4631 = vpop.f32.mrf.mxu0
    %v4632 = vadd.f32 %v4499, %v4631
    %v4633 = vpop.f32.mrf.mxu0
    %v4634 = vadd.f32 %v4501, %v4633
    %4635 = vmatmul.bf16.gmra.mxu0 %v3702
    %v4636 = vpop.f32.mrf.mxu0
    %v4637 = vadd.f32 %v4504, %v4636
    %v4638 = vpop.f32.mrf.mxu0
    %v4639 = vadd.f32 %v4506, %v4638
    %4640 = vmatmul.bf16.gmra.mxu0 %v3711
    %v4641 = vpop.f32.mrf.mxu0
    %v4642 = vadd.f32 %v4509, %v4641
    %v4643 = vpop.f32.mrf.mxu0
    %v4644 = vadd.f32 %v4511, %v4643
    %4645 = vmatmul.bf16.gmra.mxu0 %v3720
    %v4646 = vpop.f32.mrf.mxu0
    %v4647 = vadd.f32 %v4514, %v4646
    %v4648 = vpop.f32.mrf.mxu0
    %v4649 = vadd.f32 %v4516, %v4648
    %4650 = vmatmul.bf16.gmra.mxu0 %v3729
    %v4651 = vpop.f32.mrf.mxu0
    %v4652 = vadd.f32 %v4519, %v4651
    %v4653 = vpop.f32.mrf.mxu0
    %v4654 = vadd.f32 %v4521, %v4653
    %4655 = vmatmul.bf16.gmra.mxu0 %v3738
    %v4656 = vpop.f32.mrf.mxu0
    %v4657 = vadd.f32 %v4524, %v4656
    %v4658 = vpop.f32.mrf.mxu0
    %v4659 = vadd.f32 %v4526, %v4658
    %4660 = vmatmul.bf16.gmra.mxu0 %v3747
    %v4661 = vpop.f32.mrf.mxu0
    %v4662 = vadd.f32 %v4529, %v4661
    %v4663 = vpop.f32.mrf.mxu0
    %v4664 = vadd.f32 %v4531, %v4663
    %4665 = vmatmul.bf16.gmra.mxu0 %v3756
    %v4666 = vpop.f32.mrf.mxu0
    %v4667 = vadd.f32 %v4534, %v4666
    %v4668 = vpop.f32.mrf.mxu0
    %v4669 = vadd.f32 %v4536, %v4668
    %4670 = vmatmul.bf16.gmra.mxu0 %v3765
    %v4671 = vpop.f32.mrf.mxu0
    %v4672 = vadd.f32 %v4539, %v4671
    %v4673 = vpop.f32.mrf.mxu0
    %v4674 = vadd.f32 %v4541, %v4673
    %4675 = vmatmul.bf16.gmra.mxu0 %v3774
    %v4676 = vpop.f32.mrf.mxu0
    %v4677 = vadd.f32 %v4544, %v4676
    %v4678 = vpop.f32.mrf.mxu0
    %v4679 = vadd.f32 %v4546, %v4678
    %4680 = vmatmul.bf16.gmra.mxu0 %v3783
    %v4681 = vpop.f32.mrf.mxu0
    %v4682 = vadd.f32 %v4549, %v4681
    %v4683 = vpop.f32.mrf.mxu0
    %v4684 = vadd.f32 %v4551, %v4683
    %4685 = vmatmul.bf16.gmra.mxu0 %v3792
    %v4686 = vpop.f32.mrf.mxu0
    %v4687 = vadd.f32 %v4554, %v4686
    %v4688 = vpop.f32.mrf.mxu0
    %v4689 = vadd.f32 %v4556, %v4688
    %4690 = vmatmul.bf16.gmra.mxu0 %v3801
    %v4691 = vpop.f32.mrf.mxu0
    %v4692 = vadd.f32 %v4559, %v4691
    %v4693 = vpop.f32.mrf.mxu0
    %v4694 = vadd.f32 %v4561, %v4693
    %4695 = vmatmul.bf16.gmra.mxu0 %v3810
    %v4696 = vpop.f32.mrf.mxu0
    %v4697 = vadd.f32 %v4564, %v4696
    %v4698 = vpop.f32.mrf.mxu0
    %v4699 = vadd.f32 %v4566, %v4698
    %4700 = vmatmul.bf16.gmra.mxu0 %v3819
    %v4701 = vpop.f32.mrf.mxu0
    %v4702 = vadd.f32 %v4569, %v4701
    %v4703 = vpop.f32.mrf.mxu0
    %v4704 = vadd.f32 %v4571, %v4703
    %4705 = vmatmul.bf16.gmra.mxu0 %v3828
    %v4706 = vpop.f32.mrf.mxu0
    %v4707 = vadd.f32 %v4574, %v4706
    %v4708 = vpop.f32.mrf.mxu0
    %v4709 = vadd.f32 %v4576, %v4708
    %4710 = vmatmul.bf16.gmra.mxu0 %v3837
    %v4711 = vpop.f32.mrf.mxu0
    %v4712 = vadd.f32 %v4579, %v4711
    %v4713 = vpop.f32.mrf.mxu0
    %v4714 = vadd.f32 %v4581, %v4713
    %4715 = vmatmul.bf16.gmra.mxu0 %v3846
    %v4716 = vpop.f32.mrf.mxu0
    %v4717 = vadd.f32 %v4584, %v4716
    %v4718 = vpop.f32.mrf.mxu0
    %v4719 = vadd.f32 %v4586, %v4718
    %4720 = vmatmul.bf16.gmra.mxu0 %v3855
    %v4721 = vpop.f32.mrf.mxu0
    %v4722 = vadd.f32 %v4589, %v4721
    %v4723 = vpop.f32.mrf.mxu0
    %v4724 = vadd.f32 %v4591, %v4723
    %4725 = vmatmul.bf16.gmra.mxu0 %v3864
    %v4726 = vpop.f32.mrf.mxu0
    %v4727 = vadd.f32 %v4594, %v4726
    %v4728 = vpop.f32.mrf.mxu0
    %v4729 = vadd.f32 %v4596, %v4728
    %4730 = vmatmul.bf16.gmra.mxu0 %v3873
    %v4731 = vpop.f32.mrf.mxu0
    %v4732 = vadd.f32 %v4599, %v4731
    %v4733 = vpop.f32.mrf.mxu0
    %v4734 = vadd.f32 %v4601, %v4733
    %4735 = vmatmul.bf16.gmra.mxu0 %v3882
    %v4736 = vpop.f32.mrf.mxu0
    %v4737 = vadd.f32 %v4604, %v4736
    %v4738 = vpop.f32.mrf.mxu0
    %v4739 = vadd.f32 %v4606, %v4738
    %4740 = vmatmul.bf16.gmra.mxu0 %v3891
    %v4741 = vpop.f32.mrf.mxu0
    %v4742 = vadd.f32 %v4609, %v4741
    %v4743 = vpop.f32.mrf.mxu0
    %4744 = vdwg.mxu0
    %4745 = vmatpush.bf16.msra.mxu0 %v4358
    %4746 = vmatpush.bf16.msra.mxu0 %v4357
    %4747 = vmatpush.bf16.msra.mxu0 %v4356
    %4748 = vmatpush.bf16.msra.mxu0 %v4355
    %4749 = vmatpush.bf16.msra.mxu0 %v4354
    %4750 = vmatpush.bf16.msra.mxu0 %v4353
    %4751 = vmatpush.bf16.msra.mxu0 %v4352
    %4752 = vmatpush.bf16.msra.mxu0 %v4351
    %4753 = vmatmul.bf16.gmra.mxu0 %v3676
    %v4754 = vpop.f32.mrf.mxu0
    %v4755 = vadd.f32 %v4622, %v4754
    %v4756 = vpop.f32.mrf.mxu0
    %v4757 = vadd.f32 %v4624, %v4756
    %4758 = vmatmul.bf16.gmra.mxu0 %v3685
    %v4759 = vpop.f32.mrf.mxu0
    %v4760 = vadd.f32 %v4627, %v4759
    %v4761 = vpop.f32.mrf.mxu0
    %v4762 = vadd.f32 %v4629, %v4761
    %4763 = vmatmul.bf16.gmra.mxu0 %v3694
    %v4764 = vpop.f32.mrf.mxu0
    %v4765 = vadd.f32 %v4632, %v4764
    %v4766 = vpop.f32.mrf.mxu0
    %v4767 = vadd.f32 %v4634, %v4766
    %4768 = vmatmul.bf16.gmra.mxu0 %v3703
    %v4769 = vpop.f32.mrf.mxu0
    %v4770 = vadd.f32 %v4637, %v4769
    %v4771 = vpop.f32.mrf.mxu0
    %v4772 = vadd.f32 %v4639, %v4771
    %4773 = vmatmul.bf16.gmra.mxu0 %v3712
    %v4774 = vpop.f32.mrf.mxu0
    %v4775 = vadd.f32 %v4642, %v4774
    %v4776 = vpop.f32.mrf.mxu0
    %v4777 = vadd.f32 %v4644, %v4776
    %4778 = vmatmul.bf16.gmra.mxu0 %v3721
    %v4779 = vpop.f32.mrf.mxu0
    %v4780 = vadd.f32 %v4647, %v4779
    %v4781 = vpop.f32.mrf.mxu0
    %v4782 = vadd.f32 %v4649, %v4781
    %4783 = vmatmul.bf16.gmra.mxu0 %v3730
    %v4784 = vpop.f32.mrf.mxu0
    %v4785 = vadd.f32 %v4652, %v4784
    %v4786 = vpop.f32.mrf.mxu0
    %v4787 = vadd.f32 %v4654, %v4786
    %4788 = vmatmul.bf16.gmra.mxu0 %v3739
    %v4789 = vpop.f32.mrf.mxu0
    %v4790 = vadd.f32 %v4657, %v4789
    %v4791 = vpop.f32.mrf.mxu0
    %v4792 = vadd.f32 %v4659, %v4791
    %4793 = vmatmul.bf16.gmra.mxu0 %v3748
    %v4794 = vpop.f32.mrf.mxu0
    %v4795 = vadd.f32 %v4662, %v4794
    %v4796 = vpop.f32.mrf.mxu0
    %v4797 = vadd.f32 %v4664, %v4796
    %4798 = vmatmul.bf16.gmra.mxu0 %v3757
    %v4799 = vpop.f32.mrf.mxu0
    %v4800 = vadd.f32 %v4667, %v4799
    %v4801 = vpop.f32.mrf.mxu0
    %v4802 = vadd.f32 %v4669, %v4801
    %4803 = vmatmul.bf16.gmra.mxu0 %v3766
    %v4804 = vpop.f32.mrf.mxu0
    %v4805 = vadd.f32 %v4672, %v4804
    %v4806 = vpop.f32.mrf.mxu0
    %v4807 = vadd.f32 %v4674, %v4806
    %4808 = vmatmul.bf16.gmra.mxu0 %v3775
    %v4809 = vpop.f32.mrf.mxu0
    %v4810 = vadd.f32 %v4677, %v4809
    %v4811 = vpop.f32.mrf.mxu0
    %v4812 = vadd.f32 %v4679, %v4811
    %4813 = vmatmul.bf16.gmra.mxu0 %v3784
    %v4814 = vpop.f32.mrf.mxu0
    %v4815 = vadd.f32 %v4682, %v4814
    %v4816 = vpop.f32.mrf.mxu0
    %v4817 = vadd.f32 %v4684, %v4816
    %4818 = vmatmul.bf16.gmra.mxu0 %v3793
    %v4819 = vpop.f32.mrf.mxu0
    %v4820 = vadd.f32 %v4687, %v4819
    %v4821 = vpop.f32.mrf.mxu0
    %v4822 = vadd.f32 %v4689, %v4821
    %4823 = vmatmul.bf16.gmra.mxu0 %v3802
    %v4824 = vpop.f32.mrf.mxu0
    %v4825 = vadd.f32 %v4692, %v4824
    %v4826 = vpop.f32.mrf.mxu0
    %v4827 = vadd.f32 %v4694, %v4826
    %4828 = vmatmul.bf16.gmra.mxu0 %v3811
    %v4829 = vpop.f32.mrf.mxu0
    %v4830 = vadd.f32 %v4697, %v4829
    %v4831 = vpop.f32.mrf.mxu0
    %v4832 = vadd.f32 %v4699, %v4831
    %4833 = vmatmul.bf16.gmra.mxu0 %v3820
    %v4834 = vpop.f32.mrf.mxu0
    %v4835 = vadd.f32 %v4702, %v4834
    %v4836 = vpop.f32.mrf.mxu0
    %v4837 = vadd.f32 %v4704, %v4836
    %4838 = vmatmul.bf16.gmra.mxu0 %v3829
    %v4839 = vpop.f32.mrf.mxu0
    %v4840 = vadd.f32 %v4707, %v4839
    %v4841 = vpop.f32.mrf.mxu0
    %v4842 = vadd.f32 %v4709, %v4841
    %4843 = vmatmul.bf16.gmra.mxu0 %v3838
    %v4844 = vpop.f32.mrf.mxu0
    %v4845 = vadd.f32 %v4712, %v4844
    %v4846 = vpop.f32.mrf.mxu0
    %v4847 = vadd.f32 %v4714, %v4846
    %4848 = vmatmul.bf16.gmra.mxu0 %v3847
    %v4849 = vpop.f32.mrf.mxu0
    %v4850 = vadd.f32 %v4717, %v4849
    %v4851 = vpop.f32.mrf.mxu0
    %v4852 = vadd.f32 %v4719, %v4851
    %4853 = vmatmul.bf16.gmra.mxu0 %v3856
    %v4854 = vpop.f32.mrf.mxu0
    %v4855 = vadd.f32 %v4722, %v4854
    %v4856 = vpop.f32.mrf.mxu0
    %v4857 = vadd.f32 %v4724, %v4856
    %4858 = vmatmul.bf16.gmra.mxu0 %v3865
    %v4859 = vpop.f32.mrf.mxu0
    %v4860 = vadd.f32 %v4727, %v4859
    %v4861 = vpop.f32.mrf.mxu0
    %v4862 = vadd.f32 %v4729, %v4861
    %4863 = vmatmul.bf16.gmra.mxu0 %v3874
    %v4864 = vpop.f32.mrf.mxu0
    %v4865 = vadd.f32 %v4732, %v4864
    %v4866 = vpop.f32.mrf.mxu0
    %v4867 = vadd.f32 %v4734, %v4866
    %4868 = vmatmul.bf16.gmra.mxu0 %v3883
    %v4869 = vpop.f32.mrf.mxu0
    %v4870 = vadd.f32 %v4737, %v4869
    %v4871 = vpop.f32.mrf.mxu0
    %v4872 = vadd.f32 %v4739, %v4871
    %4873 = vmatmul.bf16.gmra.mxu0 %v3892
    %v4874 = vpop.f32.mrf.mxu0
    %v4875 = vadd.f32 %v4742, %v4874
    %v4876 = vpop.f32.mrf.mxu0
    %4877 = vdwg.mxu0
    %4878 = vmatpush.bf16.msra.mxu0 %v4366
    %4879 = vmatpush.bf16.msra.mxu0 %v4365
    %4880 = vmatpush.bf16.msra.mxu0 %v4364
    %4881 = vmatpush.bf16.msra.mxu0 %v4363
    %4882 = vmatpush.bf16.msra.mxu0 %v4362
    %4883 = vmatpush.bf16.msra.mxu0 %v4361
    %4884 = vmatpush.bf16.msra.mxu0 %v4360
    %4885 = vmatpush.bf16.msra.mxu0 %v4359
    %4886 = vmatmul.bf16.gmra.mxu0 %v3677
    %v4887 = vpop.f32.mrf.mxu0
    %v4888 = vadd.f32 %v4755, %v4887
    %v4889 = vpop.f32.mrf.mxu0
    %v4890 = vadd.f32 %v4757, %v4889
    %4891 = vmatmul.bf16.gmra.mxu0 %v3686
    %v4892 = vpop.f32.mrf.mxu0
    %v4893 = vadd.f32 %v4760, %v4892
    %v4894 = vpop.f32.mrf.mxu0
    %v4895 = vadd.f32 %v4762, %v4894
    %4896 = vmatmul.bf16.gmra.mxu0 %v3695
    %v4897 = vpop.f32.mrf.mxu0
    %v4898 = vadd.f32 %v4765, %v4897
    %v4899 = vpop.f32.mrf.mxu0
    %v4900 = vadd.f32 %v4767, %v4899
    %4901 = vmatmul.bf16.gmra.mxu0 %v3704
    %v4902 = vpop.f32.mrf.mxu0
    %v4903 = vadd.f32 %v4770, %v4902
    %v4904 = vpop.f32.mrf.mxu0
    %v4905 = vadd.f32 %v4772, %v4904
    %4906 = vmatmul.bf16.gmra.mxu0 %v3713
    %v4907 = vpop.f32.mrf.mxu0
    %v4908 = vadd.f32 %v4775, %v4907
    %v4909 = vpop.f32.mrf.mxu0
    %v4910 = vadd.f32 %v4777, %v4909
    %4911 = vmatmul.bf16.gmra.mxu0 %v3722
    %v4912 = vpop.f32.mrf.mxu0
    %v4913 = vadd.f32 %v4780, %v4912
    %v4914 = vpop.f32.mrf.mxu0
    %v4915 = vadd.f32 %v4782, %v4914
    %4916 = vmatmul.bf16.gmra.mxu0 %v3731
    %v4917 = vpop.f32.mrf.mxu0
    %v4918 = vadd.f32 %v4785, %v4917
    %v4919 = vpop.f32.mrf.mxu0
    %v4920 = vadd.f32 %v4787, %v4919
    %4921 = vmatmul.bf16.gmra.mxu0 %v3740
    %v4922 = vpop.f32.mrf.mxu0
    %v4923 = vadd.f32 %v4790, %v4922
    %v4924 = vpop.f32.mrf.mxu0
    %v4925 = vadd.f32 %v4792, %v4924
    %4926 = vmatmul.bf16.gmra.mxu0 %v3749
    %v4927 = vpop.f32.mrf.mxu0
    %v4928 = vadd.f32 %v4795, %v4927
    %v4929 = vpop.f32.mrf.mxu0
    %v4930 = vadd.f32 %v4797, %v4929
    %4931 = vmatmul.bf16.gmra.mxu0 %v3758
    %v4932 = vpop.f32.mrf.mxu0
    %v4933 = vadd.f32 %v4800, %v4932
    %v4934 = vpop.f32.mrf.mxu0
    %v4935 = vadd.f32 %v4802, %v4934
    %4936 = vmatmul.bf16.gmra.mxu0 %v3767
    %v4937 = vpop.f32.mrf.mxu0
    %v4938 = vadd.f32 %v4805, %v4937
    %v4939 = vpop.f32.mrf.mxu0
    %v4940 = vadd.f32 %v4807, %v4939
    %4941 = vmatmul.bf16.gmra.mxu0 %v3776
    %v4942 = vpop.f32.mrf.mxu0
    %v4943 = vadd.f32 %v4810, %v4942
    %v4944 = vpop.f32.mrf.mxu0
    %v4945 = vadd.f32 %v4812, %v4944
    %4946 = vmatmul.bf16.gmra.mxu0 %v3785
    %v4947 = vpop.f32.mrf.mxu0
    %v4948 = vadd.f32 %v4815, %v4947
    %v4949 = vpop.f32.mrf.mxu0
    %v4950 = vadd.f32 %v4817, %v4949
    %4951 = vmatmul.bf16.gmra.mxu0 %v3794
    %v4952 = vpop.f32.mrf.mxu0
    %v4953 = vadd.f32 %v4820, %v4952
    %v4954 = vpop.f32.mrf.mxu0
    %v4955 = vadd.f32 %v4822, %v4954
    %4956 = vmatmul.bf16.gmra.mxu0 %v3803
    %v4957 = vpop.f32.mrf.mxu0
    %v4958 = vadd.f32 %v4825, %v4957
    %v4959 = vpop.f32.mrf.mxu0
    %v4960 = vadd.f32 %v4827, %v4959
    %4961 = vmatmul.bf16.gmra.mxu0 %v3812
    %v4962 = vpop.f32.mrf.mxu0
    %v4963 = vadd.f32 %v4830, %v4962
    %v4964 = vpop.f32.mrf.mxu0
    %v4965 = vadd.f32 %v4832, %v4964
    %4966 = vmatmul.bf16.gmra.mxu0 %v3821
    %v4967 = vpop.f32.mrf.mxu0
    %v4968 = vadd.f32 %v4835, %v4967
    %v4969 = vpop.f32.mrf.mxu0
    %v4970 = vadd.f32 %v4837, %v4969
    %4971 = vmatmul.bf16.gmra.mxu0 %v3830
    %v4972 = vpop.f32.mrf.mxu0
    %v4973 = vadd.f32 %v4840, %v4972
    %v4974 = vpop.f32.mrf.mxu0
    %v4975 = vadd.f32 %v4842, %v4974
    %4976 = vmatmul.bf16.gmra.mxu0 %v3839
    %v4977 = vpop.f32.mrf.mxu0
    %v4978 = vadd.f32 %v4845, %v4977
    %v4979 = vpop.f32.mrf.mxu0
    %v4980 = vadd.f32 %v4847, %v4979
    %4981 = vmatmul.bf16.gmra.mxu0 %v3848
    %v4982 = vpop.f32.mrf.mxu0
    %v4983 = vadd.f32 %v4850, %v4982
    %v4984 = vpop.f32.mrf.mxu0
    %v4985 = vadd.f32 %v4852, %v4984
    %4986 = vmatmul.bf16.gmra.mxu0 %v3857
    %v4987 = vpop.f32.mrf.mxu0
    %v4988 = vadd.f32 %v4855, %v4987
    %v4989 = vpop.f32.mrf.mxu0
    %v4990 = vadd.f32 %v4857, %v4989
    %4991 = vmatmul.bf16.gmra.mxu0 %v3866
    %v4992 = vpop.f32.mrf.mxu0
    %v4993 = vadd.f32 %v4860, %v4992
    %v4994 = vpop.f32.mrf.mxu0
    %v4995 = vadd.f32 %v4862, %v4994
    %4996 = vmatmul.bf16.gmra.mxu0 %v3875
    %v4997 = vpop.f32.mrf.mxu0
    %v4998 = vadd.f32 %v4865, %v4997
    %v4999 = vpop.f32.mrf.mxu0
    %v5000 = vadd.f32 %v4867, %v4999
    %5001 = vmatmul.bf16.gmra.mxu0 %v3884
    %v5002 = vpop.f32.mrf.mxu0
    %v5003 = vadd.f32 %v4870, %v5002
    %v5004 = vpop.f32.mrf.mxu0
    %v5005 = vadd.f32 %v4872, %v5004
    %5006 = vmatmul.bf16.gmra.mxu0 %v3893
    %v5007 = vpop.f32.mrf.mxu0
    %v5008 = vadd.f32 %v4875, %v5007
    %v5009 = vpop.f32.mrf.mxu0
    %5010 = vdwg.mxu0
    %5011 = vmatpush.bf16.msra.mxu0 %v4374
    %5012 = vmatpush.bf16.msra.mxu0 %v4373
    %5013 = vmatpush.bf16.msra.mxu0 %v4372
    %5014 = vmatpush.bf16.msra.mxu0 %v4371
    %5015 = vmatpush.bf16.msra.mxu0 %v4370
    %5016 = vmatpush.bf16.msra.mxu0 %v4369
    %5017 = vmatpush.bf16.msra.mxu0 %v4368
    %5018 = vmatpush.bf16.msra.mxu0 %v4367
    %5019 = vmatmul.bf16.gmra.mxu0 %v3678
    %v5020 = vpop.f32.mrf.mxu0
    %v5021 = vadd.f32 %v4888, %v5020
    %v5022 = vpop.f32.mrf.mxu0
    %v5023 = vadd.f32 %v4890, %v5022
    %5024 = vmatmul.bf16.gmra.mxu0 %v3687
    %v5025 = vpop.f32.mrf.mxu0
    %v5026 = vadd.f32 %v4893, %v5025
    %v5027 = vpop.f32.mrf.mxu0
    %v5028 = vadd.f32 %v4895, %v5027
    %5029 = vmatmul.bf16.gmra.mxu0 %v3696
    %v5030 = vpop.f32.mrf.mxu0
    %v5031 = vadd.f32 %v4898, %v5030
    %v5032 = vpop.f32.mrf.mxu0
    %v5033 = vadd.f32 %v4900, %v5032
    %5034 = vmatmul.bf16.gmra.mxu0 %v3705
    %v5035 = vpop.f32.mrf.mxu0
    %v5036 = vadd.f32 %v4903, %v5035
    %v5037 = vpop.f32.mrf.mxu0
    %v5038 = vadd.f32 %v4905, %v5037
    %5039 = vmatmul.bf16.gmra.mxu0 %v3714
    %v5040 = vpop.f32.mrf.mxu0
    %v5041 = vadd.f32 %v4908, %v5040
    %v5042 = vpop.f32.mrf.mxu0
    %v5043 = vadd.f32 %v4910, %v5042
    %5044 = vmatmul.bf16.gmra.mxu0 %v3723
    %v5045 = vpop.f32.mrf.mxu0
    %v5046 = vadd.f32 %v4913, %v5045
    %v5047 = vpop.f32.mrf.mxu0
    %v5048 = vadd.f32 %v4915, %v5047
    %5049 = vmatmul.bf16.gmra.mxu0 %v3732
    %v5050 = vpop.f32.mrf.mxu0
    %v5051 = vadd.f32 %v4918, %v5050
    %v5052 = vpop.f32.mrf.mxu0
    %v5053 = vadd.f32 %v4920, %v5052
    %5054 = vmatmul.bf16.gmra.mxu0 %v3741
    %v5055 = vpop.f32.mrf.mxu0
    %v5056 = vadd.f32 %v4923, %v5055
    %v5057 = vpop.f32.mrf.mxu0
    %v5058 = vadd.f32 %v4925, %v5057
    %5059 = vmatmul.bf16.gmra.mxu0 %v3750
    %v5060 = vpop.f32.mrf.mxu0
    %v5061 = vadd.f32 %v4928, %v5060
    %v5062 = vpop.f32.mrf.mxu0
    %v5063 = vadd.f32 %v4930, %v5062
    %5064 = vmatmul.bf16.gmra.mxu0 %v3759
    %v5065 = vpop.f32.mrf.mxu0
    %v5066 = vadd.f32 %v4933, %v5065
    %v5067 = vpop.f32.mrf.mxu0
    %v5068 = vadd.f32 %v4935, %v5067
    %5069 = vmatmul.bf16.gmra.mxu0 %v3768
    %v5070 = vpop.f32.mrf.mxu0
    %v5071 = vadd.f32 %v4938, %v5070
    %v5072 = vpop.f32.mrf.mxu0
    %v5073 = vadd.f32 %v4940, %v5072
    %5074 = vmatmul.bf16.gmra.mxu0 %v3777
    %v5075 = vpop.f32.mrf.mxu0
    %v5076 = vadd.f32 %v4943, %v5075
    %v5077 = vpop.f32.mrf.mxu0
    %v5078 = vadd.f32 %v4945, %v5077
    %5079 = vmatmul.bf16.gmra.mxu0 %v3786
    %v5080 = vpop.f32.mrf.mxu0
    %v5081 = vadd.f32 %v4948, %v5080
    %v5082 = vpop.f32.mrf.mxu0
    %v5083 = vadd.f32 %v4950, %v5082
    %5084 = vmatmul.bf16.gmra.mxu0 %v3795
    %v5085 = vpop.f32.mrf.mxu0
    %v5086 = vadd.f32 %v4953, %v5085
    %v5087 = vpop.f32.mrf.mxu0
    %v5088 = vadd.f32 %v4955, %v5087
    %5089 = vmatmul.bf16.gmra.mxu0 %v3804
    %v5090 = vpop.f32.mrf.mxu0
    %v5091 = vadd.f32 %v4958, %v5090
    %v5092 = vpop.f32.mrf.mxu0
    %v5093 = vadd.f32 %v4960, %v5092
    %5094 = vmatmul.bf16.gmra.mxu0 %v3813
    %v5095 = vpop.f32.mrf.mxu0
    %v5096 = vadd.f32 %v4963, %v5095
    %v5097 = vpop.f32.mrf.mxu0
    %v5098 = vadd.f32 %v4965, %v5097
    %5099 = vmatmul.bf16.gmra.mxu0 %v3822
    %v5100 = vpop.f32.mrf.mxu0
    %v5101 = vadd.f32 %v4968, %v5100
    %v5102 = vpop.f32.mrf.mxu0
    %v5103 = vadd.f32 %v4970, %v5102
    %5104 = vmatmul.bf16.gmra.mxu0 %v3831
    %v5105 = vpop.f32.mrf.mxu0
    %v5106 = vadd.f32 %v4973, %v5105
    %v5107 = vpop.f32.mrf.mxu0
    %v5108 = vadd.f32 %v4975, %v5107
    %5109 = vmatmul.bf16.gmra.mxu0 %v3840
    %v5110 = vpop.f32.mrf.mxu0
    %v5111 = vadd.f32 %v4978, %v5110
    %v5112 = vpop.f32.mrf.mxu0
    %v5113 = vadd.f32 %v4980, %v5112
    %5114 = vmatmul.bf16.gmra.mxu0 %v3849
    %v5115 = vpop.f32.mrf.mxu0
    %v5116 = vadd.f32 %v4983, %v5115
    %v5117 = vpop.f32.mrf.mxu0
    %v5118 = vadd.f32 %v4985, %v5117
    %5119 = vmatmul.bf16.gmra.mxu0 %v3858
    %v5120 = vpop.f32.mrf.mxu0
    %v5121 = vadd.f32 %v4988, %v5120
    %v5122 = vpop.f32.mrf.mxu0
    %v5123 = vadd.f32 %v4990, %v5122
    %5124 = vmatmul.bf16.gmra.mxu0 %v3867
    %v5125 = vpop.f32.mrf.mxu0
    %v5126 = vadd.f32 %v4993, %v5125
    %v5127 = vpop.f32.mrf.mxu0
    %v5128 = vadd.f32 %v4995, %v5127
    %5129 = vmatmul.bf16.gmra.mxu0 %v3876
    %v5130 = vpop.f32.mrf.mxu0
    %v5131 = vadd.f32 %v4998, %v5130
    %v5132 = vpop.f32.mrf.mxu0
    %v5133 = vadd.f32 %v5000, %v5132
    %5134 = vmatmul.bf16.gmra.mxu0 %v3885
    %v5135 = vpop.f32.mrf.mxu0
    %v5136 = vadd.f32 %v5003, %v5135
    %v5137 = vpop.f32.mrf.mxu0
    %v5138 = vadd.f32 %v5005, %v5137
    %5139 = vmatmul.bf16.gmra.mxu0 %v3894
    %v5140 = vpop.f32.mrf.mxu0
    %v5141 = vadd.f32 %v5008, %v5140
    %v5142 = vpop.f32.mrf.mxu0
    %5143 = vdwg.mxu0
    %5144 = vmatpush.bf16.msra.mxu0 %v4382
    %5145 = vmatpush.bf16.msra.mxu0 %v4381
    %5146 = vmatpush.bf16.msra.mxu0 %v4380
    %5147 = vmatpush.bf16.msra.mxu0 %v4379
    %5148 = vmatpush.bf16.msra.mxu0 %v4378
    %5149 = vmatpush.bf16.msra.mxu0 %v4377
    %5150 = vmatpush.bf16.msra.mxu0 %v4376
    %5151 = vmatpush.bf16.msra.mxu0 %v4375
    %5152 = vmatmul.bf16.gmra.mxu0 %v3679
    %v5153 = vpop.f32.mrf.mxu0
    %v5154 = vadd.f32 %v5021, %v5153
    %v5155 = vpop.f32.mrf.mxu0
    %v5156 = vadd.f32 %v5023, %v5155
    %5157 = vmatmul.bf16.gmra.mxu0 %v3688
    %v5158 = vpop.f32.mrf.mxu0
    %v5159 = vadd.f32 %v5026, %v5158
    %v5160 = vpop.f32.mrf.mxu0
    %v5161 = vadd.f32 %v5028, %v5160
    %5162 = vmatmul.bf16.gmra.mxu0 %v3697
    %v5163 = vpop.f32.mrf.mxu0
    %v5164 = vadd.f32 %v5031, %v5163
    %v5165 = vpop.f32.mrf.mxu0
    %v5166 = vadd.f32 %v5033, %v5165
    %5167 = vmatmul.bf16.gmra.mxu0 %v3706
    %v5168 = vpop.f32.mrf.mxu0
    %v5169 = vadd.f32 %v5036, %v5168
    %v5170 = vpop.f32.mrf.mxu0
    %v5171 = vadd.f32 %v5038, %v5170
    %5172 = vmatmul.bf16.gmra.mxu0 %v3715
    %v5173 = vpop.f32.mrf.mxu0
    %v5174 = vadd.f32 %v5041, %v5173
    %v5175 = vpop.f32.mrf.mxu0
    %v5176 = vadd.f32 %v5043, %v5175
    %5177 = vmatmul.bf16.gmra.mxu0 %v3724
    %v5178 = vpop.f32.mrf.mxu0
    %v5179 = vadd.f32 %v5046, %v5178
    %v5180 = vpop.f32.mrf.mxu0
    %v5181 = vadd.f32 %v5048, %v5180
    %5182 = vmatmul.bf16.gmra.mxu0 %v3733
    %v5183 = vpop.f32.mrf.mxu0
    %v5184 = vadd.f32 %v5051, %v5183
    %v5185 = vpop.f32.mrf.mxu0
    %v5186 = vadd.f32 %v5053, %v5185
    %5187 = vmatmul.bf16.gmra.mxu0 %v3742
    %v5188 = vpop.f32.mrf.mxu0
    %v5189 = vadd.f32 %v5056, %v5188
    %v5190 = vpop.f32.mrf.mxu0
    %v5191 = vadd.f32 %v5058, %v5190
    %5192 = vmatmul.bf16.gmra.mxu0 %v3751
    %v5193 = vpop.f32.mrf.mxu0
    %v5194 = vadd.f32 %v5061, %v5193
    %v5195 = vpop.f32.mrf.mxu0
    %v5196 = vadd.f32 %v5063, %v5195
    %5197 = vmatmul.bf16.gmra.mxu0 %v3760
    %v5198 = vpop.f32.mrf.mxu0
    %v5199 = vadd.f32 %v5066, %v5198
    %v5200 = vpop.f32.mrf.mxu0
    %v5201 = vadd.f32 %v5068, %v5200
    %5202 = vmatmul.bf16.gmra.mxu0 %v3769
    %v5203 = vpop.f32.mrf.mxu0
    %v5204 = vadd.f32 %v5071, %v5203
    %v5205 = vpop.f32.mrf.mxu0
    %v5206 = vadd.f32 %v5073, %v5205
    %5207 = vmatmul.bf16.gmra.mxu0 %v3778
    %v5208 = vpop.f32.mrf.mxu0
    %v5209 = vadd.f32 %v5076, %v5208
    %v5210 = vpop.f32.mrf.mxu0
    %v5211 = vadd.f32 %v5078, %v5210
    %5212 = vmatmul.bf16.gmra.mxu0 %v3787
    %v5213 = vpop.f32.mrf.mxu0
    %v5214 = vadd.f32 %v5081, %v5213
    %v5215 = vpop.f32.mrf.mxu0
    %v5216 = vadd.f32 %v5083, %v5215
    %5217 = vmatmul.bf16.gmra.mxu0 %v3796
    %v5218 = vpop.f32.mrf.mxu0
    %v5219 = vadd.f32 %v5086, %v5218
    %v5220 = vpop.f32.mrf.mxu0
    %v5221 = vadd.f32 %v5088, %v5220
    %5222 = vmatmul.bf16.gmra.mxu0 %v3805
    %v5223 = vpop.f32.mrf.mxu0
    %v5224 = vadd.f32 %v5091, %v5223
    %v5225 = vpop.f32.mrf.mxu0
    %v5226 = vadd.f32 %v5093, %v5225
    %5227 = vmatmul.bf16.gmra.mxu0 %v3814
    %v5228 = vpop.f32.mrf.mxu0
    %v5229 = vadd.f32 %v5096, %v5228
    %v5230 = vpop.f32.mrf.mxu0
    %v5231 = vadd.f32 %v5098, %v5230
    %5232 = vmatmul.bf16.gmra.mxu0 %v3823
    %v5233 = vpop.f32.mrf.mxu0
    %v5234 = vadd.f32 %v5101, %v5233
    %v5235 = vpop.f32.mrf.mxu0
    %v5236 = vadd.f32 %v5103, %v5235
    %5237 = vmatmul.bf16.gmra.mxu0 %v3832
    %v5238 = vpop.f32.mrf.mxu0
    %v5239 = vadd.f32 %v5106, %v5238
    %v5240 = vpop.f32.mrf.mxu0
    %v5241 = vadd.f32 %v5108, %v5240
    %5242 = vmatmul.bf16.gmra.mxu0 %v3841
    %v5243 = vpop.f32.mrf.mxu0
    %v5244 = vadd.f32 %v5111, %v5243
    %v5245 = vpop.f32.mrf.mxu0
    %v5246 = vadd.f32 %v5113, %v5245
    %5247 = vmatmul.bf16.gmra.mxu0 %v3850
    %v5248 = vpop.f32.mrf.mxu0
    %v5249 = vadd.f32 %v5116, %v5248
    %v5250 = vpop.f32.mrf.mxu0
    %v5251 = vadd.f32 %v5118, %v5250
    %5252 = vmatmul.bf16.gmra.mxu0 %v3859
    %v5253 = vpop.f32.mrf.mxu0
    %v5254 = vadd.f32 %v5121, %v5253
    %v5255 = vpop.f32.mrf.mxu0
    %v5256 = vadd.f32 %v5123, %v5255
    %5257 = vmatmul.bf16.gmra.mxu0 %v3868
    %v5258 = vpop.f32.mrf.mxu0
    %v5259 = vadd.f32 %v5126, %v5258
    %v5260 = vpop.f32.mrf.mxu0
    %v5261 = vadd.f32 %v5128, %v5260
    %5262 = vmatmul.bf16.gmra.mxu0 %v3877
    %v5263 = vpop.f32.mrf.mxu0
    %v5264 = vadd.f32 %v5131, %v5263
    %v5265 = vpop.f32.mrf.mxu0
    %v5266 = vadd.f32 %v5133, %v5265
    %5267 = vmatmul.bf16.gmra.mxu0 %v3886
    %v5268 = vpop.f32.mrf.mxu0
    %v5269 = vadd.f32 %v5136, %v5268
    %v5270 = vpop.f32.mrf.mxu0
    %v5271 = vadd.f32 %v5138, %v5270
    %5272 = vmatmul.bf16.gmra.mxu0 %v3895
    %v5273 = vpop.f32.mrf.mxu0
    %v5274 = vadd.f32 %v5141, %v5273
    %v5275 = vpop.f32.mrf.mxu0
    %5276 = vdwg.mxu0
    %5277 = vmatpush.bf16.msra.mxu0 %v4390
    %5278 = vmatpush.bf16.msra.mxu0 %v4389
    %5279 = vmatpush.bf16.msra.mxu0 %v4388
    %5280 = vmatpush.bf16.msra.mxu0 %v4387
    %5281 = vmatpush.bf16.msra.mxu0 %v4386
    %5282 = vmatpush.bf16.msra.mxu0 %v4385
    %5283 = vmatpush.bf16.msra.mxu0 %v4384
    %5284 = vmatpush.bf16.msra.mxu0 %v4383
    %5285 = vmatmul.bf16.gmra.mxu0 %v3680
    %v5286 = vpop.f32.mrf.mxu0
    %v5287 = vadd.f32 %v5154, %v5286
    %v5288 = vpop.f32.mrf.mxu0
    %v5289 = vadd.f32 %v5156, %v5288
    %5290 = vmatmul.bf16.gmra.mxu0 %v3689
    %v5291 = vpop.f32.mrf.mxu0
    %v5292 = vadd.f32 %v5159, %v5291
    %v5293 = vpop.f32.mrf.mxu0
    %v5294 = vadd.f32 %v5161, %v5293
    %5295 = vmatmul.bf16.gmra.mxu0 %v3698
    %v5296 = vpop.f32.mrf.mxu0
    %v5297 = vadd.f32 %v5164, %v5296
    %v5298 = vpop.f32.mrf.mxu0
    %v5299 = vadd.f32 %v5166, %v5298
    %5300 = vmatmul.bf16.gmra.mxu0 %v3707
    %v5301 = vpop.f32.mrf.mxu0
    %v5302 = vadd.f32 %v5169, %v5301
    %v5303 = vpop.f32.mrf.mxu0
    %v5304 = vadd.f32 %v5171, %v5303
    %5305 = vmatmul.bf16.gmra.mxu0 %v3716
    %v5306 = vpop.f32.mrf.mxu0
    %v5307 = vadd.f32 %v5174, %v5306
    %v5308 = vpop.f32.mrf.mxu0
    %v5309 = vadd.f32 %v5176, %v5308
    %5310 = vmatmul.bf16.gmra.mxu0 %v3725
    %v5311 = vpop.f32.mrf.mxu0
    %v5312 = vadd.f32 %v5179, %v5311
    %v5313 = vpop.f32.mrf.mxu0
    %v5314 = vadd.f32 %v5181, %v5313
    %5315 = vmatmul.bf16.gmra.mxu0 %v3734
    %v5316 = vpop.f32.mrf.mxu0
    %v5317 = vadd.f32 %v5184, %v5316
    %v5318 = vpop.f32.mrf.mxu0
    %v5319 = vadd.f32 %v5186, %v5318
    %5320 = vmatmul.bf16.gmra.mxu0 %v3743
    %v5321 = vpop.f32.mrf.mxu0
    %v5322 = vadd.f32 %v5189, %v5321
    %v5323 = vpop.f32.mrf.mxu0
    %v5324 = vadd.f32 %v5191, %v5323
    %5325 = vmatmul.bf16.gmra.mxu0 %v3752
    %v5326 = vpop.f32.mrf.mxu0
    %v5327 = vadd.f32 %v5194, %v5326
    %v5328 = vpop.f32.mrf.mxu0
    %v5329 = vadd.f32 %v5196, %v5328
    %5330 = vmatmul.bf16.gmra.mxu0 %v3761
    %v5331 = vpop.f32.mrf.mxu0
    %v5332 = vadd.f32 %v5199, %v5331
    %v5333 = vpop.f32.mrf.mxu0
    %v5334 = vadd.f32 %v5201, %v5333
    %5335 = vmatmul.bf16.gmra.mxu0 %v3770
    %v5336 = vpop.f32.mrf.mxu0
    %v5337 = vadd.f32 %v5204, %v5336
    %v5338 = vpop.f32.mrf.mxu0
    %v5339 = vadd.f32 %v5206, %v5338
    %5340 = vmatmul.bf16.gmra.mxu0 %v3779
    %v5341 = vpop.f32.mrf.mxu0
    %v5342 = vadd.f32 %v5209, %v5341
    %v5343 = vpop.f32.mrf.mxu0
    %v5344 = vadd.f32 %v5211, %v5343
    %5345 = vmatmul.bf16.gmra.mxu0 %v3788
    %v5346 = vpop.f32.mrf.mxu0
    %v5347 = vadd.f32 %v5214, %v5346
    %v5348 = vpop.f32.mrf.mxu0
    %v5349 = vadd.f32 %v5216, %v5348
    %5350 = vmatmul.bf16.gmra.mxu0 %v3797
    %v5351 = vpop.f32.mrf.mxu0
    %v5352 = vadd.f32 %v5219, %v5351
    %v5353 = vpop.f32.mrf.mxu0
    %v5354 = vadd.f32 %v5221, %v5353
    %5355 = vmatmul.bf16.gmra.mxu0 %v3806
    %v5356 = vpop.f32.mrf.mxu0
    %v5357 = vadd.f32 %v5224, %v5356
    %v5358 = vpop.f32.mrf.mxu0
    %v5359 = vadd.f32 %v5226, %v5358
    %5360 = vmatmul.bf16.gmra.mxu0 %v3815
    %v5361 = vpop.f32.mrf.mxu0
    %v5362 = vadd.f32 %v5229, %v5361
    %v5363 = vpop.f32.mrf.mxu0
    %v5364 = vadd.f32 %v5231, %v5363
    %5365 = vmatmul.bf16.gmra.mxu0 %v3824
    %v5366 = vpop.f32.mrf.mxu0
    %v5367 = vadd.f32 %v5234, %v5366
    %v5368 = vpop.f32.mrf.mxu0
    %v5369 = vadd.f32 %v5236, %v5368
    %5370 = vmatmul.bf16.gmra.mxu0 %v3833
    %v5371 = vpop.f32.mrf.mxu0
    %v5372 = vadd.f32 %v5239, %v5371
    %v5373 = vpop.f32.mrf.mxu0
    %v5374 = vadd.f32 %v5241, %v5373
    %5375 = vmatmul.bf16.gmra.mxu0 %v3842
    %v5376 = vpop.f32.mrf.mxu0
    %v5377 = vadd.f32 %v5244, %v5376
    %v5378 = vpop.f32.mrf.mxu0
    %v5379 = vadd.f32 %v5246, %v5378
    %5380 = vmatmul.bf16.gmra.mxu0 %v3851
    %v5381 = vpop.f32.mrf.mxu0
    %v5382 = vadd.f32 %v5249, %v5381
    %v5383 = vpop.f32.mrf.mxu0
    %v5384 = vadd.f32 %v5251, %v5383
    %5385 = vmatmul.bf16.gmra.mxu0 %v3860
    %v5386 = vpop.f32.mrf.mxu0
    %v5387 = vadd.f32 %v5254, %v5386
    %v5388 = vpop.f32.mrf.mxu0
    %v5389 = vadd.f32 %v5256, %v5388
    %5390 = vmatmul.bf16.gmra.mxu0 %v3869
    %v5391 = vpop.f32.mrf.mxu0
    %v5392 = vadd.f32 %v5259, %v5391
    %v5393 = vpop.f32.mrf.mxu0
    %v5394 = vadd.f32 %v5261, %v5393
    %5395 = vmatmul.bf16.gmra.mxu0 %v3878
    %v5396 = vpop.f32.mrf.mxu0
    %v5397 = vadd.f32 %v5264, %v5396
    %v5398 = vpop.f32.mrf.mxu0
    %v5399 = vadd.f32 %v5266, %v5398
    %5400 = vmatmul.bf16.gmra.mxu0 %v3887
    %v5401 = vpop.f32.mrf.mxu0
    %v5402 = vadd.f32 %v5269, %v5401
    %v5403 = vpop.f32.mrf.mxu0
    %v5404 = vadd.f32 %v5271, %v5403
    %5405 = vmatmul.bf16.gmra.mxu0 %v3896
    %v5406 = vpop.f32.mrf.mxu0
    %v5407 = vadd.f32 %v5274, %v5406
    %v5408 = vpop.f32.mrf.mxu0
    %5409 = vdwg.mxu0
    %5410 = vmatpush.bf16.msra.mxu0 %v4398
    %5411 = vmatpush.bf16.msra.mxu0 %v4397
    %5412 = vmatpush.bf16.msra.mxu0 %v4396
    %5413 = vmatpush.bf16.msra.mxu0 %v4395
    %5414 = vmatpush.bf16.msra.mxu0 %v4394
    %5415 = vmatpush.bf16.msra.mxu0 %v4393
    %5416 = vmatpush.bf16.msra.mxu0 %v4392
    %5417 = vmatpush.bf16.msra.mxu0 %v4391
    %5418 = vmatmul.bf16.gmra.mxu0 %v3681
    %v5419 = vpop.f32.mrf.mxu0
    %v5420 = vadd.f32 %v5287, %v5419
    %v5421 = vpop.f32.mrf.mxu0
    %v5422 = vadd.f32 %v5289, %v5421
    %5423 = vmatmul.bf16.gmra.mxu0 %v3690
    %v5424 = vpop.f32.mrf.mxu0
    %v5425 = vadd.f32 %v5292, %v5424
    %v5426 = vpop.f32.mrf.mxu0
    %v5427 = vadd.f32 %v5294, %v5426
    %5428 = vmatmul.bf16.gmra.mxu0 %v3699
    %v5429 = vpop.f32.mrf.mxu0
    %v5430 = vadd.f32 %v5297, %v5429
    %v5431 = vpop.f32.mrf.mxu0
    %v5432 = vadd.f32 %v5299, %v5431
    %5433 = vmatmul.bf16.gmra.mxu0 %v3708
    %v5434 = vpop.f32.mrf.mxu0
    %v5435 = vadd.f32 %v5302, %v5434
    %v5436 = vpop.f32.mrf.mxu0
    %v5437 = vadd.f32 %v5304, %v5436
    %5438 = vmatmul.bf16.gmra.mxu0 %v3717
    %v5439 = vpop.f32.mrf.mxu0
    %v5440 = vadd.f32 %v5307, %v5439
    %v5441 = vpop.f32.mrf.mxu0
    %v5442 = vadd.f32 %v5309, %v5441
    %5443 = vmatmul.bf16.gmra.mxu0 %v3726
    %v5444 = vpop.f32.mrf.mxu0
    %v5445 = vadd.f32 %v5312, %v5444
    %v5446 = vpop.f32.mrf.mxu0
    %v5447 = vadd.f32 %v5314, %v5446
    %5448 = vmatmul.bf16.gmra.mxu0 %v3735
    %v5449 = vpop.f32.mrf.mxu0
    %v5450 = vadd.f32 %v5317, %v5449
    %v5451 = vpop.f32.mrf.mxu0
    %v5452 = vadd.f32 %v5319, %v5451
    %5453 = vmatmul.bf16.gmra.mxu0 %v3744
    %v5454 = vpop.f32.mrf.mxu0
    %v5455 = vadd.f32 %v5322, %v5454
    %v5456 = vpop.f32.mrf.mxu0
    %v5457 = vadd.f32 %v5324, %v5456
    %5458 = vmatmul.bf16.gmra.mxu0 %v3753
    %v5459 = vpop.f32.mrf.mxu0
    %v5460 = vadd.f32 %v5327, %v5459
    %v5461 = vpop.f32.mrf.mxu0
    %v5462 = vadd.f32 %v5329, %v5461
    %5463 = vmatmul.bf16.gmra.mxu0 %v3762
    %v5464 = vpop.f32.mrf.mxu0
    %v5465 = vadd.f32 %v5332, %v5464
    %v5466 = vpop.f32.mrf.mxu0
    %v5467 = vadd.f32 %v5334, %v5466
    %5468 = vmatmul.bf16.gmra.mxu0 %v3771
    %v5469 = vpop.f32.mrf.mxu0
    %v5470 = vadd.f32 %v5337, %v5469
    %v5471 = vpop.f32.mrf.mxu0
    %v5472 = vadd.f32 %v5339, %v5471
    %5473 = vmatmul.bf16.gmra.mxu0 %v3780
    %v5474 = vpop.f32.mrf.mxu0
    %v5475 = vadd.f32 %v5342, %v5474
    %v5476 = vpop.f32.mrf.mxu0
    %v5477 = vadd.f32 %v5344, %v5476
    %5478 = vmatmul.bf16.gmra.mxu0 %v3789
    %v5479 = vpop.f32.mrf.mxu0
    %v5480 = vadd.f32 %v5347, %v5479
    %v5481 = vpop.f32.mrf.mxu0
    %v5482 = vadd.f32 %v5349, %v5481
    %5483 = vmatmul.bf16.gmra.mxu0 %v3798
    %v5484 = vpop.f32.mrf.mxu0
    %v5485 = vadd.f32 %v5352, %v5484
    %v5486 = vpop.f32.mrf.mxu0
    %v5487 = vadd.f32 %v5354, %v5486
    %5488 = vmatmul.bf16.gmra.mxu0 %v3807
    %v5489 = vpop.f32.mrf.mxu0
    %v5490 = vadd.f32 %v5357, %v5489
    %v5491 = vpop.f32.mrf.mxu0
    %v5492 = vadd.f32 %v5359, %v5491
    %5493 = vmatmul.bf16.gmra.mxu0 %v3816
    %v5494 = vpop.f32.mrf.mxu0
    %v5495 = vadd.f32 %v5362, %v5494
    %v5496 = vpop.f32.mrf.mxu0
    %v5497 = vadd.f32 %v5364, %v5496
    %5498 = vmatmul.bf16.gmra.mxu0 %v3825
    %v5499 = vpop.f32.mrf.mxu0
    %v5500 = vadd.f32 %v5367, %v5499
    %v5501 = vpop.f32.mrf.mxu0
    %v5502 = vadd.f32 %v5369, %v5501
    %5503 = vmatmul.bf16.gmra.mxu0 %v3834
    %v5504 = vpop.f32.mrf.mxu0
    %v5505 = vadd.f32 %v5372, %v5504
    %v5506 = vpop.f32.mrf.mxu0
    %v5507 = vadd.f32 %v5374, %v5506
    %5508 = vmatmul.bf16.gmra.mxu0 %v3843
    %v5509 = vpop.f32.mrf.mxu0
    %v5510 = vadd.f32 %v5377, %v5509
    %v5511 = vpop.f32.mrf.mxu0
    %v5512 = vadd.f32 %v5379, %v5511
    %5513 = vmatmul.bf16.gmra.mxu0 %v3852
    %v5514 = vpop.f32.mrf.mxu0
    %v5515 = vadd.f32 %v5382, %v5514
    %v5516 = vpop.f32.mrf.mxu0
    %v5517 = vadd.f32 %v5384, %v5516
    %5518 = vmatmul.bf16.gmra.mxu0 %v3861
    %v5519 = vpop.f32.mrf.mxu0
    %v5520 = vadd.f32 %v5387, %v5519
    %v5521 = vpop.f32.mrf.mxu0
    %v5522 = vadd.f32 %v5389, %v5521
    %5523 = vmatmul.bf16.gmra.mxu0 %v3870
    %v5524 = vpop.f32.mrf.mxu0
    %v5525 = vadd.f32 %v5392, %v5524
    %v5526 = vpop.f32.mrf.mxu0
    %v5527 = vadd.f32 %v5394, %v5526
    %5528 = vmatmul.bf16.gmra.mxu0 %v3879
    %v5529 = vpop.f32.mrf.mxu0
    %v5530 = vadd.f32 %v5397, %v5529
    %v5531 = vpop.f32.mrf.mxu0
    %v5532 = vadd.f32 %v5399, %v5531
    %5533 = vmatmul.bf16.gmra.mxu0 %v3888
    %v5534 = vpop.f32.mrf.mxu0
    %v5535 = vadd.f32 %v5402, %v5534
    %v5536 = vpop.f32.mrf.mxu0
    %v5537 = vadd.f32 %v5404, %v5536
    %5538 = vmatmul.bf16.gmra.mxu0 %v3897
    %v5539 = vpop.f32.mrf.mxu0
    %v5540 = vadd.f32 %v5407, %v5539
    %v5541 = vpop.f32.mrf.mxu0
    %5542 = vdwg.mxu0
    %5543 = vmatpush.bf16.msra.mxu0 %v4406
    %5544 = vmatpush.bf16.msra.mxu0 %v4405
    %5545 = vmatpush.bf16.msra.mxu0 %v4404
    %5546 = vmatpush.bf16.msra.mxu0 %v4403
    %5547 = vmatpush.bf16.msra.mxu0 %v4402
    %5548 = vmatpush.bf16.msra.mxu0 %v4401
    %5549 = vmatpush.bf16.msra.mxu0 %v4400
    %5550 = vmatpush.bf16.msra.mxu0 %v4399
    %5551 = vmatmul.bf16.gmra.mxu0 %v3682
    %v5552 = vpop.f32.mrf.mxu0
    %v5553 = vadd.f32 %v5420, %v5552
    %v5554 = vpop.f32.mrf.mxu0
    %v5555 = vadd.f32 %v5422, %v5554
    %5556 = vmatmul.bf16.gmra.mxu0 %v3691
    %v5557 = vpop.f32.mrf.mxu0
    %v5558 = vadd.f32 %v5425, %v5557
    %v5559 = vpop.f32.mrf.mxu0
    %v5560 = vadd.f32 %v5427, %v5559
    %5561 = vmatmul.bf16.gmra.mxu0 %v3700
    %v5562 = vpop.f32.mrf.mxu0
    %v5563 = vadd.f32 %v5430, %v5562
    %v5564 = vpop.f32.mrf.mxu0
    %v5565 = vadd.f32 %v5432, %v5564
    %5566 = vmatmul.bf16.gmra.mxu0 %v3709
    %v5567 = vpop.f32.mrf.mxu0
    %v5568 = vadd.f32 %v5435, %v5567
    %v5569 = vpop.f32.mrf.mxu0
    %v5570 = vadd.f32 %v5437, %v5569
    %5571 = vmatmul.bf16.gmra.mxu0 %v3718
    %v5572 = vpop.f32.mrf.mxu0
    %v5573 = vadd.f32 %v5440, %v5572
    %v5574 = vpop.f32.mrf.mxu0
    %v5575 = vadd.f32 %v5442, %v5574
    %5576 = vmatmul.bf16.gmra.mxu0 %v3727
    %v5577 = vpop.f32.mrf.mxu0
    %v5578 = vadd.f32 %v5445, %v5577
    %v5579 = vpop.f32.mrf.mxu0
    %v5580 = vadd.f32 %v5447, %v5579
    %5581 = vmatmul.bf16.gmra.mxu0 %v3736
    %v5582 = vpop.f32.mrf.mxu0
    %v5583 = vadd.f32 %v5450, %v5582
    %v5584 = vpop.f32.mrf.mxu0
    %v5585 = vadd.f32 %v5452, %v5584
    %5586 = vmatmul.bf16.gmra.mxu0 %v3745
    %v5587 = vpop.f32.mrf.mxu0
    %v5588 = vadd.f32 %v5455, %v5587
    %v5589 = vpop.f32.mrf.mxu0
    %v5590 = vadd.f32 %v5457, %v5589
    %5591 = vmatmul.bf16.gmra.mxu0 %v3754
    %v5592 = vpop.f32.mrf.mxu0
    %v5593 = vadd.f32 %v5460, %v5592
    %v5594 = vpop.f32.mrf.mxu0
    %v5595 = vadd.f32 %v5462, %v5594
    %5596 = vmatmul.bf16.gmra.mxu0 %v3763
    %v5597 = vpop.f32.mrf.mxu0
    %v5598 = vadd.f32 %v5465, %v5597
    %v5599 = vpop.f32.mrf.mxu0
    %v5600 = vadd.f32 %v5467, %v5599
    %5601 = vmatmul.bf16.gmra.mxu0 %v3772
    %v5602 = vpop.f32.mrf.mxu0
    %v5603 = vadd.f32 %v5470, %v5602
    %v5604 = vpop.f32.mrf.mxu0
    %v5605 = vadd.f32 %v5472, %v5604
    %5606 = vmatmul.bf16.gmra.mxu0 %v3781
    %v5607 = vpop.f32.mrf.mxu0
    %v5608 = vadd.f32 %v5475, %v5607
    %v5609 = vpop.f32.mrf.mxu0
    %v5610 = vadd.f32 %v5477, %v5609
    %5611 = vmatmul.bf16.gmra.mxu0 %v3790
    %v5612 = vpop.f32.mrf.mxu0
    %v5613 = vadd.f32 %v5480, %v5612
    %v5614 = vpop.f32.mrf.mxu0
    %v5615 = vadd.f32 %v5482, %v5614
    %5616 = vmatmul.bf16.gmra.mxu0 %v3799
    %v5617 = vpop.f32.mrf.mxu0
    %v5618 = vadd.f32 %v5485, %v5617
    %v5619 = vpop.f32.mrf.mxu0
    %v5620 = vadd.f32 %v5487, %v5619
    %5621 = vmatmul.bf16.gmra.mxu0 %v3808
    %v5622 = vpop.f32.mrf.mxu0
    %v5623 = vadd.f32 %v5490, %v5622
    %v5624 = vpop.f32.mrf.mxu0
    %v5625 = vadd.f32 %v5492, %v5624
    %5626 = vmatmul.bf16.gmra.mxu0 %v3817
    %v5627 = vpop.f32.mrf.mxu0
    %v5628 = vadd.f32 %v5495, %v5627
    %v5629 = vpop.f32.mrf.mxu0
    %v5630 = vadd.f32 %v5497, %v5629
    %5631 = vmatmul.bf16.gmra.mxu0 %v3826
    %v5632 = vpop.f32.mrf.mxu0
    %v5633 = vadd.f32 %v5500, %v5632
    %v5634 = vpop.f32.mrf.mxu0
    %v5635 = vadd.f32 %v5502, %v5634
    %5636 = vmatmul.bf16.gmra.mxu0 %v3835
    %v5637 = vpop.f32.mrf.mxu0
    %v5638 = vadd.f32 %v5505, %v5637
    %v5639 = vpop.f32.mrf.mxu0
    %v5640 = vadd.f32 %v5507, %v5639
    %5641 = vmatmul.bf16.gmra.mxu0 %v3844
    %v5642 = vpop.f32.mrf.mxu0
    %v5643 = vadd.f32 %v5510, %v5642
    %v5644 = vpop.f32.mrf.mxu0
    %v5645 = vadd.f32 %v5512, %v5644
    %5646 = vmatmul.bf16.gmra.mxu0 %v3853
    %v5647 = vpop.f32.mrf.mxu0
    %v5648 = vadd.f32 %v5515, %v5647
    %v5649 = vpop.f32.mrf.mxu0
    %v5650 = vadd.f32 %v5517, %v5649
    %5651 = vmatmul.bf16.gmra.mxu0 %v3862
    %v5652 = vpop.f32.mrf.mxu0
    %v5653 = vadd.f32 %v5520, %v5652
    %v5654 = vpop.f32.mrf.mxu0
    %v5655 = vadd.f32 %v5522, %v5654
    %5656 = vmatmul.bf16.gmra.mxu0 %v3871
    %v5657 = vpop.f32.mrf.mxu0
    %v5658 = vadd.f32 %v5525, %v5657
    %v5659 = vpop.f32.mrf.mxu0
    %v5660 = vadd.f32 %v5527, %v5659
    %5661 = vmatmul.bf16.gmra.mxu0 %v3880
    %v5662 = vpop.f32.mrf.mxu0
    %v5663 = vadd.f32 %v5530, %v5662
    %v5664 = vpop.f32.mrf.mxu0
    %v5665 = vadd.f32 %v5532, %v5664
    %5666 = vmatmul.bf16.gmra.mxu0 %v3889
    %v5667 = vpop.f32.mrf.mxu0
    %v5668 = vadd.f32 %v5535, %v5667
    %v5669 = vpop.f32.mrf.mxu0
    %v5670 = vadd.f32 %v5537, %v5669
    %5671 = vmatmul.bf16.gmra.mxu0 %v3898
    %v5672 = vpop.f32.mrf.mxu0
    %v5673 = vadd.f32 %v5540, %v5672
    %v5674 = vpop.f32.mrf.mxu0
    %5675 = vdwg.mxu0
    %v5676 = vmax.f32 %v5553, 0.0
    %v5677 = vmax.f32 %v5555, 0.0
    %v5678 = vmax.f32 %v5558, 0.0
    %v5679 = vmax.f32 %v5560, 0.0
    %v5680 = vmax.f32 %v5563, 0.0
    %v5681 = vmax.f32 %v5565, 0.0
    %v5682 = vmax.f32 %v5568, 0.0
    %v5683 = vmax.f32 %v5570, 0.0
    %v5684 = vmax.f32 %v5573, 0.0
    %v5685 = vmax.f32 %v5575, 0.0
    %v5686 = vmax.f32 %v5578, 0.0
    %v5687 = vmax.f32 %v5580, 0.0
    %v5688 = vmax.f32 %v5583, 0.0
    %v5689 = vmax.f32 %v5585, 0.0
    %v5690 = vmax.f32 %v5588, 0.0
    %v5691 = vmax.f32 %v5590, 0.0
    %v5692 = vmax.f32 %v5593, 0.0
    %v5693 = vmax.f32 %v5595, 0.0
    %v5694 = vmax.f32 %v5598, 0.0
    %v5695 = vmax.f32 %v5600, 0.0
    %v5696 = vmax.f32 %v5603, 0.0
    %v5697 = vmax.f32 %v5605, 0.0
    %v5698 = vmax.f32 %v5608, 0.0
    %v5699 = vmax.f32 %v5610, 0.0
    %v5700 = vmax.f32 %v5613, 0.0
    %v5701 = vmax.f32 %v5615, 0.0
    %v5702 = vmax.f32 %v5618, 0.0
    %v5703 = vmax.f32 %v5620, 0.0
    %v5704 = vmax.f32 %v5623, 0.0
    %v5705 = vmax.f32 %v5625, 0.0
    %v5706 = vmax.f32 %v5628, 0.0
    %v5707 = vmax.f32 %v5630, 0.0
    %v5708 = vmax.f32 %v5633, 0.0
    %v5709 = vmax.f32 %v5635, 0.0
    %v5710 = vmax.f32 %v5638, 0.0
    %v5711 = vmax.f32 %v5640, 0.0
    %v5712 = vmax.f32 %v5643, 0.0
    %v5713 = vmax.f32 %v5645, 0.0
    %v5714 = vmax.f32 %v5648, 0.0
    %v5715 = vmax.f32 %v5650, 0.0
    %v5716 = vmax.f32 %v5653, 0.0
    %v5717 = vmax.f32 %v5655, 0.0
    %v5718 = vmax.f32 %v5658, 0.0
    %v5719 = vmax.f32 %v5660, 0.0
    %v5720 = vmax.f32 %v5663, 0.0
    %v5721 = vmax.f32 %v5665, 0.0
    %v5722 = vmax.f32 %v5668, 0.0
    %v5723 = vmax.f32 %v5670, 0.0
    %v5724 = vmax.f32 %v5673, 0.0
    %v5774 = vrot.slane %v5676, 2
    %v5775 = vrot.slane %v5676, 4
    %v5776 = vrot.slane %v5676, 6
    %v5777 = vrot.slane %v5677, 2
    %v5778 = vrot.slane %v5677, 4
    %v5779 = vrot.slane %v5677, 6
    %v5780 = vrot.slane %v5678, 2
    %v5781 = vrot.slane %v5678, 4
    %v5782 = vrot.slane %v5678, 6
    %v5783 = vrot.slane %v5679, 2
    %v5784 = vrot.slane %v5679, 4
    %v5785 = vrot.slane %v5679, 6
    %v5786 = vrot.slane %v5680, 2
    %v5787 = vrot.slane %v5680, 4
    %v5788 = vrot.slane %v5680, 6
    %v5789 = vrot.slane %v5681, 2
    %v5790 = vrot.slane %v5681, 4
    %v5791 = vrot.slane %v5681, 6
    %v5792 = vrot.slane %v5682, 2
    %v5793 = vrot.slane %v5682, 4
    %v5794 = vrot.slane %v5682, 6
    %v5795 = vrot.slane %v5683, 2
    %v5796 = vrot.slane %v5683, 4
    %v5797 = vrot.slane %v5683, 6
    %v5798 = vrot.slane %v5684, 2
    %v5799 = vrot.slane %v5684, 4
    %v5800 = vrot.slane %v5684, 6
    %v5801 = vrot.slane %v5685, 2
    %v5802 = vrot.slane %v5685, 4
    %v5803 = vrot.slane %v5685, 6
    %v5804 = vrot.slane %v5686, 2
    %v5805 = vrot.slane %v5686, 4
    %v5806 = vrot.slane %v5686, 6
    %v5807 = vrot.slane %v5687, 2
    %v5808 = vrot.slane %v5687, 4
    %v5809 = vrot.slane %v5687, 6
    %v5810 = vrot.slane %v5688, 2
    %v5811 = vrot.slane %v5688, 4
    %v5812 = vrot.slane %v5688, 6
    %v5813 = vrot.slane %v5689, 2
    %v5814 = vrot.slane %v5689, 4
    %v5815 = vrot.slane %v5689, 6
    %v5816 = vrot.slane %v5690, 2
    %v5817 = vrot.slane %v5690, 4
    %v5818 = vrot.slane %v5690, 6
    %v5819 = vrot.slane %v5691, 2
    %v5820 = vrot.slane %v5691, 4
    %v5821 = vrot.slane %v5691, 6
    %v5822 = vrot.slane %v5692, 2
    %v5823 = vrot.slane %v5692, 4
    %v5824 = vrot.slane %v5692, 6
    %v5825 = vrot.slane %v5693, 2
    %v5826 = vrot.slane %v5693, 4
    %v5827 = vrot.slane %v5693, 6
    %v5828 = vrot.slane %v5694, 2
    %v5829 = vrot.slane %v5694, 4
    %v5830 = vrot.slane %v5694, 6
    %v5831 = vrot.slane %v5695, 2
    %v5832 = vrot.slane %v5695, 4
    %v5833 = vrot.slane %v5695, 6
    %v5834 = vrot.slane %v5696, 2
    %v5835 = vrot.slane %v5696, 4
    %v5836 = vrot.slane %v5696, 6
    %v5837 = vrot.slane %v5697, 2
    %v5838 = vrot.slane %v5697, 4
    %v5839 = vrot.slane %v5697, 6
    %v5840 = vrot.slane %v5698, 2
    %v5841 = vrot.slane %v5698, 4
    %v5842 = vrot.slane %v5698, 6
    %v5843 = vrot.slane %v5699, 2
    %v5844 = vrot.slane %v5699, 4
    %v5845 = vrot.slane %v5699, 6
    %v5846 = vrot.slane %v5700, 2
    %v5847 = vrot.slane %v5700, 4
    %v5848 = vrot.slane %v5700, 6
    %v5849 = vrot.slane %v5701, 2
    %v5850 = vrot.slane %v5701, 4
    %v5851 = vrot.slane %v5701, 6
    %v5852 = vrot.slane %v5702, 2
    %v5853 = vrot.slane %v5702, 4
    %v5854 = vrot.slane %v5702, 6
    %v5855 = vrot.slane %v5703, 2
    %v5856 = vrot.slane %v5703, 4
    %v5857 = vrot.slane %v5703, 6
    %v5858 = vrot.slane %v5704, 2
    %v5859 = vrot.slane %v5704, 4
    %v5860 = vrot.slane %v5704, 6
    %v5861 = vrot.slane %v5705, 2
    %v5862 = vrot.slane %v5705, 4
    %v5863 = vrot.slane %v5705, 6
    %v5864 = vrot.slane %v5706, 2
    %v5865 = vrot.slane %v5706, 4
    %v5866 = vrot.slane %v5706, 6
    %v5867 = vrot.slane %v5707, 2
    %v5868 = vrot.slane %v5707, 4
    %v5869 = vrot.slane %v5707, 6
    %v5870 = vrot.slane %v5708, 2
    %v5871 = vrot.slane %v5708, 4
    %v5872 = vrot.slane %v5708, 6
    %v5873 = vrot.slane %v5709, 2
    %v5874 = vrot.slane %v5709, 4
    %v5875 = vrot.slane %v5709, 6
    %v5876 = vrot.slane %v5710, 2
    %v5877 = vrot.slane %v5710, 4
    %v5878 = vrot.slane %v5710, 6
    %v5879 = vrot.slane %v5711, 2
    %v5880 = vrot.slane %v5711, 4
    %v5881 = vrot.slane %v5711, 6
    %v5882 = vrot.slane %v5712, 2
    %v5883 = vrot.slane %v5712, 4
    %v5884 = vrot.slane %v5712, 6
    %v5885 = vrot.slane %v5713, 2
    %v5886 = vrot.slane %v5713, 4
    %v5887 = vrot.slane %v5713, 6
    %v5888 = vrot.slane %v5714, 2
    %v5889 = vrot.slane %v5714, 4
    %v5890 = vrot.slane %v5714, 6
    %v5891 = vrot.slane %v5715, 2
    %v5892 = vrot.slane %v5715, 4
    %v5893 = vrot.slane %v5715, 6
    %v5894 = vrot.slane %v5716, 2
    %v5895 = vrot.slane %v5716, 4
    %v5896 = vrot.slane %v5716, 6
    %v5897 = vrot.slane %v5717, 2
    %v5898 = vrot.slane %v5717, 4
    %v5899 = vrot.slane %v5717, 6
    %v5900 = vrot.slane %v5718, 2
    %v5901 = vrot.slane %v5718, 4
    %v5902 = vrot.slane %v5718, 6
    %v5903 = vrot.slane %v5719, 2
    %v5904 = vrot.slane %v5719, 4
    %v5905 = vrot.slane %v5719, 6
    %v5906 = vrot.slane %v5720, 2
    %v5907 = vrot.slane %v5720, 4
    %v5908 = vrot.slane %v5720, 6
    %v5909 = vrot.slane %v5721, 2
    %v5910 = vrot.slane %v5721, 4
    %v5911 = vrot.slane %v5721, 6
    %v5912 = vrot.slane %v5722, 2
    %v5913 = vrot.slane %v5722, 4
    %v5914 = vrot.slane %v5722, 6
    %v5915 = vrot.slane %v5723, 2
    %v5916 = vrot.slane %v5723, 4
    %v5917 = vrot.slane %v5723, 6
    %v5918 = vrot.slane %v5724, 2
    %v5919 = vrot.slane %v5724, 4
    %v5920 = vrot.slane %v5724, 6
    %5921 = vst [vmem:[#allocation1] ss:$4 sm:$0xff] %v5676
    %s5922 = scalar_lea.vmem [#allocation1], 1
    %5923 = vst [vmem:[%s5922] ss:$4 sm:$0xff] %v5774
    %s5924 = scalar_lea.vmem [#allocation1], 2
    %5925 = vst [vmem:[%s5924] ss:$4 sm:$0xff] %v5775
    %s5926 = scalar_lea.vmem [#allocation1], 3
    %5927 = vst [vmem:[%s5926] ss:$4 sm:$0xff] %v5776
    %s5928 = scalar_lea.vmem [#allocation1], 32
    %5929 = vst [vmem:[%s5928] ss:$4 sm:$0xff] %v5677
    %s5930 = scalar_lea.vmem [#allocation1], 33
    %5931 = vst [vmem:[%s5930] ss:$4 sm:$0xff] %v5777
    %v5932 = vld.sshfl [vmem:[#allocation1] sm:$0xff pattern:$0x73625140]
    %v5933 = vld.sshfl [vmem:[#allocation1 + $0x20] sm:$0xff pattern:$0x73625140]
    %5934 = vst [vmem:[#allocation1] ss:$4 sm:$0xff] %v5779
    %5935 = vst [vmem:[%s5922] ss:$4 sm:$0xff] %v5678
    %5936 = vst [vmem:[%s5924] ss:$4 sm:$0xff] %v5780
    %5937 = vst [vmem:[%s5926] ss:$4 sm:$0xff] %v5781
    %5938 = vst [vmem:[%s5928] ss:$4 sm:$0xff] %v5782
    %5939 = vst [vmem:[%s5930] ss:$4 sm:$0xff] %v5679
    %v5940 = vld.sshfl [vmem:[#allocation1] sm:$0xff pattern:$0x73625140]
    %v5941 = vld.sshfl [vmem:[#allocation1 + $0x20] sm:$0xff pattern:$0x73625140]
    %5942 = vst [vmem:[#allocation1] ss:$4 sm:$0xff] %v5784
    %5943 = vst [vmem:[%s5922] ss:$4 sm:$0xff] %v5785
    %5944 = vst [vmem:[%s5924] ss:$4 sm:$0xff] %v5680
    %5945 = vst [vmem:[%s5926] ss:$4 sm:$0xff] %v5786
    %5946 = vst [vmem:[%s5928] ss:$4 sm:$0xff] %v5787
    %5947 = vst [vmem:[%s5930] ss:$4 sm:$0xff] %v5788
    %v5948 = vld.sshfl [vmem:[#allocation1] sm:$0xff pattern:$0x73625140]
    %v5949 = vld.sshfl [vmem:[#allocation1 + $0x20] sm:$0xff pattern:$0x73625140]
    %5950 = vst [vmem:[#allocation1] ss:$4 sm:$0xff] %v5789
    %5951 = vst [vmem:[%s5922] ss:$4 sm:$0xff] %v5790
    %5952 = vst [vmem:[%s5924] ss:$4 sm:$0xff] %v5791
    %5953 = vst [vmem:[%s5926] ss:$4 sm:$0xff] %v5682
    %5954 = vst [vmem:[%s5928] ss:$4 sm:$0xff] %v5792
    %5955 = vst [vmem:[%s5930] ss:$4 sm:$0xff] %v5793
    %v5956 = vld.sshfl [vmem:[#allocation1] sm:$0xff pattern:$0x73625140]
    %v5957 = vld.sshfl [vmem:[#allocation1 + $0x20] sm:$0xff pattern:$0x73625140]
    %5958 = vst [vmem:[#allocation1] ss:$4 sm:$0xff] %v5683
    %5959 = vst [vmem:[%s5922] ss:$4 sm:$0xff] %v5795
    %5960 = vst [vmem:[%s5924] ss:$4 sm:$0xff] %v5796
    %5961 = vst [vmem:[%s5926] ss:$4 sm:$0xff] %v5797
    %5962 = vst [vmem:[%s5928] ss:$4 sm:$0xff] %v5684
    %5963 = vst [vmem:[%s5930] ss:$4 sm:$0xff] %v5798
    %v5964 = vld.sshfl [vmem:[#allocation1] sm:$0xff pattern:$0x73625140]
    %v5965 = vld.sshfl [vmem:[#allocation1 + $0x20] sm:$0xff pattern:$0x73625140]
    %5966 = vst [vmem:[#allocation1] ss:$4 sm:$0xff] %v5800
    %5967 = vst [vmem:[%s5922] ss:$4 sm:$0xff] %v5685
    %5968 = vst [vmem:[%s5924] ss:$4 sm:$0xff] %v5801
    %5969 = vst [vmem:[%s5926] ss:$4 sm:$0xff] %v5802
    %5970 = vst [vmem:[%s5928] ss:$4 sm:$0xff] %v5803
    %5971 = vst [vmem:[%s5930] ss:$4 sm:$0xff] %v5686
    %v5972 = vld.sshfl [vmem:[#allocation1] sm:$0xff pattern:$0x73625140]
    %v5973 = vld.sshfl [vmem:[#allocation1 + $0x20] sm:$0xff pattern:$0x73625140]
    %5974 = vst [vmem:[#allocation1] ss:$4 sm:$0xff] %v5805
    %5975 = vst [vmem:[%s5922] ss:$4 sm:$0xff] %v5806
    %5976 = vst [vmem:[%s5924] ss:$4 sm:$0xff] %v5687
    %5977 = vst [vmem:[%s5926] ss:$4 sm:$0xff] %v5807
    %5978 = vst [vmem:[%s5928] ss:$4 sm:$0xff] %v5808
    %5979 = vst [vmem:[%s5930] ss:$4 sm:$0xff] %v5809
    %v5980 = vld.sshfl [vmem:[#allocation1] sm:$0xff pattern:$0x73625140]
    %v5981 = vld.sshfl [vmem:[#allocation1 + $0x20] sm:$0xff pattern:$0x73625140]
    %5982 = vst [vmem:[#allocation1] ss:$4 sm:$0xff] %v5810
    %5983 = vst [vmem:[%s5922] ss:$4 sm:$0xff] %v5811
    %5984 = vst [vmem:[%s5924] ss:$4 sm:$0xff] %v5812
    %5985 = vst [vmem:[%s5926] ss:$4 sm:$0xff] %v5689
    %5986 = vst [vmem:[%s5928] ss:$4 sm:$0xff] %v5813
    %5987 = vst [vmem:[%s5930] ss:$4 sm:$0xff] %v5814
    %v5988 = vld.sshfl [vmem:[#allocation1] sm:$0xff pattern:$0x73625140]
    %v5989 = vld.sshfl [vmem:[#allocation1 + $0x20] sm:$0xff pattern:$0x73625140]
    %5990 = vst [vmem:[#allocation1] ss:$4 sm:$0xff] %v5690
    %5991 = vst [vmem:[%s5922] ss:$4 sm:$0xff] %v5816
    %5992 = vst [vmem:[%s5924] ss:$4 sm:$0xff] %v5817
    %5993 = vst [vmem:[%s5926] ss:$4 sm:$0xff] %v5818
    %5994 = vst [vmem:[%s5928] ss:$4 sm:$0xff] %v5691
    %5995 = vst [vmem:[%s5930] ss:$4 sm:$0xff] %v5819
    %v5996 = vld.sshfl [vmem:[#allocation1] sm:$0xff pattern:$0x73625140]
    %v5997 = vld.sshfl [vmem:[#allocation1 + $0x20] sm:$0xff pattern:$0x73625140]
    %5998 = vst [vmem:[#allocation1] ss:$4 sm:$0xff] %v5821
    %5999 = vst [vmem:[%s5922] ss:$4 sm:$0xff] %v5692
    %6000 = vst [vmem:[%s5924] ss:$4 sm:$0xff] %v5822
    %6001 = vst [vmem:[%s5926] ss:$4 sm:$0xff] %v5823
    %6002 = vst [vmem:[%s5928] ss:$4 sm:$0xff] %v5824
    %6003 = vst [vmem:[%s5930] ss:$4 sm:$0xff] %v5693
    %v6004 = vld.sshfl [vmem:[#allocation1] sm:$0xff pattern:$0x73625140]
    %v6005 = vld.sshfl [vmem:[#allocation1 + $0x20] sm:$0xff pattern:$0x73625140]
    %6006 = vst [vmem:[#allocation1] ss:$4 sm:$0xff] %v5826
    %6007 = vst [vmem:[%s5922] ss:$4 sm:$0xff] %v5827
    %6008 = vst [vmem:[%s5924] ss:$4 sm:$0xff] %v5694
    %6009 = vst [vmem:[%s5926] ss:$4 sm:$0xff] %v5828
    %6010 = vst [vmem:[%s5928] ss:$4 sm:$0xff] %v5829
    %6011 = vst [vmem:[%s5930] ss:$4 sm:$0xff] %v5830
    %v6012 = vld.sshfl [vmem:[#allocation1] sm:$0xff pattern:$0x73625140]
    %v6013 = vld.sshfl [vmem:[#allocation1 + $0x20] sm:$0xff pattern:$0x73625140]
    %6014 = vst [vmem:[#allocation1] ss:$4 sm:$0xff] %v5831
    %6015 = vst [vmem:[%s5922] ss:$4 sm:$0xff] %v5832
    %6016 = vst [vmem:[%s5924] ss:$4 sm:$0xff] %v5833
    %6017 = vst [vmem:[%s5926] ss:$4 sm:$0xff] %v5696
    %6018 = vst [vmem:[%s5928] ss:$4 sm:$0xff] %v5834
    %6019 = vst [vmem:[%s5930] ss:$4 sm:$0xff] %v5835
    %v6020 = vld.sshfl [vmem:[#allocation1] sm:$0xff pattern:$0x73625140]
    %v6021 = vld.sshfl [vmem:[#allocation1 + $0x20] sm:$0xff pattern:$0x73625140]
    %6022 = vst [vmem:[#allocation1] ss:$4 sm:$0xff] %v5697
    %6023 = vst [vmem:[%s5922] ss:$4 sm:$0xff] %v5837
    %6024 = vst [vmem:[%s5924] ss:$4 sm:$0xff] %v5838
    %6025 = vst [vmem:[%s5926] ss:$4 sm:$0xff] %v5839
    %6026 = vst [vmem:[%s5928] ss:$4 sm:$0xff] %v5698
    %6027 = vst [vmem:[%s5930] ss:$4 sm:$0xff] %v5840
    %v6028 = vld.sshfl [vmem:[#allocation1] sm:$0xff pattern:$0x73625140]
    %v6029 = vld.sshfl [vmem:[#allocation1 + $0x20] sm:$0xff pattern:$0x73625140]
    %6030 = vst [vmem:[#allocation1] ss:$4 sm:$0xff] %v5842
    %6031 = vst [vmem:[%s5922] ss:$4 sm:$0xff] %v5699
    %6032 = vst [vmem:[%s5924] ss:$4 sm:$0xff] %v5843
    %6033 = vst [vmem:[%s5926] ss:$4 sm:$0xff] %v5844
    %6034 = vst [vmem:[%s5928] ss:$4 sm:$0xff] %v5845
    %6035 = vst [vmem:[%s5930] ss:$4 sm:$0xff] %v5700
    %v6036 = vld.sshfl [vmem:[#allocation1] sm:$0xff pattern:$0x73625140]
    %v6037 = vld.sshfl [vmem:[#allocation1 + $0x20] sm:$0xff pattern:$0x73625140]
    %6038 = vst [vmem:[#allocation1] ss:$4 sm:$0xff] %v5847
    %6039 = vst [vmem:[%s5922] ss:$4 sm:$0xff] %v5848
    %6040 = vst [vmem:[%s5924] ss:$4 sm:$0xff] %v5701
    %6041 = vst [vmem:[%s5926] ss:$4 sm:$0xff] %v5849
    %6042 = vst [vmem:[%s5928] ss:$4 sm:$0xff] %v5850
    %6043 = vst [vmem:[%s5930] ss:$4 sm:$0xff] %v5851
    %v6044 = vld.sshfl [vmem:[#allocation1] sm:$0xff pattern:$0x73625140]
    %v6045 = vld.sshfl [vmem:[#allocation1 + $0x20] sm:$0xff pattern:$0x73625140]
    %6046 = vst [vmem:[#allocation1] ss:$4 sm:$0xff] %v5852
    %6047 = vst [vmem:[%s5922] ss:$4 sm:$0xff] %v5853
    %6048 = vst [vmem:[%s5924] ss:$4 sm:$0xff] %v5854
    %6049 = vst [vmem:[%s5926] ss:$4 sm:$0xff] %v5703
    %6050 = vst [vmem:[%s5928] ss:$4 sm:$0xff] %v5855
    %6051 = vst [vmem:[%s5930] ss:$4 sm:$0xff] %v5856
    %v6052 = vld.sshfl [vmem:[#allocation1] sm:$0xff pattern:$0x73625140]
    %v6053 = vld.sshfl [vmem:[#allocation1 + $0x20] sm:$0xff pattern:$0x73625140]
    %6054 = vst [vmem:[#allocation1] ss:$4 sm:$0xff] %v5704
    %6055 = vst [vmem:[%s5922] ss:$4 sm:$0xff] %v5858
    %6056 = vst [vmem:[%s5924] ss:$4 sm:$0xff] %v5859
    %6057 = vst [vmem:[%s5926] ss:$4 sm:$0xff] %v5860
    %6058 = vst [vmem:[%s5928] ss:$4 sm:$0xff] %v5705
    %6059 = vst [vmem:[%s5930] ss:$4 sm:$0xff] %v5861
    %v6060 = vld.sshfl [vmem:[#allocation1] sm:$0xff pattern:$0x73625140]
    %v6061 = vld.sshfl [vmem:[#allocation1 + $0x20] sm:$0xff pattern:$0x73625140]
    %6062 = vst [vmem:[#allocation1] ss:$4 sm:$0xff] %v5863
    %6063 = vst [vmem:[%s5922] ss:$4 sm:$0xff] %v5706
    %6064 = vst [vmem:[%s5924] ss:$4 sm:$0xff] %v5864
    %6065 = vst [vmem:[%s5926] ss:$4 sm:$0xff] %v5865
    %6066 = vst [vmem:[%s5928] ss:$4 sm:$0xff] %v5866
    %6067 = vst [vmem:[%s5930] ss:$4 sm:$0xff] %v5707
    %v6068 = vld.sshfl [vmem:[#allocation1] sm:$0xff pattern:$0x73625140]
    %v6069 = vld.sshfl [vmem:[#allocation1 + $0x20] sm:$0xff pattern:$0x73625140]
    %6070 = vst [vmem:[#allocation1] ss:$4 sm:$0xff] %v5868
    %6071 = vst [vmem:[%s5922] ss:$4 sm:$0xff] %v5869
    %6072 = vst [vmem:[%s5924] ss:$4 sm:$0xff] %v5708
    %6073 = vst [vmem:[%s5926] ss:$4 sm:$0xff] %v5870
    %6074 = vst [vmem:[%s5928] ss:$4 sm:$0xff] %v5871
    %6075 = vst [vmem:[%s5930] ss:$4 sm:$0xff] %v5872
    %v6076 = vld.sshfl [vmem:[#allocation1] sm:$0xff pattern:$0x73625140]
    %v6077 = vld.sshfl [vmem:[#allocation1 + $0x20] sm:$0xff pattern:$0x73625140]
    %6078 = vst [vmem:[#allocation1] ss:$4 sm:$0xff] %v5873
    %6079 = vst [vmem:[%s5922] ss:$4 sm:$0xff] %v5874
    %6080 = vst [vmem:[%s5924] ss:$4 sm:$0xff] %v5875
    %6081 = vst [vmem:[%s5926] ss:$4 sm:$0xff] %v5710
    %6082 = vst [vmem:[%s5928] ss:$4 sm:$0xff] %v5876
    %6083 = vst [vmem:[%s5930] ss:$4 sm:$0xff] %v5877
    %v6084 = vld.sshfl [vmem:[#allocation1] sm:$0xff pattern:$0x73625140]
    %v6085 = vld.sshfl [vmem:[#allocation1 + $0x20] sm:$0xff pattern:$0x73625140]
    %6086 = vst [vmem:[#allocation1] ss:$4 sm:$0xff] %v5711
    %6087 = vst [vmem:[%s5922] ss:$4 sm:$0xff] %v5879
    %6088 = vst [vmem:[%s5924] ss:$4 sm:$0xff] %v5880
    %6089 = vst [vmem:[%s5926] ss:$4 sm:$0xff] %v5881
    %6090 = vst [vmem:[%s5928] ss:$4 sm:$0xff] %v5712
    %6091 = vst [vmem:[%s5930] ss:$4 sm:$0xff] %v5882
    %v6092 = vld.sshfl [vmem:[#allocation1] sm:$0xff pattern:$0x73625140]
    %v6093 = vld.sshfl [vmem:[#allocation1 + $0x20] sm:$0xff pattern:$0x73625140]
    %6094 = vst [vmem:[#allocation1] ss:$4 sm:$0xff] %v5884
    %6095 = vst [vmem:[%s5922] ss:$4 sm:$0xff] %v5713
    %6096 = vst [vmem:[%s5924] ss:$4 sm:$0xff] %v5885
    %6097 = vst [vmem:[%s5926] ss:$4 sm:$0xff] %v5886
    %6098 = vst [vmem:[%s5928] ss:$4 sm:$0xff] %v5887
    %6099 = vst [vmem:[%s5930] ss:$4 sm:$0xff] %v5714
    %v6100 = vld.sshfl [vmem:[#allocation1] sm:$0xff pattern:$0x73625140]
    %v6101 = vld.sshfl [vmem:[#allocation1 + $0x20] sm:$0xff pattern:$0x73625140]
    %6102 = vst [vmem:[#allocation1] ss:$4 sm:$0xff] %v5889
    %6103 = vst [vmem:[%s5922] ss:$4 sm:$0xff] %v5890
    %6104 = vst [vmem:[%s5924] ss:$4 sm:$0xff] %v5715
    %6105 = vst [vmem:[%s5926] ss:$4 sm:$0xff] %v5891
    %6106 = vst [vmem:[%s5928] ss:$4 sm:$0xff] %v5892
    %6107 = vst [vmem:[%s5930] ss:$4 sm:$0xff] %v5893
    %v6108 = vld.sshfl [vmem:[#allocation1] sm:$0xff pattern:$0x73625140]
    %v6109 = vld.sshfl [vmem:[#allocation1 + $0x20] sm:$0xff pattern:$0x73625140]
    %6110 = vst [vmem:[#allocation1] ss:$4 sm:$0xff] %v5894
    %6111 = vst [vmem:[%s5922] ss:$4 sm:$0xff] %v5895
    %6112 = vst [vmem:[%s5924] ss:$4 sm:$0xff] %v5896
    %6113 = vst [vmem:[%s5926] ss:$4 sm:$0xff] %v5717
    %6114 = vst [vmem:[%s5928] ss:$4 sm:$0xff] %v5897
    %6115 = vst [vmem:[%s5930] ss:$4 sm:$0xff] %v5898
    %v6116 = vld.sshfl [vmem:[#allocation1] sm:$0xff pattern:$0x73625140]
    %v6117 = vld.sshfl [vmem:[#allocation1 + $0x20] sm:$0xff pattern:$0x73625140]
    %6118 = vst [vmem:[#allocation1] ss:$4 sm:$0xff] %v5718
    %6119 = vst [vmem:[%s5922] ss:$4 sm:$0xff] %v5900
    %6120 = vst [vmem:[%s5924] ss:$4 sm:$0xff] %v5901
    %6121 = vst [vmem:[%s5926] ss:$4 sm:$0xff] %v5902
    %6122 = vst [vmem:[%s5928] ss:$4 sm:$0xff] %v5719
    %6123 = vst [vmem:[%s5930] ss:$4 sm:$0xff] %v5903
    %v6124 = vld.sshfl [vmem:[#allocation1] sm:$0xff pattern:$0x73625140]
    %v6125 = vld.sshfl [vmem:[#allocation1 + $0x20] sm:$0xff pattern:$0x73625140]
    %6126 = vst [vmem:[#allocation1] ss:$4 sm:$0xff] %v5905
    %6127 = vst [vmem:[%s5922] ss:$4 sm:$0xff] %v5720
    %6128 = vst [vmem:[%s5924] ss:$4 sm:$0xff] %v5906
    %6129 = vst [vmem:[%s5926] ss:$4 sm:$0xff] %v5907
    %6130 = vst [vmem:[%s5928] ss:$4 sm:$0xff] %v5908
    %6131 = vst [vmem:[%s5930] ss:$4 sm:$0xff] %v5721
    %v6132 = vld.sshfl [vmem:[#allocation1] sm:$0xff pattern:$0x73625140]
    %v6133 = vld.sshfl [vmem:[#allocation1 + $0x20] sm:$0xff pattern:$0x73625140]
    %6134 = vst [vmem:[#allocation1] ss:$4 sm:$0xff] %v5910
    %6135 = vst [vmem:[%s5922] ss:$4 sm:$0xff] %v5911
    %6136 = vst [vmem:[%s5924] ss:$4 sm:$0xff] %v5722
    %6137 = vst [vmem:[%s5926] ss:$4 sm:$0xff] %v5912
    %6138 = vst [vmem:[%s5928] ss:$4 sm:$0xff] %v5913
    %6139 = vst [vmem:[%s5930] ss:$4 sm:$0xff] %v5914
    %v6140 = vld.sshfl [vmem:[#allocation1] sm:$0xff pattern:$0x73625140]
    %v6141 = vld.sshfl [vmem:[#allocation1 + $0x20] sm:$0xff pattern:$0x73625140]
    %6142 = vst [vmem:[#allocation1] ss:$4 sm:$0xff] %v5915
    %6143 = vst [vmem:[%s5922] ss:$4 sm:$0xff] %v5916
    %6144 = vst [vmem:[%s5924] ss:$4 sm:$0xff] %v5917
    %6145 = vst [vmem:[%s5926] ss:$4 sm:$0xff] %v5724
    %6146 = vst [vmem:[%s5928] ss:$4 sm:$0xff] %v5918
    %6147 = vst [vmem:[%s5930] ss:$4 sm:$0xff] %v5919
    %v6148 = vld.sshfl [vmem:[#allocation1] sm:$0xff pattern:$0x73625140]
    %v6149 = vld.sshfl [vmem:[#allocation1 + $0x20] sm:$0xff pattern:$0x73625140]
    %6150 = vst [vmem:[#allocation1] ss:$4 sm:$0xff] %v5676
    %s6151 = scalar_lea.vmem [#allocation1], 1
    %6152 = vst [vmem:[%s6151] ss:$4 sm:$0xff] %v5774
    %s6153 = scalar_lea.vmem [#allocation1], 2
    %6154 = vst [vmem:[%s6153] ss:$4 sm:$0xff] %v5775
    %s6155 = scalar_lea.vmem [#allocation1], 3
    %6156 = vst [vmem:[%s6155] ss:$4 sm:$0xff] %v5776
    %s6157 = scalar_lea.vmem [#allocation1], 32
    %6158 = vst [vmem:[%s6157] ss:$4 sm:$0xff] %v5677
    %s6159 = scalar_lea.vmem [#allocation1], 33
    %6160 = vst [vmem:[%s6159] ss:$4 sm:$0xff] %v5777
    %s6161 = scalar_lea.vmem [#allocation1], 34
    %6162 = vst [vmem:[%s6161] ss:$4 sm:$0xff] %v5778
    %v6163 = vld.sshfl [vmem:[#allocation1] sm:$0xff pattern:$0x73625140]
    %v6164 = vld.sshfl [vmem:[#allocation1 + $0x20] sm:$0xff pattern:$0x73625140]
    %6165 = vst [vmem:[#allocation1] ss:$4 sm:$0xff] %v5779
    %6166 = vst [vmem:[%s6151] ss:$4 sm:$0xff] %v5678
    %6167 = vst [vmem:[%s6153] ss:$4 sm:$0xff] %v5780
    %6168 = vst [vmem:[%s6155] ss:$4 sm:$0xff] %v5781
    %6169 = vst [vmem:[%s6157] ss:$4 sm:$0xff] %v5782
    %6170 = vst [vmem:[%s6159] ss:$4 sm:$0xff] %v5679
    %6171 = vst [vmem:[%s6161] ss:$4 sm:$0xff] %v5783
    %v6172 = vld.sshfl [vmem:[#allocation1] sm:$0xff pattern:$0x73625140]
    %v6173 = vld.sshfl [vmem:[#allocation1 + $0x20] sm:$0xff pattern:$0x73625140]
    %6174 = vst [vmem:[#allocation1] ss:$4 sm:$0xff] %v5784
    %6175 = vst [vmem:[%s6151] ss:$4 sm:$0xff] %v5785
    %6176 = vst [vmem:[%s6153] ss:$4 sm:$0xff] %v5680
    %6177 = vst [vmem:[%s6155] ss:$4 sm:$0xff] %v5786
    %6178 = vst [vmem:[%s6157] ss:$4 sm:$0xff] %v5787
    %6179 = vst [vmem:[%s6159] ss:$4 sm:$0xff] %v5788
    %6180 = vst [vmem:[%s6161] ss:$4 sm:$0xff] %v5681
    %v6181 = vld.sshfl [vmem:[#allocation1] sm:$0xff pattern:$0x73625140]
    %v6182 = vld.sshfl [vmem:[#allocation1 + $0x20] sm:$0xff pattern:$0x73625140]
    %6183 = vst [vmem:[#allocation1] ss:$4 sm:$0xff] %v5789
    %6184 = vst [vmem:[%s6151] ss:$4 sm:$0xff] %v5790
    %6185 = vst [vmem:[%s6153] ss:$4 sm:$0xff] %v5791
    %6186 = vst [vmem:[%s6155] ss:$4 sm:$0xff] %v5682
    %6187 = vst [vmem:[%s6157] ss:$4 sm:$0xff] %v5792
    %6188 = vst [vmem:[%s6159] ss:$4 sm:$0xff] %v5793
    %6189 = vst [vmem:[%s6161] ss:$4 sm:$0xff] %v5794
    %v6190 = vld.sshfl [vmem:[#allocation1] sm:$0xff pattern:$0x73625140]
    %v6191 = vld.sshfl [vmem:[#allocation1 + $0x20] sm:$0xff pattern:$0x73625140]
    %6192 = vst [vmem:[#allocation1] ss:$4 sm:$0xff] %v5683
    %6193 = vst [vmem:[%s6151] ss:$4 sm:$0xff] %v5795
    %6194 = vst [vmem:[%s6153] ss:$4 sm:$0xff] %v5796
    %6195 = vst [vmem:[%s6155] ss:$4 sm:$0xff] %v5797
    %6196 = vst [vmem:[%s6157] ss:$4 sm:$0xff] %v5684
    %6197 = vst [vmem:[%s6159] ss:$4 sm:$0xff] %v5798
    %6198 = vst [vmem:[%s6161] ss:$4 sm:$0xff] %v5799
    %v6199 = vld.sshfl [vmem:[#allocation1] sm:$0xff pattern:$0x73625140]
    %v6200 = vld.sshfl [vmem:[#allocation1 + $0x20] sm:$0xff pattern:$0x73625140]
    %6201 = vst [vmem:[#allocation1] ss:$4 sm:$0xff] %v5800
    %6202 = vst [vmem:[%s6151] ss:$4 sm:$0xff] %v5685
    %6203 = vst [vmem:[%s6153] ss:$4 sm:$0xff] %v5801
    %6204 = vst [vmem:[%s6155] ss:$4 sm:$0xff] %v5802
    %6205 = vst [vmem:[%s6157] ss:$4 sm:$0xff] %v5803
    %6206 = vst [vmem:[%s6159] ss:$4 sm:$0xff] %v5686
    %6207 = vst [vmem:[%s6161] ss:$4 sm:$0xff] %v5804
    %v6208 = vld.sshfl [vmem:[#allocation1] sm:$0xff pattern:$0x73625140]
    %v6209 = vld.sshfl [vmem:[#allocation1 + $0x20] sm:$0xff pattern:$0x73625140]
    %6210 = vst [vmem:[#allocation1] ss:$4 sm:$0xff] %v5805
    %6211 = vst [vmem:[%s6151] ss:$4 sm:$0xff] %v5806
    %6212 = vst [vmem:[%s6153] ss:$4 sm:$0xff] %v5687
    %6213 = vst [vmem:[%s6155] ss:$4 sm:$0xff] %v5807
    %6214 = vst [vmem:[%s6157] ss:$4 sm:$0xff] %v5808
    %6215 = vst [vmem:[%s6159] ss:$4 sm:$0xff] %v5809
    %6216 = vst [vmem:[%s6161] ss:$4 sm:$0xff] %v5688
    %v6217 = vld.sshfl [vmem:[#allocation1] sm:$0xff pattern:$0x73625140]
    %v6218 = vld.sshfl [vmem:[#allocation1 + $0x20] sm:$0xff pattern:$0x73625140]
    %6219 = vst [vmem:[#allocation1] ss:$4 sm:$0xff] %v5810
    %6220 = vst [vmem:[%s6151] ss:$4 sm:$0xff] %v5811
    %6221 = vst [vmem:[%s6153] ss:$4 sm:$0xff] %v5812
    %6222 = vst [vmem:[%s6155] ss:$4 sm:$0xff] %v5689
    %6223 = vst [vmem:[%s6157] ss:$4 sm:$0xff] %v5813
    %6224 = vst [vmem:[%s6159] ss:$4 sm:$0xff] %v5814
    %6225 = vst [vmem:[%s6161] ss:$4 sm:$0xff] %v5815
    %v6226 = vld.sshfl [vmem:[#allocation1] sm:$0xff pattern:$0x73625140]
    %v6227 = vld.sshfl [vmem:[#allocation1 + $0x20] sm:$0xff pattern:$0x73625140]
    %6228 = vst [vmem:[#allocation1] ss:$4 sm:$0xff] %v5690
    %6229 = vst [vmem:[%s6151] ss:$4 sm:$0xff] %v5816
    %6230 = vst [vmem:[%s6153] ss:$4 sm:$0xff] %v5817
    %6231 = vst [vmem:[%s6155] ss:$4 sm:$0xff] %v5818
    %6232 = vst [vmem:[%s6157] ss:$4 sm:$0xff] %v5691
    %6233 = vst [vmem:[%s6159] ss:$4 sm:$0xff] %v5819
    %6234 = vst [vmem:[%s6161] ss:$4 sm:$0xff] %v5820
    %v6235 = vld.sshfl [vmem:[#allocation1] sm:$0xff pattern:$0x73625140]
    %v6236 = vld.sshfl [vmem:[#allocation1 + $0x20] sm:$0xff pattern:$0x73625140]
    %6237 = vst [vmem:[#allocation1] ss:$4 sm:$0xff] %v5821
    %6238 = vst [vmem:[%s6151] ss:$4 sm:$0xff] %v5692
    %6239 = vst [vmem:[%s6153] ss:$4 sm:$0xff] %v5822
    %6240 = vst [vmem:[%s6155] ss:$4 sm:$0xff] %v5823
    %6241 = vst [vmem:[%s6157] ss:$4 sm:$0xff] %v5824
    %6242 = vst [vmem:[%s6159] ss:$4 sm:$0xff] %v5693
    %6243 = vst [vmem:[%s6161] ss:$4 sm:$0xff] %v5825
    %v6244 = vld.sshfl [vmem:[#allocation1] sm:$0xff pattern:$0x73625140]
    %v6245 = vld.sshfl [vmem:[#allocation1 + $0x20] sm:$0xff pattern:$0x73625140]
    %6246 = vst [vmem:[#allocation1] ss:$4 sm:$0xff] %v5826
    %6247 = vst [vmem:[%s6151] ss:$4 sm:$0xff] %v5827
    %6248 = vst [vmem:[%s6153] ss:$4 sm:$0xff] %v5694
    %6249 = vst [vmem:[%s6155] ss:$4 sm:$0xff] %v5828
    %6250 = vst [vmem:[%s6157] ss:$4 sm:$0xff] %v5829
    %6251 = vst [vmem:[%s6159] ss:$4 sm:$0xff] %v5830
    %6252 = vst [vmem:[%s6161] ss:$4 sm:$0xff] %v5695
    %v6253 = vld.sshfl [vmem:[#allocation1] sm:$0xff pattern:$0x73625140]
    %v6254 = vld.sshfl [vmem:[#allocation1 + $0x20] sm:$0xff pattern:$0x73625140]
    %6255 = vst [vmem:[#allocation1] ss:$4 sm:$0xff] %v5831
    %6256 = vst [vmem:[%s6151] ss:$4 sm:$0xff] %v5832
    %6257 = vst [vmem:[%s6153] ss:$4 sm:$0xff] %v5833
    %6258 = vst [vmem:[%s6155] ss:$4 sm:$0xff] %v5696
    %6259 = vst [vmem:[%s6157] ss:$4 sm:$0xff] %v5834
    %6260 = vst [vmem:[%s6159] ss:$4 sm:$0xff] %v5835
    %6261 = vst [vmem:[%s6161] ss:$4 sm:$0xff] %v5836
    %v6262 = vld.sshfl [vmem:[#allocation1] sm:$0xff pattern:$0x73625140]
    %v6263 = vld.sshfl [vmem:[#allocation1 + $0x20] sm:$0xff pattern:$0x73625140]
    %6264 = vst [vmem:[#allocation1] ss:$4 sm:$0xff] %v5697
    %6265 = vst [vmem:[%s6151] ss:$4 sm:$0xff] %v5837
    %6266 = vst [vmem:[%s6153] ss:$4 sm:$0xff] %v5838
    %6267 = vst [vmem:[%s6155] ss:$4 sm:$0xff] %v5839
    %6268 = vst [vmem:[%s6157] ss:$4 sm:$0xff] %v5698
    %6269 = vst [vmem:[%s6159] ss:$4 sm:$0xff] %v5840
    %6270 = vst [vmem:[%s6161] ss:$4 sm:$0xff] %v5841
    %v6271 = vld.sshfl [vmem:[#allocation1] sm:$0xff pattern:$0x73625140]
    %v6272 = vld.sshfl [vmem:[#allocation1 + $0x20] sm:$0xff pattern:$0x73625140]
    %6273 = vst [vmem:[#allocation1] ss:$4 sm:$0xff] %v5842
    %6274 = vst [vmem:[%s6151] ss:$4 sm:$0xff] %v5699
    %6275 = vst [vmem:[%s6153] ss:$4 sm:$0xff] %v5843
    %6276 = vst [vmem:[%s6155] ss:$4 sm:$0xff] %v5844
    %6277 = vst [vmem:[%s6157] ss:$4 sm:$0xff] %v5845
    %6278 = vst [vmem:[%s6159] ss:$4 sm:$0xff] %v5700
    %6279 = vst [vmem:[%s6161] ss:$4 sm:$0xff] %v5846
    %v6280 = vld.sshfl [vmem:[#allocation1] sm:$0xff pattern:$0x73625140]
    %v6281 = vld.sshfl [vmem:[#allocation1 + $0x20] sm:$0xff pattern:$0x73625140]
    %6282 = vst [vmem:[#allocation1] ss:$4 sm:$0xff] %v5847
    %6283 = vst [vmem:[%s6151] ss:$4 sm:$0xff] %v5848
    %6284 = vst [vmem:[%s6153] ss:$4 sm:$0xff] %v5701
    %6285 = vst [vmem:[%s6155] ss:$4 sm:$0xff] %v5849
    %6286 = vst [vmem:[%s6157] ss:$4 sm:$0xff] %v5850
    %6287 = vst [vmem:[%s6159] ss:$4 sm:$0xff] %v5851
    %6288 = vst [vmem:[%s6161] ss:$4 sm:$0xff] %v5702
    %v6289 = vld.sshfl [vmem:[#allocation1] sm:$0xff pattern:$0x73625140]
    %v6290 = vld.sshfl [vmem:[#allocation1 + $0x20] sm:$0xff pattern:$0x73625140]
    %6291 = vst [vmem:[#allocation1] ss:$4 sm:$0xff] %v5852
    %6292 = vst [vmem:[%s6151] ss:$4 sm:$0xff] %v5853
    %6293 = vst [vmem:[%s6153] ss:$4 sm:$0xff] %v5854
    %6294 = vst [vmem:[%s6155] ss:$4 sm:$0xff] %v5703
    %6295 = vst [vmem:[%s6157] ss:$4 sm:$0xff] %v5855
    %6296 = vst [vmem:[%s6159] ss:$4 sm:$0xff] %v5856
    %6297 = vst [vmem:[%s6161] ss:$4 sm:$0xff] %v5857
    %v6298 = vld.sshfl [vmem:[#allocation1] sm:$0xff pattern:$0x73625140]
    %v6299 = vld.sshfl [vmem:[#allocation1 + $0x20] sm:$0xff pattern:$0x73625140]
    %6300 = vst [vmem:[#allocation1] ss:$4 sm:$0xff] %v5704
    %6301 = vst [vmem:[%s6151] ss:$4 sm:$0xff] %v5858
    %6302 = vst [vmem:[%s6153] ss:$4 sm:$0xff] %v5859
    %6303 = vst [vmem:[%s6155] ss:$4 sm:$0xff] %v5860
    %6304 = vst [vmem:[%s6157] ss:$4 sm:$0xff] %v5705
    %6305 = vst [vmem:[%s6159] ss:$4 sm:$0xff] %v5861
    %6306 = vst [vmem:[%s6161] ss:$4 sm:$0xff] %v5862
    %v6307 = vld.sshfl [vmem:[#allocation1] sm:$0xff pattern:$0x73625140]
    %v6308 = vld.sshfl [vmem:[#allocation1 + $0x20] sm:$0xff pattern:$0x73625140]
    %6309 = vst [vmem:[#allocation1] ss:$4 sm:$0xff] %v5863
    %6310 = vst [vmem:[%s6151] ss:$4 sm:$0xff] %v5706
    %6311 = vst [vmem:[%s6153] ss:$4 sm:$0xff] %v5864
    %6312 = vst [vmem:[%s6155] ss:$4 sm:$0xff] %v5865
    %6313 = vst [vmem:[%s6157] ss:$4 sm:$0xff] %v5866
    %6314 = vst [vmem:[%s6159] ss:$4 sm:$0xff] %v5707
    %6315 = vst [vmem:[%s6161] ss:$4 sm:$0xff] %v5867
    %v6316 = vld.sshfl [vmem:[#allocation1] sm:$0xff pattern:$0x73625140]
    %v6317 = vld.sshfl [vmem:[#allocation1 + $0x20] sm:$0xff pattern:$0x73625140]
    %6318 = vst [vmem:[#allocation1] ss:$4 sm:$0xff] %v5868
    %6319 = vst [vmem:[%s6151] ss:$4 sm:$0xff] %v5869
    %6320 = vst [vmem:[%s6153] ss:$4 sm:$0xff] %v5708
    %6321 = vst [vmem:[%s6155] ss:$4 sm:$0xff] %v5870
    %6322 = vst [vmem:[%s6157] ss:$4 sm:$0xff] %v5871
    %6323 = vst [vmem:[%s6159] ss:$4 sm:$0xff] %v5872
    %6324 = vst [vmem:[%s6161] ss:$4 sm:$0xff] %v5709
    %v6325 = vld.sshfl [vmem:[#allocation1] sm:$0xff pattern:$0x73625140]
    %v6326 = vld.sshfl [vmem:[#allocation1 + $0x20] sm:$0xff pattern:$0x73625140]
    %6327 = vst [vmem:[#allocation1] ss:$4 sm:$0xff] %v5873
    %6328 = vst [vmem:[%s6151] ss:$4 sm:$0xff] %v5874
    %6329 = vst [vmem:[%s6153] ss:$4 sm:$0xff] %v5875
    %6330 = vst [vmem:[%s6155] ss:$4 sm:$0xff] %v5710
    %6331 = vst [vmem:[%s6157] ss:$4 sm:$0xff] %v5876
    %6332 = vst [vmem:[%s6159] ss:$4 sm:$0xff] %v5877
    %6333 = vst [vmem:[%s6161] ss:$4 sm:$0xff] %v5878
    %v6334 = vld.sshfl [vmem:[#allocation1] sm:$0xff pattern:$0x73625140]
    %v6335 = vld.sshfl [vmem:[#allocation1 + $0x20] sm:$0xff pattern:$0x73625140]
    %6336 = vst [vmem:[#allocation1] ss:$4 sm:$0xff] %v5711
    %6337 = vst [vmem:[%s6151] ss:$4 sm:$0xff] %v5879
    %6338 = vst [vmem:[%s6153] ss:$4 sm:$0xff] %v5880
    %6339 = vst [vmem:[%s6155] ss:$4 sm:$0xff] %v5881
    %6340 = vst [vmem:[%s6157] ss:$4 sm:$0xff] %v5712
    %6341 = vst [vmem:[%s6159] ss:$4 sm:$0xff] %v5882
    %6342 = vst [vmem:[%s6161] ss:$4 sm:$0xff] %v5883
    %v6343 = vld.sshfl [vmem:[#allocation1] sm:$0xff pattern:$0x73625140]
    %v6344 = vld.sshfl [vmem:[#allocation1 + $0x20] sm:$0xff pattern:$0x73625140]
    %6345 = vst [vmem:[#allocation1] ss:$4 sm:$0xff] %v5884
    %6346 = vst [vmem:[%s6151] ss:$4 sm:$0xff] %v5713
    %6347 = vst [vmem:[%s6153] ss:$4 sm:$0xff] %v5885
    %6348 = vst [vmem:[%s6155] ss:$4 sm:$0xff] %v5886
    %6349 = vst [vmem:[%s6157] ss:$4 sm:$0xff] %v5887
    %6350 = vst [vmem:[%s6159] ss:$4 sm:$0xff] %v5714
    %6351 = vst [vmem:[%s6161] ss:$4 sm:$0xff] %v5888
    %v6352 = vld.sshfl [vmem:[#allocation1] sm:$0xff pattern:$0x73625140]
    %v6353 = vld.sshfl [vmem:[#allocation1 + $0x20] sm:$0xff pattern:$0x73625140]
    %6354 = vst [vmem:[#allocation1] ss:$4 sm:$0xff] %v5889
    %6355 = vst [vmem:[%s6151] ss:$4 sm:$0xff] %v5890
    %6356 = vst [vmem:[%s6153] ss:$4 sm:$0xff] %v5715
    %6357 = vst [vmem:[%s6155] ss:$4 sm:$0xff] %v5891
    %6358 = vst [vmem:[%s6157] ss:$4 sm:$0xff] %v5892
    %6359 = vst [vmem:[%s6159] ss:$4 sm:$0xff] %v5893
    %6360 = vst [vmem:[%s6161] ss:$4 sm:$0xff] %v5716
    %v6361 = vld.sshfl [vmem:[#allocation1] sm:$0xff pattern:$0x73625140]
    %v6362 = vld.sshfl [vmem:[#allocation1 + $0x20] sm:$0xff pattern:$0x73625140]
    %6363 = vst [vmem:[#allocation1] ss:$4 sm:$0xff] %v5894
    %6364 = vst [vmem:[%s6151] ss:$4 sm:$0xff] %v5895
    %6365 = vst [vmem:[%s6153] ss:$4 sm:$0xff] %v5896
    %6366 = vst [vmem:[%s6155] ss:$4 sm:$0xff] %v5717
    %6367 = vst [vmem:[%s6157] ss:$4 sm:$0xff] %v5897
    %6368 = vst [vmem:[%s6159] ss:$4 sm:$0xff] %v5898
    %6369 = vst [vmem:[%s6161] ss:$4 sm:$0xff] %v5899
    %v6370 = vld.sshfl [vmem:[#allocation1] sm:$0xff pattern:$0x73625140]
    %v6371 = vld.sshfl [vmem:[#allocation1 + $0x20] sm:$0xff pattern:$0x73625140]
    %6372 = vst [vmem:[#allocation1] ss:$4 sm:$0xff] %v5718
    %6373 = vst [vmem:[%s6151] ss:$4 sm:$0xff] %v5900
    %6374 = vst [vmem:[%s6153] ss:$4 sm:$0xff] %v5901
    %6375 = vst [vmem:[%s6155] ss:$4 sm:$0xff] %v5902
    %6376 = vst [vmem:[%s6157] ss:$4 sm:$0xff] %v5719
    %6377 = vst [vmem:[%s6159] ss:$4 sm:$0xff] %v5903
    %6378 = vst [vmem:[%s6161] ss:$4 sm:$0xff] %v5904
    %v6379 = vld.sshfl [vmem:[#allocation1] sm:$0xff pattern:$0x73625140]
    %v6380 = vld.sshfl [vmem:[#allocation1 + $0x20] sm:$0xff pattern:$0x73625140]
    %6381 = vst [vmem:[#allocation1] ss:$4 sm:$0xff] %v5905
    %6382 = vst [vmem:[%s6151] ss:$4 sm:$0xff] %v5720
    %6383 = vst [vmem:[%s6153] ss:$4 sm:$0xff] %v5906
    %6384 = vst [vmem:[%s6155] ss:$4 sm:$0xff] %v5907
    %6385 = vst [vmem:[%s6157] ss:$4 sm:$0xff] %v5908
    %6386 = vst [vmem:[%s6159] ss:$4 sm:$0xff] %v5721
    %6387 = vst [vmem:[%s6161] ss:$4 sm:$0xff] %v5909
    %v6388 = vld.sshfl [vmem:[#allocation1] sm:$0xff pattern:$0x73625140]
    %v6389 = vld.sshfl [vmem:[#allocation1 + $0x20] sm:$0xff pattern:$0x73625140]
    %6390 = vst [vmem:[#allocation1] ss:$4 sm:$0xff] %v5910
    %6391 = vst [vmem:[%s6151] ss:$4 sm:$0xff] %v5911
    %6392 = vst [vmem:[%s6153] ss:$4 sm:$0xff] %v5722
    %6393 = vst [vmem:[%s6155] ss:$4 sm:$0xff] %v5912
    %6394 = vst [vmem:[%s6157] ss:$4 sm:$0xff] %v5913
    %6395 = vst [vmem:[%s6159] ss:$4 sm:$0xff] %v5914
    %6396 = vst [vmem:[%s6161] ss:$4 sm:$0xff] %v5723
    %v6397 = vld.sshfl [vmem:[#allocation1] sm:$0xff pattern:$0x73625140]
    %v6398 = vld.sshfl [vmem:[#allocation1 + $0x20] sm:$0xff pattern:$0x73625140]
    %6399 = vst [vmem:[#allocation1] ss:$4 sm:$0xff] %v5915
    %6400 = vst [vmem:[%s6151] ss:$4 sm:$0xff] %v5916
    %6401 = vst [vmem:[%s6153] ss:$4 sm:$0xff] %v5917
    %6402 = vst [vmem:[%s6155] ss:$4 sm:$0xff] %v5724
    %6403 = vst [vmem:[%s6157] ss:$4 sm:$0xff] %v5918
    %6404 = vst [vmem:[%s6159] ss:$4 sm:$0xff] %v5919
    %6405 = vst [vmem:[%s6161] ss:$4 sm:$0xff] %v5920
    %v6406 = vld.sshfl [vmem:[#allocation1] sm:$0xff pattern:$0x73625140]
    %v6407 = vld.sshfl [vmem:[#allocation1 + $0x20] sm:$0xff pattern:$0x73625140]
    %v6408 = vrot.slane %v6163, 1
    %v6409 = vrot.slane %v6164, 1
    %v6410 = vsel %vm196, %v6408, %v6409
    %v6411 = vrot.slane %v6172, 1
    %v6412 = vrot.slane %v6173, 1
    %v6413 = vsel %vm196, %v6411, %v6412
    %v6414 = vrot.slane %v6181, 1
    %v6415 = vrot.slane %v6182, 1
    %v6416 = vsel %vm196, %v6414, %v6415
    %v6417 = vrot.slane %v6190, 1
    %v6418 = vrot.slane %v6191, 1
    %v6419 = vsel %vm196, %v6417, %v6418
    %v6420 = vrot.slane %v6199, 1
    %v6421 = vrot.slane %v6200, 1
    %v6422 = vsel %vm196, %v6420, %v6421
    %v6423 = vrot.slane %v6208, 1
    %v6424 = vrot.slane %v6209, 1
    %v6425 = vsel %vm196, %v6423, %v6424
    %v6426 = vrot.slane %v6217, 1
    %v6427 = vrot.slane %v6218, 1
    %v6428 = vsel %vm196, %v6426, %v6427
    %v6429 = vrot.slane %v6226, 1
    %v6430 = vrot.slane %v6227, 1
    %v6431 = vsel %vm196, %v6429, %v6430
    %v6432 = vrot.slane %v6235, 1
    %v6433 = vrot.slane %v6236, 1
    %v6434 = vsel %vm196, %v6432, %v6433
    %v6435 = vrot.slane %v6244, 1
    %v6436 = vrot.slane %v6245, 1
    %v6437 = vsel %vm196, %v6435, %v6436
    %v6438 = vrot.slane %v6253, 1
    %v6439 = vrot.slane %v6254, 1
    %v6440 = vsel %vm196, %v6438, %v6439
    %v6441 = vrot.slane %v6262, 1
    %v6442 = vrot.slane %v6263, 1
    %v6443 = vsel %vm196, %v6441, %v6442
    %v6444 = vrot.slane %v6271, 1
    %v6445 = vrot.slane %v6272, 1
    %v6446 = vsel %vm196, %v6444, %v6445
    %v6447 = vrot.slane %v6280, 1
    %v6448 = vrot.slane %v6281, 1
    %v6449 = vsel %vm196, %v6447, %v6448
    %v6450 = vrot.slane %v6289, 1
    %v6451 = vrot.slane %v6290, 1
    %v6452 = vsel %vm196, %v6450, %v6451
    %v6453 = vrot.slane %v6298, 1
    %v6454 = vrot.slane %v6299, 1
    %v6455 = vsel %vm196, %v6453, %v6454
    %v6456 = vrot.slane %v6307, 1
    %v6457 = vrot.slane %v6308, 1
    %v6458 = vsel %vm196, %v6456, %v6457
    %v6459 = vrot.slane %v6316, 1
    %v6460 = vrot.slane %v6317, 1
    %v6461 = vsel %vm196, %v6459, %v6460
    %v6462 = vrot.slane %v6325, 1
    %v6463 = vrot.slane %v6326, 1
    %v6464 = vsel %vm196, %v6462, %v6463
    %v6465 = vrot.slane %v6334, 1
    %v6466 = vrot.slane %v6335, 1
    %v6467 = vsel %vm196, %v6465, %v6466
    %v6468 = vrot.slane %v6343, 1
    %v6469 = vrot.slane %v6344, 1
    %v6470 = vsel %vm196, %v6468, %v6469
    %v6471 = vrot.slane %v6352, 1
    %v6472 = vrot.slane %v6353, 1
    %v6473 = vsel %vm196, %v6471, %v6472
    %v6474 = vrot.slane %v6361, 1
    %v6475 = vrot.slane %v6362, 1
    %v6476 = vsel %vm196, %v6474, %v6475
    %v6477 = vrot.slane %v6370, 1
    %v6478 = vrot.slane %v6371, 1
    %v6479 = vsel %vm196, %v6477, %v6478
    %v6480 = vrot.slane %v6379, 1
    %v6481 = vrot.slane %v6380, 1
    %v6482 = vsel %vm196, %v6480, %v6481
    %v6483 = vrot.slane %v6388, 1
    %v6484 = vrot.slane %v6389, 1
    %v6485 = vsel %vm196, %v6483, %v6484
    %v6486 = vrot.slane %v6397, 1
    %v6487 = vrot.slane %v6398, 1
    %v6488 = vsel %vm196, %v6486, %v6487
    %v6489 = vrot.slane %v6406, 1
    %v6490 = vrot.slane %v6407, 1
    %v6491 = vsel %vm196, %v6489, %v6490
    %6492 = vst [vmem:[#allocation1] ss:$4 sm:$0xff] %v5774
    %s6493 = scalar_lea.vmem [#allocation1], 1
    %6494 = vst [vmem:[%s6493] ss:$4 sm:$0xff] %v5775
    %s6495 = scalar_lea.vmem [#allocation1], 2
    %6496 = vst [vmem:[%s6495] ss:$4 sm:$0xff] %v5776
    %s6497 = scalar_lea.vmem [#allocation1], 3
    %6498 = vst [vmem:[%s6497] ss:$4 sm:$0xff] %v5677
    %s6499 = scalar_lea.vmem [#allocation1], 32
    %6500 = vst [vmem:[%s6499] ss:$4 sm:$0xff] %v5777
    %s6501 = scalar_lea.vmem [#allocation1], 33
    %6502 = vst [vmem:[%s6501] ss:$4 sm:$0xff] %v5778
    %v6503 = vld.sshfl [vmem:[#allocation1] sm:$0xff pattern:$0x73625140]
    %v6504 = vld.sshfl [vmem:[#allocation1 + $0x20] sm:$0xff pattern:$0x73625140]
    %6505 = vst [vmem:[#allocation1] ss:$4 sm:$0xff] %v5678
    %6506 = vst [vmem:[%s6493] ss:$4 sm:$0xff] %v5780
    %6507 = vst [vmem:[%s6495] ss:$4 sm:$0xff] %v5781
    %6508 = vst [vmem:[%s6497] ss:$4 sm:$0xff] %v5782
    %6509 = vst [vmem:[%s6499] ss:$4 sm:$0xff] %v5679
    %6510 = vst [vmem:[%s6501] ss:$4 sm:$0xff] %v5783
    %v6511 = vld.sshfl [vmem:[#allocation1] sm:$0xff pattern:$0x73625140]
    %v6512 = vld.sshfl [vmem:[#allocation1 + $0x20] sm:$0xff pattern:$0x73625140]
    %6513 = vst [vmem:[#allocation1] ss:$4 sm:$0xff] %v5785
    %6514 = vst [vmem:[%s6493] ss:$4 sm:$0xff] %v5680
    %6515 = vst [vmem:[%s6495] ss:$4 sm:$0xff] %v5786
    %6516 = vst [vmem:[%s6497] ss:$4 sm:$0xff] %v5787
    %6517 = vst [vmem:[%s6499] ss:$4 sm:$0xff] %v5788
    %6518 = vst [vmem:[%s6501] ss:$4 sm:$0xff] %v5681
    %v6519 = vld.sshfl [vmem:[#allocation1] sm:$0xff pattern:$0x73625140]
    %v6520 = vld.sshfl [vmem:[#allocation1 + $0x20] sm:$0xff pattern:$0x73625140]
    %6521 = vst [vmem:[#allocation1] ss:$4 sm:$0xff] %v5790
    %6522 = vst [vmem:[%s6493] ss:$4 sm:$0xff] %v5791
    %6523 = vst [vmem:[%s6495] ss:$4 sm:$0xff] %v5682
    %6524 = vst [vmem:[%s6497] ss:$4 sm:$0xff] %v5792
    %6525 = vst [vmem:[%s6499] ss:$4 sm:$0xff] %v5793
    %6526 = vst [vmem:[%s6501] ss:$4 sm:$0xff] %v5794
    %v6527 = vld.sshfl [vmem:[#allocation1] sm:$0xff pattern:$0x73625140]
    %v6528 = vld.sshfl [vmem:[#allocation1 + $0x20] sm:$0xff pattern:$0x73625140]
    %6529 = vst [vmem:[#allocation1] ss:$4 sm:$0xff] %v5795
    %6530 = vst [vmem:[%s6493] ss:$4 sm:$0xff] %v5796
    %6531 = vst [vmem:[%s6495] ss:$4 sm:$0xff] %v5797
    %6532 = vst [vmem:[%s6497] ss:$4 sm:$0xff] %v5684
    %6533 = vst [vmem:[%s6499] ss:$4 sm:$0xff] %v5798
    %6534 = vst [vmem:[%s6501] ss:$4 sm:$0xff] %v5799
    %v6535 = vld.sshfl [vmem:[#allocation1] sm:$0xff pattern:$0x73625140]
    %v6536 = vld.sshfl [vmem:[#allocation1 + $0x20] sm:$0xff pattern:$0x73625140]
    %6537 = vst [vmem:[#allocation1] ss:$4 sm:$0xff] %v5685
    %6538 = vst [vmem:[%s6493] ss:$4 sm:$0xff] %v5801
    %6539 = vst [vmem:[%s6495] ss:$4 sm:$0xff] %v5802
    %6540 = vst [vmem:[%s6497] ss:$4 sm:$0xff] %v5803
    %6541 = vst [vmem:[%s6499] ss:$4 sm:$0xff] %v5686
    %6542 = vst [vmem:[%s6501] ss:$4 sm:$0xff] %v5804
    %v6543 = vld.sshfl [vmem:[#allocation1] sm:$0xff pattern:$0x73625140]
    %v6544 = vld.sshfl [vmem:[#allocation1 + $0x20] sm:$0xff pattern:$0x73625140]
    %6545 = vst [vmem:[#allocation1] ss:$4 sm:$0xff] %v5806
    %6546 = vst [vmem:[%s6493] ss:$4 sm:$0xff] %v5687
    %6547 = vst [vmem:[%s6495] ss:$4 sm:$0xff] %v5807
    %6548 = vst [vmem:[%s6497] ss:$4 sm:$0xff] %v5808
    %6549 = vst [vmem:[%s6499] ss:$4 sm:$0xff] %v5809
    %6550 = vst [vmem:[%s6501] ss:$4 sm:$0xff] %v5688
    %v6551 = vld.sshfl [vmem:[#allocation1] sm:$0xff pattern:$0x73625140]
    %v6552 = vld.sshfl [vmem:[#allocation1 + $0x20] sm:$0xff pattern:$0x73625140]
    %6553 = vst [vmem:[#allocation1] ss:$4 sm:$0xff] %v5811
    %6554 = vst [vmem:[%s6493] ss:$4 sm:$0xff] %v5812
    %6555 = vst [vmem:[%s6495] ss:$4 sm:$0xff] %v5689
    %6556 = vst [vmem:[%s6497] ss:$4 sm:$0xff] %v5813
    %6557 = vst [vmem:[%s6499] ss:$4 sm:$0xff] %v5814
    %6558 = vst [vmem:[%s6501] ss:$4 sm:$0xff] %v5815
    %v6559 = vld.sshfl [vmem:[#allocation1] sm:$0xff pattern:$0x73625140]
    %v6560 = vld.sshfl [vmem:[#allocation1 + $0x20] sm:$0xff pattern:$0x73625140]
    %6561 = vst [vmem:[#allocation1] ss:$4 sm:$0xff] %v5816
    %6562 = vst [vmem:[%s6493] ss:$4 sm:$0xff] %v5817
    %6563 = vst [vmem:[%s6495] ss:$4 sm:$0xff] %v5818
    %6564 = vst [vmem:[%s6497] ss:$4 sm:$0xff] %v5691
    %6565 = vst [vmem:[%s6499] ss:$4 sm:$0xff] %v5819
    %6566 = vst [vmem:[%s6501] ss:$4 sm:$0xff] %v5820
    %v6567 = vld.sshfl [vmem:[#allocation1] sm:$0xff pattern:$0x73625140]
    %v6568 = vld.sshfl [vmem:[#allocation1 + $0x20] sm:$0xff pattern:$0x73625140]
    %6569 = vst [vmem:[#allocation1] ss:$4 sm:$0xff] %v5692
    %6570 = vst [vmem:[%s6493] ss:$4 sm:$0xff] %v5822
    %6571 = vst [vmem:[%s6495] ss:$4 sm:$0xff] %v5823
    %6572 = vst [vmem:[%s6497] ss:$4 sm:$0xff] %v5824
    %6573 = vst [vmem:[%s6499] ss:$4 sm:$0xff] %v5693
    %6574 = vst [vmem:[%s6501] ss:$4 sm:$0xff] %v5825
    %v6575 = vld.sshfl [vmem:[#allocation1] sm:$0xff pattern:$0x73625140]
    %v6576 = vld.sshfl [vmem:[#allocation1 + $0x20] sm:$0xff pattern:$0x73625140]
    %6577 = vst [vmem:[#allocation1] ss:$4 sm:$0xff] %v5827
    %6578 = vst [vmem:[%s6493] ss:$4 sm:$0xff] %v5694
    %6579 = vst [vmem:[%s6495] ss:$4 sm:$0xff] %v5828
    %6580 = vst [vmem:[%s6497] ss:$4 sm:$0xff] %v5829
    %6581 = vst [vmem:[%s6499] ss:$4 sm:$0xff] %v5830
    %6582 = vst [vmem:[%s6501] ss:$4 sm:$0xff] %v5695
    %v6583 = vld.sshfl [vmem:[#allocation1] sm:$0xff pattern:$0x73625140]
    %v6584 = vld.sshfl [vmem:[#allocation1 + $0x20] sm:$0xff pattern:$0x73625140]
    %6585 = vst [vmem:[#allocation1] ss:$4 sm:$0xff] %v5832
    %6586 = vst [vmem:[%s6493] ss:$4 sm:$0xff] %v5833
    %6587 = vst [vmem:[%s6495] ss:$4 sm:$0xff] %v5696
    %6588 = vst [vmem:[%s6497] ss:$4 sm:$0xff] %v5834
    %6589 = vst [vmem:[%s6499] ss:$4 sm:$0xff] %v5835
    %6590 = vst [vmem:[%s6501] ss:$4 sm:$0xff] %v5836
    %v6591 = vld.sshfl [vmem:[#allocation1] sm:$0xff pattern:$0x73625140]
    %v6592 = vld.sshfl [vmem:[#allocation1 + $0x20] sm:$0xff pattern:$0x73625140]
    %6593 = vst [vmem:[#allocation1] ss:$4 sm:$0xff] %v5837
    %6594 = vst [vmem:[%s6493] ss:$4 sm:$0xff] %v5838
    %6595 = vst [vmem:[%s6495] ss:$4 sm:$0xff] %v5839
    %6596 = vst [vmem:[%s6497] ss:$4 sm:$0xff] %v5698
    %6597 = vst [vmem:[%s6499] ss:$4 sm:$0xff] %v5840
    %6598 = vst [vmem:[%s6501] ss:$4 sm:$0xff] %v5841
    %v6599 = vld.sshfl [vmem:[#allocation1] sm:$0xff pattern:$0x73625140]
    %v6600 = vld.sshfl [vmem:[#allocation1 + $0x20] sm:$0xff pattern:$0x73625140]
    %6601 = vst [vmem:[#allocation1] ss:$4 sm:$0xff] %v5699
    %6602 = vst [vmem:[%s6493] ss:$4 sm:$0xff] %v5843
    %6603 = vst [vmem:[%s6495] ss:$4 sm:$0xff] %v5844
    %6604 = vst [vmem:[%s6497] ss:$4 sm:$0xff] %v5845
    %6605 = vst [vmem:[%s6499] ss:$4 sm:$0xff] %v5700
    %6606 = vst [vmem:[%s6501] ss:$4 sm:$0xff] %v5846
    %v6607 = vld.sshfl [vmem:[#allocation1] sm:$0xff pattern:$0x73625140]
    %v6608 = vld.sshfl [vmem:[#allocation1 + $0x20] sm:$0xff pattern:$0x73625140]
    %6609 = vst [vmem:[#allocation1] ss:$4 sm:$0xff] %v5848
    %6610 = vst [vmem:[%s6493] ss:$4 sm:$0xff] %v5701
    %6611 = vst [vmem:[%s6495] ss:$4 sm:$0xff] %v5849
    %6612 = vst [vmem:[%s6497] ss:$4 sm:$0xff] %v5850
    %6613 = vst [vmem:[%s6499] ss:$4 sm:$0xff] %v5851
    %6614 = vst [vmem:[%s6501] ss:$4 sm:$0xff] %v5702
    %v6615 = vld.sshfl [vmem:[#allocation1] sm:$0xff pattern:$0x73625140]
    %v6616 = vld.sshfl [vmem:[#allocation1 + $0x20] sm:$0xff pattern:$0x73625140]
    %6617 = vst [vmem:[#allocation1] ss:$4 sm:$0xff] %v5853
    %6618 = vst [vmem:[%s6493] ss:$4 sm:$0xff] %v5854
    %6619 = vst [vmem:[%s6495] ss:$4 sm:$0xff] %v5703
    %6620 = vst [vmem:[%s6497] ss:$4 sm:$0xff] %v5855
    %6621 = vst [vmem:[%s6499] ss:$4 sm:$0xff] %v5856
    %6622 = vst [vmem:[%s6501] ss:$4 sm:$0xff] %v5857
    %v6623 = vld.sshfl [vmem:[#allocation1] sm:$0xff pattern:$0x73625140]
    %v6624 = vld.sshfl [vmem:[#allocation1 + $0x20] sm:$0xff pattern:$0x73625140]
    %6625 = vst [vmem:[#allocation1] ss:$4 sm:$0xff] %v5858
    %6626 = vst [vmem:[%s6493] ss:$4 sm:$0xff] %v5859
    %6627 = vst [vmem:[%s6495] ss:$4 sm:$0xff] %v5860
    %6628 = vst [vmem:[%s6497] ss:$4 sm:$0xff] %v5705
    %6629 = vst [vmem:[%s6499] ss:$4 sm:$0xff] %v5861
    %6630 = vst [vmem:[%s6501] ss:$4 sm:$0xff] %v5862
    %v6631 = vld.sshfl [vmem:[#allocation1] sm:$0xff pattern:$0x73625140]
    %v6632 = vld.sshfl [vmem:[#allocation1 + $0x20] sm:$0xff pattern:$0x73625140]
    %6633 = vst [vmem:[#allocation1] ss:$4 sm:$0xff] %v5706
    %6634 = vst [vmem:[%s6493] ss:$4 sm:$0xff] %v5864
    %6635 = vst [vmem:[%s6495] ss:$4 sm:$0xff] %v5865
    %6636 = vst [vmem:[%s6497] ss:$4 sm:$0xff] %v5866
    %6637 = vst [vmem:[%s6499] ss:$4 sm:$0xff] %v5707
    %6638 = vst [vmem:[%s6501] ss:$4 sm:$0xff] %v5867
    %v6639 = vld.sshfl [vmem:[#allocation1] sm:$0xff pattern:$0x73625140]
    %v6640 = vld.sshfl [vmem:[#allocation1 + $0x20] sm:$0xff pattern:$0x73625140]
    %6641 = vst [vmem:[#allocation1] ss:$4 sm:$0xff] %v5869
    %6642 = vst [vmem:[%s6493] ss:$4 sm:$0xff] %v5708
    %6643 = vst [vmem:[%s6495] ss:$4 sm:$0xff] %v5870
    %6644 = vst [vmem:[%s6497] ss:$4 sm:$0xff] %v5871
    %6645 = vst [vmem:[%s6499] ss:$4 sm:$0xff] %v5872
    %6646 = vst [vmem:[%s6501] ss:$4 sm:$0xff] %v5709
    %v6647 = vld.sshfl [vmem:[#allocation1] sm:$0xff pattern:$0x73625140]
    %v6648 = vld.sshfl [vmem:[#allocation1 + $0x20] sm:$0xff pattern:$0x73625140]
    %6649 = vst [vmem:[#allocation1] ss:$4 sm:$0xff] %v5874
    %6650 = vst [vmem:[%s6493] ss:$4 sm:$0xff] %v5875
    %6651 = vst [vmem:[%s6495] ss:$4 sm:$0xff] %v5710
    %6652 = vst [vmem:[%s6497] ss:$4 sm:$0xff] %v5876
    %6653 = vst [vmem:[%s6499] ss:$4 sm:$0xff] %v5877
    %6654 = vst [vmem:[%s6501] ss:$4 sm:$0xff] %v5878
    %v6655 = vld.sshfl [vmem:[#allocation1] sm:$0xff pattern:$0x73625140]
    %v6656 = vld.sshfl [vmem:[#allocation1 + $0x20] sm:$0xff pattern:$0x73625140]
    %6657 = vst [vmem:[#allocation1] ss:$4 sm:$0xff] %v5879
    %6658 = vst [vmem:[%s6493] ss:$4 sm:$0xff] %v5880
    %6659 = vst [vmem:[%s6495] ss:$4 sm:$0xff] %v5881
    %6660 = vst [vmem:[%s6497] ss:$4 sm:$0xff] %v5712
    %6661 = vst [vmem:[%s6499] ss:$4 sm:$0xff] %v5882
    %6662 = vst [vmem:[%s6501] ss:$4 sm:$0xff] %v5883
    %v6663 = vld.sshfl [vmem:[#allocation1] sm:$0xff pattern:$0x73625140]
    %v6664 = vld.sshfl [vmem:[#allocation1 + $0x20] sm:$0xff pattern:$0x73625140]
    %6665 = vst [vmem:[#allocation1] ss:$4 sm:$0xff] %v5713
    %6666 = vst [vmem:[%s6493] ss:$4 sm:$0xff] %v5885
    %6667 = vst [vmem:[%s6495] ss:$4 sm:$0xff] %v5886
    %6668 = vst [vmem:[%s6497] ss:$4 sm:$0xff] %v5887
    %6669 = vst [vmem:[%s6499] ss:$4 sm:$0xff] %v5714
    %6670 = vst [vmem:[%s6501] ss:$4 sm:$0xff] %v5888
    %v6671 = vld.sshfl [vmem:[#allocation1] sm:$0xff pattern:$0x73625140]
    %v6672 = vld.sshfl [vmem:[#allocation1 + $0x20] sm:$0xff pattern:$0x73625140]
    %6673 = vst [vmem:[#allocation1] ss:$4 sm:$0xff] %v5890
    %6674 = vst [vmem:[%s6493] ss:$4 sm:$0xff] %v5715
    %6675 = vst [vmem:[%s6495] ss:$4 sm:$0xff] %v5891
    %6676 = vst [vmem:[%s6497] ss:$4 sm:$0xff] %v5892
    %6677 = vst [vmem:[%s6499] ss:$4 sm:$0xff] %v5893
    %6678 = vst [vmem:[%s6501] ss:$4 sm:$0xff] %v5716
    %v6679 = vld.sshfl [vmem:[#allocation1] sm:$0xff pattern:$0x73625140]
    %v6680 = vld.sshfl [vmem:[#allocation1 + $0x20] sm:$0xff pattern:$0x73625140]
    %6681 = vst [vmem:[#allocation1] ss:$4 sm:$0xff] %v5895
    %6682 = vst [vmem:[%s6493] ss:$4 sm:$0xff] %v5896
    %6683 = vst [vmem:[%s6495] ss:$4 sm:$0xff] %v5717
    %6684 = vst [vmem:[%s6497] ss:$4 sm:$0xff] %v5897
    %6685 = vst [vmem:[%s6499] ss:$4 sm:$0xff] %v5898
    %6686 = vst [vmem:[%s6501] ss:$4 sm:$0xff] %v5899
    %v6687 = vld.sshfl [vmem:[#allocation1] sm:$0xff pattern:$0x73625140]
    %v6688 = vld.sshfl [vmem:[#allocation1 + $0x20] sm:$0xff pattern:$0x73625140]
    %6689 = vst [vmem:[#allocation1] ss:$4 sm:$0xff] %v5900
    %6690 = vst [vmem:[%s6493] ss:$4 sm:$0xff] %v5901
    %6691 = vst [vmem:[%s6495] ss:$4 sm:$0xff] %v5902
    %6692 = vst [vmem:[%s6497] ss:$4 sm:$0xff] %v5719
    %6693 = vst [vmem:[%s6499] ss:$4 sm:$0xff] %v5903
    %6694 = vst [vmem:[%s6501] ss:$4 sm:$0xff] %v5904
    %v6695 = vld.sshfl [vmem:[#allocation1] sm:$0xff pattern:$0x73625140]
    %v6696 = vld.sshfl [vmem:[#allocation1 + $0x20] sm:$0xff pattern:$0x73625140]
    %6697 = vst [vmem:[#allocation1] ss:$4 sm:$0xff] %v5720
    %6698 = vst [vmem:[%s6493] ss:$4 sm:$0xff] %v5906
    %6699 = vst [vmem:[%s6495] ss:$4 sm:$0xff] %v5907
    %6700 = vst [vmem:[%s6497] ss:$4 sm:$0xff] %v5908
    %6701 = vst [vmem:[%s6499] ss:$4 sm:$0xff] %v5721
    %6702 = vst [vmem:[%s6501] ss:$4 sm:$0xff] %v5909
    %v6703 = vld.sshfl [vmem:[#allocation1] sm:$0xff pattern:$0x73625140]
    %v6704 = vld.sshfl [vmem:[#allocation1 + $0x20] sm:$0xff pattern:$0x73625140]
    %6705 = vst [vmem:[#allocation1] ss:$4 sm:$0xff] %v5911
    %6706 = vst [vmem:[%s6493] ss:$4 sm:$0xff] %v5722
    %6707 = vst [vmem:[%s6495] ss:$4 sm:$0xff] %v5912
    %6708 = vst [vmem:[%s6497] ss:$4 sm:$0xff] %v5913
    %6709 = vst [vmem:[%s6499] ss:$4 sm:$0xff] %v5914
    %6710 = vst [vmem:[%s6501] ss:$4 sm:$0xff] %v5723
    %v6711 = vld.sshfl [vmem:[#allocation1] sm:$0xff pattern:$0x73625140]
    %v6712 = vld.sshfl [vmem:[#allocation1 + $0x20] sm:$0xff pattern:$0x73625140]
    %6713 = vst [vmem:[#allocation1] ss:$4 sm:$0xff] %v5916
    %6714 = vst [vmem:[%s6493] ss:$4 sm:$0xff] %v5917
    %6715 = vst [vmem:[%s6495] ss:$4 sm:$0xff] %v5724
    %6716 = vst [vmem:[%s6497] ss:$4 sm:$0xff] %v5918
    %6717 = vst [vmem:[%s6499] ss:$4 sm:$0xff] %v5919
    %6718 = vst [vmem:[%s6501] ss:$4 sm:$0xff] %v5920
    %v6719 = vld.sshfl [vmem:[#allocation1] sm:$0xff pattern:$0x73625140]
    %v6720 = vld.sshfl [vmem:[#allocation1 + $0x20] sm:$0xff pattern:$0x73625140]
    %v6721 = vrot.slane %v6410, 4
    %v6722 = vrot.slane %v5940, 4
    %v6723 = vrot.slane %v6511, 4
    %v6724 = vrot.slane %v6416, 4
    %v6725 = vrot.slane %v6409, 4
    %v6726 = vrot.slane %v5941, 4
    %v6727 = vrot.slane %v6512, 4
    %v6728 = vrot.slane %v6415, 4
    %v6729 = vrot.slane %v6413, 4
    %v6730 = vrot.slane %v5948, 4
    %v6731 = vrot.slane %v6519, 4
    %v6732 = vrot.slane %v6419, 4
    %v6733 = vrot.slane %v6412, 4
    %v6734 = vrot.slane %v5949, 4
    %v6735 = vrot.slane %v6520, 4
    %v6736 = vrot.slane %v6418, 4
    %v6737 = vrot.slane %v5956, 4
    %v6738 = vrot.slane %v6527, 4
    %v6739 = vrot.slane %v6422, 4
    %v6740 = vrot.slane %v5957, 4
    %v6741 = vrot.slane %v6528, 4
    %v6742 = vrot.slane %v6421, 4
    %v6743 = vrot.slane %v5964, 4
    %v6744 = vrot.slane %v6535, 4
    %v6745 = vrot.slane %v6425, 4
    %v6746 = vrot.slane %v5965, 4
    %v6747 = vrot.slane %v6536, 4
    %v6748 = vrot.slane %v6424, 4
    %v6749 = vrot.slane %v5972, 4
    %v6750 = vrot.slane %v6543, 4
    %v6751 = vrot.slane %v6428, 4
    %v6752 = vrot.slane %v5973, 4
    %v6753 = vrot.slane %v6544, 4
    %v6754 = vrot.slane %v6427, 4
    %v6755 = vrot.slane %v5980, 4
    %v6756 = vrot.slane %v6551, 4
    %v6757 = vrot.slane %v6431, 4
    %v6758 = vrot.slane %v5981, 4
    %v6759 = vrot.slane %v6552, 4
    %v6760 = vrot.slane %v6430, 4
    %v6761 = vrot.slane %v5988, 4
    %v6762 = vrot.slane %v6559, 4
    %v6763 = vrot.slane %v6434, 4
    %v6764 = vrot.slane %v5989, 4
    %v6765 = vrot.slane %v6560, 4
    %v6766 = vrot.slane %v6433, 4
    %v6767 = vrot.slane %v5996, 4
    %v6768 = vrot.slane %v6567, 4
    %v6769 = vrot.slane %v6437, 4
    %v6770 = vrot.slane %v5997, 4
    %v6771 = vrot.slane %v6568, 4
    %v6772 = vrot.slane %v6436, 4
    %v6773 = vrot.slane %v6004, 4
    %v6774 = vrot.slane %v6575, 4
    %v6775 = vrot.slane %v6440, 4
    %v6776 = vrot.slane %v6005, 4
    %v6777 = vrot.slane %v6576, 4
    %v6778 = vrot.slane %v6439, 4
    %v6779 = vrot.slane %v6012, 4
    %v6780 = vrot.slane %v6583, 4
    %v6781 = vrot.slane %v6443, 4
    %v6782 = vrot.slane %v6013, 4
    %v6783 = vrot.slane %v6584, 4
    %v6784 = vrot.slane %v6442, 4
    %v6785 = vrot.slane %v6020, 4
    %v6786 = vrot.slane %v6591, 4
    %v6787 = vrot.slane %v6446, 4
    %v6788 = vrot.slane %v6021, 4
    %v6789 = vrot.slane %v6592, 4
    %v6790 = vrot.slane %v6445, 4
    %v6791 = vrot.slane %v6028, 4
    %v6792 = vrot.slane %v6599, 4
    %v6793 = vrot.slane %v6449, 4
    %v6794 = vrot.slane %v6029, 4
    %v6795 = vrot.slane %v6600, 4
    %v6796 = vrot.slane %v6448, 4
    %v6797 = vrot.slane %v6452, 4
    %v6798 = vrot.slane %v6052, 4
    %v6799 = vrot.slane %v6623, 4
    %v6800 = vrot.slane %v6458, 4
    %v6801 = vrot.slane %v6451, 4
    %v6802 = vrot.slane %v6053, 4
    %v6803 = vrot.slane %v6624, 4
    %v6804 = vrot.slane %v6457, 4
    %v6805 = vrot.slane %v6455, 4
    %v6806 = vrot.slane %v6060, 4
    %v6807 = vrot.slane %v6631, 4
    %v6808 = vrot.slane %v6461, 4
    %v6809 = vrot.slane %v6454, 4
    %v6810 = vrot.slane %v6061, 4
    %v6811 = vrot.slane %v6632, 4
    %v6812 = vrot.slane %v6460, 4
    %v6813 = vrot.slane %v6068, 4
    %v6814 = vrot.slane %v6639, 4
    %v6815 = vrot.slane %v6464, 4
    %v6816 = vrot.slane %v6069, 4
    %v6817 = vrot.slane %v6640, 4
    %v6818 = vrot.slane %v6463, 4
    %v6819 = vrot.slane %v6076, 4
    %v6820 = vrot.slane %v6647, 4
    %v6821 = vrot.slane %v6467, 4
    %v6822 = vrot.slane %v6077, 4
    %v6823 = vrot.slane %v6648, 4
    %v6824 = vrot.slane %v6466, 4
    %v6825 = vrot.slane %v6084, 4
    %v6826 = vrot.slane %v6655, 4
    %v6827 = vrot.slane %v6470, 4
    %v6828 = vrot.slane %v6085, 4
    %v6829 = vrot.slane %v6656, 4
    %v6830 = vrot.slane %v6469, 4
    %v6831 = vrot.slane %v6092, 4
    %v6832 = vrot.slane %v6663, 4
    %v6833 = vrot.slane %v6473, 4
    %v6834 = vrot.slane %v6093, 4
    %v6835 = vrot.slane %v6664, 4
    %v6836 = vrot.slane %v6472, 4
    %v6837 = vrot.slane %v6100, 4
    %v6838 = vrot.slane %v6671, 4
    %v6839 = vrot.slane %v6476, 4
    %v6840 = vrot.slane %v6101, 4
    %v6841 = vrot.slane %v6672, 4
    %v6842 = vrot.slane %v6475, 4
    %v6843 = vrot.slane %v6108, 4
    %v6844 = vrot.slane %v6679, 4
    %v6845 = vrot.slane %v6479, 4
    %v6846 = vrot.slane %v6109, 4
    %v6847 = vrot.slane %v6680, 4
    %v6848 = vrot.slane %v6478, 4
    %v6849 = vrot.slane %v6116, 4
    %v6850 = vrot.slane %v6687, 4
    %v6851 = vrot.slane %v6482, 4
    %v6852 = vrot.slane %v6117, 4
    %v6853 = vrot.slane %v6688, 4
    %v6854 = vrot.slane %v6481, 4
    %v6855 = vrot.slane %v6124, 4
    %v6856 = vrot.slane %v6695, 4
    %v6857 = vrot.slane %v6485, 4
    %v6858 = vrot.slane %v6125, 4
    %v6859 = vrot.slane %v6696, 4
    %v6860 = vrot.slane %v6484, 4
    %v6861 = vrot.slane %v6132, 4
    %v6862 = vrot.slane %v6703, 4
    %v6863 = vrot.slane %v6488, 4
    %v6864 = vrot.slane %v6133, 4
    %v6865 = vrot.slane %v6704, 4
    %v6866 = vrot.slane %v6487, 4
    %v6867 = vrot.slane %v6140, 4
    %v6868 = vrot.slane %v6711, 4
    %v6869 = vrot.slane %v6491, 4
    %v6870 = vrot.slane %v6141, 4
    %v6871 = vrot.slane %v6712, 4
    %v6872 = vrot.slane %v6490, 4
    %v6873 = vsel %vm674, %v5932, %v6721
    %v6874 = vsel %vm674, %v6503, %v6722
    %v6875 = vsel %vm674, %v6413, %v6723
    %v6876 = vsel %vm674, %v5948, %v6724
    %v6877 = vsel %vm674, %v6721, %v5932
    %v6878 = vrot.slane %v6877, 4
    %v6879 = vsel %vm674, %v6722, %v6503
    %v6880 = vrot.slane %v6879, 4
    %v6881 = vsel %vm674, %v6723, %v6413
    %v6882 = vrot.slane %v6881, 4
    %v6883 = vsel %vm674, %v6724, %v5948
    %v6884 = vrot.slane %v6883, 4
    %v6885 = vsel %vm674, %v5933, %v6725
    %v6886 = vsel %vm674, %v6504, %v6726
    %v6887 = vsel %vm674, %v6412, %v6727
    %v6888 = vsel %vm674, %v5949, %v6728
    %v6889 = vsel %vm674, %v5940, %v6729
    %v6890 = vsel %vm674, %v6511, %v6730
    %v6891 = vsel %vm674, %v6416, %v6731
    %v6892 = vsel %vm674, %v5956, %v6732
    %v6893 = vsel %vm674, %v6729, %v5940
    %v6894 = vrot.slane %v6893, 4
    %v6895 = vsel %vm674, %v6730, %v6511
    %v6896 = vrot.slane %v6895, 4
    %v6897 = vsel %vm674, %v6731, %v6416
    %v6898 = vrot.slane %v6897, 4
    %v6899 = vsel %vm674, %v6732, %v5956
    %v6900 = vrot.slane %v6899, 4
    %v6901 = vsel %vm674, %v5941, %v6733
    %v6902 = vsel %vm674, %v6512, %v6734
    %v6903 = vsel %vm674, %v6415, %v6735
    %v6904 = vsel %vm674, %v5957, %v6736
    %v6905 = vsel %vm674, %v6519, %v6737
    %v6906 = vsel %vm674, %v6419, %v6738
    %v6907 = vsel %vm674, %v5964, %v6739
    %v6908 = vsel %vm674, %v6737, %v6519
    %v6909 = vrot.slane %v6908, 4
    %v6910 = vsel %vm674, %v6738, %v6419
    %v6911 = vrot.slane %v6910, 4
    %v6912 = vsel %vm674, %v6739, %v5964
    %v6913 = vrot.slane %v6912, 4
    %v6914 = vsel %vm674, %v6520, %v6740
    %v6915 = vsel %vm674, %v6418, %v6741
    %v6916 = vsel %vm674, %v5965, %v6742
    %v6917 = vsel %vm674, %v6527, %v6743
    %v6918 = vsel %vm674, %v6422, %v6744
    %v6919 = vsel %vm674, %v5972, %v6745
    %v6920 = vsel %vm674, %v6743, %v6527
    %v6921 = vrot.slane %v6920, 4
    %v6922 = vsel %vm674, %v6744, %v6422
    %v6923 = vrot.slane %v6922, 4
    %v6924 = vsel %vm674, %v6745, %v5972
    %v6925 = vrot.slane %v6924, 4
    %v6926 = vsel %vm674, %v6528, %v6746
    %v6927 = vsel %vm674, %v6421, %v6747
    %v6928 = vsel %vm674, %v5973, %v6748
    %v6929 = vsel %vm674, %v6535, %v6749
    %v6930 = vsel %vm674, %v6425, %v6750
    %v6931 = vsel %vm674, %v5980, %v6751
    %v6932 = vsel %vm674, %v6749, %v6535
    %v6933 = vrot.slane %v6932, 4
    %v6934 = vsel %vm674, %v6750, %v6425
    %v6935 = vrot.slane %v6934, 4
    %v6936 = vsel %vm674, %v6751, %v5980
    %v6937 = vrot.slane %v6936, 4
    %v6938 = vsel %vm674, %v6536, %v6752
    %v6939 = vsel %vm674, %v6424, %v6753
    %v6940 = vsel %vm674, %v5981, %v6754
    %v6941 = vsel %vm674, %v6543, %v6755
    %v6942 = vsel %vm674, %v6428, %v6756
    %v6943 = vsel %vm674, %v5988, %v6757
    %v6944 = vsel %vm674, %v6755, %v6543
    %v6945 = vrot.slane %v6944, 4
    %v6946 = vsel %vm674, %v6756, %v6428
    %v6947 = vrot.slane %v6946, 4
    %v6948 = vsel %vm674, %v6757, %v5988
    %v6949 = vrot.slane %v6948, 4
    %v6950 = vsel %vm674, %v6544, %v6758
    %v6951 = vsel %vm674, %v6427, %v6759
    %v6952 = vsel %vm674, %v5989, %v6760
    %v6953 = vsel %vm674, %v6551, %v6761
    %v6954 = vsel %vm674, %v6431, %v6762
    %v6955 = vsel %vm674, %v5996, %v6763
    %v6956 = vsel %vm674, %v6761, %v6551
    %v6957 = vrot.slane %v6956, 4
    %v6958 = vsel %vm674, %v6762, %v6431
    %v6959 = vrot.slane %v6958, 4
    %v6960 = vsel %vm674, %v6763, %v5996
    %v6961 = vrot.slane %v6960, 4
    %v6962 = vsel %vm674, %v6552, %v6764
    %v6963 = vsel %vm674, %v6430, %v6765
    %v6964 = vsel %vm674, %v5997, %v6766
    %v6965 = vsel %vm674, %v6559, %v6767
    %v6966 = vsel %vm674, %v6434, %v6768
    %v6967 = vsel %vm674, %v6004, %v6769
    %v6968 = vsel %vm674, %v6767, %v6559
    %v6969 = vrot.slane %v6968, 4
    %v6970 = vsel %vm674, %v6768, %v6434
    %v6971 = vrot.slane %v6970, 4
    %v6972 = vsel %vm674, %v6769, %v6004
    %v6973 = vrot.slane %v6972, 4
    %v6974 = vsel %vm674, %v6560, %v6770
    %v6975 = vsel %vm674, %v6433, %v6771
    %v6976 = vsel %vm674, %v6005, %v6772
    %v6977 = vsel %vm674, %v6567, %v6773
    %v6978 = vsel %vm674, %v6437, %v6774
    %v6979 = vsel %vm674, %v6012, %v6775
    %v6980 = vsel %vm674, %v6773, %v6567
    %v6981 = vrot.slane %v6980, 4
    %v6982 = vsel %vm674, %v6774, %v6437
    %v6983 = vrot.slane %v6982, 4
    %v6984 = vsel %vm674, %v6775, %v6012
    %v6985 = vrot.slane %v6984, 4
    %v6986 = vsel %vm674, %v6568, %v6776
    %v6987 = vsel %vm674, %v6436, %v6777
    %v6988 = vsel %vm674, %v6013, %v6778
    %v6989 = vsel %vm674, %v6575, %v6779
    %v6990 = vsel %vm674, %v6440, %v6780
    %v6991 = vsel %vm674, %v6020, %v6781
    %v6992 = vsel %vm674, %v6779, %v6575
    %v6993 = vrot.slane %v6992, 4
    %v6994 = vsel %vm674, %v6780, %v6440
    %v6995 = vrot.slane %v6994, 4
    %v6996 = vsel %vm674, %v6781, %v6020
    %v6997 = vrot.slane %v6996, 4
    %v6998 = vsel %vm674, %v6576, %v6782
    %v6999 = vsel %vm674, %v6439, %v6783
    %v7000 = vsel %vm674, %v6021, %v6784
    %v7001 = vsel %vm674, %v6583, %v6785
    %v7002 = vsel %vm674, %v6443, %v6786
    %v7003 = vsel %vm674, %v6028, %v6787
    %v7004 = vsel %vm674, %v6785, %v6583
    %v7005 = vrot.slane %v7004, 4
    %v7006 = vsel %vm674, %v6786, %v6443
    %v7007 = vrot.slane %v7006, 4
    %v7008 = vsel %vm674, %v6787, %v6028
    %v7009 = vrot.slane %v7008, 4
    %v7010 = vsel %vm674, %v6584, %v6788
    %v7011 = vsel %vm674, %v6442, %v6789
    %v7012 = vsel %vm674, %v6029, %v6790
    %v7013 = vsel %vm674, %v6591, %v6791
    %v7014 = vsel %vm674, %v6446, %v6792
    %v7015 = vsel %vm674, %v6036, %v6793
    %v7016 = vsel %vm674, %v6791, %v6591
    %v7017 = vrot.slane %v7016, 4
    %v7018 = vsel %vm674, %v6792, %v6446
    %v7019 = vrot.slane %v7018, 4
    %v7020 = vsel %vm674, %v6793, %v6036
    %v7021 = vrot.slane %v7020, 4
    %v7022 = vrot.slane %v6607, 4
    %v7023 = vsel %vm674, %v6592, %v6794
    %v7024 = vsel %vm674, %v6445, %v6795
    %v7025 = vsel %vm674, %v6037, %v6796
    %v7026 = vsel %vm674, %v6044, %v6797
    %v7027 = vsel %vm674, %v6615, %v6798
    %v7028 = vsel %vm674, %v6455, %v6799
    %v7029 = vsel %vm674, %v6060, %v6800
    %v7030 = vsel %vm674, %v6797, %v6044
    %v7031 = vrot.slane %v7030, 4
    %v7032 = vsel %vm674, %v6798, %v6615
    %v7033 = vrot.slane %v7032, 4
    %v7034 = vsel %vm674, %v6799, %v6455
    %v7035 = vrot.slane %v7034, 4
    %v7036 = vsel %vm674, %v6800, %v6060
    %v7037 = vrot.slane %v7036, 4
    %v7038 = vsel %vm674, %v6045, %v6801
    %v7039 = vsel %vm674, %v6616, %v6802
    %v7040 = vsel %vm674, %v6454, %v6803
    %v7041 = vsel %vm674, %v6061, %v6804
    %v7042 = vsel %vm674, %v6052, %v6805
    %v7043 = vsel %vm674, %v6623, %v6806
    %v7044 = vsel %vm674, %v6458, %v6807
    %v7045 = vsel %vm674, %v6068, %v6808
    %v7046 = vsel %vm674, %v6805, %v6052
    %v7047 = vrot.slane %v7046, 4
    %v7048 = vsel %vm674, %v6806, %v6623
    %v7049 = vrot.slane %v7048, 4
    %v7050 = vsel %vm674, %v6807, %v6458
    %v7051 = vrot.slane %v7050, 4
    %v7052 = vsel %vm674, %v6808, %v6068
    %v7053 = vrot.slane %v7052, 4
    %v7054 = vsel %vm674, %v6053, %v6809
    %v7055 = vsel %vm674, %v6624, %v6810
    %v7056 = vsel %vm674, %v6457, %v6811
    %v7057 = vsel %vm674, %v6069, %v6812
    %v7058 = vsel %vm674, %v6631, %v6813
    %v7059 = vsel %vm674, %v6461, %v6814
    %v7060 = vsel %vm674, %v6076, %v6815
    %v7061 = vsel %vm674, %v6813, %v6631
    %v7062 = vrot.slane %v7061, 4
    %v7063 = vsel %vm674, %v6814, %v6461
    %v7064 = vrot.slane %v7063, 4
    %v7065 = vsel %vm674, %v6815, %v6076
    %v7066 = vrot.slane %v7065, 4
    %v7067 = vsel %vm674, %v6632, %v6816
    %v7068 = vsel %vm674, %v6460, %v6817
    %v7069 = vsel %vm674, %v6077, %v6818
    %v7070 = vsel %vm674, %v6639, %v6819
    %v7071 = vsel %vm674, %v6464, %v6820
    %v7072 = vsel %vm674, %v6084, %v6821
    %v7073 = vsel %vm674, %v6819, %v6639
    %v7074 = vrot.slane %v7073, 4
    %v7075 = vsel %vm674, %v6820, %v6464
    %v7076 = vrot.slane %v7075, 4
    %v7077 = vsel %vm674, %v6821, %v6084
    %v7078 = vrot.slane %v7077, 4
    %v7079 = vsel %vm674, %v6640, %v6822
    %v7080 = vsel %vm674, %v6463, %v6823
    %v7081 = vsel %vm674, %v6085, %v6824
    %v7082 = vsel %vm674, %v6647, %v6825
    %v7083 = vsel %vm674, %v6467, %v6826
    %v7084 = vsel %vm674, %v6092, %v6827
    %v7085 = vsel %vm674, %v6825, %v6647
    %v7086 = vrot.slane %v7085, 4
    %v7087 = vsel %vm674, %v6826, %v6467
    %v7088 = vrot.slane %v7087, 4
    %v7089 = vsel %vm674, %v6827, %v6092
    %v7090 = vrot.slane %v7089, 4
    %v7091 = vsel %vm674, %v6648, %v6828
    %v7092 = vsel %vm674, %v6466, %v6829
    %v7093 = vsel %vm674, %v6093, %v6830
    %v7094 = vsel %vm674, %v6655, %v6831
    %v7095 = vsel %vm674, %v6470, %v6832
    %v7096 = vsel %vm674, %v6100, %v6833
    %v7097 = vsel %vm674, %v6831, %v6655
    %v7098 = vrot.slane %v7097, 4
    %v7099 = vsel %vm674, %v6832, %v6470
    %v7100 = vrot.slane %v7099, 4
    %v7101 = vsel %vm674, %v6833, %v6100
    %v7102 = vrot.slane %v7101, 4
    %v7103 = vsel %vm674, %v6656, %v6834
    %v7104 = vsel %vm674, %v6469, %v6835
    %v7105 = vsel %vm674, %v6101, %v6836
    %v7106 = vsel %vm674, %v6663, %v6837
    %v7107 = vsel %vm674, %v6473, %v6838
    %v7108 = vsel %vm674, %v6108, %v6839
    %v7109 = vsel %vm674, %v6837, %v6663
    %v7110 = vrot.slane %v7109, 4
    %v7111 = vsel %vm674, %v6838, %v6473
    %v7112 = vrot.slane %v7111, 4
    %v7113 = vsel %vm674, %v6839, %v6108
    %v7114 = vrot.slane %v7113, 4
    %v7115 = vsel %vm674, %v6664, %v6840
    %v7116 = vsel %vm674, %v6472, %v6841
    %v7117 = vsel %vm674, %v6109, %v6842
    %v7118 = vsel %vm674, %v6671, %v6843
    %v7119 = vsel %vm674, %v6476, %v6844
    %v7120 = vsel %vm674, %v6116, %v6845
    %v7121 = vsel %vm674, %v6843, %v6671
    %v7122 = vrot.slane %v7121, 4
    %v7123 = vsel %vm674, %v6844, %v6476
    %v7124 = vrot.slane %v7123, 4
    %v7125 = vsel %vm674, %v6845, %v6116
    %v7126 = vrot.slane %v7125, 4
    %v7127 = vsel %vm674, %v6672, %v6846
    %v7128 = vsel %vm674, %v6475, %v6847
    %v7129 = vsel %vm674, %v6117, %v6848
    %v7130 = vsel %vm674, %v6679, %v6849
    %v7131 = vsel %vm674, %v6479, %v6850
    %v7132 = vsel %vm674, %v6124, %v6851
    %v7133 = vsel %vm674, %v6849, %v6679
    %v7134 = vrot.slane %v7133, 4
    %v7135 = vsel %vm674, %v6850, %v6479
    %v7136 = vrot.slane %v7135, 4
    %v7137 = vsel %vm674, %v6851, %v6124
    %v7138 = vrot.slane %v7137, 4
    %v7139 = vsel %vm674, %v6680, %v6852
    %v7140 = vsel %vm674, %v6478, %v6853
    %v7141 = vsel %vm674, %v6125, %v6854
    %v7142 = vsel %vm674, %v6687, %v6855
    %v7143 = vsel %vm674, %v6482, %v6856
    %v7144 = vsel %vm674, %v6132, %v6857
    %v7145 = vsel %vm674, %v6855, %v6687
    %v7146 = vrot.slane %v7145, 4
    %v7147 = vsel %vm674, %v6856, %v6482
    %v7148 = vrot.slane %v7147, 4
    %v7149 = vsel %vm674, %v6857, %v6132
    %v7150 = vrot.slane %v7149, 4
    %v7151 = vsel %vm674, %v6688, %v6858
    %v7152 = vsel %vm674, %v6481, %v6859
    %v7153 = vsel %vm674, %v6133, %v6860
    %v7154 = vsel %vm674, %v6695, %v6861
    %v7155 = vsel %vm674, %v6485, %v6862
    %v7156 = vsel %vm674, %v6140, %v6863
    %v7157 = vsel %vm674, %v6861, %v6695
    %v7158 = vrot.slane %v7157, 4
    %v7159 = vsel %vm674, %v6862, %v6485
    %v7160 = vrot.slane %v7159, 4
    %v7161 = vsel %vm674, %v6863, %v6140
    %v7162 = vrot.slane %v7161, 4
    %v7163 = vsel %vm674, %v6696, %v6864
    %v7164 = vsel %vm674, %v6484, %v6865
    %v7165 = vsel %vm674, %v6141, %v6866
    %v7166 = vsel %vm674, %v6703, %v6867
    %v7167 = vsel %vm674, %v6488, %v6868
    %v7168 = vsel %vm674, %v6148, %v6869
    %v7169 = vsel %vm674, %v6867, %v6703
    %v7170 = vrot.slane %v7169, 4
    %v7171 = vsel %vm674, %v6868, %v6488
    %v7172 = vrot.slane %v7171, 4
    %v7173 = vsel %vm674, %v6869, %v6148
    %v7174 = vrot.slane %v7173, 4
    %v7175 = vrot.slane %v6719, 4
    %v7176 = vsel %vm674, %v6704, %v6870
    %v7177 = vsel %vm674, %v6487, %v6871
    %v7178 = vsel %vm674, %v6149, %v6872
    %7179 = vst [vmem:[#allocation1] ss:$2 sm:$0xff] %v6873
    %s7180 = scalar_lea.vmem [#allocation1], 1
    %7181 = vst [vmem:[%s7180] ss:$2 sm:$0xff] %v6878
    %s7182 = scalar_lea.vmem [#allocation1], 16
    %7183 = vst [vmem:[%s7182] ss:$2 sm:$0xff] %v6874
    %s7184 = scalar_lea.vmem [#allocation1], 17
    %7185 = vst [vmem:[%s7184] ss:$2 sm:$0xff] %v6880
    %s7186 = scalar_lea.vmem [#allocation1], 32
    %7187 = vst [vmem:[%s7186] ss:$2 sm:$0xff] %v6875
    %s7188 = scalar_lea.vmem [#allocation1], 33
    %7189 = vst [vmem:[%s7188] ss:$2 sm:$0xff] %v6882
    %s7190 = scalar_lea.vmem [#allocation1], 48
    %7191 = vst [vmem:[%s7190] ss:$2 sm:$0xff] %v6876
    %s7192 = scalar_lea.vmem [#allocation1], 49
    %7193 = vst [vmem:[%s7192] ss:$2 sm:$0xff] %v6884
    %v7194 = vld.sshfl [vmem:[#allocation1] sm:$0xff pattern:$0x75316420]
    %v7195 = vld.sshfl [vmem:[#allocation1 + $0x8] sm:$0xff pattern:$0x75316420]
    %v7196 = vld.sshfl [vmem:[#allocation1 + $0x10] sm:$0xff pattern:$0x75316420]
    %v7197 = vld.sshfl [vmem:[#allocation1 + $0x18] sm:$0xff pattern:$0x75316420]
    %v7198 = vld.sshfl [vmem:[#allocation1 + $0x20] sm:$0xff pattern:$0x75316420]
    %v7199 = vld.sshfl [vmem:[#allocation1 + $0x28] sm:$0xff pattern:$0x75316420]
    %v7200 = vld.sshfl [vmem:[#allocation1 + $0x30] sm:$0xff pattern:$0x75316420]
    %v7201 = vld.sshfl [vmem:[#allocation1 + $0x38] sm:$0xff pattern:$0x75316420]
    %7202 = vst [vmem:[#allocation1] ss:$2 sm:$0xff] %v6519
    %7203 = vst [vmem:[%s7180] ss:$2 sm:$0xff] %v6731
    %7204 = vst [vmem:[%s7182] ss:$2 sm:$0xff] %v6885
    %7205 = vst [vmem:[%s7184] ss:$2 sm:$0xff] %v6889
    %7206 = vst [vmem:[%s7186] ss:$2 sm:$0xff] %v6886
    %7207 = vst [vmem:[%s7188] ss:$2 sm:$0xff] %v6890
    %7208 = vst [vmem:[%s7190] ss:$2 sm:$0xff] %v6887
    %7209 = vst [vmem:[%s7192] ss:$2 sm:$0xff] %v6891
    %v7210 = vld.sshfl [vmem:[#allocation1] sm:$0xff pattern:$0x75316420]
    %v7211 = vld.sshfl [vmem:[#allocation1 + $0x10] sm:$0xff pattern:$0x75316420]
    %v7212 = vld.sshfl [vmem:[#allocation1 + $0x18] sm:$0xff pattern:$0x75316420]
    %v7213 = vld.sshfl [vmem:[#allocation1 + $0x20] sm:$0xff pattern:$0x75316420]
    %v7214 = vld.sshfl [vmem:[#allocation1 + $0x28] sm:$0xff pattern:$0x75316420]
    %v7215 = vld.sshfl [vmem:[#allocation1 + $0x30] sm:$0xff pattern:$0x75316420]
    %v7216 = vld.sshfl [vmem:[#allocation1 + $0x38] sm:$0xff pattern:$0x75316420]
    %7217 = vst [vmem:[#allocation1] ss:$2 sm:$0xff] %v6888
    %7218 = vst [vmem:[%s7180] ss:$2 sm:$0xff] %v6892
    %7219 = vst [vmem:[%s7182] ss:$2 sm:$0xff] %v6520
    %7220 = vst [vmem:[%s7184] ss:$2 sm:$0xff] %v6527
    %7221 = vst [vmem:[%s7186] ss:$2 sm:$0xff] %v6894
    %7222 = vst [vmem:[%s7188] ss:$2 sm:$0xff] %v6901
    %7223 = vst [vmem:[%s7190] ss:$2 sm:$0xff] %v6896
    %7224 = vst [vmem:[%s7192] ss:$2 sm:$0xff] %v6902
    %v7225 = vld.sshfl [vmem:[#allocation1] sm:$0xff pattern:$0x75316420]
    %v7226 = vld.sshfl [vmem:[#allocation1 + $0x8] sm:$0xff pattern:$0x75316420]
    %v7227 = vld.sshfl [vmem:[#allocation1 + $0x10] sm:$0xff pattern:$0x75316420]
    %v7228 = vld.sshfl [vmem:[#allocation1 + $0x20] sm:$0xff pattern:$0x75316420]
    %v7229 = vld.sshfl [vmem:[#allocation1 + $0x28] sm:$0xff pattern:$0x75316420]
    %v7230 = vld.sshfl [vmem:[#allocation1 + $0x30] sm:$0xff pattern:$0x75316420]
    %v7231 = vld.sshfl [vmem:[#allocation1 + $0x38] sm:$0xff pattern:$0x75316420]
    %7232 = vst [vmem:[#allocation1] ss:$2 sm:$0xff] %v6898
    %7233 = vst [vmem:[%s7180] ss:$2 sm:$0xff] %v6903
    %7234 = vst [vmem:[%s7182] ss:$2 sm:$0xff] %v6900
    %7235 = vst [vmem:[%s7184] ss:$2 sm:$0xff] %v6904
    %7236 = vst [vmem:[%s7186] ss:$2 sm:$0xff] %v6738
    %7237 = vst [vmem:[%s7188] ss:$2 sm:$0xff] %v6528
    %7238 = vst [vmem:[%s7190] ss:$2 sm:$0xff] %v6876
    %7239 = vst [vmem:[%s7192] ss:$2 sm:$0xff] %v6884
    %v7240 = vld.sshfl [vmem:[#allocation1] sm:$0xff pattern:$0x75316420]
    %v7241 = vld.sshfl [vmem:[#allocation1 + $0x8] sm:$0xff pattern:$0x75316420]
    %v7242 = vld.sshfl [vmem:[#allocation1 + $0x10] sm:$0xff pattern:$0x75316420]
    %v7243 = vld.sshfl [vmem:[#allocation1 + $0x18] sm:$0xff pattern:$0x75316420]
    %v7244 = vld.sshfl [vmem:[#allocation1 + $0x20] sm:$0xff pattern:$0x75316420]
    %v7245 = vld.sshfl [vmem:[#allocation1 + $0x30] sm:$0xff pattern:$0x75316420]
    %v7246 = vld.sshfl [vmem:[#allocation1 + $0x38] sm:$0xff pattern:$0x75316420]
    %7247 = vst [vmem:[#allocation1] ss:$2 sm:$0xff] %v6905
    %7248 = vst [vmem:[%s7180] ss:$2 sm:$0xff] %v6909
    %7249 = vst [vmem:[%s7182] ss:$2 sm:$0xff] %v6906
    %7250 = vst [vmem:[%s7184] ss:$2 sm:$0xff] %v6911
    %7251 = vst [vmem:[%s7186] ss:$2 sm:$0xff] %v6907
    %7252 = vst [vmem:[%s7188] ss:$2 sm:$0xff] %v6913
    %7253 = vst [vmem:[%s7190] ss:$2 sm:$0xff] %v6535
    %7254 = vst [vmem:[%s7192] ss:$2 sm:$0xff] %v6744
    %v7255 = vld.sshfl [vmem:[#allocation1] sm:$0xff pattern:$0x75316420]
    %v7256 = vld.sshfl [vmem:[#allocation1 + $0x8] sm:$0xff pattern:$0x75316420]
    %v7257 = vld.sshfl [vmem:[#allocation1 + $0x10] sm:$0xff pattern:$0x75316420]
    %v7258 = vld.sshfl [vmem:[#allocation1 + $0x18] sm:$0xff pattern:$0x75316420]
    %v7259 = vld.sshfl [vmem:[#allocation1 + $0x20] sm:$0xff pattern:$0x75316420]
    %v7260 = vld.sshfl [vmem:[#allocation1 + $0x28] sm:$0xff pattern:$0x75316420]
    %v7261 = vld.sshfl [vmem:[#allocation1 + $0x30] sm:$0xff pattern:$0x75316420]
    %7262 = vst [vmem:[#allocation1] ss:$2 sm:$0xff] %v6888
    %7263 = vst [vmem:[%s7180] ss:$2 sm:$0xff] %v6892
    %7264 = vst [vmem:[%s7182] ss:$2 sm:$0xff] %v6914
    %7265 = vst [vmem:[%s7184] ss:$2 sm:$0xff] %v6917
    %7266 = vst [vmem:[%s7186] ss:$2 sm:$0xff] %v6915
    %7267 = vst [vmem:[%s7188] ss:$2 sm:$0xff] %v6918
    %7268 = vst [vmem:[%s7190] ss:$2 sm:$0xff] %v6916
    %7269 = vst [vmem:[%s7192] ss:$2 sm:$0xff] %v6919
    %v7270 = vld.sshfl [vmem:[#allocation1] sm:$0xff pattern:$0x75316420]
    %v7271 = vld.sshfl [vmem:[#allocation1 + $0x8] sm:$0xff pattern:$0x75316420]
    %v7272 = vld.sshfl [vmem:[#allocation1 + $0x10] sm:$0xff pattern:$0x75316420]
    %v7273 = vld.sshfl [vmem:[#allocation1 + $0x18] sm:$0xff pattern:$0x75316420]
    %v7274 = vld.sshfl [vmem:[#allocation1 + $0x20] sm:$0xff pattern:$0x75316420]
    %v7275 = vld.sshfl [vmem:[#allocation1 + $0x28] sm:$0xff pattern:$0x75316420]
    %v7276 = vld.sshfl [vmem:[#allocation1 + $0x30] sm:$0xff pattern:$0x75316420]
    %v7277 = vld.sshfl [vmem:[#allocation1 + $0x38] sm:$0xff pattern:$0x75316420]
    %7278 = vst [vmem:[#allocation1] ss:$2 sm:$0xff] %v6536
    %7279 = vst [vmem:[%s7180] ss:$2 sm:$0xff] %v6543
    %7280 = vst [vmem:[%s7182] ss:$2 sm:$0xff] %v6900
    %7281 = vst [vmem:[%s7184] ss:$2 sm:$0xff] %v6904
    %7282 = vst [vmem:[%s7186] ss:$2 sm:$0xff] %v6921
    %7283 = vst [vmem:[%s7188] ss:$2 sm:$0xff] %v6926
    %7284 = vst [vmem:[%s7190] ss:$2 sm:$0xff] %v6923
    %7285 = vst [vmem:[%s7192] ss:$2 sm:$0xff] %v6927
    %v7286 = vld.sshfl [vmem:[#allocation1] sm:$0xff pattern:$0x75316420]
    %v7287 = vld.sshfl [vmem:[#allocation1 + $0x10] sm:$0xff pattern:$0x75316420]
    %v7288 = vld.sshfl [vmem:[#allocation1 + $0x18] sm:$0xff pattern:$0x75316420]
    %v7289 = vld.sshfl [vmem:[#allocation1 + $0x20] sm:$0xff pattern:$0x75316420]
    %v7290 = vld.sshfl [vmem:[#allocation1 + $0x28] sm:$0xff pattern:$0x75316420]
    %v7291 = vld.sshfl [vmem:[#allocation1 + $0x30] sm:$0xff pattern:$0x75316420]
    %v7292 = vld.sshfl [vmem:[#allocation1 + $0x38] sm:$0xff pattern:$0x75316420]
    %7293 = vst [vmem:[#allocation1] ss:$2 sm:$0xff] %v6925
    %7294 = vst [vmem:[%s7180] ss:$2 sm:$0xff] %v6928
    %7295 = vst [vmem:[%s7182] ss:$2 sm:$0xff] %v6750
    %7296 = vst [vmem:[%s7184] ss:$2 sm:$0xff] %v6544
    %7297 = vst [vmem:[%s7186] ss:$2 sm:$0xff] %v6907
    %7298 = vst [vmem:[%s7188] ss:$2 sm:$0xff] %v6913
    %7299 = vst [vmem:[%s7190] ss:$2 sm:$0xff] %v6929
    %7300 = vst [vmem:[%s7192] ss:$2 sm:$0xff] %v6933
    %v7301 = vld.sshfl [vmem:[#allocation1] sm:$0xff pattern:$0x75316420]
    %v7302 = vld.sshfl [vmem:[#allocation1 + $0x8] sm:$0xff pattern:$0x75316420]
    %v7303 = vld.sshfl [vmem:[#allocation1 + $0x10] sm:$0xff pattern:$0x75316420]
    %v7304 = vld.sshfl [vmem:[#allocation1 + $0x20] sm:$0xff pattern:$0x75316420]
    %v7305 = vld.sshfl [vmem:[#allocation1 + $0x28] sm:$0xff pattern:$0x75316420]
    %v7306 = vld.sshfl [vmem:[#allocation1 + $0x30] sm:$0xff pattern:$0x75316420]
    %v7307 = vld.sshfl [vmem:[#allocation1 + $0x38] sm:$0xff pattern:$0x75316420]
    %7308 = vst [vmem:[#allocation1] ss:$2 sm:$0xff] %v6930
    %7309 = vst [vmem:[%s7180] ss:$2 sm:$0xff] %v6935
    %7310 = vst [vmem:[%s7182] ss:$2 sm:$0xff] %v6931
    %7311 = vst [vmem:[%s7184] ss:$2 sm:$0xff] %v6937
    %7312 = vst [vmem:[%s7186] ss:$2 sm:$0xff] %v6551
    %7313 = vst [vmem:[%s7188] ss:$2 sm:$0xff] %v6756
    %7314 = vst [vmem:[%s7190] ss:$2 sm:$0xff] %v6916
    %7315 = vst [vmem:[%s7192] ss:$2 sm:$0xff] %v6919
    %v7316 = vld.sshfl [vmem:[#allocation1] sm:$0xff pattern:$0x75316420]
    %v7317 = vld.sshfl [vmem:[#allocation1 + $0x8] sm:$0xff pattern:$0x75316420]
    %v7318 = vld.sshfl [vmem:[#allocation1 + $0x10] sm:$0xff pattern:$0x75316420]
    %v7319 = vld.sshfl [vmem:[#allocation1 + $0x18] sm:$0xff pattern:$0x75316420]
    %v7320 = vld.sshfl [vmem:[#allocation1 + $0x20] sm:$0xff pattern:$0x75316420]
    %v7321 = vld.sshfl [vmem:[#allocation1 + $0x30] sm:$0xff pattern:$0x75316420]
    %v7322 = vld.sshfl [vmem:[#allocation1 + $0x38] sm:$0xff pattern:$0x75316420]
    %7323 = vst [vmem:[#allocation1] ss:$2 sm:$0xff] %v6938
    %7324 = vst [vmem:[%s7180] ss:$2 sm:$0xff] %v6941
    %7325 = vst [vmem:[%s7182] ss:$2 sm:$0xff] %v6939
    %7326 = vst [vmem:[%s7184] ss:$2 sm:$0xff] %v6942
    %7327 = vst [vmem:[%s7186] ss:$2 sm:$0xff] %v6940
    %7328 = vst [vmem:[%s7188] ss:$2 sm:$0xff] %v6943
    %7329 = vst [vmem:[%s7190] ss:$2 sm:$0xff] %v6552
    %7330 = vst [vmem:[%s7192] ss:$2 sm:$0xff] %v6559
    %v7331 = vld.sshfl [vmem:[#allocation1] sm:$0xff pattern:$0x75316420]
    %v7332 = vld.sshfl [vmem:[#allocation1 + $0x8] sm:$0xff pattern:$0x75316420]
    %v7333 = vld.sshfl [vmem:[#allocation1 + $0x10] sm:$0xff pattern:$0x75316420]
    %v7334 = vld.sshfl [vmem:[#allocation1 + $0x18] sm:$0xff pattern:$0x75316420]
    %v7335 = vld.sshfl [vmem:[#allocation1 + $0x20] sm:$0xff pattern:$0x75316420]
    %v7336 = vld.sshfl [vmem:[#allocation1 + $0x28] sm:$0xff pattern:$0x75316420]
    %v7337 = vld.sshfl [vmem:[#allocation1 + $0x30] sm:$0xff pattern:$0x75316420]
    %7338 = vst [vmem:[#allocation1] ss:$2 sm:$0xff] %v6925
    %7339 = vst [vmem:[%s7180] ss:$2 sm:$0xff] %v6928
    %7340 = vst [vmem:[%s7182] ss:$2 sm:$0xff] %v6945
    %7341 = vst [vmem:[%s7184] ss:$2 sm:$0xff] %v6950
    %7342 = vst [vmem:[%s7186] ss:$2 sm:$0xff] %v6947
    %7343 = vst [vmem:[%s7188] ss:$2 sm:$0xff] %v6951
    %7344 = vst [vmem:[%s7190] ss:$2 sm:$0xff] %v6949
    %7345 = vst [vmem:[%s7192] ss:$2 sm:$0xff] %v6952
    %v7346 = vld.sshfl [vmem:[#allocation1] sm:$0xff pattern:$0x75316420]
    %v7347 = vld.sshfl [vmem:[#allocation1 + $0x8] sm:$0xff pattern:$0x75316420]
    %v7348 = vld.sshfl [vmem:[#allocation1 + $0x10] sm:$0xff pattern:$0x75316420]
    %v7349 = vld.sshfl [vmem:[#allocation1 + $0x18] sm:$0xff pattern:$0x75316420]
    %v7350 = vld.sshfl [vmem:[#allocation1 + $0x20] sm:$0xff pattern:$0x75316420]
    %v7351 = vld.sshfl [vmem:[#allocation1 + $0x28] sm:$0xff pattern:$0x75316420]
    %v7352 = vld.sshfl [vmem:[#allocation1 + $0x30] sm:$0xff pattern:$0x75316420]
    %v7353 = vld.sshfl [vmem:[#allocation1 + $0x38] sm:$0xff pattern:$0x75316420]
    %7354 = vst [vmem:[#allocation1] ss:$2 sm:$0xff] %v6762
    %7355 = vst [vmem:[%s7180] ss:$2 sm:$0xff] %v6560
    %7356 = vst [vmem:[%s7182] ss:$2 sm:$0xff] %v6931
    %7357 = vst [vmem:[%s7184] ss:$2 sm:$0xff] %v6937
    %7358 = vst [vmem:[%s7186] ss:$2 sm:$0xff] %v6953
    %7359 = vst [vmem:[%s7188] ss:$2 sm:$0xff] %v6957
    %7360 = vst [vmem:[%s7190] ss:$2 sm:$0xff] %v6954
    %7361 = vst [vmem:[%s7192] ss:$2 sm:$0xff] %v6959
    %v7362 = vld.sshfl [vmem:[#allocation1] sm:$0xff pattern:$0x75316420]
    %v7363 = vld.sshfl [vmem:[#allocation1 + $0x10] sm:$0xff pattern:$0x75316420]
    %v7364 = vld.sshfl [vmem:[#allocation1 + $0x18] sm:$0xff pattern:$0x75316420]
    %v7365 = vld.sshfl [vmem:[#allocation1 + $0x20] sm:$0xff pattern:$0x75316420]
    %v7366 = vld.sshfl [vmem:[#allocation1 + $0x28] sm:$0xff pattern:$0x75316420]
    %v7367 = vld.sshfl [vmem:[#allocation1 + $0x30] sm:$0xff pattern:$0x75316420]
    %v7368 = vld.sshfl [vmem:[#allocation1 + $0x38] sm:$0xff pattern:$0x75316420]
    %7369 = vst [vmem:[#allocation1] ss:$2 sm:$0xff] %v6955
    %7370 = vst [vmem:[%s7180] ss:$2 sm:$0xff] %v6961
    %7371 = vst [vmem:[%s7182] ss:$2 sm:$0xff] %v6567
    %7372 = vst [vmem:[%s7184] ss:$2 sm:$0xff] %v6768
    %7373 = vst [vmem:[%s7186] ss:$2 sm:$0xff] %v6940
    %7374 = vst [vmem:[%s7188] ss:$2 sm:$0xff] %v6943
    %7375 = vst [vmem:[%s7190] ss:$2 sm:$0xff] %v6962
    %7376 = vst [vmem:[%s7192] ss:$2 sm:$0xff] %v6965
    %v7377 = vld.sshfl [vmem:[#allocation1] sm:$0xff pattern:$0x75316420]
    %v7378 = vld.sshfl [vmem:[#allocation1 + $0x8] sm:$0xff pattern:$0x75316420]
    %v7379 = vld.sshfl [vmem:[#allocation1 + $0x10] sm:$0xff pattern:$0x75316420]
    %v7380 = vld.sshfl [vmem:[#allocation1 + $0x20] sm:$0xff pattern:$0x75316420]
    %v7381 = vld.sshfl [vmem:[#allocation1 + $0x28] sm:$0xff pattern:$0x75316420]
    %v7382 = vld.sshfl [vmem:[#allocation1 + $0x30] sm:$0xff pattern:$0x75316420]
    %v7383 = vld.sshfl [vmem:[#allocation1 + $0x38] sm:$0xff pattern:$0x75316420]
    %7384 = vst [vmem:[#allocation1] ss:$2 sm:$0xff] %v6963
    %7385 = vst [vmem:[%s7180] ss:$2 sm:$0xff] %v6966
    %7386 = vst [vmem:[%s7182] ss:$2 sm:$0xff] %v6964
    %7387 = vst [vmem:[%s7184] ss:$2 sm:$0xff] %v6967
    %7388 = vst [vmem:[%s7186] ss:$2 sm:$0xff] %v6568
    %7389 = vst [vmem:[%s7188] ss:$2 sm:$0xff] %v6575
    %7390 = vst [vmem:[%s7190] ss:$2 sm:$0xff] %v6949
    %7391 = vst [vmem:[%s7192] ss:$2 sm:$0xff] %v6952
    %v7392 = vld.sshfl [vmem:[#allocation1] sm:$0xff pattern:$0x75316420]
    %v7393 = vld.sshfl [vmem:[#allocation1 + $0x8] sm:$0xff pattern:$0x75316420]
    %v7394 = vld.sshfl [vmem:[#allocation1 + $0x10] sm:$0xff pattern:$0x75316420]
    %v7395 = vld.sshfl [vmem:[#allocation1 + $0x18] sm:$0xff pattern:$0x75316420]
    %v7396 = vld.sshfl [vmem:[#allocation1 + $0x20] sm:$0xff pattern:$0x75316420]
    %v7397 = vld.sshfl [vmem:[#allocation1 + $0x30] sm:$0xff pattern:$0x75316420]
    %v7398 = vld.sshfl [vmem:[#allocation1 + $0x38] sm:$0xff pattern:$0x75316420]
    %7399 = vst [vmem:[#allocation1] ss:$2 sm:$0xff] %v6969
    %7400 = vst [vmem:[%s7180] ss:$2 sm:$0xff] %v6974
    %7401 = vst [vmem:[%s7182] ss:$2 sm:$0xff] %v6971
    %7402 = vst [vmem:[%s7184] ss:$2 sm:$0xff] %v6975
    %7403 = vst [vmem:[%s7186] ss:$2 sm:$0xff] %v6973
    %7404 = vst [vmem:[%s7188] ss:$2 sm:$0xff] %v6976
    %7405 = vst [vmem:[%s7190] ss:$2 sm:$0xff] %v6774
    %7406 = vst [vmem:[%s7192] ss:$2 sm:$0xff] %v6576
    %v7407 = vld.sshfl [vmem:[#allocation1] sm:$0xff pattern:$0x75316420]
    %v7408 = vld.sshfl [vmem:[#allocation1 + $0x8] sm:$0xff pattern:$0x75316420]
    %v7409 = vld.sshfl [vmem:[#allocation1 + $0x10] sm:$0xff pattern:$0x75316420]
    %v7410 = vld.sshfl [vmem:[#allocation1 + $0x18] sm:$0xff pattern:$0x75316420]
    %v7411 = vld.sshfl [vmem:[#allocation1 + $0x20] sm:$0xff pattern:$0x75316420]
    %v7412 = vld.sshfl [vmem:[#allocation1 + $0x28] sm:$0xff pattern:$0x75316420]
    %v7413 = vld.sshfl [vmem:[#allocation1 + $0x30] sm:$0xff pattern:$0x75316420]
    %7414 = vst [vmem:[#allocation1] ss:$2 sm:$0xff] %v6955
    %7415 = vst [vmem:[%s7180] ss:$2 sm:$0xff] %v6961
    %7416 = vst [vmem:[%s7182] ss:$2 sm:$0xff] %v6977
    %7417 = vst [vmem:[%s7184] ss:$2 sm:$0xff] %v6981
    %7418 = vst [vmem:[%s7186] ss:$2 sm:$0xff] %v6978
    %7419 = vst [vmem:[%s7188] ss:$2 sm:$0xff] %v6983
    %7420 = vst [vmem:[%s7190] ss:$2 sm:$0xff] %v6979
    %7421 = vst [vmem:[%s7192] ss:$2 sm:$0xff] %v6985
    %v7422 = vld.sshfl [vmem:[#allocation1] sm:$0xff pattern:$0x75316420]
    %v7423 = vld.sshfl [vmem:[#allocation1 + $0x8] sm:$0xff pattern:$0x75316420]
    %v7424 = vld.sshfl [vmem:[#allocation1 + $0x10] sm:$0xff pattern:$0x75316420]
    %v7425 = vld.sshfl [vmem:[#allocation1 + $0x18] sm:$0xff pattern:$0x75316420]
    %v7426 = vld.sshfl [vmem:[#allocation1 + $0x20] sm:$0xff pattern:$0x75316420]
    %v7427 = vld.sshfl [vmem:[#allocation1 + $0x28] sm:$0xff pattern:$0x75316420]
    %v7428 = vld.sshfl [vmem:[#allocation1 + $0x30] sm:$0xff pattern:$0x75316420]
    %v7429 = vld.sshfl [vmem:[#allocation1 + $0x38] sm:$0xff pattern:$0x75316420]
    %7430 = vst [vmem:[#allocation1] ss:$2 sm:$0xff] %v6583
    %7431 = vst [vmem:[%s7180] ss:$2 sm:$0xff] %v6780
    %7432 = vst [vmem:[%s7182] ss:$2 sm:$0xff] %v6964
    %7433 = vst [vmem:[%s7184] ss:$2 sm:$0xff] %v6967
    %7434 = vst [vmem:[%s7186] ss:$2 sm:$0xff] %v6986
    %7435 = vst [vmem:[%s7188] ss:$2 sm:$0xff] %v6989
    %7436 = vst [vmem:[%s7190] ss:$2 sm:$0xff] %v6987
    %7437 = vst [vmem:[%s7192] ss:$2 sm:$0xff] %v6990
    %v7438 = vld.sshfl [vmem:[#allocation1] sm:$0xff pattern:$0x75316420]
    %v7439 = vld.sshfl [vmem:[#allocation1 + $0x10] sm:$0xff pattern:$0x75316420]
    %v7440 = vld.sshfl [vmem:[#allocation1 + $0x18] sm:$0xff pattern:$0x75316420]
    %v7441 = vld.sshfl [vmem:[#allocation1 + $0x20] sm:$0xff pattern:$0x75316420]
    %v7442 = vld.sshfl [vmem:[#allocation1 + $0x28] sm:$0xff pattern:$0x75316420]
    %v7443 = vld.sshfl [vmem:[#allocation1 + $0x30] sm:$0xff pattern:$0x75316420]
    %v7444 = vld.sshfl [vmem:[#allocation1 + $0x38] sm:$0xff pattern:$0x75316420]
    %7445 = vst [vmem:[#allocation1] ss:$2 sm:$0xff] %v6988
    %7446 = vst [vmem:[%s7180] ss:$2 sm:$0xff] %v6991
    %7447 = vst [vmem:[%s7182] ss:$2 sm:$0xff] %v6584
    %7448 = vst [vmem:[%s7184] ss:$2 sm:$0xff] %v6591
    %7449 = vst [vmem:[%s7186] ss:$2 sm:$0xff] %v6973
    %7450 = vst [vmem:[%s7188] ss:$2 sm:$0xff] %v6976
    %7451 = vst [vmem:[%s7190] ss:$2 sm:$0xff] %v6993
    %7452 = vst [vmem:[%s7192] ss:$2 sm:$0xff] %v6998
    %v7453 = vld.sshfl [vmem:[#allocation1] sm:$0xff pattern:$0x75316420]
    %v7454 = vld.sshfl [vmem:[#allocation1 + $0x8] sm:$0xff pattern:$0x75316420]
    %v7455 = vld.sshfl [vmem:[#allocation1 + $0x10] sm:$0xff pattern:$0x75316420]
    %v7456 = vld.sshfl [vmem:[#allocation1 + $0x20] sm:$0xff pattern:$0x75316420]
    %v7457 = vld.sshfl [vmem:[#allocation1 + $0x28] sm:$0xff pattern:$0x75316420]
    %v7458 = vld.sshfl [vmem:[#allocation1 + $0x30] sm:$0xff pattern:$0x75316420]
    %v7459 = vld.sshfl [vmem:[#allocation1 + $0x38] sm:$0xff pattern:$0x75316420]
    %7460 = vst [vmem:[#allocation1] ss:$2 sm:$0xff] %v6995
    %7461 = vst [vmem:[%s7180] ss:$2 sm:$0xff] %v6999
    %7462 = vst [vmem:[%s7182] ss:$2 sm:$0xff] %v6997
    %7463 = vst [vmem:[%s7184] ss:$2 sm:$0xff] %v7000
    %7464 = vst [vmem:[%s7186] ss:$2 sm:$0xff] %v6786
    %7465 = vst [vmem:[%s7188] ss:$2 sm:$0xff] %v6592
    %7466 = vst [vmem:[%s7190] ss:$2 sm:$0xff] %v6979
    %7467 = vst [vmem:[%s7192] ss:$2 sm:$0xff] %v6985
    %v7468 = vld.sshfl [vmem:[#allocation1] sm:$0xff pattern:$0x75316420]
    %v7469 = vld.sshfl [vmem:[#allocation1 + $0x8] sm:$0xff pattern:$0x75316420]
    %v7470 = vld.sshfl [vmem:[#allocation1 + $0x10] sm:$0xff pattern:$0x75316420]
    %v7471 = vld.sshfl [vmem:[#allocation1 + $0x18] sm:$0xff pattern:$0x75316420]
    %v7472 = vld.sshfl [vmem:[#allocation1 + $0x20] sm:$0xff pattern:$0x75316420]
    %v7473 = vld.sshfl [vmem:[#allocation1 + $0x30] sm:$0xff pattern:$0x75316420]
    %v7474 = vld.sshfl [vmem:[#allocation1 + $0x38] sm:$0xff pattern:$0x75316420]
    %7475 = vst [vmem:[#allocation1] ss:$2 sm:$0xff] %v7001
    %7476 = vst [vmem:[%s7180] ss:$2 sm:$0xff] %v7005
    %7477 = vst [vmem:[%s7182] ss:$2 sm:$0xff] %v7002
    %7478 = vst [vmem:[%s7184] ss:$2 sm:$0xff] %v7007
    %7479 = vst [vmem:[%s7186] ss:$2 sm:$0xff] %v7003
    %7480 = vst [vmem:[%s7188] ss:$2 sm:$0xff] %v7009
    %7481 = vst [vmem:[%s7190] ss:$2 sm:$0xff] %v6599
    %7482 = vst [vmem:[%s7192] ss:$2 sm:$0xff] %v6792
    %v7483 = vld.sshfl [vmem:[#allocation1] sm:$0xff pattern:$0x75316420]
    %v7484 = vld.sshfl [vmem:[#allocation1 + $0x8] sm:$0xff pattern:$0x75316420]
    %v7485 = vld.sshfl [vmem:[#allocation1 + $0x10] sm:$0xff pattern:$0x75316420]
    %v7486 = vld.sshfl [vmem:[#allocation1 + $0x18] sm:$0xff pattern:$0x75316420]
    %v7487 = vld.sshfl [vmem:[#allocation1 + $0x20] sm:$0xff pattern:$0x75316420]
    %v7488 = vld.sshfl [vmem:[#allocation1 + $0x28] sm:$0xff pattern:$0x75316420]
    %v7489 = vld.sshfl [vmem:[#allocation1 + $0x30] sm:$0xff pattern:$0x75316420]
    %7490 = vst [vmem:[#allocation1] ss:$2 sm:$0xff] %v6988
    %7491 = vst [vmem:[%s7180] ss:$2 sm:$0xff] %v6991
    %7492 = vst [vmem:[%s7182] ss:$2 sm:$0xff] %v7010
    %7493 = vst [vmem:[%s7184] ss:$2 sm:$0xff] %v7013
    %7494 = vst [vmem:[%s7186] ss:$2 sm:$0xff] %v7011
    %7495 = vst [vmem:[%s7188] ss:$2 sm:$0xff] %v7014
    %7496 = vst [vmem:[%s7190] ss:$2 sm:$0xff] %v7012
    %7497 = vst [vmem:[%s7192] ss:$2 sm:$0xff] %v7015
    %v7498 = vld.sshfl [vmem:[#allocation1] sm:$0xff pattern:$0x75316420]
    %v7499 = vld.sshfl [vmem:[#allocation1 + $0x8] sm:$0xff pattern:$0x75316420]
    %v7500 = vld.sshfl [vmem:[#allocation1 + $0x10] sm:$0xff pattern:$0x75316420]
    %v7501 = vld.sshfl [vmem:[#allocation1 + $0x18] sm:$0xff pattern:$0x75316420]
    %v7502 = vld.sshfl [vmem:[#allocation1 + $0x20] sm:$0xff pattern:$0x75316420]
    %v7503 = vld.sshfl [vmem:[#allocation1 + $0x28] sm:$0xff pattern:$0x75316420]
    %v7504 = vld.sshfl [vmem:[#allocation1 + $0x30] sm:$0xff pattern:$0x75316420]
    %v7505 = vld.sshfl [vmem:[#allocation1 + $0x38] sm:$0xff pattern:$0x75316420]
    %7506 = vst [vmem:[#allocation1] ss:$2 sm:$0xff] %v6600
    %7507 = vst [vmem:[%s7180] ss:$2 sm:$0xff] %v6607
    %7508 = vst [vmem:[%s7182] ss:$2 sm:$0xff] %v6997
    %7509 = vst [vmem:[%s7184] ss:$2 sm:$0xff] %v7000
    %7510 = vst [vmem:[%s7186] ss:$2 sm:$0xff] %v7017
    %7511 = vst [vmem:[%s7188] ss:$2 sm:$0xff] %v7023
    %7512 = vst [vmem:[%s7190] ss:$2 sm:$0xff] %v7019
    %7513 = vst [vmem:[%s7192] ss:$2 sm:$0xff] %v7024
    %v7514 = vld.sshfl [vmem:[#allocation1] sm:$0xff pattern:$0x75316420]
    %v7515 = vld.sshfl [vmem:[#allocation1 + $0x10] sm:$0xff pattern:$0x75316420]
    %v7516 = vld.sshfl [vmem:[#allocation1 + $0x18] sm:$0xff pattern:$0x75316420]
    %v7517 = vld.sshfl [vmem:[#allocation1 + $0x20] sm:$0xff pattern:$0x75316420]
    %v7518 = vld.sshfl [vmem:[#allocation1 + $0x28] sm:$0xff pattern:$0x75316420]
    %v7519 = vld.sshfl [vmem:[#allocation1 + $0x30] sm:$0xff pattern:$0x75316420]
    %v7520 = vld.sshfl [vmem:[#allocation1 + $0x38] sm:$0xff pattern:$0x75316420]
    %7521 = vst [vmem:[#allocation1] ss:$2 sm:$0xff] %v7021
    %7522 = vst [vmem:[%s7180] ss:$2 sm:$0xff] %v7025
    %7523 = vst [vmem:[%s7182] ss:$2 sm:$0xff] %v7022
    %7524 = vst [vmem:[%s7184] ss:$2 sm:$0xff] %v6608
    %7525 = vst [vmem:[%s7186] ss:$2 sm:$0xff] %v7026
    %7526 = vst [vmem:[%s7188] ss:$2 sm:$0xff] %v7031
    %7527 = vst [vmem:[%s7190] ss:$2 sm:$0xff] %v7027
    %7528 = vst [vmem:[%s7192] ss:$2 sm:$0xff] %v7033
    %v7529 = vld.sshfl [vmem:[#allocation1] sm:$0xff pattern:$0x75316420]
    %v7530 = vld.sshfl [vmem:[#allocation1 + $0x8] sm:$0xff pattern:$0x75316420]
    %v7531 = vld.sshfl [vmem:[#allocation1 + $0x10] sm:$0xff pattern:$0x75316420]
    %v7532 = vld.sshfl [vmem:[#allocation1 + $0x20] sm:$0xff pattern:$0x75316420]
    %v7533 = vld.sshfl [vmem:[#allocation1 + $0x28] sm:$0xff pattern:$0x75316420]
    %v7534 = vld.sshfl [vmem:[#allocation1 + $0x30] sm:$0xff pattern:$0x75316420]
    %v7535 = vld.sshfl [vmem:[#allocation1 + $0x38] sm:$0xff pattern:$0x75316420]
    %7536 = vst [vmem:[#allocation1] ss:$2 sm:$0xff] %v7028
    %7537 = vst [vmem:[%s7180] ss:$2 sm:$0xff] %v7035
    %7538 = vst [vmem:[%s7182] ss:$2 sm:$0xff] %v7029
    %7539 = vst [vmem:[%s7184] ss:$2 sm:$0xff] %v7037
    %7540 = vst [vmem:[%s7186] ss:$2 sm:$0xff] %v6631
    %7541 = vst [vmem:[%s7188] ss:$2 sm:$0xff] %v6807
    %7542 = vst [vmem:[%s7190] ss:$2 sm:$0xff] %v7038
    %7543 = vst [vmem:[%s7192] ss:$2 sm:$0xff] %v7042
    %v7544 = vld.sshfl [vmem:[#allocation1] sm:$0xff pattern:$0x75316420]
    %v7545 = vld.sshfl [vmem:[#allocation1 + $0x8] sm:$0xff pattern:$0x75316420]
    %v7546 = vld.sshfl [vmem:[#allocation1 + $0x10] sm:$0xff pattern:$0x75316420]
    %v7547 = vld.sshfl [vmem:[#allocation1 + $0x18] sm:$0xff pattern:$0x75316420]
    %v7548 = vld.sshfl [vmem:[#allocation1 + $0x20] sm:$0xff pattern:$0x75316420]
    %v7549 = vld.sshfl [vmem:[#allocation1 + $0x30] sm:$0xff pattern:$0x75316420]
    %v7550 = vld.sshfl [vmem:[#allocation1 + $0x38] sm:$0xff pattern:$0x75316420]
    %7551 = vst [vmem:[#allocation1] ss:$2 sm:$0xff] %v7039
    %7552 = vst [vmem:[%s7180] ss:$2 sm:$0xff] %v7043
    %7553 = vst [vmem:[%s7182] ss:$2 sm:$0xff] %v7040
    %7554 = vst [vmem:[%s7184] ss:$2 sm:$0xff] %v7044
    %7555 = vst [vmem:[%s7186] ss:$2 sm:$0xff] %v7041
    %7556 = vst [vmem:[%s7188] ss:$2 sm:$0xff] %v7045
    %7557 = vst [vmem:[%s7190] ss:$2 sm:$0xff] %v6632
    %7558 = vst [vmem:[%s7192] ss:$2 sm:$0xff] %v6639
    %v7559 = vld.sshfl [vmem:[#allocation1] sm:$0xff pattern:$0x75316420]
    %v7560 = vld.sshfl [vmem:[#allocation1 + $0x8] sm:$0xff pattern:$0x75316420]
    %v7561 = vld.sshfl [vmem:[#allocation1 + $0x10] sm:$0xff pattern:$0x75316420]
    %v7562 = vld.sshfl [vmem:[#allocation1 + $0x18] sm:$0xff pattern:$0x75316420]
    %v7563 = vld.sshfl [vmem:[#allocation1 + $0x20] sm:$0xff pattern:$0x75316420]
    %v7564 = vld.sshfl [vmem:[#allocation1 + $0x28] sm:$0xff pattern:$0x75316420]
    %v7565 = vld.sshfl [vmem:[#allocation1 + $0x30] sm:$0xff pattern:$0x75316420]
    %7566 = vst [vmem:[#allocation1] ss:$2 sm:$0xff] %v7047
    %7567 = vst [vmem:[%s7180] ss:$2 sm:$0xff] %v7054
    %7568 = vst [vmem:[%s7182] ss:$2 sm:$0xff] %v7049
    %7569 = vst [vmem:[%s7184] ss:$2 sm:$0xff] %v7055
    %7570 = vst [vmem:[%s7186] ss:$2 sm:$0xff] %v7051
    %7571 = vst [vmem:[%s7188] ss:$2 sm:$0xff] %v7056
    %7572 = vst [vmem:[%s7190] ss:$2 sm:$0xff] %v7053
    %7573 = vst [vmem:[%s7192] ss:$2 sm:$0xff] %v7057
    %v7574 = vld.sshfl [vmem:[#allocation1] sm:$0xff pattern:$0x75316420]
    %v7575 = vld.sshfl [vmem:[#allocation1 + $0x8] sm:$0xff pattern:$0x75316420]
    %v7576 = vld.sshfl [vmem:[#allocation1 + $0x10] sm:$0xff pattern:$0x75316420]
    %v7577 = vld.sshfl [vmem:[#allocation1 + $0x18] sm:$0xff pattern:$0x75316420]
    %v7578 = vld.sshfl [vmem:[#allocation1 + $0x20] sm:$0xff pattern:$0x75316420]
    %v7579 = vld.sshfl [vmem:[#allocation1 + $0x28] sm:$0xff pattern:$0x75316420]
    %v7580 = vld.sshfl [vmem:[#allocation1 + $0x30] sm:$0xff pattern:$0x75316420]
    %v7581 = vld.sshfl [vmem:[#allocation1 + $0x38] sm:$0xff pattern:$0x75316420]
    %7582 = vst [vmem:[#allocation1] ss:$2 sm:$0xff] %v6814
    %7583 = vst [vmem:[%s7180] ss:$2 sm:$0xff] %v6640
    %7584 = vst [vmem:[%s7182] ss:$2 sm:$0xff] %v7029
    %7585 = vst [vmem:[%s7184] ss:$2 sm:$0xff] %v7037
    %7586 = vst [vmem:[%s7186] ss:$2 sm:$0xff] %v7058
    %7587 = vst [vmem:[%s7188] ss:$2 sm:$0xff] %v7062
    %7588 = vst [vmem:[%s7190] ss:$2 sm:$0xff] %v7059
    %7589 = vst [vmem:[%s7192] ss:$2 sm:$0xff] %v7064
    %v7590 = vld.sshfl [vmem:[#allocation1] sm:$0xff pattern:$0x75316420]
    %v7591 = vld.sshfl [vmem:[#allocation1 + $0x10] sm:$0xff pattern:$0x75316420]
    %v7592 = vld.sshfl [vmem:[#allocation1 + $0x18] sm:$0xff pattern:$0x75316420]
    %v7593 = vld.sshfl [vmem:[#allocation1 + $0x20] sm:$0xff pattern:$0x75316420]
    %v7594 = vld.sshfl [vmem:[#allocation1 + $0x28] sm:$0xff pattern:$0x75316420]
    %v7595 = vld.sshfl [vmem:[#allocation1 + $0x30] sm:$0xff pattern:$0x75316420]
    %v7596 = vld.sshfl [vmem:[#allocation1 + $0x38] sm:$0xff pattern:$0x75316420]
    %7597 = vst [vmem:[#allocation1] ss:$2 sm:$0xff] %v7060
    %7598 = vst [vmem:[%s7180] ss:$2 sm:$0xff] %v7066
    %7599 = vst [vmem:[%s7182] ss:$2 sm:$0xff] %v6647
    %7600 = vst [vmem:[%s7184] ss:$2 sm:$0xff] %v6820
    %7601 = vst [vmem:[%s7186] ss:$2 sm:$0xff] %v7041
    %7602 = vst [vmem:[%s7188] ss:$2 sm:$0xff] %v7045
    %7603 = vst [vmem:[%s7190] ss:$2 sm:$0xff] %v7067
    %7604 = vst [vmem:[%s7192] ss:$2 sm:$0xff] %v7070
    %v7605 = vld.sshfl [vmem:[#allocation1] sm:$0xff pattern:$0x75316420]
    %v7606 = vld.sshfl [vmem:[#allocation1 + $0x8] sm:$0xff pattern:$0x75316420]
    %v7607 = vld.sshfl [vmem:[#allocation1 + $0x10] sm:$0xff pattern:$0x75316420]
    %v7608 = vld.sshfl [vmem:[#allocation1 + $0x20] sm:$0xff pattern:$0x75316420]
    %v7609 = vld.sshfl [vmem:[#allocation1 + $0x28] sm:$0xff pattern:$0x75316420]
    %v7610 = vld.sshfl [vmem:[#allocation1 + $0x30] sm:$0xff pattern:$0x75316420]
    %v7611 = vld.sshfl [vmem:[#allocation1 + $0x38] sm:$0xff pattern:$0x75316420]
    %7612 = vst [vmem:[#allocation1] ss:$2 sm:$0xff] %v7068
    %7613 = vst [vmem:[%s7180] ss:$2 sm:$0xff] %v7071
    %7614 = vst [vmem:[%s7182] ss:$2 sm:$0xff] %v7069
    %7615 = vst [vmem:[%s7184] ss:$2 sm:$0xff] %v7072
    %7616 = vst [vmem:[%s7186] ss:$2 sm:$0xff] %v6648
    %7617 = vst [vmem:[%s7188] ss:$2 sm:$0xff] %v6655
    %7618 = vst [vmem:[%s7190] ss:$2 sm:$0xff] %v7053
    %7619 = vst [vmem:[%s7192] ss:$2 sm:$0xff] %v7057
    %v7620 = vld.sshfl [vmem:[#allocation1] sm:$0xff pattern:$0x75316420]
    %v7621 = vld.sshfl [vmem:[#allocation1 + $0x8] sm:$0xff pattern:$0x75316420]
    %v7622 = vld.sshfl [vmem:[#allocation1 + $0x10] sm:$0xff pattern:$0x75316420]
    %v7623 = vld.sshfl [vmem:[#allocation1 + $0x18] sm:$0xff pattern:$0x75316420]
    %v7624 = vld.sshfl [vmem:[#allocation1 + $0x20] sm:$0xff pattern:$0x75316420]
    %v7625 = vld.sshfl [vmem:[#allocation1 + $0x30] sm:$0xff pattern:$0x75316420]
    %v7626 = vld.sshfl [vmem:[#allocation1 + $0x38] sm:$0xff pattern:$0x75316420]
    %7627 = vst [vmem:[#allocation1] ss:$2 sm:$0xff] %v7074
    %7628 = vst [vmem:[%s7180] ss:$2 sm:$0xff] %v7079
    %7629 = vst [vmem:[%s7182] ss:$2 sm:$0xff] %v7076
    %7630 = vst [vmem:[%s7184] ss:$2 sm:$0xff] %v7080
    %7631 = vst [vmem:[%s7186] ss:$2 sm:$0xff] %v7078
    %7632 = vst [vmem:[%s7188] ss:$2 sm:$0xff] %v7081
    %7633 = vst [vmem:[%s7190] ss:$2 sm:$0xff] %v6826
    %7634 = vst [vmem:[%s7192] ss:$2 sm:$0xff] %v6656
    %v7635 = vld.sshfl [vmem:[#allocation1] sm:$0xff pattern:$0x75316420]
    %v7636 = vld.sshfl [vmem:[#allocation1 + $0x8] sm:$0xff pattern:$0x75316420]
    %v7637 = vld.sshfl [vmem:[#allocation1 + $0x10] sm:$0xff pattern:$0x75316420]
    %v7638 = vld.sshfl [vmem:[#allocation1 + $0x18] sm:$0xff pattern:$0x75316420]
    %v7639 = vld.sshfl [vmem:[#allocation1 + $0x20] sm:$0xff pattern:$0x75316420]
    %v7640 = vld.sshfl [vmem:[#allocation1 + $0x28] sm:$0xff pattern:$0x75316420]
    %v7641 = vld.sshfl [vmem:[#allocation1 + $0x30] sm:$0xff pattern:$0x75316420]
    %7642 = vst [vmem:[#allocation1] ss:$2 sm:$0xff] %v7060
    %7643 = vst [vmem:[%s7180] ss:$2 sm:$0xff] %v7066
    %7644 = vst [vmem:[%s7182] ss:$2 sm:$0xff] %v7082
    %7645 = vst [vmem:[%s7184] ss:$2 sm:$0xff] %v7086
    %7646 = vst [vmem:[%s7186] ss:$2 sm:$0xff] %v7083
    %7647 = vst [vmem:[%s7188] ss:$2 sm:$0xff] %v7088
    %7648 = vst [vmem:[%s7190] ss:$2 sm:$0xff] %v7084
    %7649 = vst [vmem:[%s7192] ss:$2 sm:$0xff] %v7090
    %v7650 = vld.sshfl [vmem:[#allocation1] sm:$0xff pattern:$0x75316420]
    %v7651 = vld.sshfl [vmem:[#allocation1 + $0x8] sm:$0xff pattern:$0x75316420]
    %v7652 = vld.sshfl [vmem:[#allocation1 + $0x10] sm:$0xff pattern:$0x75316420]
    %v7653 = vld.sshfl [vmem:[#allocation1 + $0x18] sm:$0xff pattern:$0x75316420]
    %v7654 = vld.sshfl [vmem:[#allocation1 + $0x20] sm:$0xff pattern:$0x75316420]
    %v7655 = vld.sshfl [vmem:[#allocation1 + $0x28] sm:$0xff pattern:$0x75316420]
    %v7656 = vld.sshfl [vmem:[#allocation1 + $0x30] sm:$0xff pattern:$0x75316420]
    %v7657 = vld.sshfl [vmem:[#allocation1 + $0x38] sm:$0xff pattern:$0x75316420]
    %7658 = vst [vmem:[#allocation1] ss:$2 sm:$0xff] %v6663
    %7659 = vst [vmem:[%s7180] ss:$2 sm:$0xff] %v6832
    %7660 = vst [vmem:[%s7182] ss:$2 sm:$0xff] %v7069
    %7661 = vst [vmem:[%s7184] ss:$2 sm:$0xff] %v7072
    %7662 = vst [vmem:[%s7186] ss:$2 sm:$0xff] %v7091
    %7663 = vst [vmem:[%s7188] ss:$2 sm:$0xff] %v7094
    %7664 = vst [vmem:[%s7190] ss:$2 sm:$0xff] %v7092
    %7665 = vst [vmem:[%s7192] ss:$2 sm:$0xff] %v7095
    %v7666 = vld.sshfl [vmem:[#allocation1] sm:$0xff pattern:$0x75316420]
    %v7667 = vld.sshfl [vmem:[#allocation1 + $0x10] sm:$0xff pattern:$0x75316420]
    %v7668 = vld.sshfl [vmem:[#allocation1 + $0x18] sm:$0xff pattern:$0x75316420]
    %v7669 = vld.sshfl [vmem:[#allocation1 + $0x20] sm:$0xff pattern:$0x75316420]
    %v7670 = vld.sshfl [vmem:[#allocation1 + $0x28] sm:$0xff pattern:$0x75316420]
    %v7671 = vld.sshfl [vmem:[#allocation1 + $0x30] sm:$0xff pattern:$0x75316420]
    %v7672 = vld.sshfl [vmem:[#allocation1 + $0x38] sm:$0xff pattern:$0x75316420]
    %7673 = vst [vmem:[#allocation1] ss:$2 sm:$0xff] %v7093
    %7674 = vst [vmem:[%s7180] ss:$2 sm:$0xff] %v7096
    %7675 = vst [vmem:[%s7182] ss:$2 sm:$0xff] %v6664
    %7676 = vst [vmem:[%s7184] ss:$2 sm:$0xff] %v6671
    %7677 = vst [vmem:[%s7186] ss:$2 sm:$0xff] %v7078
    %7678 = vst [vmem:[%s7188] ss:$2 sm:$0xff] %v7081
    %7679 = vst [vmem:[%s7190] ss:$2 sm:$0xff] %v7098
    %7680 = vst [vmem:[%s7192] ss:$2 sm:$0xff] %v7103
    %v7681 = vld.sshfl [vmem:[#allocation1] sm:$0xff pattern:$0x75316420]
    %v7682 = vld.sshfl [vmem:[#allocation1 + $0x8] sm:$0xff pattern:$0x75316420]
    %v7683 = vld.sshfl [vmem:[#allocation1 + $0x10] sm:$0xff pattern:$0x75316420]
    %v7684 = vld.sshfl [vmem:[#allocation1 + $0x20] sm:$0xff pattern:$0x75316420]
    %v7685 = vld.sshfl [vmem:[#allocation1 + $0x28] sm:$0xff pattern:$0x75316420]
    %v7686 = vld.sshfl [vmem:[#allocation1 + $0x30] sm:$0xff pattern:$0x75316420]
    %v7687 = vld.sshfl [vmem:[#allocation1 + $0x38] sm:$0xff pattern:$0x75316420]
    %7688 = vst [vmem:[#allocation1] ss:$2 sm:$0xff] %v7100
    %7689 = vst [vmem:[%s7180] ss:$2 sm:$0xff] %v7104
    %7690 = vst [vmem:[%s7182] ss:$2 sm:$0xff] %v7102
    %7691 = vst [vmem:[%s7184] ss:$2 sm:$0xff] %v7105
    %7692 = vst [vmem:[%s7186] ss:$2 sm:$0xff] %v6838
    %7693 = vst [vmem:[%s7188] ss:$2 sm:$0xff] %v6672
    %7694 = vst [vmem:[%s7190] ss:$2 sm:$0xff] %v7084
    %7695 = vst [vmem:[%s7192] ss:$2 sm:$0xff] %v7090
    %v7696 = vld.sshfl [vmem:[#allocation1] sm:$0xff pattern:$0x75316420]
    %v7697 = vld.sshfl [vmem:[#allocation1 + $0x8] sm:$0xff pattern:$0x75316420]
    %v7698 = vld.sshfl [vmem:[#allocation1 + $0x10] sm:$0xff pattern:$0x75316420]
    %v7699 = vld.sshfl [vmem:[#allocation1 + $0x18] sm:$0xff pattern:$0x75316420]
    %v7700 = vld.sshfl [vmem:[#allocation1 + $0x20] sm:$0xff pattern:$0x75316420]
    %v7701 = vld.sshfl [vmem:[#allocation1 + $0x30] sm:$0xff pattern:$0x75316420]
    %v7702 = vld.sshfl [vmem:[#allocation1 + $0x38] sm:$0xff pattern:$0x75316420]
    %7703 = vst [vmem:[#allocation1] ss:$2 sm:$0xff] %v7106
    %7704 = vst [vmem:[%s7180] ss:$2 sm:$0xff] %v7110
    %7705 = vst [vmem:[%s7182] ss:$2 sm:$0xff] %v7107
    %7706 = vst [vmem:[%s7184] ss:$2 sm:$0xff] %v7112
    %7707 = vst [vmem:[%s7186] ss:$2 sm:$0xff] %v7108
    %7708 = vst [vmem:[%s7188] ss:$2 sm:$0xff] %v7114
    %7709 = vst [vmem:[%s7190] ss:$2 sm:$0xff] %v6679
    %7710 = vst [vmem:[%s7192] ss:$2 sm:$0xff] %v6844
    %v7711 = vld.sshfl [vmem:[#allocation1] sm:$0xff pattern:$0x75316420]
    %v7712 = vld.sshfl [vmem:[#allocation1 + $0x8] sm:$0xff pattern:$0x75316420]
    %v7713 = vld.sshfl [vmem:[#allocation1 + $0x10] sm:$0xff pattern:$0x75316420]
    %v7714 = vld.sshfl [vmem:[#allocation1 + $0x18] sm:$0xff pattern:$0x75316420]
    %v7715 = vld.sshfl [vmem:[#allocation1 + $0x20] sm:$0xff pattern:$0x75316420]
    %v7716 = vld.sshfl [vmem:[#allocation1 + $0x28] sm:$0xff pattern:$0x75316420]
    %v7717 = vld.sshfl [vmem:[#allocation1 + $0x30] sm:$0xff pattern:$0x75316420]
    %7718 = vst [vmem:[#allocation1] ss:$2 sm:$0xff] %v7093
    %7719 = vst [vmem:[%s7180] ss:$2 sm:$0xff] %v7096
    %7720 = vst [vmem:[%s7182] ss:$2 sm:$0xff] %v7115
    %7721 = vst [vmem:[%s7184] ss:$2 sm:$0xff] %v7118
    %7722 = vst [vmem:[%s7186] ss:$2 sm:$0xff] %v7116
    %7723 = vst [vmem:[%s7188] ss:$2 sm:$0xff] %v7119
    %7724 = vst [vmem:[%s7190] ss:$2 sm:$0xff] %v7117
    %7725 = vst [vmem:[%s7192] ss:$2 sm:$0xff] %v7120
    %v7726 = vld.sshfl [vmem:[#allocation1] sm:$0xff pattern:$0x75316420]
    %v7727 = vld.sshfl [vmem:[#allocation1 + $0x8] sm:$0xff pattern:$0x75316420]
    %v7728 = vld.sshfl [vmem:[#allocation1 + $0x10] sm:$0xff pattern:$0x75316420]
    %v7729 = vld.sshfl [vmem:[#allocation1 + $0x18] sm:$0xff pattern:$0x75316420]
    %v7730 = vld.sshfl [vmem:[#allocation1 + $0x20] sm:$0xff pattern:$0x75316420]
    %v7731 = vld.sshfl [vmem:[#allocation1 + $0x28] sm:$0xff pattern:$0x75316420]
    %v7732 = vld.sshfl [vmem:[#allocation1 + $0x30] sm:$0xff pattern:$0x75316420]
    %v7733 = vld.sshfl [vmem:[#allocation1 + $0x38] sm:$0xff pattern:$0x75316420]
    %7734 = vst [vmem:[#allocation1] ss:$2 sm:$0xff] %v6680
    %7735 = vst [vmem:[%s7180] ss:$2 sm:$0xff] %v6687
    %7736 = vst [vmem:[%s7182] ss:$2 sm:$0xff] %v7102
    %7737 = vst [vmem:[%s7184] ss:$2 sm:$0xff] %v7105
    %7738 = vst [vmem:[%s7186] ss:$2 sm:$0xff] %v7122
    %7739 = vst [vmem:[%s7188] ss:$2 sm:$0xff] %v7127
    %7740 = vst [vmem:[%s7190] ss:$2 sm:$0xff] %v7124
    %7741 = vst [vmem:[%s7192] ss:$2 sm:$0xff] %v7128
    %v7742 = vld.sshfl [vmem:[#allocation1] sm:$0xff pattern:$0x75316420]
    %v7743 = vld.sshfl [vmem:[#allocation1 + $0x10] sm:$0xff pattern:$0x75316420]
    %v7744 = vld.sshfl [vmem:[#allocation1 + $0x18] sm:$0xff pattern:$0x75316420]
    %v7745 = vld.sshfl [vmem:[#allocation1 + $0x20] sm:$0xff pattern:$0x75316420]
    %v7746 = vld.sshfl [vmem:[#allocation1 + $0x28] sm:$0xff pattern:$0x75316420]
    %v7747 = vld.sshfl [vmem:[#allocation1 + $0x30] sm:$0xff pattern:$0x75316420]
    %v7748 = vld.sshfl [vmem:[#allocation1 + $0x38] sm:$0xff pattern:$0x75316420]
    %7749 = vst [vmem:[#allocation1] ss:$2 sm:$0xff] %v7126
    %7750 = vst [vmem:[%s7180] ss:$2 sm:$0xff] %v7129
    %7751 = vst [vmem:[%s7182] ss:$2 sm:$0xff] %v6850
    %7752 = vst [vmem:[%s7184] ss:$2 sm:$0xff] %v6688
    %7753 = vst [vmem:[%s7186] ss:$2 sm:$0xff] %v7108
    %7754 = vst [vmem:[%s7188] ss:$2 sm:$0xff] %v7114
    %7755 = vst [vmem:[%s7190] ss:$2 sm:$0xff] %v7130
    %7756 = vst [vmem:[%s7192] ss:$2 sm:$0xff] %v7134
    %v7757 = vld.sshfl [vmem:[#allocation1] sm:$0xff pattern:$0x75316420]
    %v7758 = vld.sshfl [vmem:[#allocation1 + $0x8] sm:$0xff pattern:$0x75316420]
    %v7759 = vld.sshfl [vmem:[#allocation1 + $0x10] sm:$0xff pattern:$0x75316420]
    %v7760 = vld.sshfl [vmem:[#allocation1 + $0x20] sm:$0xff pattern:$0x75316420]
    %v7761 = vld.sshfl [vmem:[#allocation1 + $0x28] sm:$0xff pattern:$0x75316420]
    %v7762 = vld.sshfl [vmem:[#allocation1 + $0x30] sm:$0xff pattern:$0x75316420]
    %v7763 = vld.sshfl [vmem:[#allocation1 + $0x38] sm:$0xff pattern:$0x75316420]
    %7764 = vst [vmem:[#allocation1] ss:$2 sm:$0xff] %v7131
    %7765 = vst [vmem:[%s7180] ss:$2 sm:$0xff] %v7136
    %7766 = vst [vmem:[%s7182] ss:$2 sm:$0xff] %v7132
    %7767 = vst [vmem:[%s7184] ss:$2 sm:$0xff] %v7138
    %7768 = vst [vmem:[%s7186] ss:$2 sm:$0xff] %v6695
    %7769 = vst [vmem:[%s7188] ss:$2 sm:$0xff] %v6856
    %7770 = vst [vmem:[%s7190] ss:$2 sm:$0xff] %v7117
    %7771 = vst [vmem:[%s7192] ss:$2 sm:$0xff] %v7120
    %v7772 = vld.sshfl [vmem:[#allocation1] sm:$0xff pattern:$0x75316420]
    %v7773 = vld.sshfl [vmem:[#allocation1 + $0x8] sm:$0xff pattern:$0x75316420]
    %v7774 = vld.sshfl [vmem:[#allocation1 + $0x10] sm:$0xff pattern:$0x75316420]
    %v7775 = vld.sshfl [vmem:[#allocation1 + $0x18] sm:$0xff pattern:$0x75316420]
    %v7776 = vld.sshfl [vmem:[#allocation1 + $0x20] sm:$0xff pattern:$0x75316420]
    %v7777 = vld.sshfl [vmem:[#allocation1 + $0x30] sm:$0xff pattern:$0x75316420]
    %v7778 = vld.sshfl [vmem:[#allocation1 + $0x38] sm:$0xff pattern:$0x75316420]
    %7779 = vst [vmem:[#allocation1] ss:$2 sm:$0xff] %v7139
    %7780 = vst [vmem:[%s7180] ss:$2 sm:$0xff] %v7142
    %7781 = vst [vmem:[%s7182] ss:$2 sm:$0xff] %v7140
    %7782 = vst [vmem:[%s7184] ss:$2 sm:$0xff] %v7143
    %7783 = vst [vmem:[%s7186] ss:$2 sm:$0xff] %v7141
    %7784 = vst [vmem:[%s7188] ss:$2 sm:$0xff] %v7144
    %7785 = vst [vmem:[%s7190] ss:$2 sm:$0xff] %v6696
    %7786 = vst [vmem:[%s7192] ss:$2 sm:$0xff] %v6703
    %v7787 = vld.sshfl [vmem:[#allocation1] sm:$0xff pattern:$0x75316420]
    %v7788 = vld.sshfl [vmem:[#allocation1 + $0x8] sm:$0xff pattern:$0x75316420]
    %v7789 = vld.sshfl [vmem:[#allocation1 + $0x10] sm:$0xff pattern:$0x75316420]
    %v7790 = vld.sshfl [vmem:[#allocation1 + $0x18] sm:$0xff pattern:$0x75316420]
    %v7791 = vld.sshfl [vmem:[#allocation1 + $0x20] sm:$0xff pattern:$0x75316420]
    %v7792 = vld.sshfl [vmem:[#allocation1 + $0x28] sm:$0xff pattern:$0x75316420]
    %v7793 = vld.sshfl [vmem:[#allocation1 + $0x30] sm:$0xff pattern:$0x75316420]
    %7794 = vst [vmem:[#allocation1] ss:$2 sm:$0xff] %v7126
    %7795 = vst [vmem:[%s7180] ss:$2 sm:$0xff] %v7129
    %7796 = vst [vmem:[%s7182] ss:$2 sm:$0xff] %v7146
    %7797 = vst [vmem:[%s7184] ss:$2 sm:$0xff] %v7151
    %7798 = vst [vmem:[%s7186] ss:$2 sm:$0xff] %v7148
    %7799 = vst [vmem:[%s7188] ss:$2 sm:$0xff] %v7152
    %7800 = vst [vmem:[%s7190] ss:$2 sm:$0xff] %v7150
    %7801 = vst [vmem:[%s7192] ss:$2 sm:$0xff] %v7153
    %v7802 = vld.sshfl [vmem:[#allocation1] sm:$0xff pattern:$0x75316420]
    %v7803 = vld.sshfl [vmem:[#allocation1 + $0x8] sm:$0xff pattern:$0x75316420]
    %v7804 = vld.sshfl [vmem:[#allocation1 + $0x10] sm:$0xff pattern:$0x75316420]
    %v7805 = vld.sshfl [vmem:[#allocation1 + $0x18] sm:$0xff pattern:$0x75316420]
    %v7806 = vld.sshfl [vmem:[#allocation1 + $0x20] sm:$0xff pattern:$0x75316420]
    %v7807 = vld.sshfl [vmem:[#allocation1 + $0x28] sm:$0xff pattern:$0x75316420]
    %v7808 = vld.sshfl [vmem:[#allocation1 + $0x30] sm:$0xff pattern:$0x75316420]
    %v7809 = vld.sshfl [vmem:[#allocation1 + $0x38] sm:$0xff pattern:$0x75316420]
    %7810 = vst [vmem:[#allocation1] ss:$2 sm:$0xff] %v6862
    %7811 = vst [vmem:[%s7180] ss:$2 sm:$0xff] %v6704
    %7812 = vst [vmem:[%s7182] ss:$2 sm:$0xff] %v7132
    %7813 = vst [vmem:[%s7184] ss:$2 sm:$0xff] %v7138
    %7814 = vst [vmem:[%s7186] ss:$2 sm:$0xff] %v7154
    %7815 = vst [vmem:[%s7188] ss:$2 sm:$0xff] %v7158
    %7816 = vst [vmem:[%s7190] ss:$2 sm:$0xff] %v7155
    %7817 = vst [vmem:[%s7192] ss:$2 sm:$0xff] %v7160
    %v7818 = vld.sshfl [vmem:[#allocation1] sm:$0xff pattern:$0x75316420]
    %v7819 = vld.sshfl [vmem:[#allocation1 + $0x10] sm:$0xff pattern:$0x75316420]
    %v7820 = vld.sshfl [vmem:[#allocation1 + $0x18] sm:$0xff pattern:$0x75316420]
    %v7821 = vld.sshfl [vmem:[#allocation1 + $0x20] sm:$0xff pattern:$0x75316420]
    %v7822 = vld.sshfl [vmem:[#allocation1 + $0x28] sm:$0xff pattern:$0x75316420]
    %v7823 = vld.sshfl [vmem:[#allocation1 + $0x30] sm:$0xff pattern:$0x75316420]
    %v7824 = vld.sshfl [vmem:[#allocation1 + $0x38] sm:$0xff pattern:$0x75316420]
    %7825 = vst [vmem:[#allocation1] ss:$2 sm:$0xff] %v7156
    %7826 = vst [vmem:[%s7180] ss:$2 sm:$0xff] %v7162
    %7827 = vst [vmem:[%s7182] ss:$2 sm:$0xff] %v6711
    %7828 = vst [vmem:[%s7184] ss:$2 sm:$0xff] %v6868
    %7829 = vst [vmem:[%s7186] ss:$2 sm:$0xff] %v7141
    %7830 = vst [vmem:[%s7188] ss:$2 sm:$0xff] %v7144
    %7831 = vst [vmem:[%s7190] ss:$2 sm:$0xff] %v7163
    %7832 = vst [vmem:[%s7192] ss:$2 sm:$0xff] %v7166
    %v7833 = vld.sshfl [vmem:[#allocation1] sm:$0xff pattern:$0x75316420]
    %v7834 = vld.sshfl [vmem:[#allocation1 + $0x8] sm:$0xff pattern:$0x75316420]
    %v7835 = vld.sshfl [vmem:[#allocation1 + $0x10] sm:$0xff pattern:$0x75316420]
    %v7836 = vld.sshfl [vmem:[#allocation1 + $0x20] sm:$0xff pattern:$0x75316420]
    %v7837 = vld.sshfl [vmem:[#allocation1 + $0x28] sm:$0xff pattern:$0x75316420]
    %v7838 = vld.sshfl [vmem:[#allocation1 + $0x30] sm:$0xff pattern:$0x75316420]
    %v7839 = vld.sshfl [vmem:[#allocation1 + $0x38] sm:$0xff pattern:$0x75316420]
    %7840 = vst [vmem:[#allocation1] ss:$2 sm:$0xff] %v7164
    %7841 = vst [vmem:[%s7180] ss:$2 sm:$0xff] %v7167
    %7842 = vst [vmem:[%s7182] ss:$2 sm:$0xff] %v7165
    %7843 = vst [vmem:[%s7184] ss:$2 sm:$0xff] %v7168
    %7844 = vst [vmem:[%s7186] ss:$2 sm:$0xff] %v6712
    %7845 = vst [vmem:[%s7188] ss:$2 sm:$0xff] %v6719
    %7846 = vst [vmem:[%s7190] ss:$2 sm:$0xff] %v7150
    %7847 = vst [vmem:[%s7192] ss:$2 sm:$0xff] %v7153
    %v7848 = vld.sshfl [vmem:[#allocation1] sm:$0xff pattern:$0x75316420]
    %v7849 = vld.sshfl [vmem:[#allocation1 + $0x8] sm:$0xff pattern:$0x75316420]
    %v7850 = vld.sshfl [vmem:[#allocation1 + $0x10] sm:$0xff pattern:$0x75316420]
    %v7851 = vld.sshfl [vmem:[#allocation1 + $0x18] sm:$0xff pattern:$0x75316420]
    %v7852 = vld.sshfl [vmem:[#allocation1 + $0x20] sm:$0xff pattern:$0x75316420]
    %v7853 = vld.sshfl [vmem:[#allocation1 + $0x30] sm:$0xff pattern:$0x75316420]
    %v7854 = vld.sshfl [vmem:[#allocation1 + $0x38] sm:$0xff pattern:$0x75316420]
    %7855 = vst [vmem:[#allocation1] ss:$2 sm:$0xff] %v7170
    %7856 = vst [vmem:[%s7180] ss:$2 sm:$0xff] %v7176
    %7857 = vst [vmem:[%s7182] ss:$2 sm:$0xff] %v7172
    %7858 = vst [vmem:[%s7184] ss:$2 sm:$0xff] %v7177
    %7859 = vst [vmem:[%s7186] ss:$2 sm:$0xff] %v7174
    %7860 = vst [vmem:[%s7188] ss:$2 sm:$0xff] %v7178
    %7861 = vst [vmem:[%s7190] ss:$2 sm:$0xff] %v7175
    %7862 = vst [vmem:[%s7192] ss:$2 sm:$0xff] %v6720
    %v7863 = vld.sshfl [vmem:[#allocation1] sm:$0xff pattern:$0x75316420]
    %v7864 = vld.sshfl [vmem:[#allocation1 + $0x8] sm:$0xff pattern:$0x75316420]
    %v7865 = vld.sshfl [vmem:[#allocation1 + $0x10] sm:$0xff pattern:$0x75316420]
    %v7866 = vld.sshfl [vmem:[#allocation1 + $0x18] sm:$0xff pattern:$0x75316420]
    %v7867 = vld.sshfl [vmem:[#allocation1 + $0x20] sm:$0xff pattern:$0x75316420]
    %v7868 = vld.sshfl [vmem:[#allocation1 + $0x28] sm:$0xff pattern:$0x75316420]
    %v7869 = vld.sshfl [vmem:[#allocation1 + $0x30] sm:$0xff pattern:$0x75316420]
    %v8194 = vpack.c.bf16 %v7211, %v7194
    %v8195 = vpack.c.bf16 %v7212, %v7195
    %v8196 = vpack.c.bf16 %v7213, %v7196
    %v8197 = vpack.c.bf16 %v7214, %v7197
    %v8198 = vpack.c.bf16 %v7215, %v7198
    %v8199 = vpack.c.bf16 %v7216, %v7199
    %v8200 = vpack.c.bf16 %v7225, %v7200
    %v8201 = vpack.c.bf16 %v7226, %v7201
    %v8202 = vpack.c.bf16 %v7227, %v7210
    %v8203 = vpack.c.bf16 %v7245, %v7228
    %v8204 = vpack.c.bf16 %v7246, %v7229
    %v8205 = vpack.c.bf16 %v7255, %v7230
    %v8206 = vpack.c.bf16 %v7256, %v7231
    %v8207 = vpack.c.bf16 %v7257, %v7240
    %v8208 = vpack.c.bf16 %v7258, %v7241
    %v8209 = vpack.c.bf16 %v7259, %v7242
    %v8210 = vpack.c.bf16 %v7260, %v7243
    %v8211 = vpack.c.bf16 %v7261, %v7244
    %v8212 = vpack.c.bf16 %v7287, %v7270
    %v8213 = vpack.c.bf16 %v7288, %v7271
    %v8214 = vpack.c.bf16 %v7289, %v7272
    %v8215 = vpack.c.bf16 %v7290, %v7273
    %v8216 = vpack.c.bf16 %v7291, %v7274
    %v8217 = vpack.c.bf16 %v7292, %v7275
    %v8218 = vpack.c.bf16 %v7301, %v7276
    %v8219 = vpack.c.bf16 %v7302, %v7277
    %v8220 = vpack.c.bf16 %v7303, %v7286
    %v8221 = vpack.c.bf16 %v7321, %v7304
    %v8222 = vpack.c.bf16 %v7322, %v7305
    %v8223 = vpack.c.bf16 %v7331, %v7306
    %v8224 = vpack.c.bf16 %v7332, %v7307
    %v8225 = vpack.c.bf16 %v7333, %v7316
    %v8226 = vpack.c.bf16 %v7334, %v7317
    %v8227 = vpack.c.bf16 %v7335, %v7318
    %v8228 = vpack.c.bf16 %v7336, %v7319
    %v8229 = vpack.c.bf16 %v7337, %v7320
    %v8230 = vpack.c.bf16 %v7363, %v7346
    %v8231 = vpack.c.bf16 %v7364, %v7347
    %v8232 = vpack.c.bf16 %v7365, %v7348
    %v8233 = vpack.c.bf16 %v7366, %v7349
    %v8234 = vpack.c.bf16 %v7367, %v7350
    %v8235 = vpack.c.bf16 %v7368, %v7351
    %v8236 = vpack.c.bf16 %v7377, %v7352
    %v8237 = vpack.c.bf16 %v7378, %v7353
    %v8238 = vpack.c.bf16 %v7379, %v7362
    %v8239 = vpack.c.bf16 %v7397, %v7380
    %v8240 = vpack.c.bf16 %v7398, %v7381
    %v8241 = vpack.c.bf16 %v7407, %v7382
    %v8242 = vpack.c.bf16 %v7408, %v7383
    %v8243 = vpack.c.bf16 %v7409, %v7392
    %v8244 = vpack.c.bf16 %v7410, %v7393
    %v8245 = vpack.c.bf16 %v7411, %v7394
    %v8246 = vpack.c.bf16 %v7412, %v7395
    %v8247 = vpack.c.bf16 %v7413, %v7396
    %v8248 = vpack.c.bf16 %v7439, %v7422
    %v8249 = vpack.c.bf16 %v7440, %v7423
    %v8250 = vpack.c.bf16 %v7441, %v7424
    %v8251 = vpack.c.bf16 %v7442, %v7425
    %v8252 = vpack.c.bf16 %v7443, %v7426
    %v8253 = vpack.c.bf16 %v7444, %v7427
    %v8254 = vpack.c.bf16 %v7453, %v7428
    %v8255 = vpack.c.bf16 %v7454, %v7429
    %v8256 = vpack.c.bf16 %v7455, %v7438
    %v8257 = vpack.c.bf16 %v7473, %v7456
    %v8258 = vpack.c.bf16 %v7474, %v7457
    %v8259 = vpack.c.bf16 %v7483, %v7458
    %v8260 = vpack.c.bf16 %v7484, %v7459
    %v8261 = vpack.c.bf16 %v7485, %v7468
    %v8262 = vpack.c.bf16 %v7486, %v7469
    %v8263 = vpack.c.bf16 %v7487, %v7470
    %v8264 = vpack.c.bf16 %v7488, %v7471
    %v8265 = vpack.c.bf16 %v7489, %v7472
    %v8266 = vpack.c.bf16 %v7515, %v7498
    %v8267 = vpack.c.bf16 %v7516, %v7499
    %v8268 = vpack.c.bf16 %v7517, %v7500
    %v8269 = vpack.c.bf16 %v7518, %v7501
    %v8270 = vpack.c.bf16 %v7519, %v7502
    %v8271 = vpack.c.bf16 %v7520, %v7503
    %v8272 = vpack.c.bf16 %v7529, %v7504
    %v8273 = vpack.c.bf16 %v7530, %v7505
    %v8274 = vpack.c.bf16 %v7531, %v7514
    %v8275 = vpack.c.bf16 %v7549, %v7532
    %v8276 = vpack.c.bf16 %v7550, %v7533
    %v8277 = vpack.c.bf16 %v7559, %v7534
    %v8278 = vpack.c.bf16 %v7560, %v7535
    %v8279 = vpack.c.bf16 %v7561, %v7544
    %v8280 = vpack.c.bf16 %v7562, %v7545
    %v8281 = vpack.c.bf16 %v7563, %v7546
    %v8282 = vpack.c.bf16 %v7564, %v7547
    %v8283 = vpack.c.bf16 %v7565, %v7548
    %v8284 = vpack.c.bf16 %v7591, %v7574
    %v8285 = vpack.c.bf16 %v7592, %v7575
    %v8286 = vpack.c.bf16 %v7593, %v7576
    %v8287 = vpack.c.bf16 %v7594, %v7577
    %v8288 = vpack.c.bf16 %v7595, %v7578
    %v8289 = vpack.c.bf16 %v7596, %v7579
    %v8290 = vpack.c.bf16 %v7605, %v7580
    %v8291 = vpack.c.bf16 %v7606, %v7581
    %v8292 = vpack.c.bf16 %v7607, %v7590
    %v8293 = vpack.c.bf16 %v7625, %v7608
    %v8294 = vpack.c.bf16 %v7626, %v7609
    %v8295 = vpack.c.bf16 %v7635, %v7610
    %v8296 = vpack.c.bf16 %v7636, %v7611
    %v8297 = vpack.c.bf16 %v7637, %v7620
    %v8298 = vpack.c.bf16 %v7638, %v7621
    %v8299 = vpack.c.bf16 %v7639, %v7622
    %v8300 = vpack.c.bf16 %v7640, %v7623
    %v8301 = vpack.c.bf16 %v7641, %v7624
    %v8302 = vpack.c.bf16 %v7667, %v7650
    %v8303 = vpack.c.bf16 %v7668, %v7651
    %v8304 = vpack.c.bf16 %v7669, %v7652
    %v8305 = vpack.c.bf16 %v7670, %v7653
    %v8306 = vpack.c.bf16 %v7671, %v7654
    %v8307 = vpack.c.bf16 %v7672, %v7655
    %v8308 = vpack.c.bf16 %v7681, %v7656
    %v8309 = vpack.c.bf16 %v7682, %v7657
    %v8310 = vpack.c.bf16 %v7683, %v7666
    %v8311 = vpack.c.bf16 %v7701, %v7684
    %v8312 = vpack.c.bf16 %v7702, %v7685
    %v8313 = vpack.c.bf16 %v7711, %v7686
    %v8314 = vpack.c.bf16 %v7712, %v7687
    %v8315 = vpack.c.bf16 %v7713, %v7696
    %v8316 = vpack.c.bf16 %v7714, %v7697
    %v8317 = vpack.c.bf16 %v7715, %v7698
    %v8318 = vpack.c.bf16 %v7716, %v7699
    %v8319 = vpack.c.bf16 %v7717, %v7700
    %v8320 = vpack.c.bf16 %v7743, %v7726
    %v8321 = vpack.c.bf16 %v7744, %v7727
    %v8322 = vpack.c.bf16 %v7745, %v7728
    %v8323 = vpack.c.bf16 %v7746, %v7729
    %v8324 = vpack.c.bf16 %v7747, %v7730
    %v8325 = vpack.c.bf16 %v7748, %v7731
    %v8326 = vpack.c.bf16 %v7757, %v7732
    %v8327 = vpack.c.bf16 %v7758, %v7733
    %v8328 = vpack.c.bf16 %v7759, %v7742
    %v8329 = vpack.c.bf16 %v7777, %v7760
    %v8330 = vpack.c.bf16 %v7778, %v7761
    %v8331 = vpack.c.bf16 %v7787, %v7762
    %v8332 = vpack.c.bf16 %v7788, %v7763
    %v8333 = vpack.c.bf16 %v7789, %v7772
    %v8334 = vpack.c.bf16 %v7790, %v7773
    %v8335 = vpack.c.bf16 %v7791, %v7774
    %v8336 = vpack.c.bf16 %v7792, %v7775
    %v8337 = vpack.c.bf16 %v7793, %v7776
    %v8338 = vpack.c.bf16 %v7819, %v7802
    %v8339 = vpack.c.bf16 %v7820, %v7803
    %v8340 = vpack.c.bf16 %v7821, %v7804
    %v8341 = vpack.c.bf16 %v7822, %v7805
    %v8342 = vpack.c.bf16 %v7823, %v7806
    %v8343 = vpack.c.bf16 %v7824, %v7807
    %v8344 = vpack.c.bf16 %v7833, %v7808
    %v8345 = vpack.c.bf16 %v7834, %v7809
    %v8346 = vpack.c.bf16 %v7835, %v7818
    %v8347 = vpack.c.bf16 %v7853, %v7836
    %v8348 = vpack.c.bf16 %v7854, %v7837
    %v8349 = vpack.c.bf16 %v7863, %v7838
    %v8350 = vpack.c.bf16 %v7864, %v7839
    %v8351 = vpack.c.bf16 %v7865, %v7848
    %v8352 = vpack.c.bf16 %v7866, %v7849
    %v8353 = vpack.c.bf16 %v7867, %v7850
    %v8354 = vpack.c.bf16 %v7868, %v7851
    %v8355 = vpack.c.bf16 %v7869, %v7852
    %v8356 = vld [vmem:[#allocation7] sm:$0xf]
    %v8357 = vld [vmem:[#allocation7 + $0x4] sm:$0xf]
    %v8358 = vld [vmem:[#allocation7 + $0x8] sm:$0xf]
    %v8359 = vld [vmem:[#allocation7 + $0xc] sm:$0xf]
    %v8360 = vld [vmem:[#allocation7 + $0x10] sm:$0xf]
    %v8361 = vld [vmem:[#allocation7 + $0x14] sm:$0xf]
    %v8362 = vld [vmem:[#allocation7 + $0x18] sm:$0xf]
    %v8363 = vld [vmem:[#allocation7 + $0x1c] sm:$0xf]
    %v8364 = vld [vmem:[#allocation7 + $0x20] sm:$0xf]
    %v8365 = vld [vmem:[#allocation7 + $0x24] sm:$0xf]
    %v8366 = vld [vmem:[#allocation7 + $0x28] sm:$0xf]
    %v8367 = vld [vmem:[#allocation7 + $0x2c] sm:$0xf]
    %v8368 = vld [vmem:[#allocation7 + $0x30] sm:$0xf]
    %v8369 = vld [vmem:[#allocation7 + $0x34] sm:$0xf]
    %v8370 = vld [vmem:[#allocation7 + $0x38] sm:$0xf]
    %v8371 = vld [vmem:[#allocation7 + $0x3c] sm:$0xf]
    %v8372 = vld [vmem:[#allocation7 + $0x40] sm:$0xf]
    %v8373 = vld [vmem:[#allocation7 + $0x44] sm:$0xf]
    %v8374 = vld [vmem:[#allocation7 + $0x48] sm:$0xf]
    %v8375 = vld [vmem:[#allocation7 + $0x4c] sm:$0xf]
    %v8376 = vld [vmem:[#allocation7 + $0x50] sm:$0xf]
    %v8377 = vld [vmem:[#allocation7 + $0x54] sm:$0xf]
    %v8378 = vld [vmem:[#allocation7 + $0x58] sm:$0xf]
    %v8379 = vld [vmem:[#allocation7 + $0x5c] sm:$0xf]
    %v8380 = vld [vmem:[#allocation7 + $0x60] sm:$0xf]
    %v8381 = vld [vmem:[#allocation7 + $0x64] sm:$0xf]
    %v8382 = vld [vmem:[#allocation7 + $0x68] sm:$0xf]
    %v8383 = vld [vmem:[#allocation7 + $0x6c] sm:$0xf]
    %v8384 = vld [vmem:[#allocation7 + $0x70] sm:$0xf]
    %v8385 = vld [vmem:[#allocation7 + $0x74] sm:$0xf]
    %v8386 = vld [vmem:[#allocation7 + $0x78] sm:$0xf]
    %v8387 = vld [vmem:[#allocation7 + $0x7c] sm:$0xf]
    %v8388 = vld [vmem:[#allocation7 + $0x80] sm:$0xf]
    %v8389 = vld [vmem:[#allocation7 + $0x84] sm:$0xf]
    %v8390 = vld [vmem:[#allocation7 + $0x88] sm:$0xf]
    %v8391 = vld [vmem:[#allocation7 + $0x8c] sm:$0xf]
    %v8392 = vld [vmem:[#allocation7 + $0x90] sm:$0xf]
    %v8393 = vld [vmem:[#allocation7 + $0x94] sm:$0xf]
    %v8394 = vld [vmem:[#allocation7 + $0x98] sm:$0xf]
    %v8395 = vld [vmem:[#allocation7 + $0x9c] sm:$0xf]
    %v8396 = vld [vmem:[#allocation7 + $0xa0] sm:$0xf]
    %v8397 = vld [vmem:[#allocation7 + $0xa4] sm:$0xf]
    %v8398 = vld [vmem:[#allocation7 + $0xa8] sm:$0xf]
    %v8399 = vld [vmem:[#allocation7 + $0xac] sm:$0xf]
    %v8400 = vld [vmem:[#allocation7 + $0xb0] sm:$0xf]
    %v8401 = vld [vmem:[#allocation7 + $0xb4] sm:$0xf]
    %v8402 = vld [vmem:[#allocation7 + $0xb8] sm:$0xf]
    %v8403 = vld [vmem:[#allocation7 + $0xbc] sm:$0xf]
    %v8404 = vld [vmem:[#allocation7 + $0xc0] sm:$0xf]
    %v8405 = vld [vmem:[#allocation7 + $0xc4] sm:$0xf]
    %v8406 = vld [vmem:[#allocation7 + $0xc8] sm:$0xf]
    %v8407 = vld [vmem:[#allocation7 + $0xcc] sm:$0xf]
    %v8408 = vld [vmem:[#allocation7 + $0xd0] sm:$0xf]
    %v8409 = vld [vmem:[#allocation7 + $0xd4] sm:$0xf]
    %v8410 = vld [vmem:[#allocation7 + $0xd8] sm:$0xf]
    %v8411 = vld [vmem:[#allocation7 + $0xdc] sm:$0xf]
    %v8412 = vld [vmem:[#allocation7 + $0xe0] sm:$0xf]
    %v8413 = vld [vmem:[#allocation7 + $0xe4] sm:$0xf]
    %v8414 = vld [vmem:[#allocation7 + $0xe8] sm:$0xf]
    %v8415 = vld [vmem:[#allocation7 + $0xec] sm:$0xf]
    %v8416 = vld [vmem:[#allocation7 + $0xf0] sm:$0xf]
    %v8417 = vld [vmem:[#allocation7 + $0xf4] sm:$0xf]
    %v8418 = vld [vmem:[#allocation7 + $0xf8] sm:$0xf]
    %v8419 = vld [vmem:[#allocation7 + $0xfc] sm:$0xf]
    %v8420 = vld [vmem:[#allocation7 + $0x100] sm:$0xf]
    %v8421 = vld [vmem:[#allocation7 + $0x104] sm:$0xf]
    %v8422 = vld [vmem:[#allocation7 + $0x108] sm:$0xf]
    %v8423 = vld [vmem:[#allocation7 + $0x10c] sm:$0xf]
    %v8424 = vld [vmem:[#allocation7 + $0x110] sm:$0xf]
    %v8425 = vld [vmem:[#allocation7 + $0x114] sm:$0xf]
    %v8426 = vld [vmem:[#allocation7 + $0x118] sm:$0xf]
    %v8427 = vld [vmem:[#allocation7 + $0x11c] sm:$0xf]
    %v8428 = vld [vmem:[#allocation7 + $0x120] sm:$0xf]
    %v8429 = vld [vmem:[#allocation7 + $0x124] sm:$0xf]
    %v8430 = vld [vmem:[#allocation7 + $0x128] sm:$0xf]
    %v8431 = vld [vmem:[#allocation7 + $0x12c] sm:$0xf]
    %v8432 = vld [vmem:[#allocation7 + $0x130] sm:$0xf]
    %v8433 = vld [vmem:[#allocation7 + $0x134] sm:$0xf]
    %v8434 = vld [vmem:[#allocation7 + $0x138] sm:$0xf]
    %v8435 = vld [vmem:[#allocation7 + $0x13c] sm:$0xf]
    %v8436 = vld [vmem:[#allocation7 + $0x140] sm:$0xf]
    %v8437 = vld [vmem:[#allocation7 + $0x144] sm:$0xf]
    %v8438 = vld [vmem:[#allocation7 + $0x148] sm:$0xf]
    %v8439 = vld [vmem:[#allocation7 + $0x14c] sm:$0xf]
    %v8440 = vld [vmem:[#allocation7 + $0x150] sm:$0xf]
    %v8441 = vld [vmem:[#allocation7 + $0x154] sm:$0xf]
    %v8442 = vld [vmem:[#allocation7 + $0x158] sm:$0xf]
    %v8443 = vld [vmem:[#allocation7 + $0x15c] sm:$0xf]
    %v8444 = vld [vmem:[#allocation7 + $0x160] sm:$0xf]
    %v8445 = vld [vmem:[#allocation7 + $0x164] sm:$0xf]
    %v8446 = vld [vmem:[#allocation7 + $0x168] sm:$0xf]
    %v8447 = vld [vmem:[#allocation7 + $0x16c] sm:$0xf]
    %v8448 = vld [vmem:[#allocation7 + $0x170] sm:$0xf]
    %v8449 = vld [vmem:[#allocation7 + $0x174] sm:$0xf]
    %v8450 = vld [vmem:[#allocation7 + $0x178] sm:$0xf]
    %v8451 = vld [vmem:[#allocation7 + $0x17c] sm:$0xf]
    %v8452 = vld [vmem:[#allocation7 + $0x180] sm:$0xf]
    %v8453 = vld [vmem:[#allocation7 + $0x184] sm:$0xf]
    %v8454 = vld [vmem:[#allocation7 + $0x188] sm:$0xf]
    %v8455 = vld [vmem:[#allocation7 + $0x18c] sm:$0xf]
    %v8456 = vld [vmem:[#allocation7 + $0x190] sm:$0xf]
    %v8457 = vld [vmem:[#allocation7 + $0x194] sm:$0xf]
    %v8458 = vld [vmem:[#allocation7 + $0x198] sm:$0xf]
    %v8459 = vld [vmem:[#allocation7 + $0x19c] sm:$0xf]
    %v8460 = vld [vmem:[#allocation7 + $0x1a0] sm:$0xf]
    %v8461 = vld [vmem:[#allocation7 + $0x1a4] sm:$0xf]
    %v8462 = vld [vmem:[#allocation7 + $0x1a8] sm:$0xf]
    %v8463 = vld [vmem:[#allocation7 + $0x1ac] sm:$0xf]
    %v8464 = vld [vmem:[#allocation7 + $0x1b0] sm:$0xf]
    %v8465 = vld [vmem:[#allocation7 + $0x1b4] sm:$0xf]
    %v8466 = vld [vmem:[#allocation7 + $0x1b8] sm:$0xf]
    %v8467 = vld [vmem:[#allocation7 + $0x1bc] sm:$0xf]
    %v8468 = vld [vmem:[#allocation7 + $0x1c0] sm:$0xf]
    %v8469 = vld [vmem:[#allocation7 + $0x1c4] sm:$0xf]
    %v8470 = vld [vmem:[#allocation7 + $0x1c8] sm:$0xf]
    %v8471 = vld [vmem:[#allocation7 + $0x1cc] sm:$0xf]
    %v8472 = vld [vmem:[#allocation7 + $0x1d0] sm:$0xf]
    %v8473 = vld [vmem:[#allocation7 + $0x1d4] sm:$0xf]
    %v8474 = vld [vmem:[#allocation7 + $0x1d8] sm:$0xf]
    %v8475 = vld [vmem:[#allocation7 + $0x1dc] sm:$0xf]
    %v8476 = vld [vmem:[#allocation7 + $0x1e0] sm:$0xf]
    %v8477 = vld [vmem:[#allocation7 + $0x1e4] sm:$0xf]
    %v8478 = vld [vmem:[#allocation7 + $0x1e8] sm:$0xf]
    %v8479 = vld [vmem:[#allocation7 + $0x1ec] sm:$0xf]
    %v8480 = vld [vmem:[#allocation7 + $0x1f0] sm:$0xf]
    %v8481 = vld [vmem:[#allocation7 + $0x1f4] sm:$0xf]
    %v8482 = vld [vmem:[#allocation7 + $0x1f8] sm:$0xf]
    %v8483 = vld [vmem:[#allocation7 + $0x1fc] sm:$0xf]
    %v8484 = vld [vmem:[#allocation7 + $0x200] sm:$0xf]
    %v8485 = vld [vmem:[#allocation7 + $0x204] sm:$0xf]
    %v8486 = vld [vmem:[#allocation7 + $0x208] sm:$0xf]
    %v8487 = vld [vmem:[#allocation7 + $0x20c] sm:$0xf]
    %v8488 = vld [vmem:[#allocation7 + $0x210] sm:$0xf]
    %v8489 = vld [vmem:[#allocation7 + $0x214] sm:$0xf]
    %v8490 = vld [vmem:[#allocation7 + $0x218] sm:$0xf]
    %v8491 = vld [vmem:[#allocation7 + $0x21c] sm:$0xf]
    %v8492 = vld [vmem:[#allocation7 + $0x220] sm:$0xf]
    %v8493 = vld [vmem:[#allocation7 + $0x224] sm:$0xf]
    %v8494 = vld [vmem:[#allocation7 + $0x228] sm:$0xf]
    %v8495 = vld [vmem:[#allocation7 + $0x22c] sm:$0xf]
    %v8496 = vld [vmem:[#allocation7 + $0x230] sm:$0xf]
    %v8497 = vld [vmem:[#allocation7 + $0x234] sm:$0xf]
    %v8498 = vld [vmem:[#allocation7 + $0x238] sm:$0xf]
    %v8499 = vld [vmem:[#allocation7 + $0x23c] sm:$0xf]
    %v8500 = vld [vmem:[%s4] sm:$0x1]
    %v8502 = vperm.slane %v8500, 0
    %v8648 = vunpack.c.l.b16 %v8356
    %v8649 = vunpack.c.l.b16 %v8357
    %v8650 = vunpack.c.l.b16 %v8358
    %v8651 = vunpack.c.l.b16 %v8359
    %v8652 = vunpack.c.l.b16 %v8360
    %v8653 = vunpack.c.l.b16 %v8361
    %v8654 = vunpack.c.l.b16 %v8362
    %v8655 = vunpack.c.l.b16 %v8363
    %v8656 = vunpack.c.l.b16 %v8364
    %v8657 = vunpack.c.l.b16 %v8365
    %v8658 = vunpack.c.l.b16 %v8366
    %v8659 = vunpack.c.l.b16 %v8367
    %v8660 = vunpack.c.l.b16 %v8368
    %v8661 = vunpack.c.l.b16 %v8369
    %v8662 = vunpack.c.l.b16 %v8370
    %v8663 = vunpack.c.l.b16 %v8371
    %v8664 = vunpack.c.l.b16 %v8372
    %v8665 = vunpack.c.l.b16 %v8373
    %v8666 = vunpack.c.l.b16 %v8374
    %v8667 = vunpack.c.l.b16 %v8375
    %v8668 = vunpack.c.l.b16 %v8376
    %v8669 = vunpack.c.l.b16 %v8377
    %v8670 = vunpack.c.l.b16 %v8378
    %v8671 = vunpack.c.l.b16 %v8379
    %v8672 = vunpack.c.l.b16 %v8380
    %v8673 = vunpack.c.l.b16 %v8381
    %v8674 = vunpack.c.l.b16 %v8382
    %v8675 = vunpack.c.l.b16 %v8383
    %v8676 = vunpack.c.l.b16 %v8384
    %v8677 = vunpack.c.l.b16 %v8385
    %v8678 = vunpack.c.l.b16 %v8386
    %v8679 = vunpack.c.l.b16 %v8387
    %v8680 = vunpack.c.l.b16 %v8388
    %v8681 = vunpack.c.l.b16 %v8389
    %v8682 = vunpack.c.l.b16 %v8390
    %v8683 = vunpack.c.l.b16 %v8391
    %v8684 = vunpack.c.l.b16 %v8392
    %v8685 = vunpack.c.l.b16 %v8393
    %v8686 = vunpack.c.l.b16 %v8394
    %v8687 = vunpack.c.l.b16 %v8395
    %v8688 = vunpack.c.l.b16 %v8396
    %v8689 = vunpack.c.l.b16 %v8397
    %v8690 = vunpack.c.l.b16 %v8398
    %v8691 = vunpack.c.l.b16 %v8399
    %v8692 = vunpack.c.l.b16 %v8400
    %v8693 = vunpack.c.l.b16 %v8401
    %v8694 = vunpack.c.l.b16 %v8402
    %v8695 = vunpack.c.l.b16 %v8403
    %v8696 = vunpack.c.l.b16 %v8404
    %v8697 = vunpack.c.l.b16 %v8405
    %v8698 = vunpack.c.l.b16 %v8406
    %v8699 = vunpack.c.l.b16 %v8407
    %v8700 = vunpack.c.l.b16 %v8408
    %v8701 = vunpack.c.l.b16 %v8409
    %v8702 = vunpack.c.l.b16 %v8410
    %v8703 = vunpack.c.l.b16 %v8411
    %v8704 = vunpack.c.l.b16 %v8412
    %v8705 = vunpack.c.l.b16 %v8413
    %v8706 = vunpack.c.l.b16 %v8414
    %v8707 = vunpack.c.l.b16 %v8415
    %v8708 = vunpack.c.l.b16 %v8416
    %v8709 = vunpack.c.l.b16 %v8417
    %v8710 = vunpack.c.l.b16 %v8418
    %v8711 = vunpack.c.l.b16 %v8419
    %v8712 = vunpack.c.l.b16 %v8420
    %v8713 = vunpack.c.l.b16 %v8421
    %v8714 = vunpack.c.l.b16 %v8422
    %v8715 = vunpack.c.l.b16 %v8423
    %v8716 = vunpack.c.l.b16 %v8424
    %v8717 = vunpack.c.l.b16 %v8425
    %v8718 = vunpack.c.l.b16 %v8426
    %v8719 = vunpack.c.l.b16 %v8427
    %v8720 = vunpack.c.l.b16 %v8428
    %v8721 = vunpack.c.l.b16 %v8429
    %v8722 = vunpack.c.l.b16 %v8430
    %v8723 = vunpack.c.l.b16 %v8431
    %v8724 = vunpack.c.l.b16 %v8432
    %v8725 = vunpack.c.l.b16 %v8433
    %v8726 = vunpack.c.l.b16 %v8434
    %v8727 = vunpack.c.l.b16 %v8435
    %v8728 = vunpack.c.l.b16 %v8436
    %v8729 = vunpack.c.l.b16 %v8437
    %v8730 = vunpack.c.l.b16 %v8438
    %v8731 = vunpack.c.l.b16 %v8439
    %v8732 = vunpack.c.l.b16 %v8440
    %v8733 = vunpack.c.l.b16 %v8441
    %v8734 = vunpack.c.l.b16 %v8442
    %v8735 = vunpack.c.l.b16 %v8443
    %v8736 = vunpack.c.l.b16 %v8444
    %v8737 = vunpack.c.l.b16 %v8445
    %v8738 = vunpack.c.l.b16 %v8446
    %v8739 = vunpack.c.l.b16 %v8447
    %v8740 = vunpack.c.l.b16 %v8448
    %v8741 = vunpack.c.l.b16 %v8449
    %v8742 = vunpack.c.l.b16 %v8450
    %v8743 = vunpack.c.l.b16 %v8451
    %v8744 = vunpack.c.l.b16 %v8452
    %v8745 = vunpack.c.l.b16 %v8453
    %v8746 = vunpack.c.l.b16 %v8454
    %v8747 = vunpack.c.l.b16 %v8455
    %v8748 = vunpack.c.l.b16 %v8456
    %v8749 = vunpack.c.l.b16 %v8457
    %v8750 = vunpack.c.l.b16 %v8458
    %v8751 = vunpack.c.l.b16 %v8459
    %v8752 = vunpack.c.l.b16 %v8460
    %v8753 = vunpack.c.l.b16 %v8461
    %v8754 = vunpack.c.l.b16 %v8462
    %v8755 = vunpack.c.l.b16 %v8463
    %v8756 = vunpack.c.l.b16 %v8464
    %v8757 = vunpack.c.l.b16 %v8465
    %v8758 = vunpack.c.l.b16 %v8466
    %v8759 = vunpack.c.l.b16 %v8467
    %v8760 = vunpack.c.l.b16 %v8468
    %v8761 = vunpack.c.l.b16 %v8469
    %v8762 = vunpack.c.l.b16 %v8470
    %v8763 = vunpack.c.l.b16 %v8471
    %v8764 = vunpack.c.l.b16 %v8472
    %v8765 = vunpack.c.l.b16 %v8473
    %v8766 = vunpack.c.l.b16 %v8474
    %v8767 = vunpack.c.l.b16 %v8475
    %v8768 = vunpack.c.l.b16 %v8476
    %v8769 = vunpack.c.l.b16 %v8477
    %v8770 = vunpack.c.l.b16 %v8478
    %v8771 = vunpack.c.l.b16 %v8479
    %v8772 = vunpack.c.l.b16 %v8480
    %v8773 = vunpack.c.l.b16 %v8481
    %v8774 = vunpack.c.l.b16 %v8482
    %v8775 = vunpack.c.l.b16 %v8483
    %v8776 = vunpack.c.l.b16 %v8484
    %v8777 = vunpack.c.l.b16 %v8485
    %v8778 = vunpack.c.l.b16 %v8486
    %v8779 = vunpack.c.l.b16 %v8487
    %v8780 = vunpack.c.l.b16 %v8488
    %v8781 = vunpack.c.l.b16 %v8489
    %v8782 = vunpack.c.l.b16 %v8490
    %v8783 = vunpack.c.l.b16 %v8491
    %v8784 = vunpack.c.l.b16 %v8492
    %v8785 = vunpack.c.l.b16 %v8493
    %v8786 = vunpack.c.l.b16 %v8494
    %v8787 = vunpack.c.l.b16 %v8495
    %v8788 = vunpack.c.l.b16 %v8496
    %v8789 = vunpack.c.l.b16 %v8497
    %v8790 = vunpack.c.l.b16 %v8498
    %v8791 = vunpack.c.l.b16 %v8499
    %v8792 = vpack.c.b16 %v8649, %v8648
    %v8793 = vpack.c.b16 %v8651, %v8650
    %v8794 = vpack.c.b16 %v8653, %v8652
    %v8795 = vpack.c.b16 %v8655, %v8654
    %v8796 = vpack.c.b16 %v8657, %v8656
    %v8797 = vpack.c.b16 %v8659, %v8658
    %v8798 = vpack.c.b16 %v8661, %v8660
    %v8799 = vpack.c.b16 %v8663, %v8662
    %v8800 = vpack.c.b16 %v8665, %v8664
    %v8801 = vpack.c.b16 %v8667, %v8666
    %v8802 = vpack.c.b16 %v8669, %v8668
    %v8803 = vpack.c.b16 %v8671, %v8670
    %v8804 = vpack.c.b16 %v8673, %v8672
    %v8805 = vpack.c.b16 %v8675, %v8674
    %v8806 = vpack.c.b16 %v8677, %v8676
    %v8807 = vpack.c.b16 %v8679, %v8678
    %v8808 = vpack.c.b16 %v8681, %v8680
    %v8809 = vpack.c.b16 %v8683, %v8682
    %v8810 = vpack.c.b16 %v8685, %v8684
    %v8811 = vpack.c.b16 %v8687, %v8686
    %v8812 = vpack.c.b16 %v8689, %v8688
    %v8813 = vpack.c.b16 %v8691, %v8690
    %v8814 = vpack.c.b16 %v8693, %v8692
    %v8815 = vpack.c.b16 %v8695, %v8694
    %v8816 = vpack.c.b16 %v8697, %v8696
    %v8817 = vpack.c.b16 %v8699, %v8698
    %v8818 = vpack.c.b16 %v8701, %v8700
    %v8819 = vpack.c.b16 %v8703, %v8702
    %v8820 = vpack.c.b16 %v8705, %v8704
    %v8821 = vpack.c.b16 %v8707, %v8706
    %v8822 = vpack.c.b16 %v8709, %v8708
    %v8823 = vpack.c.b16 %v8711, %v8710
    %v8824 = vpack.c.b16 %v8713, %v8712
    %v8825 = vpack.c.b16 %v8715, %v8714
    %v8826 = vpack.c.b16 %v8717, %v8716
    %v8827 = vpack.c.b16 %v8719, %v8718
    %v8828 = vpack.c.b16 %v8721, %v8720
    %v8829 = vpack.c.b16 %v8723, %v8722
    %v8830 = vpack.c.b16 %v8725, %v8724
    %v8831 = vpack.c.b16 %v8727, %v8726
    %v8832 = vpack.c.b16 %v8729, %v8728
    %v8833 = vpack.c.b16 %v8731, %v8730
    %v8834 = vpack.c.b16 %v8733, %v8732
    %v8835 = vpack.c.b16 %v8735, %v8734
    %v8836 = vpack.c.b16 %v8737, %v8736
    %v8837 = vpack.c.b16 %v8739, %v8738
    %v8838 = vpack.c.b16 %v8741, %v8740
    %v8839 = vpack.c.b16 %v8743, %v8742
    %v8840 = vpack.c.b16 %v8745, %v8744
    %v8841 = vpack.c.b16 %v8747, %v8746
    %v8842 = vpack.c.b16 %v8749, %v8748
    %v8843 = vpack.c.b16 %v8751, %v8750
    %v8844 = vpack.c.b16 %v8753, %v8752
    %v8845 = vpack.c.b16 %v8755, %v8754
    %v8846 = vpack.c.b16 %v8757, %v8756
    %v8847 = vpack.c.b16 %v8759, %v8758
    %v8848 = vpack.c.b16 %v8761, %v8760
    %v8849 = vpack.c.b16 %v8763, %v8762
    %v8850 = vpack.c.b16 %v8765, %v8764
    %v8851 = vpack.c.b16 %v8767, %v8766
    %v8852 = vpack.c.b16 %v8769, %v8768
    %v8853 = vpack.c.b16 %v8771, %v8770
    %v8854 = vpack.c.b16 %v8773, %v8772
    %v8855 = vpack.c.b16 %v8775, %v8774
    %v8856 = vpack.c.b16 %v8777, %v8776
    %v8857 = vpack.c.b16 %v8779, %v8778
    %v8858 = vpack.c.b16 %v8781, %v8780
    %v8859 = vpack.c.b16 %v8783, %v8782
    %v8860 = vpack.c.b16 %v8785, %v8784
    %v8861 = vpack.c.b16 %v8787, %v8786
    %v8862 = vpack.c.b16 %v8789, %v8788
    %v8863 = vpack.c.b16 %v8791, %v8790
    %8936 = vmatpush.bf16.msra.mxu0 %v8799
    %8937 = vmatpush.bf16.msra.mxu0 %v8798
    %8938 = vmatpush.bf16.msra.mxu0 %v8797
    %8939 = vmatpush.bf16.msra.mxu0 %v8796
    %8940 = vmatpush.bf16.msra.mxu0 %v8795
    %8941 = vmatpush.bf16.msra.mxu0 %v8794
    %8942 = vmatpush.bf16.msra.mxu0 %v8793
    %8943 = vmatpush.bf16.msra.mxu0 %v8792
    %8944 = vmatmul.bf16.gmra.mxu0 %v8194
    %v8945 = vpop.f32.mrf.mxu0
    %v8946 = vadd.f32 %v8502, %v8945
    %v8947 = vpop.f32.mrf.mxu0
    %v8948 = vadd.f32 %v8502, %v8947
    %8949 = vmatmul.bf16.gmra.mxu0 %v8203
    %v8950 = vpop.f32.mrf.mxu0
    %v8951 = vadd.f32 %v8502, %v8950
    %v8952 = vpop.f32.mrf.mxu0
    %v8953 = vadd.f32 %v8502, %v8952
    %8954 = vmatmul.bf16.gmra.mxu0 %v8212
    %v8955 = vpop.f32.mrf.mxu0
    %v8956 = vadd.f32 %v8502, %v8955
    %v8957 = vpop.f32.mrf.mxu0
    %v8958 = vadd.f32 %v8502, %v8957
    %8959 = vmatmul.bf16.gmra.mxu0 %v8221
    %v8960 = vpop.f32.mrf.mxu0
    %v8961 = vadd.f32 %v8502, %v8960
    %v8962 = vpop.f32.mrf.mxu0
    %v8963 = vadd.f32 %v8502, %v8962
    %8964 = vmatmul.bf16.gmra.mxu0 %v8230
    %v8965 = vpop.f32.mrf.mxu0
    %v8966 = vadd.f32 %v8502, %v8965
    %v8967 = vpop.f32.mrf.mxu0
    %v8968 = vadd.f32 %v8502, %v8967
    %8969 = vmatmul.bf16.gmra.mxu0 %v8239
    %v8970 = vpop.f32.mrf.mxu0
    %v8971 = vadd.f32 %v8502, %v8970
    %v8972 = vpop.f32.mrf.mxu0
    %v8973 = vadd.f32 %v8502, %v8972
    %8974 = vmatmul.bf16.gmra.mxu0 %v8248
    %v8975 = vpop.f32.mrf.mxu0
    %v8976 = vadd.f32 %v8502, %v8975
    %v8977 = vpop.f32.mrf.mxu0
    %v8978 = vadd.f32 %v8502, %v8977
    %8979 = vmatmul.bf16.gmra.mxu0 %v8257
    %v8980 = vpop.f32.mrf.mxu0
    %v8981 = vadd.f32 %v8502, %v8980
    %v8982 = vpop.f32.mrf.mxu0
    %v8983 = vadd.f32 %v8502, %v8982
    %8984 = vmatmul.bf16.gmra.mxu0 %v8266
    %v8985 = vpop.f32.mrf.mxu0
    %v8986 = vadd.f32 %v8502, %v8985
    %v8987 = vpop.f32.mrf.mxu0
    %v8988 = vadd.f32 %v8502, %v8987
    %8989 = vmatmul.bf16.gmra.mxu0 %v8275
    %v8990 = vpop.f32.mrf.mxu0
    %v8991 = vadd.f32 %v8502, %v8990
    %v8992 = vpop.f32.mrf.mxu0
    %v8993 = vadd.f32 %v8502, %v8992
    %8994 = vmatmul.bf16.gmra.mxu0 %v8284
    %v8995 = vpop.f32.mrf.mxu0
    %v8996 = vadd.f32 %v8502, %v8995
    %v8997 = vpop.f32.mrf.mxu0
    %v8998 = vadd.f32 %v8502, %v8997
    %8999 = vmatmul.bf16.gmra.mxu0 %v8293
    %v9000 = vpop.f32.mrf.mxu0
    %v9001 = vadd.f32 %v8502, %v9000
    %v9002 = vpop.f32.mrf.mxu0
    %v9003 = vadd.f32 %v8502, %v9002
    %9004 = vmatmul.bf16.gmra.mxu0 %v8302
    %v9005 = vpop.f32.mrf.mxu0
    %v9006 = vadd.f32 %v8502, %v9005
    %v9007 = vpop.f32.mrf.mxu0
    %v9008 = vadd.f32 %v8502, %v9007
    %9009 = vmatmul.bf16.gmra.mxu0 %v8311
    %v9010 = vpop.f32.mrf.mxu0
    %v9011 = vadd.f32 %v8502, %v9010
    %v9012 = vpop.f32.mrf.mxu0
    %v9013 = vadd.f32 %v8502, %v9012
    %9014 = vmatmul.bf16.gmra.mxu0 %v8320
    %v9015 = vpop.f32.mrf.mxu0
    %v9016 = vadd.f32 %v8502, %v9015
    %v9017 = vpop.f32.mrf.mxu0
    %v9018 = vadd.f32 %v8502, %v9017
    %9019 = vmatmul.bf16.gmra.mxu0 %v8329
    %v9020 = vpop.f32.mrf.mxu0
    %v9021 = vadd.f32 %v8502, %v9020
    %v9022 = vpop.f32.mrf.mxu0
    %v9023 = vadd.f32 %v8502, %v9022
    %9024 = vmatmul.bf16.gmra.mxu0 %v8338
    %v9025 = vpop.f32.mrf.mxu0
    %v9026 = vadd.f32 %v8502, %v9025
    %v9027 = vpop.f32.mrf.mxu0
    %v9028 = vadd.f32 %v8502, %v9027
    %9029 = vmatmul.bf16.gmra.mxu0 %v8347
    %v9030 = vpop.f32.mrf.mxu0
    %v9031 = vadd.f32 %v8502, %v9030
    %v9032 = vpop.f32.mrf.mxu0
    %v9033 = vadd.f32 %v8502, %v9032
    %9034 = vdwg.mxu0
    %9035 = vmatpush.bf16.msra.mxu0 %v8807
    %9036 = vmatpush.bf16.msra.mxu0 %v8806
    %9037 = vmatpush.bf16.msra.mxu0 %v8805
    %9038 = vmatpush.bf16.msra.mxu0 %v8804
    %9039 = vmatpush.bf16.msra.mxu0 %v8803
    %9040 = vmatpush.bf16.msra.mxu0 %v8802
    %9041 = vmatpush.bf16.msra.mxu0 %v8801
    %9042 = vmatpush.bf16.msra.mxu0 %v8800
    %9043 = vmatmul.bf16.gmra.mxu0 %v8195
    %v9044 = vpop.f32.mrf.mxu0
    %v9045 = vadd.f32 %v8946, %v9044
    %v9046 = vpop.f32.mrf.mxu0
    %v9047 = vadd.f32 %v8948, %v9046
    %9048 = vmatmul.bf16.gmra.mxu0 %v8204
    %v9049 = vpop.f32.mrf.mxu0
    %v9050 = vadd.f32 %v8951, %v9049
    %v9051 = vpop.f32.mrf.mxu0
    %v9052 = vadd.f32 %v8953, %v9051
    %9053 = vmatmul.bf16.gmra.mxu0 %v8213
    %v9054 = vpop.f32.mrf.mxu0
    %v9055 = vadd.f32 %v8956, %v9054
    %v9056 = vpop.f32.mrf.mxu0
    %v9057 = vadd.f32 %v8958, %v9056
    %9058 = vmatmul.bf16.gmra.mxu0 %v8222
    %v9059 = vpop.f32.mrf.mxu0
    %v9060 = vadd.f32 %v8961, %v9059
    %v9061 = vpop.f32.mrf.mxu0
    %v9062 = vadd.f32 %v8963, %v9061
    %9063 = vmatmul.bf16.gmra.mxu0 %v8231
    %v9064 = vpop.f32.mrf.mxu0
    %v9065 = vadd.f32 %v8966, %v9064
    %v9066 = vpop.f32.mrf.mxu0
    %v9067 = vadd.f32 %v8968, %v9066
    %9068 = vmatmul.bf16.gmra.mxu0 %v8240
    %v9069 = vpop.f32.mrf.mxu0
    %v9070 = vadd.f32 %v8971, %v9069
    %v9071 = vpop.f32.mrf.mxu0
    %v9072 = vadd.f32 %v8973, %v9071
    %9073 = vmatmul.bf16.gmra.mxu0 %v8249
    %v9074 = vpop.f32.mrf.mxu0
    %v9075 = vadd.f32 %v8976, %v9074
    %v9076 = vpop.f32.mrf.mxu0
    %v9077 = vadd.f32 %v8978, %v9076
    %9078 = vmatmul.bf16.gmra.mxu0 %v8258
    %v9079 = vpop.f32.mrf.mxu0
    %v9080 = vadd.f32 %v8981, %v9079
    %v9081 = vpop.f32.mrf.mxu0
    %v9082 = vadd.f32 %v8983, %v9081
    %9083 = vmatmul.bf16.gmra.mxu0 %v8267
    %v9084 = vpop.f32.mrf.mxu0
    %v9085 = vadd.f32 %v8986, %v9084
    %v9086 = vpop.f32.mrf.mxu0
    %v9087 = vadd.f32 %v8988, %v9086
    %9088 = vmatmul.bf16.gmra.mxu0 %v8276
    %v9089 = vpop.f32.mrf.mxu0
    %v9090 = vadd.f32 %v8991, %v9089
    %v9091 = vpop.f32.mrf.mxu0
    %v9092 = vadd.f32 %v8993, %v9091
    %9093 = vmatmul.bf16.gmra.mxu0 %v8285
    %v9094 = vpop.f32.mrf.mxu0
    %v9095 = vadd.f32 %v8996, %v9094
    %v9096 = vpop.f32.mrf.mxu0
    %v9097 = vadd.f32 %v8998, %v9096
    %9098 = vmatmul.bf16.gmra.mxu0 %v8294
    %v9099 = vpop.f32.mrf.mxu0
    %v9100 = vadd.f32 %v9001, %v9099
    %v9101 = vpop.f32.mrf.mxu0
    %v9102 = vadd.f32 %v9003, %v9101
    %9103 = vmatmul.bf16.gmra.mxu0 %v8303
    %v9104 = vpop.f32.mrf.mxu0
    %v9105 = vadd.f32 %v9006, %v9104
    %v9106 = vpop.f32.mrf.mxu0
    %v9107 = vadd.f32 %v9008, %v9106
    %9108 = vmatmul.bf16.gmra.mxu0 %v8312
    %v9109 = vpop.f32.mrf.mxu0
    %v9110 = vadd.f32 %v9011, %v9109
    %v9111 = vpop.f32.mrf.mxu0
    %v9112 = vadd.f32 %v9013, %v9111
    %9113 = vmatmul.bf16.gmra.mxu0 %v8321
    %v9114 = vpop.f32.mrf.mxu0
    %v9115 = vadd.f32 %v9016, %v9114
    %v9116 = vpop.f32.mrf.mxu0
    %v9117 = vadd.f32 %v9018, %v9116
    %9118 = vmatmul.bf16.gmra.mxu0 %v8330
    %v9119 = vpop.f32.mrf.mxu0
    %v9120 = vadd.f32 %v9021, %v9119
    %v9121 = vpop.f32.mrf.mxu0
    %v9122 = vadd.f32 %v9023, %v9121
    %9123 = vmatmul.bf16.gmra.mxu0 %v8339
    %v9124 = vpop.f32.mrf.mxu0
    %v9125 = vadd.f32 %v9026, %v9124
    %v9126 = vpop.f32.mrf.mxu0
    %v9127 = vadd.f32 %v9028, %v9126
    %9128 = vmatmul.bf16.gmra.mxu0 %v8348
    %v9129 = vpop.f32.mrf.mxu0
    %v9130 = vadd.f32 %v9031, %v9129
    %v9131 = vpop.f32.mrf.mxu0
    %v9132 = vadd.f32 %v9033, %v9131
    %9133 = vdwg.mxu0
    %9134 = vmatpush.bf16.msra.mxu0 %v8815
    %9135 = vmatpush.bf16.msra.mxu0 %v8814
    %9136 = vmatpush.bf16.msra.mxu0 %v8813
    %9137 = vmatpush.bf16.msra.mxu0 %v8812
    %9138 = vmatpush.bf16.msra.mxu0 %v8811
    %9139 = vmatpush.bf16.msra.mxu0 %v8810
    %9140 = vmatpush.bf16.msra.mxu0 %v8809
    %9141 = vmatpush.bf16.msra.mxu0 %v8808
    %9142 = vmatmul.bf16.gmra.mxu0 %v8196
    %v9143 = vpop.f32.mrf.mxu0
    %v9144 = vadd.f32 %v9045, %v9143
    %v9145 = vpop.f32.mrf.mxu0
    %v9146 = vadd.f32 %v9047, %v9145
    %9147 = vmatmul.bf16.gmra.mxu0 %v8205
    %v9148 = vpop.f32.mrf.mxu0
    %v9149 = vadd.f32 %v9050, %v9148
    %v9150 = vpop.f32.mrf.mxu0
    %v9151 = vadd.f32 %v9052, %v9150
    %9152 = vmatmul.bf16.gmra.mxu0 %v8214
    %v9153 = vpop.f32.mrf.mxu0
    %v9154 = vadd.f32 %v9055, %v9153
    %v9155 = vpop.f32.mrf.mxu0
    %v9156 = vadd.f32 %v9057, %v9155
    %9157 = vmatmul.bf16.gmra.mxu0 %v8223
    %v9158 = vpop.f32.mrf.mxu0
    %v9159 = vadd.f32 %v9060, %v9158
    %v9160 = vpop.f32.mrf.mxu0
    %v9161 = vadd.f32 %v9062, %v9160
    %9162 = vmatmul.bf16.gmra.mxu0 %v8232
    %v9163 = vpop.f32.mrf.mxu0
    %v9164 = vadd.f32 %v9065, %v9163
    %v9165 = vpop.f32.mrf.mxu0
    %v9166 = vadd.f32 %v9067, %v9165
    %9167 = vmatmul.bf16.gmra.mxu0 %v8241
    %v9168 = vpop.f32.mrf.mxu0
    %v9169 = vadd.f32 %v9070, %v9168
    %v9170 = vpop.f32.mrf.mxu0
    %v9171 = vadd.f32 %v9072, %v9170
    %9172 = vmatmul.bf16.gmra.mxu0 %v8250
    %v9173 = vpop.f32.mrf.mxu0
    %v9174 = vadd.f32 %v9075, %v9173
    %v9175 = vpop.f32.mrf.mxu0
    %v9176 = vadd.f32 %v9077, %v9175
    %9177 = vmatmul.bf16.gmra.mxu0 %v8259
    %v9178 = vpop.f32.mrf.mxu0
    %v9179 = vadd.f32 %v9080, %v9178
    %v9180 = vpop.f32.mrf.mxu0
    %v9181 = vadd.f32 %v9082, %v9180
    %9182 = vmatmul.bf16.gmra.mxu0 %v8268
    %v9183 = vpop.f32.mrf.mxu0
    %v9184 = vadd.f32 %v9085, %v9183
    %v9185 = vpop.f32.mrf.mxu0
    %v9186 = vadd.f32 %v9087, %v9185
    %9187 = vmatmul.bf16.gmra.mxu0 %v8277
    %v9188 = vpop.f32.mrf.mxu0
    %v9189 = vadd.f32 %v9090, %v9188
    %v9190 = vpop.f32.mrf.mxu0
    %v9191 = vadd.f32 %v9092, %v9190
    %9192 = vmatmul.bf16.gmra.mxu0 %v8286
    %v9193 = vpop.f32.mrf.mxu0
    %v9194 = vadd.f32 %v9095, %v9193
    %v9195 = vpop.f32.mrf.mxu0
    %v9196 = vadd.f32 %v9097, %v9195
    %9197 = vmatmul.bf16.gmra.mxu0 %v8295
    %v9198 = vpop.f32.mrf.mxu0
    %v9199 = vadd.f32 %v9100, %v9198
    %v9200 = vpop.f32.mrf.mxu0
    %v9201 = vadd.f32 %v9102, %v9200
    %9202 = vmatmul.bf16.gmra.mxu0 %v8304
    %v9203 = vpop.f32.mrf.mxu0
    %v9204 = vadd.f32 %v9105, %v9203
    %v9205 = vpop.f32.mrf.mxu0
    %v9206 = vadd.f32 %v9107, %v9205
    %9207 = vmatmul.bf16.gmra.mxu0 %v8313
    %v9208 = vpop.f32.mrf.mxu0
    %v9209 = vadd.f32 %v9110, %v9208
    %v9210 = vpop.f32.mrf.mxu0
    %v9211 = vadd.f32 %v9112, %v9210
    %9212 = vmatmul.bf16.gmra.mxu0 %v8322
    %v9213 = vpop.f32.mrf.mxu0
    %v9214 = vadd.f32 %v9115, %v9213
    %v9215 = vpop.f32.mrf.mxu0
    %v9216 = vadd.f32 %v9117, %v9215
    %9217 = vmatmul.bf16.gmra.mxu0 %v8331
    %v9218 = vpop.f32.mrf.mxu0
    %v9219 = vadd.f32 %v9120, %v9218
    %v9220 = vpop.f32.mrf.mxu0
    %v9221 = vadd.f32 %v9122, %v9220
    %9222 = vmatmul.bf16.gmra.mxu0 %v8340
    %v9223 = vpop.f32.mrf.mxu0
    %v9224 = vadd.f32 %v9125, %v9223
    %v9225 = vpop.f32.mrf.mxu0
    %v9226 = vadd.f32 %v9127, %v9225
    %9227 = vmatmul.bf16.gmra.mxu0 %v8349
    %v9228 = vpop.f32.mrf.mxu0
    %v9229 = vadd.f32 %v9130, %v9228
    %v9230 = vpop.f32.mrf.mxu0
    %v9231 = vadd.f32 %v9132, %v9230
    %9232 = vdwg.mxu0
    %9233 = vmatpush.bf16.msra.mxu0 %v8823
    %9234 = vmatpush.bf16.msra.mxu0 %v8822
    %9235 = vmatpush.bf16.msra.mxu0 %v8821
    %9236 = vmatpush.bf16.msra.mxu0 %v8820
    %9237 = vmatpush.bf16.msra.mxu0 %v8819
    %9238 = vmatpush.bf16.msra.mxu0 %v8818
    %9239 = vmatpush.bf16.msra.mxu0 %v8817
    %9240 = vmatpush.bf16.msra.mxu0 %v8816
    %9241 = vmatmul.bf16.gmra.mxu0 %v8197
    %v9242 = vpop.f32.mrf.mxu0
    %v9243 = vadd.f32 %v9144, %v9242
    %v9244 = vpop.f32.mrf.mxu0
    %v9245 = vadd.f32 %v9146, %v9244
    %9246 = vmatmul.bf16.gmra.mxu0 %v8206
    %v9247 = vpop.f32.mrf.mxu0
    %v9248 = vadd.f32 %v9149, %v9247
    %v9249 = vpop.f32.mrf.mxu0
    %v9250 = vadd.f32 %v9151, %v9249
    %9251 = vmatmul.bf16.gmra.mxu0 %v8215
    %v9252 = vpop.f32.mrf.mxu0
    %v9253 = vadd.f32 %v9154, %v9252
    %v9254 = vpop.f32.mrf.mxu0
    %v9255 = vadd.f32 %v9156, %v9254
    %9256 = vmatmul.bf16.gmra.mxu0 %v8224
    %v9257 = vpop.f32.mrf.mxu0
    %v9258 = vadd.f32 %v9159, %v9257
    %v9259 = vpop.f32.mrf.mxu0
    %v9260 = vadd.f32 %v9161, %v9259
    %9261 = vmatmul.bf16.gmra.mxu0 %v8233
    %v9262 = vpop.f32.mrf.mxu0
    %v9263 = vadd.f32 %v9164, %v9262
    %v9264 = vpop.f32.mrf.mxu0
    %v9265 = vadd.f32 %v9166, %v9264
    %9266 = vmatmul.bf16.gmra.mxu0 %v8242
    %v9267 = vpop.f32.mrf.mxu0
    %v9268 = vadd.f32 %v9169, %v9267
    %v9269 = vpop.f32.mrf.mxu0
    %v9270 = vadd.f32 %v9171, %v9269
    %9271 = vmatmul.bf16.gmra.mxu0 %v8251
    %v9272 = vpop.f32.mrf.mxu0
    %v9273 = vadd.f32 %v9174, %v9272
    %v9274 = vpop.f32.mrf.mxu0
    %v9275 = vadd.f32 %v9176, %v9274
    %9276 = vmatmul.bf16.gmra.mxu0 %v8260
    %v9277 = vpop.f32.mrf.mxu0
    %v9278 = vadd.f32 %v9179, %v9277
    %v9279 = vpop.f32.mrf.mxu0
    %v9280 = vadd.f32 %v9181, %v9279
    %9281 = vmatmul.bf16.gmra.mxu0 %v8269
    %v9282 = vpop.f32.mrf.mxu0
    %v9283 = vadd.f32 %v9184, %v9282
    %v9284 = vpop.f32.mrf.mxu0
    %v9285 = vadd.f32 %v9186, %v9284
    %9286 = vmatmul.bf16.gmra.mxu0 %v8278
    %v9287 = vpop.f32.mrf.mxu0
    %v9288 = vadd.f32 %v9189, %v9287
    %v9289 = vpop.f32.mrf.mxu0
    %v9290 = vadd.f32 %v9191, %v9289
    %9291 = vmatmul.bf16.gmra.mxu0 %v8287
    %v9292 = vpop.f32.mrf.mxu0
    %v9293 = vadd.f32 %v9194, %v9292
    %v9294 = vpop.f32.mrf.mxu0
    %v9295 = vadd.f32 %v9196, %v9294
    %9296 = vmatmul.bf16.gmra.mxu0 %v8296
    %v9297 = vpop.f32.mrf.mxu0
    %v9298 = vadd.f32 %v9199, %v9297
    %v9299 = vpop.f32.mrf.mxu0
    %v9300 = vadd.f32 %v9201, %v9299
    %9301 = vmatmul.bf16.gmra.mxu0 %v8305
    %v9302 = vpop.f32.mrf.mxu0
    %v9303 = vadd.f32 %v9204, %v9302
    %v9304 = vpop.f32.mrf.mxu0
    %v9305 = vadd.f32 %v9206, %v9304
    %9306 = vmatmul.bf16.gmra.mxu0 %v8314
    %v9307 = vpop.f32.mrf.mxu0
    %v9308 = vadd.f32 %v9209, %v9307
    %v9309 = vpop.f32.mrf.mxu0
    %v9310 = vadd.f32 %v9211, %v9309
    %9311 = vmatmul.bf16.gmra.mxu0 %v8323
    %v9312 = vpop.f32.mrf.mxu0
    %v9313 = vadd.f32 %v9214, %v9312
    %v9314 = vpop.f32.mrf.mxu0
    %v9315 = vadd.f32 %v9216, %v9314
    %9316 = vmatmul.bf16.gmra.mxu0 %v8332
    %v9317 = vpop.f32.mrf.mxu0
    %v9318 = vadd.f32 %v9219, %v9317
    %v9319 = vpop.f32.mrf.mxu0
    %v9320 = vadd.f32 %v9221, %v9319
    %9321 = vmatmul.bf16.gmra.mxu0 %v8341
    %v9322 = vpop.f32.mrf.mxu0
    %v9323 = vadd.f32 %v9224, %v9322
    %v9324 = vpop.f32.mrf.mxu0
    %v9325 = vadd.f32 %v9226, %v9324
    %9326 = vmatmul.bf16.gmra.mxu0 %v8350
    %v9327 = vpop.f32.mrf.mxu0
    %v9328 = vadd.f32 %v9229, %v9327
    %v9329 = vpop.f32.mrf.mxu0
    %v9330 = vadd.f32 %v9231, %v9329
    %9331 = vdwg.mxu0
    %9332 = vmatpush.bf16.msra.mxu0 %v8831
    %9333 = vmatpush.bf16.msra.mxu0 %v8830
    %9334 = vmatpush.bf16.msra.mxu0 %v8829
    %9335 = vmatpush.bf16.msra.mxu0 %v8828
    %9336 = vmatpush.bf16.msra.mxu0 %v8827
    %9337 = vmatpush.bf16.msra.mxu0 %v8826
    %9338 = vmatpush.bf16.msra.mxu0 %v8825
    %9339 = vmatpush.bf16.msra.mxu0 %v8824
    %9340 = vmatmul.bf16.gmra.mxu0 %v8198
    %v9341 = vpop.f32.mrf.mxu0
    %v9342 = vadd.f32 %v9243, %v9341
    %v9343 = vpop.f32.mrf.mxu0
    %v9344 = vadd.f32 %v9245, %v9343
    %9345 = vmatmul.bf16.gmra.mxu0 %v8207
    %v9346 = vpop.f32.mrf.mxu0
    %v9347 = vadd.f32 %v9248, %v9346
    %v9348 = vpop.f32.mrf.mxu0
    %v9349 = vadd.f32 %v9250, %v9348
    %9350 = vmatmul.bf16.gmra.mxu0 %v8216
    %v9351 = vpop.f32.mrf.mxu0
    %v9352 = vadd.f32 %v9253, %v9351
    %v9353 = vpop.f32.mrf.mxu0
    %v9354 = vadd.f32 %v9255, %v9353
    %9355 = vmatmul.bf16.gmra.mxu0 %v8225
    %v9356 = vpop.f32.mrf.mxu0
    %v9357 = vadd.f32 %v9258, %v9356
    %v9358 = vpop.f32.mrf.mxu0
    %v9359 = vadd.f32 %v9260, %v9358
    %9360 = vmatmul.bf16.gmra.mxu0 %v8234
    %v9361 = vpop.f32.mrf.mxu0
    %v9362 = vadd.f32 %v9263, %v9361
    %v9363 = vpop.f32.mrf.mxu0
    %v9364 = vadd.f32 %v9265, %v9363
    %9365 = vmatmul.bf16.gmra.mxu0 %v8243
    %v9366 = vpop.f32.mrf.mxu0
    %v9367 = vadd.f32 %v9268, %v9366
    %v9368 = vpop.f32.mrf.mxu0
    %v9369 = vadd.f32 %v9270, %v9368
    %9370 = vmatmul.bf16.gmra.mxu0 %v8252
    %v9371 = vpop.f32.mrf.mxu0
    %v9372 = vadd.f32 %v9273, %v9371
    %v9373 = vpop.f32.mrf.mxu0
    %v9374 = vadd.f32 %v9275, %v9373
    %9375 = vmatmul.bf16.gmra.mxu0 %v8261
    %v9376 = vpop.f32.mrf.mxu0
    %v9377 = vadd.f32 %v9278, %v9376
    %v9378 = vpop.f32.mrf.mxu0
    %v9379 = vadd.f32 %v9280, %v9378
    %9380 = vmatmul.bf16.gmra.mxu0 %v8270
    %v9381 = vpop.f32.mrf.mxu0
    %v9382 = vadd.f32 %v9283, %v9381
    %v9383 = vpop.f32.mrf.mxu0
    %v9384 = vadd.f32 %v9285, %v9383
    %9385 = vmatmul.bf16.gmra.mxu0 %v8279
    %v9386 = vpop.f32.mrf.mxu0
    %v9387 = vadd.f32 %v9288, %v9386
    %v9388 = vpop.f32.mrf.mxu0
    %v9389 = vadd.f32 %v9290, %v9388
    %9390 = vmatmul.bf16.gmra.mxu0 %v8288
    %v9391 = vpop.f32.mrf.mxu0
    %v9392 = vadd.f32 %v9293, %v9391
    %v9393 = vpop.f32.mrf.mxu0
    %v9394 = vadd.f32 %v9295, %v9393
    %9395 = vmatmul.bf16.gmra.mxu0 %v8297
    %v9396 = vpop.f32.mrf.mxu0
    %v9397 = vadd.f32 %v9298, %v9396
    %v9398 = vpop.f32.mrf.mxu0
    %v9399 = vadd.f32 %v9300, %v9398
    %9400 = vmatmul.bf16.gmra.mxu0 %v8306
    %v9401 = vpop.f32.mrf.mxu0
    %v9402 = vadd.f32 %v9303, %v9401
    %v9403 = vpop.f32.mrf.mxu0
    %v9404 = vadd.f32 %v9305, %v9403
    %9405 = vmatmul.bf16.gmra.mxu0 %v8315
    %v9406 = vpop.f32.mrf.mxu0
    %v9407 = vadd.f32 %v9308, %v9406
    %v9408 = vpop.f32.mrf.mxu0
    %v9409 = vadd.f32 %v9310, %v9408
    %9410 = vmatmul.bf16.gmra.mxu0 %v8324
    %v9411 = vpop.f32.mrf.mxu0
    %v9412 = vadd.f32 %v9313, %v9411
    %v9413 = vpop.f32.mrf.mxu0
    %v9414 = vadd.f32 %v9315, %v9413
    %9415 = vmatmul.bf16.gmra.mxu0 %v8333
    %v9416 = vpop.f32.mrf.mxu0
    %v9417 = vadd.f32 %v9318, %v9416
    %v9418 = vpop.f32.mrf.mxu0
    %v9419 = vadd.f32 %v9320, %v9418
    %9420 = vmatmul.bf16.gmra.mxu0 %v8342
    %v9421 = vpop.f32.mrf.mxu0
    %v9422 = vadd.f32 %v9323, %v9421
    %v9423 = vpop.f32.mrf.mxu0
    %v9424 = vadd.f32 %v9325, %v9423
    %9425 = vmatmul.bf16.gmra.mxu0 %v8351
    %v9426 = vpop.f32.mrf.mxu0
    %v9427 = vadd.f32 %v9328, %v9426
    %v9428 = vpop.f32.mrf.mxu0
    %v9429 = vadd.f32 %v9330, %v9428
    %9430 = vdwg.mxu0
    %9431 = vmatpush.bf16.msra.mxu0 %v8839
    %9432 = vmatpush.bf16.msra.mxu0 %v8838
    %9433 = vmatpush.bf16.msra.mxu0 %v8837
    %9434 = vmatpush.bf16.msra.mxu0 %v8836
    %9435 = vmatpush.bf16.msra.mxu0 %v8835
    %9436 = vmatpush.bf16.msra.mxu0 %v8834
    %9437 = vmatpush.bf16.msra.mxu0 %v8833
    %9438 = vmatpush.bf16.msra.mxu0 %v8832
    %9439 = vmatmul.bf16.gmra.mxu0 %v8199
    %v9440 = vpop.f32.mrf.mxu0
    %v9441 = vadd.f32 %v9342, %v9440
    %v9442 = vpop.f32.mrf.mxu0
    %v9443 = vadd.f32 %v9344, %v9442
    %9444 = vmatmul.bf16.gmra.mxu0 %v8208
    %v9445 = vpop.f32.mrf.mxu0
    %v9446 = vadd.f32 %v9347, %v9445
    %v9447 = vpop.f32.mrf.mxu0
    %v9448 = vadd.f32 %v9349, %v9447
    %9449 = vmatmul.bf16.gmra.mxu0 %v8217
    %v9450 = vpop.f32.mrf.mxu0
    %v9451 = vadd.f32 %v9352, %v9450
    %v9452 = vpop.f32.mrf.mxu0
    %v9453 = vadd.f32 %v9354, %v9452
    %9454 = vmatmul.bf16.gmra.mxu0 %v8226
    %v9455 = vpop.f32.mrf.mxu0
    %v9456 = vadd.f32 %v9357, %v9455
    %v9457 = vpop.f32.mrf.mxu0
    %v9458 = vadd.f32 %v9359, %v9457
    %9459 = vmatmul.bf16.gmra.mxu0 %v8235
    %v9460 = vpop.f32.mrf.mxu0
    %v9461 = vadd.f32 %v9362, %v9460
    %v9462 = vpop.f32.mrf.mxu0
    %v9463 = vadd.f32 %v9364, %v9462
    %9464 = vmatmul.bf16.gmra.mxu0 %v8244
    %v9465 = vpop.f32.mrf.mxu0
    %v9466 = vadd.f32 %v9367, %v9465
    %v9467 = vpop.f32.mrf.mxu0
    %v9468 = vadd.f32 %v9369, %v9467
    %9469 = vmatmul.bf16.gmra.mxu0 %v8253
    %v9470 = vpop.f32.mrf.mxu0
    %v9471 = vadd.f32 %v9372, %v9470
    %v9472 = vpop.f32.mrf.mxu0
    %v9473 = vadd.f32 %v9374, %v9472
    %9474 = vmatmul.bf16.gmra.mxu0 %v8262
    %v9475 = vpop.f32.mrf.mxu0
    %v9476 = vadd.f32 %v9377, %v9475
    %v9477 = vpop.f32.mrf.mxu0
    %v9478 = vadd.f32 %v9379, %v9477
    %9479 = vmatmul.bf16.gmra.mxu0 %v8271
    %v9480 = vpop.f32.mrf.mxu0
    %v9481 = vadd.f32 %v9382, %v9480
    %v9482 = vpop.f32.mrf.mxu0
    %v9483 = vadd.f32 %v9384, %v9482
    %9484 = vmatmul.bf16.gmra.mxu0 %v8280
    %v9485 = vpop.f32.mrf.mxu0
    %v9486 = vadd.f32 %v9387, %v9485
    %v9487 = vpop.f32.mrf.mxu0
    %v9488 = vadd.f32 %v9389, %v9487
    %9489 = vmatmul.bf16.gmra.mxu0 %v8289
    %v9490 = vpop.f32.mrf.mxu0
    %v9491 = vadd.f32 %v9392, %v9490
    %v9492 = vpop.f32.mrf.mxu0
    %v9493 = vadd.f32 %v9394, %v9492
    %9494 = vmatmul.bf16.gmra.mxu0 %v8298
    %v9495 = vpop.f32.mrf.mxu0
    %v9496 = vadd.f32 %v9397, %v9495
    %v9497 = vpop.f32.mrf.mxu0
    %v9498 = vadd.f32 %v9399, %v9497
    %9499 = vmatmul.bf16.gmra.mxu0 %v8307
    %v9500 = vpop.f32.mrf.mxu0
    %v9501 = vadd.f32 %v9402, %v9500
    %v9502 = vpop.f32.mrf.mxu0
    %v9503 = vadd.f32 %v9404, %v9502
    %9504 = vmatmul.bf16.gmra.mxu0 %v8316
    %v9505 = vpop.f32.mrf.mxu0
    %v9506 = vadd.f32 %v9407, %v9505
    %v9507 = vpop.f32.mrf.mxu0
    %v9508 = vadd.f32 %v9409, %v9507
    %9509 = vmatmul.bf16.gmra.mxu0 %v8325
    %v9510 = vpop.f32.mrf.mxu0
    %v9511 = vadd.f32 %v9412, %v9510
    %v9512 = vpop.f32.mrf.mxu0
    %v9513 = vadd.f32 %v9414, %v9512
    %9514 = vmatmul.bf16.gmra.mxu0 %v8334
    %v9515 = vpop.f32.mrf.mxu0
    %v9516 = vadd.f32 %v9417, %v9515
    %v9517 = vpop.f32.mrf.mxu0
    %v9518 = vadd.f32 %v9419, %v9517
    %9519 = vmatmul.bf16.gmra.mxu0 %v8343
    %v9520 = vpop.f32.mrf.mxu0
    %v9521 = vadd.f32 %v9422, %v9520
    %v9522 = vpop.f32.mrf.mxu0
    %v9523 = vadd.f32 %v9424, %v9522
    %9524 = vmatmul.bf16.gmra.mxu0 %v8352
    %v9525 = vpop.f32.mrf.mxu0
    %v9526 = vadd.f32 %v9427, %v9525
    %v9527 = vpop.f32.mrf.mxu0
    %v9528 = vadd.f32 %v9429, %v9527
    %9529 = vdwg.mxu0
    %9530 = vmatpush.bf16.msra.mxu0 %v8847
    %9531 = vmatpush.bf16.msra.mxu0 %v8846
    %9532 = vmatpush.bf16.msra.mxu0 %v8845
    %9533 = vmatpush.bf16.msra.mxu0 %v8844
    %9534 = vmatpush.bf16.msra.mxu0 %v8843
    %9535 = vmatpush.bf16.msra.mxu0 %v8842
    %9536 = vmatpush.bf16.msra.mxu0 %v8841
    %9537 = vmatpush.bf16.msra.mxu0 %v8840
    %9538 = vmatmul.bf16.gmra.mxu0 %v8200
    %v9539 = vpop.f32.mrf.mxu0
    %v9540 = vadd.f32 %v9441, %v9539
    %v9541 = vpop.f32.mrf.mxu0
    %v9542 = vadd.f32 %v9443, %v9541
    %9543 = vmatmul.bf16.gmra.mxu0 %v8209
    %v9544 = vpop.f32.mrf.mxu0
    %v9545 = vadd.f32 %v9446, %v9544
    %v9546 = vpop.f32.mrf.mxu0
    %v9547 = vadd.f32 %v9448, %v9546
    %9548 = vmatmul.bf16.gmra.mxu0 %v8218
    %v9549 = vpop.f32.mrf.mxu0
    %v9550 = vadd.f32 %v9451, %v9549
    %v9551 = vpop.f32.mrf.mxu0
    %v9552 = vadd.f32 %v9453, %v9551
    %9553 = vmatmul.bf16.gmra.mxu0 %v8227
    %v9554 = vpop.f32.mrf.mxu0
    %v9555 = vadd.f32 %v9456, %v9554
    %v9556 = vpop.f32.mrf.mxu0
    %v9557 = vadd.f32 %v9458, %v9556
    %9558 = vmatmul.bf16.gmra.mxu0 %v8236
    %v9559 = vpop.f32.mrf.mxu0
    %v9560 = vadd.f32 %v9461, %v9559
    %v9561 = vpop.f32.mrf.mxu0
    %v9562 = vadd.f32 %v9463, %v9561
    %9563 = vmatmul.bf16.gmra.mxu0 %v8245
    %v9564 = vpop.f32.mrf.mxu0
    %v9565 = vadd.f32 %v9466, %v9564
    %v9566 = vpop.f32.mrf.mxu0
    %v9567 = vadd.f32 %v9468, %v9566
    %9568 = vmatmul.bf16.gmra.mxu0 %v8254
    %v9569 = vpop.f32.mrf.mxu0
    %v9570 = vadd.f32 %v9471, %v9569
    %v9571 = vpop.f32.mrf.mxu0
    %v9572 = vadd.f32 %v9473, %v9571
    %9573 = vmatmul.bf16.gmra.mxu0 %v8263
    %v9574 = vpop.f32.mrf.mxu0
    %v9575 = vadd.f32 %v9476, %v9574
    %v9576 = vpop.f32.mrf.mxu0
    %v9577 = vadd.f32 %v9478, %v9576
    %9578 = vmatmul.bf16.gmra.mxu0 %v8272
    %v9579 = vpop.f32.mrf.mxu0
    %v9580 = vadd.f32 %v9481, %v9579
    %v9581 = vpop.f32.mrf.mxu0
    %v9582 = vadd.f32 %v9483, %v9581
    %9583 = vmatmul.bf16.gmra.mxu0 %v8281
    %v9584 = vpop.f32.mrf.mxu0
    %v9585 = vadd.f32 %v9486, %v9584
    %v9586 = vpop.f32.mrf.mxu0
    %v9587 = vadd.f32 %v9488, %v9586
    %9588 = vmatmul.bf16.gmra.mxu0 %v8290
    %v9589 = vpop.f32.mrf.mxu0
    %v9590 = vadd.f32 %v9491, %v9589
    %v9591 = vpop.f32.mrf.mxu0
    %v9592 = vadd.f32 %v9493, %v9591
    %9593 = vmatmul.bf16.gmra.mxu0 %v8299
    %v9594 = vpop.f32.mrf.mxu0
    %v9595 = vadd.f32 %v9496, %v9594
    %v9596 = vpop.f32.mrf.mxu0
    %v9597 = vadd.f32 %v9498, %v9596
    %9598 = vmatmul.bf16.gmra.mxu0 %v8308
    %v9599 = vpop.f32.mrf.mxu0
    %v9600 = vadd.f32 %v9501, %v9599
    %v9601 = vpop.f32.mrf.mxu0
    %v9602 = vadd.f32 %v9503, %v9601
    %9603 = vmatmul.bf16.gmra.mxu0 %v8317
    %v9604 = vpop.f32.mrf.mxu0
    %v9605 = vadd.f32 %v9506, %v9604
    %v9606 = vpop.f32.mrf.mxu0
    %v9607 = vadd.f32 %v9508, %v9606
    %9608 = vmatmul.bf16.gmra.mxu0 %v8326
    %v9609 = vpop.f32.mrf.mxu0
    %v9610 = vadd.f32 %v9511, %v9609
    %v9611 = vpop.f32.mrf.mxu0
    %v9612 = vadd.f32 %v9513, %v9611
    %9613 = vmatmul.bf16.gmra.mxu0 %v8335
    %v9614 = vpop.f32.mrf.mxu0
    %v9615 = vadd.f32 %v9516, %v9614
    %v9616 = vpop.f32.mrf.mxu0
    %v9617 = vadd.f32 %v9518, %v9616
    %9618 = vmatmul.bf16.gmra.mxu0 %v8344
    %v9619 = vpop.f32.mrf.mxu0
    %v9620 = vadd.f32 %v9521, %v9619
    %v9621 = vpop.f32.mrf.mxu0
    %v9622 = vadd.f32 %v9523, %v9621
    %9623 = vmatmul.bf16.gmra.mxu0 %v8353
    %v9624 = vpop.f32.mrf.mxu0
    %v9625 = vadd.f32 %v9526, %v9624
    %v9626 = vpop.f32.mrf.mxu0
    %v9627 = vadd.f32 %v9528, %v9626
    %9628 = vdwg.mxu0
    %9629 = vmatpush.bf16.msra.mxu0 %v8855
    %9630 = vmatpush.bf16.msra.mxu0 %v8854
    %9631 = vmatpush.bf16.msra.mxu0 %v8853
    %9632 = vmatpush.bf16.msra.mxu0 %v8852
    %9633 = vmatpush.bf16.msra.mxu0 %v8851
    %9634 = vmatpush.bf16.msra.mxu0 %v8850
    %9635 = vmatpush.bf16.msra.mxu0 %v8849
    %9636 = vmatpush.bf16.msra.mxu0 %v8848
    %9637 = vmatmul.bf16.gmra.mxu0 %v8201
    %v9638 = vpop.f32.mrf.mxu0
    %v9639 = vadd.f32 %v9540, %v9638
    %v9640 = vpop.f32.mrf.mxu0
    %v9641 = vadd.f32 %v9542, %v9640
    %9642 = vmatmul.bf16.gmra.mxu0 %v8210
    %v9643 = vpop.f32.mrf.mxu0
    %v9644 = vadd.f32 %v9545, %v9643
    %v9645 = vpop.f32.mrf.mxu0
    %v9646 = vadd.f32 %v9547, %v9645
    %9647 = vmatmul.bf16.gmra.mxu0 %v8219
    %v9648 = vpop.f32.mrf.mxu0
    %v9649 = vadd.f32 %v9550, %v9648
    %v9650 = vpop.f32.mrf.mxu0
    %v9651 = vadd.f32 %v9552, %v9650
    %9652 = vmatmul.bf16.gmra.mxu0 %v8228
    %v9653 = vpop.f32.mrf.mxu0
    %v9654 = vadd.f32 %v9555, %v9653
    %v9655 = vpop.f32.mrf.mxu0
    %v9656 = vadd.f32 %v9557, %v9655
    %9657 = vmatmul.bf16.gmra.mxu0 %v8237
    %v9658 = vpop.f32.mrf.mxu0
    %v9659 = vadd.f32 %v9560, %v9658
    %v9660 = vpop.f32.mrf.mxu0
    %v9661 = vadd.f32 %v9562, %v9660
    %9662 = vmatmul.bf16.gmra.mxu0 %v8246
    %v9663 = vpop.f32.mrf.mxu0
    %v9664 = vadd.f32 %v9565, %v9663
    %v9665 = vpop.f32.mrf.mxu0
    %v9666 = vadd.f32 %v9567, %v9665
    %9667 = vmatmul.bf16.gmra.mxu0 %v8255
    %v9668 = vpop.f32.mrf.mxu0
    %v9669 = vadd.f32 %v9570, %v9668
    %v9670 = vpop.f32.mrf.mxu0
    %v9671 = vadd.f32 %v9572, %v9670
    %9672 = vmatmul.bf16.gmra.mxu0 %v8264
    %v9673 = vpop.f32.mrf.mxu0
    %v9674 = vadd.f32 %v9575, %v9673
    %v9675 = vpop.f32.mrf.mxu0
    %v9676 = vadd.f32 %v9577, %v9675
    %9677 = vmatmul.bf16.gmra.mxu0 %v8273
    %v9678 = vpop.f32.mrf.mxu0
    %v9679 = vadd.f32 %v9580, %v9678
    %v9680 = vpop.f32.mrf.mxu0
    %v9681 = vadd.f32 %v9582, %v9680
    %9682 = vmatmul.bf16.gmra.mxu0 %v8282
    %v9683 = vpop.f32.mrf.mxu0
    %v9684 = vadd.f32 %v9585, %v9683
    %v9685 = vpop.f32.mrf.mxu0
    %v9686 = vadd.f32 %v9587, %v9685
    %9687 = vmatmul.bf16.gmra.mxu0 %v8291
    %v9688 = vpop.f32.mrf.mxu0
    %v9689 = vadd.f32 %v9590, %v9688
    %v9690 = vpop.f32.mrf.mxu0
    %v9691 = vadd.f32 %v9592, %v9690
    %9692 = vmatmul.bf16.gmra.mxu0 %v8300
    %v9693 = vpop.f32.mrf.mxu0
    %v9694 = vadd.f32 %v9595, %v9693
    %v9695 = vpop.f32.mrf.mxu0
    %v9696 = vadd.f32 %v9597, %v9695
    %9697 = vmatmul.bf16.gmra.mxu0 %v8309
    %v9698 = vpop.f32.mrf.mxu0
    %v9699 = vadd.f32 %v9600, %v9698
    %v9700 = vpop.f32.mrf.mxu0
    %v9701 = vadd.f32 %v9602, %v9700
    %9702 = vmatmul.bf16.gmra.mxu0 %v8318
    %v9703 = vpop.f32.mrf.mxu0
    %v9704 = vadd.f32 %v9605, %v9703
    %v9705 = vpop.f32.mrf.mxu0
    %v9706 = vadd.f32 %v9607, %v9705
    %9707 = vmatmul.bf16.gmra.mxu0 %v8327
    %v9708 = vpop.f32.mrf.mxu0
    %v9709 = vadd.f32 %v9610, %v9708
    %v9710 = vpop.f32.mrf.mxu0
    %v9711 = vadd.f32 %v9612, %v9710
    %9712 = vmatmul.bf16.gmra.mxu0 %v8336
    %v9713 = vpop.f32.mrf.mxu0
    %v9714 = vadd.f32 %v9615, %v9713
    %v9715 = vpop.f32.mrf.mxu0
    %v9716 = vadd.f32 %v9617, %v9715
    %9717 = vmatmul.bf16.gmra.mxu0 %v8345
    %v9718 = vpop.f32.mrf.mxu0
    %v9719 = vadd.f32 %v9620, %v9718
    %v9720 = vpop.f32.mrf.mxu0
    %v9721 = vadd.f32 %v9622, %v9720
    %9722 = vmatmul.bf16.gmra.mxu0 %v8354
    %v9723 = vpop.f32.mrf.mxu0
    %v9724 = vadd.f32 %v9625, %v9723
    %v9725 = vpop.f32.mrf.mxu0
    %v9726 = vadd.f32 %v9627, %v9725
    %9727 = vdwg.mxu0
    %9728 = vmatpush.bf16.msra.mxu0 %v8863
    %9729 = vmatpush.bf16.msra.mxu0 %v8862
    %9730 = vmatpush.bf16.msra.mxu0 %v8861
    %9731 = vmatpush.bf16.msra.mxu0 %v8860
    %9732 = vmatpush.bf16.msra.mxu0 %v8859
    %9733 = vmatpush.bf16.msra.mxu0 %v8858
    %9734 = vmatpush.bf16.msra.mxu0 %v8857
    %9735 = vmatpush.bf16.msra.mxu0 %v8856
    %9736 = vmatmul.bf16.gmra.mxu0 %v8202
    %v9737 = vpop.f32.mrf.mxu0
    %v9738 = vadd.f32 %v9639, %v9737
    %v9739 = vpop.f32.mrf.mxu0
    %v9740 = vadd.f32 %v9641, %v9739
    %9741 = vmatmul.bf16.gmra.mxu0 %v8211
    %v9742 = vpop.f32.mrf.mxu0
    %v9743 = vadd.f32 %v9644, %v9742
    %v9744 = vpop.f32.mrf.mxu0
    %v9745 = vadd.f32 %v9646, %v9744
    %9746 = vmatmul.bf16.gmra.mxu0 %v8220
    %v9747 = vpop.f32.mrf.mxu0
    %v9748 = vadd.f32 %v9649, %v9747
    %v9749 = vpop.f32.mrf.mxu0
    %v9750 = vadd.f32 %v9651, %v9749
    %9751 = vmatmul.bf16.gmra.mxu0 %v8229
    %v9752 = vpop.f32.mrf.mxu0
    %v9753 = vadd.f32 %v9654, %v9752
    %v9754 = vpop.f32.mrf.mxu0
    %v9755 = vadd.f32 %v9656, %v9754
    %9756 = vmatmul.bf16.gmra.mxu0 %v8238
    %v9757 = vpop.f32.mrf.mxu0
    %v9758 = vadd.f32 %v9659, %v9757
    %v9759 = vpop.f32.mrf.mxu0
    %v9760 = vadd.f32 %v9661, %v9759
    %9761 = vmatmul.bf16.gmra.mxu0 %v8247
    %v9762 = vpop.f32.mrf.mxu0
    %v9763 = vadd.f32 %v9664, %v9762
    %v9764 = vpop.f32.mrf.mxu0
    %v9765 = vadd.f32 %v9666, %v9764
    %9766 = vmatmul.bf16.gmra.mxu0 %v8256
    %v9767 = vpop.f32.mrf.mxu0
    %v9768 = vadd.f32 %v9669, %v9767
    %v9769 = vpop.f32.mrf.mxu0
    %v9770 = vadd.f32 %v9671, %v9769
    %9771 = vmatmul.bf16.gmra.mxu0 %v8265
    %v9772 = vpop.f32.mrf.mxu0
    %v9773 = vadd.f32 %v9674, %v9772
    %v9774 = vpop.f32.mrf.mxu0
    %v9775 = vadd.f32 %v9676, %v9774
    %9776 = vmatmul.bf16.gmra.mxu0 %v8274
    %v9777 = vpop.f32.mrf.mxu0
    %v9778 = vadd.f32 %v9679, %v9777
    %v9779 = vpop.f32.mrf.mxu0
    %v9780 = vadd.f32 %v9681, %v9779
    %9781 = vmatmul.bf16.gmra.mxu0 %v8283
    %v9782 = vpop.f32.mrf.mxu0
    %v9783 = vadd.f32 %v9684, %v9782
    %v9784 = vpop.f32.mrf.mxu0
    %v9785 = vadd.f32 %v9686, %v9784
    %9786 = vmatmul.bf16.gmra.mxu0 %v8292
    %v9787 = vpop.f32.mrf.mxu0
    %v9788 = vadd.f32 %v9689, %v9787
    %v9789 = vpop.f32.mrf.mxu0
    %v9790 = vadd.f32 %v9691, %v9789
    %9791 = vmatmul.bf16.gmra.mxu0 %v8301
    %v9792 = vpop.f32.mrf.mxu0
    %v9793 = vadd.f32 %v9694, %v9792
    %v9794 = vpop.f32.mrf.mxu0
    %v9795 = vadd.f32 %v9696, %v9794
    %9796 = vmatmul.bf16.gmra.mxu0 %v8310
    %v9797 = vpop.f32.mrf.mxu0
    %v9798 = vadd.f32 %v9699, %v9797
    %v9799 = vpop.f32.mrf.mxu0
    %v9800 = vadd.f32 %v9701, %v9799
    %9801 = vmatmul.bf16.gmra.mxu0 %v8319
    %v9802 = vpop.f32.mrf.mxu0
    %v9803 = vadd.f32 %v9704, %v9802
    %v9804 = vpop.f32.mrf.mxu0
    %v9805 = vadd.f32 %v9706, %v9804
    %9806 = vmatmul.bf16.gmra.mxu0 %v8328
    %v9807 = vpop.f32.mrf.mxu0
    %v9808 = vadd.f32 %v9709, %v9807
    %v9809 = vpop.f32.mrf.mxu0
    %v9810 = vadd.f32 %v9711, %v9809
    %9811 = vmatmul.bf16.gmra.mxu0 %v8337
    %v9812 = vpop.f32.mrf.mxu0
    %v9813 = vadd.f32 %v9714, %v9812
    %v9814 = vpop.f32.mrf.mxu0
    %v9815 = vadd.f32 %v9716, %v9814
    %9816 = vmatmul.bf16.gmra.mxu0 %v8346
    %v9817 = vpop.f32.mrf.mxu0
    %v9818 = vadd.f32 %v9719, %v9817
    %v9819 = vpop.f32.mrf.mxu0
    %v9820 = vadd.f32 %v9721, %v9819
    %9821 = vmatmul.bf16.gmra.mxu0 %v8355
    %v9822 = vpop.f32.mrf.mxu0
    %v9823 = vadd.f32 %v9724, %v9822
    %v9824 = vpop.f32.mrf.mxu0
    %v9825 = vadd.f32 %v9726, %v9824
    %9826 = vdwg.mxu0
    %9827 = vst [vmem:[#allocation8] sm:$0xff] %v9738
    %9828 = vst [vmem:[#allocation8 + $0x8] sm:$0xff] %v9740
    %9829 = vst [vmem:[#allocation8 + $0x10] sm:$0xff] %v9743
    %9830 = vst [vmem:[#allocation8 + $0x18] sm:$0xff] %v9745
    %9831 = vst [vmem:[#allocation8 + $0x20] sm:$0xff] %v9748
    %9832 = vst [vmem:[#allocation8 + $0x28] sm:$0xff] %v9750
    %9833 = vst [vmem:[#allocation8 + $0x30] sm:$0xff] %v9753
    %9834 = vst [vmem:[#allocation8 + $0x38] sm:$0xff] %v9755
    %9835 = vst [vmem:[#allocation8 + $0x40] sm:$0xff] %v9758
    %9836 = vst [vmem:[#allocation8 + $0x48] sm:$0xff] %v9760
    %9837 = vst [vmem:[#allocation8 + $0x50] sm:$0xff] %v9763
    %9838 = vst [vmem:[#allocation8 + $0x58] sm:$0xff] %v9765
    %9839 = vst [vmem:[#allocation8 + $0x60] sm:$0xff] %v9768
    %9840 = vst [vmem:[#allocation8 + $0x68] sm:$0xff] %v9770
    %9841 = vst [vmem:[#allocation8 + $0x70] sm:$0xff] %v9773
    %9842 = vst [vmem:[#allocation8 + $0x78] sm:$0xff] %v9775
    %9843 = vst [vmem:[#allocation8 + $0x80] sm:$0xff] %v9778
    %9844 = vst [vmem:[#allocation8 + $0x88] sm:$0xff] %v9780
    %9845 = vst [vmem:[#allocation8 + $0x90] sm:$0xff] %v9783
    %9846 = vst [vmem:[#allocation8 + $0x98] sm:$0xff] %v9785
    %9847 = vst [vmem:[#allocation8 + $0xa0] sm:$0xff] %v9788
    %9848 = vst [vmem:[#allocation8 + $0xa8] sm:$0xff] %v9790
    %9849 = vst [vmem:[#allocation8 + $0xb0] sm:$0xff] %v9793
    %9850 = vst [vmem:[#allocation8 + $0xb8] sm:$0xff] %v9795
    %9851 = vst [vmem:[#allocation8 + $0xc0] sm:$0xff] %v9798
    %9852 = vst [vmem:[#allocation8 + $0xc8] sm:$0xff] %v9800
    %9853 = vst [vmem:[#allocation8 + $0xd0] sm:$0xff] %v9803
    %9854 = vst [vmem:[#allocation8 + $0xd8] sm:$0xff] %v9805
    %9855 = vst [vmem:[#allocation8 + $0xe0] sm:$0xff] %v9808
    %9856 = vst [vmem:[#allocation8 + $0xe8] sm:$0xff] %v9810
    %9857 = vst [vmem:[#allocation8 + $0xf0] sm:$0xff] %v9813
    %9858 = vst [vmem:[#allocation8 + $0xf8] sm:$0xff] %v9815
    %9859 = vst [vmem:[#allocation8 + $0x100] sm:$0xff] %v9818
    %9860 = vst [vmem:[#allocation8 + $0x108] sm:$0xff] %v9820
    %9861 = vst [vmem:[#allocation8 + $0x110] sm:$0xff] %v9823
    %9862 = vst [vmem:[#allocation8 + $0x118] sm:$0xff] %v9825
    // Predicated region
    $region34: #{tpu_custom_call.1} parent=1 // pred_check
      _
    $region35: #{tpu_custom_call.1} parent=1 // pred_check_branch
      %9864 = sbr.rel (0) target = $region37
    $region36: #{tpu_custom_call.1} parent=1 // pred_region
      %9866 = vsyncadd [#allocation4], 0
      %s9867 = sshll.u32 [#allocation8], 4
      %s9868 = int_to_ptr.vmem [resolvable:$true] %s9867
      %s9869 = sshll.u32 %s5, 4
      %s9870 = int_to_ptr.hbm [resolvable:$true] %s9869
      %9875 = dma.vmem_to_hbm [thread:$0]  %s9868, 4608, %s9870, [#allocation4], 128, 128, 8
    $region37: #{tpu_custom_call.1} parent=1 // pred_fallthru
      _
    // Predicated region
    $region38: #{tpu_custom_call.1} parent=1 // pred_check
      _
    $region39: #{tpu_custom_call.1} parent=1 // pred_check_branch
      %9877 = sbr.rel (0) target = $region41
    $region40: #{tpu_custom_call.1} parent=1 // pred_region
      %9879 = dma.done [#allocation4], 4608
    $region41: #{tpu_custom_call.1} parent=1 // pred_fallthru
      _
    %9880 = vsyncpa [#allocation3], 1
    %9881 = vsyncpa [#allocation6], 1
    %9882 = vsyncpa [#allocation4], 1

</llo_original>
